<compile_context>
chip_gen: v7x
topology: tpu7x:2x2x1
jax: 0.10.0
libtpu: 0.0.40
codegen_flags: <defaults>
</compile_context>

<pallas_src>
import functools

import jax
import jax.numpy as jnp
from jax import lax
from jax.experimental import pallas as pl
from jax.experimental.pallas import tpu as pltpu

BN_EPS = 1e-5
POOL_CHUNK = 256  # lane-chunk width for the pooling matmuls


# ----------------------------------------------------------------------------
# Fused Pallas kernel: the whole ASCADBranch forward for `bt` batch elements.
# ----------------------------------------------------------------------------
def fused_ascad_kernel(x_ref, s_ref, t_ref, *refs,
                       layer_dims, ksize, pad, pool, lf, bt):
    """refs = [w_1, sh_1, ..., w_7, sh_7, wlin, blin, o].

    x_ref:   (1, 1, bt*L0)       folded batch chunk (lane = b*L0 + l)
    s_ref:   (256, 256//pool)    pairwise-averaging pool matrix (sliced)
    t_ref:   (lf, ch7, ch7//L7)  pool7 + C-major flatten selectors
    w_i:     (K, c_out, c_in)    conv weights with BN scale folded in
    sh_i:    (c_out, 1)          folded BN shift (VPU broadcast add)
    wlin:    (lf, n_out, c_last) linear weights split per final position
    blin:    (n_out, 1)          linear bias
    o:       (bt, n_out)         lane-dense output block
    """
    n_layers = len(layer_dims)
    w_refs = refs[0:2 * n_layers:2]
    sh_refs = refs[1:2 * n_layers:2]
    wlin_ref = refs[2 * n_layers]
    blin_ref = refs[2 * n_layers + 1]
    o_ref = refs[2 * n_layers + 2]

    h = x_ref[0]                                    # (1, bt*L0) f32
    y = None

    for i, (c_in, c_out, L) in enumerate(layer_dims):
        n = bt * L
        # Per-lane position within each batch segment (for edge masking).
        lane = lax.broadcasted_iota(jnp.int32, (1, n), 1)
        if (L & (L - 1)) == 0:
            pos = lane & (L - 1)                    # power-of-two fast path
        else:
            pos = lane % L

        # ---- Conv1d('same'): K tap matmuls on roll-shifted operands --------
        acc = None
        for k in range(ksize):
            d = k - pad                             # tap offset
            if d == 0:
                xk = h
            else:
                # xk[:, m] = h[:, m + d] (within each batch segment, 0 at edges)
                xk = pltpu.roll(h, shift=(-d) % n, axis=1)   # XLU lane rotate
                if d < 0:
                    xk = jnp.where(pos >= -d, xk, 0.0)
                else:
                    xk = jnp.where(pos < L - d, xk, 0.0)
            wk = w_refs[i][k]                       # (c_out, c_in)
            if c_in == 1:
                tap = wk * xk                       # outer product on the VPU
            else:
                tap = jnp.dot(wk, xk, preferred_element_type=jnp.float32)
            acc = tap if acc is None else acc + tap

        # Folded BN shift (broadcast VPU add) + ReLU.
        y = jnp.maximum(acc + sh_refs[i][...], 0.0)             # (c_out, n)

        if i < n_layers - 1:
            # ---- AvgPool1d(pool): 256-lane-chunk matmuls (MXU, linear in bt)
            ch = min(POOL_CHUNK, n)
            npc = ch // pool
            pieces = [
                jnp.dot(y[:, j * ch:(j + 1) * ch], s_ref[0:ch, 0:npc],
                        preferred_element_type=jnp.float32)
                for j in range(n // ch)
            ]
            h = pieces[0] if len(pieces) == 1 else jnp.concatenate(pieces,
                                                                   axis=1)

    # ---- AvgPool7 + C-major flatten + Linear, fused -------------------------
    l_pre = layer_dims[-1][2]                       # pre-pool length of block 7
    n7 = bt * l_pre
    ch = min(POOL_CHUNK, n7)
    out = blin_ref[...]                             # (n_out, 1)
    for l in range(lf):
        pieces = [
            jnp.dot(y[:, j * ch:(j + 1) * ch], t_ref[l],
                    preferred_element_type=jnp.float32)
            for j in range(n7 // ch)
        ]
        h_l = pieces[0] if len(pieces) == 1 else jnp.concatenate(pieces,
                                                                 axis=1)
        # (n_out, c_last) @ (c_last, bt): one big linear matmul per final pos.
        out = out + jnp.dot(wlin_ref[l], h_l, preferred_element_type=jnp.float32)

    o_ref[...] = out.T                              # (bt, n_out) lane-dense store


# ----------------------------------------------------------------------------
# One-time parameter folding (host/XLA, outside the per-call path)
# ----------------------------------------------------------------------------
def fold_params(conv_params, out_params, dim_input, pool_size, bt):
    """Fold eval-mode BN into conv weights / a shift vector, build the pool
    matrix and the fused pool7+flatten selectors, split the linear weights."""
    n_blocks = len(conv_params)
    assert dim_input % (pool_size ** n_blocks) == 0, (
        "dim_input must be divisible by pool_size**n_blocks")
    ksize = conv_params[0][0].shape[-1]
    assert ksize % 2 == 1, "kernel_size must be odd for 'same' padding"
    pad = (ksize - 1) // 2

    ws, shifts, layer_dims = [], [], []
    L = dim_input
    for (w, scale, shift) in conv_params:
        c_out, c_in, _ = w.shape
        wf = (w * scale[:, None, None]).astype(jnp.float32)   # BN scale folded
        ws.append(jnp.transpose(wf, (2, 0, 1)))               # (K, c_out, c_in)
        shifts.append(shift.reshape(c_out, 1).astype(jnp.float32))
        layer_dims.append((c_in, c_out, L))
        L //= pool_size
    lf = L                                   # final spatial length
    l_pre = lf * pool_size                   # pre-pool length of the last block
    c_last = layer_dims[-1][1]

    # Pairwise-averaging pool matrix applied to POOL_CHUNK-lane chunks.
    q = jnp.arange(POOL_CHUNK)[:, None]
    m = jnp.arange(POOL_CHUNK // pool_size)[None, :]
    pool_mat = ((q // pool_size) == m).astype(jnp.float32) / pool_size

    # Last-block selectors: t[l][q, b] averages the pool_size lanes of final
    # position l of local batch element b (folds AvgPool7 + C-major flatten).
    n7 = bt * l_pre
    ch7 = min(POOL_CHUNK, n7)
    cols7 = ch7 // l_pre
    q = jnp.arange(ch7)[:, None]
    m = jnp.arange(cols7)[None, :]
    t_list = []
    for l in range(lf):
        sel = jnp.zeros((ch7, cols7), jnp.float32)
        for r in range(pool_size):
            sel = sel + (q == m * l_pre + l * pool_size + r).astype(jnp.float32)
        t_list.append(sel / pool_size)
    t_mat = jnp.stack(t_list, axis=0)                          # (lf, ch7, cols7)

    w_out, b_out = out_params
    n_out, flat = w_out.shape
    assert flat == c_last * lf
    # wlin[l, o, c] = w_out[o, c*lf + l]   (torch .view flattens C-major)
    wlin = jnp.transpose(w_out.reshape(n_out, c_last, lf), (2, 0, 1))
    blin = b_out.reshape(n_out, 1).astype(jnp.float32)

    arrays = (tuple(ws), tuple(shifts), pool_mat, t_mat, wlin, blin)
    static = (tuple(layer_dims), ksize, pad, lf)
    return arrays, static


# ----------------------------------------------------------------------------
# Forward pass wrapper (single fused, batch-folded pallas_call)
# ----------------------------------------------------------------------------
def ascad_branch_forward(x, ws, shifts, pool_mat, t_mat, wlin, blin, *,
                         layer_dims, ksize, pad, pool, lf, bt):
    B, L0 = x.shape
    n_out = blin.shape[0]
    assert B % bt == 0, "batch must be divisible by the fold factor bt"
    assert bt > 0 and (bt & (bt - 1)) == 0, "bt must be a power of two"
    assert bt % 8 == 0 or bt == B, "bt should be a multiple of 8 (sublanes)"
    grid_len = B // bt
    n0 = bt * L0
    # Host-side reshape: lane = b_local*L0 + l (batch folded onto lanes).
    x3 = x.reshape(grid_len, 1, n0).astype(jnp.float32)

    kernel = functools.partial(
        fused_ascad_kernel, layer_dims=tuple(layer_dims), ksize=ksize,
        pad=pad, pool=pool, lf=lf, bt=bt)

    in_specs = [
        pl.BlockSpec((1, 1, n0), lambda g: (g, 0, 0)),      # folded batch chunk
        pl.BlockSpec(pool_mat.shape, lambda g: (0, 0)),     # resident pool matrix
        pl.BlockSpec(t_mat.shape, lambda g: (0, 0, 0)),     # pool7+flatten selectors
    ]
    inputs = [x3, pool_mat, t_mat]
    for w, sh in zip(ws, shifts):                           # conv+BN params
        in_specs.append(pl.BlockSpec(w.shape, lambda g: (0, 0, 0)))
        in_specs.append(pl.BlockSpec(sh.shape, lambda g: (0, 0)))
        inputs.extend([w, sh])
    in_specs.append(pl.BlockSpec(wlin.shape, lambda g: (0, 0, 0)))
    in_specs.append(pl.BlockSpec(blin.shape, lambda g: (0, 0)))
    inputs.extend([wlin, blin])

    return pl.pallas_call(
        kernel,
        out_shape=jax.ShapeDtypeStruct((B, n_out), jnp.float32),
        grid=(grid_len,),
        in_specs=in_specs,
        out_specs=pl.BlockSpec((bt, n_out), lambda g: (g, 0)),
        compiler_params=pltpu.CompilerParams(
            dimension_semantics=("parallel",)),
    )(*inputs)


# ----------------------------------------------------------------------------
# Parameter init (deterministic, synthetic)
# ----------------------------------------------------------------------------
def init_params(key, dim_input, n_filters_1, kernel_size, pool_size, n_bits):
    conv_params = []
    c_in, c_out, dim = 1, n_filters_1, dim_input
    for _ in range(7):
        key, k1, k2, k3, k4, k5 = jax.random.split(key, 6)
        w = 0.1 * jax.random.normal(k1, (c_out, c_in, kernel_size), jnp.float32)
        gamma = 1.0 + 0.1 * jax.random.normal(k2, (c_out,), jnp.float32)
        beta = 0.1 * jax.random.normal(k3, (c_out,), jnp.float32)
        mean = 0.1 * jax.random.normal(k4, (c_out,), jnp.float32)
        var = jnp.abs(jax.random.normal(k5, (c_out,), jnp.float32)) + 0.5
        # Eval-mode BatchNorm folded into a per-channel affine.
        scale = gamma / jnp.sqrt(var + BN_EPS)
        shift = beta - mean * scale
        conv_params.append((w, scale, shift))
        c_in, c_out = c_out, c_out * 2
        dim //= pool_size
    flat_dims = c_in * dim
    n_out = 1 << n_bits
    key, kw, kb = jax.random.split(key, 3)
    w_out = 0.05 * jax.random.normal(kw, (n_out, flat_dims), jnp.float32)
    b_out = 0.05 * jax.random.normal(kb, (n_out,), jnp.float32)
    return conv_params, (w_out, b_out)


# Pure-JAX reference for validation.
def ascad_branch_reference(x, conv_params, out_params, pool_size):
    h = x[:, None, :]
    for (w, scale, shift) in conv_params:
        ksz = w.shape[-1]
        pad = (ksz - 1) // 2
        h = lax.conv_general_dilated(h, w, (1,), [(pad, pad)],
                                     dimension_numbers=('NCH', 'OIH', 'NCH'))
        h = h * scale[None, :, None] + shift[None, :, None]
        h = jnp.maximum(h, 0.0)
        B, C, L = h.shape
        Lo = L // pool_size
        h = h[:, :, :Lo * pool_size].reshape(B, C, Lo, pool_size).mean(-1)
    h_flat = h.reshape(h.shape[0], -1)
    w_out, b_out = out_params
    return h_flat @ w_out.T + b_out


if __name__ == "__main__":
    # Small-but-consistent hyperparameters (dim_input survives 7 pools).
    dim_input = 256
    n_filters_1 = 4
    kernel_size = 3
    pool_size = 2
    n_bits = 4
    batch = 16
    bt = 8            # batch elements folded per grid step -> grid = (2,)
                      # (for production sizes use bt ~ 64 so late-layer lane
                      #  extents reach >= 256 for the wide MXUs)

    key = jax.random.PRNGKey(0)
    key, kx = jax.random.split(key)
    x = jax.random.normal(kx, (batch, dim_input), jnp.float32)

    conv_params, out_params = init_params(
        key, dim_input, n_filters_1, kernel_size, pool_size, n_bits)

    arrays, static = fold_params(conv_params, out_params, dim_input,
                                 pool_size, bt)
    ws, shifts, pool_mat, t_mat, wlin, blin = arrays
    layer_dims, ksize, pad, lf = static

    fwd = jax.jit(functools.partial(
        ascad_branch_forward, layer_dims=layer_dims, ksize=ksize, pad=pad,
        pool=pool_size, lf=lf, bt=bt))
    y = fwd(x, ws, shifts, pool_mat, t_mat, wlin, blin)
    y = jax.block_until_ready(y)

    y_ref = ascad_branch_reference(x, conv_params, out_params, pool_size)
    assert y.shape == (batch, 1 << n_bits), y.shape
    assert jnp.allclose(y, y_ref, atol=2e-3, rtol=2e-2), (
        "Pallas output mismatch vs reference")

    print("KERNEL_OK")
</pallas_src>

<mosaic_0001>
module attributes {stable_mosaic.version = 11 : i64} {
  func.func @fused_ascad_kernel(%arg0: i32, %arg1: memref<1x1x2048xf32, #tpu.memory_space<vmem>>, %arg2: memref<256x128xf32, #tpu.memory_space<vmem>>, %arg3: memref<2x32x8xf32, #tpu.memory_space<vmem>>, %arg4: memref<3x4x1xf32, #tpu.memory_space<vmem>>, %arg5: memref<4x1xf32, #tpu.memory_space<vmem>>, %arg6: memref<3x8x4xf32, #tpu.memory_space<vmem>>, %arg7: memref<8x1xf32, #tpu.memory_space<vmem>>, %arg8: memref<3x16x8xf32, #tpu.memory_space<vmem>>, %arg9: memref<16x1xf32, #tpu.memory_space<vmem>>, %arg10: memref<3x32x16xf32, #tpu.memory_space<vmem>>, %arg11: memref<32x1xf32, #tpu.memory_space<vmem>>, %arg12: memref<3x64x32xf32, #tpu.memory_space<vmem>>, %arg13: memref<64x1xf32, #tpu.memory_space<vmem>>, %arg14: memref<3x128x64xf32, #tpu.memory_space<vmem>>, %arg15: memref<128x1xf32, #tpu.memory_space<vmem>>, %arg16: memref<3x256x128xf32, #tpu.memory_space<vmem>>, %arg17: memref<256x1xf32, #tpu.memory_space<vmem>>, %arg18: memref<2x16x256xf32, #tpu.memory_space<vmem>>, %arg19: memref<16x1xf32, #tpu.memory_space<vmem>>, %arg20: memref<8x16xf32, #tpu.memory_space<vmem>>) attributes {dimension_semantics = [#tpu.dimension_semantics<parallel>], iteration_bounds = array<i64: 2>, scalar_prefetch = 0 : i64, scratch_operands = 0 : i64, tpu.core_type = #tpu.core_type<tc>, window_params = [{transform_indices = @transform_0, window_bounds = array<i64: 1, 1, 2048>}, {pipeline_mode = #tpu.pipeline_mode<synchronous>, transform_indices = @transform_1, window_bounds = array<i64: 256, 128>}, {pipeline_mode = #tpu.pipeline_mode<synchronous>, transform_indices = @transform_2, window_bounds = array<i64: 2, 32, 8>}, {pipeline_mode = #tpu.pipeline_mode<synchronous>, transform_indices = @transform_3, window_bounds = array<i64: 3, 4, 1>}, {pipeline_mode = #tpu.pipeline_mode<synchronous>, transform_indices = @transform_4, window_bounds = array<i64: 4, 1>}, {pipeline_mode = #tpu.pipeline_mode<synchronous>, transform_indices = @transform_5, window_bounds = array<i64: 3, 8, 4>}, {pipeline_mode = #tpu.pipeline_mode<synchronous>, transform_indices = @transform_6, window_bounds = array<i64: 8, 1>}, {pipeline_mode = #tpu.pipeline_mode<synchronous>, transform_indices = @transform_7, window_bounds = array<i64: 3, 16, 8>}, {pipeline_mode = #tpu.pipeline_mode<synchronous>, transform_indices = @transform_8, window_bounds = array<i64: 16, 1>}, {pipeline_mode = #tpu.pipeline_mode<synchronous>, transform_indices = @transform_9, window_bounds = array<i64: 3, 32, 16>}, {pipeline_mode = #tpu.pipeline_mode<synchronous>, transform_indices = @transform_10, window_bounds = array<i64: 32, 1>}, {pipeline_mode = #tpu.pipeline_mode<synchronous>, transform_indices = @transform_11, window_bounds = array<i64: 3, 64, 32>}, {pipeline_mode = #tpu.pipeline_mode<synchronous>, transform_indices = @transform_12, window_bounds = array<i64: 64, 1>}, {pipeline_mode = #tpu.pipeline_mode<synchronous>, transform_indices = @transform_13, window_bounds = array<i64: 3, 128, 64>}, {pipeline_mode = #tpu.pipeline_mode<synchronous>, transform_indices = @transform_14, window_bounds = array<i64: 128, 1>}, {pipeline_mode = #tpu.pipeline_mode<synchronous>, transform_indices = @transform_15, window_bounds = array<i64: 3, 256, 128>}, {pipeline_mode = #tpu.pipeline_mode<synchronous>, transform_indices = @transform_16, window_bounds = array<i64: 256, 1>}, {pipeline_mode = #tpu.pipeline_mode<synchronous>, transform_indices = @transform_17, window_bounds = array<i64: 2, 16, 256>}, {pipeline_mode = #tpu.pipeline_mode<synchronous>, transform_indices = @transform_18, window_bounds = array<i64: 16, 1>}, {transform_indices = @transform_19, window_bounds = array<i64: 8, 16>}]} {
    %c0 = arith.constant 0 : index
    %c0_0 = arith.constant 0 : index
    %c0_1 = arith.constant 0 : index
    %0 = vector.load %arg1[%c0, %c0_0, %c0_1] : memref<1x1x2048xf32, #tpu.memory_space<vmem>>, vector<1x1x2048xf32>
    %1 = vector.shape_cast %0 : vector<1x1x2048xf32> to vector<1x2048xf32>
    %2 = tpu.iota {dimensions = array<i32: 1>} : vector<1x2048xi32>
    %c255_i32 = arith.constant 255 : i32
    %3 = vector.broadcast %c255_i32 : i32 to vector<1x2048xi32>
    %4 = arith.andi %2, %3 : vector<1x2048xi32>
    %c1_i32 = arith.constant 1 : i32
    %5 = tpu.dynamic_rotate %1 by %c1_i32 dim 1 : vector<1x2048xf32>, i32 -> vector<1x2048xf32>
    %c1_i32_2 = arith.constant 1 : i32
    %6 = vector.broadcast %c1_i32_2 : i32 to vector<1x2048xi32>
    %7 = arith.cmpi sge, %4, %6 : vector<1x2048xi32>
    %cst = arith.constant 0.000000e+00 : f32
    %8 = vector.broadcast %cst : f32 to vector<1x2048xf32>
    %9 = arith.select %7, %5, %8 : vector<1x2048xi1>, vector<1x2048xf32>
    %c0_3 = arith.constant 0 : index
    %c0_4 = arith.constant 0 : index
    %c0_5 = arith.constant 0 : index
    %10 = vector.load %arg4[%c0_3, %c0_4, %c0_5] : memref<3x4x1xf32, #tpu.memory_space<vmem>>, vector<1x4x1xf32>
    %11 = vector.shape_cast %10 : vector<1x4x1xf32> to vector<4x1xf32>
    %12 = vector.broadcast %11 : vector<4x1xf32> to vector<4x2048xf32>
    %13 = vector.broadcast %9 : vector<1x2048xf32> to vector<4x2048xf32>
    %14 = arith.mulf %12, %13 : vector<4x2048xf32>
    %c1 = arith.constant 1 : index
    %c0_6 = arith.constant 0 : index
    %c0_7 = arith.constant 0 : index
    %15 = vector.load %arg4[%c1, %c0_6, %c0_7] : memref<3x4x1xf32, #tpu.memory_space<vmem>>, vector<1x4x1xf32>
    %16 = vector.shape_cast %15 : vector<1x4x1xf32> to vector<4x1xf32>
    %17 = vector.broadcast %16 : vector<4x1xf32> to vector<4x2048xf32>
    %18 = vector.broadcast %1 : vector<1x2048xf32> to vector<4x2048xf32>
    %19 = arith.mulf %17, %18 : vector<4x2048xf32>
    %20 = arith.addf %14, %19 : vector<4x2048xf32>
    %c2047_i32 = arith.constant 2047 : i32
    %21 = tpu.dynamic_rotate %1 by %c2047_i32 dim 1 : vector<1x2048xf32>, i32 -> vector<1x2048xf32>
    %c255_i32_8 = arith.constant 255 : i32
    %22 = vector.broadcast %c255_i32_8 : i32 to vector<1x2048xi32>
    %23 = arith.cmpi slt, %4, %22 : vector<1x2048xi32>
    %cst_9 = arith.constant 0.000000e+00 : f32
    %24 = vector.broadcast %cst_9 : f32 to vector<1x2048xf32>
    %25 = arith.select %23, %21, %24 : vector<1x2048xi1>, vector<1x2048xf32>
    %c2 = arith.constant 2 : index
    %c0_10 = arith.constant 0 : index
    %c0_11 = arith.constant 0 : index
    %26 = vector.load %arg4[%c2, %c0_10, %c0_11] : memref<3x4x1xf32, #tpu.memory_space<vmem>>, vector<1x4x1xf32>
    %27 = vector.shape_cast %26 : vector<1x4x1xf32> to vector<4x1xf32>
    %28 = vector.broadcast %27 : vector<4x1xf32> to vector<4x2048xf32>
    %29 = vector.broadcast %25 : vector<1x2048xf32> to vector<4x2048xf32>
    %30 = arith.mulf %28, %29 : vector<4x2048xf32>
    %31 = arith.addf %20, %30 : vector<4x2048xf32>
    %c0_12 = arith.constant 0 : index
    %c0_13 = arith.constant 0 : index
    %32 = vector.load %arg5[%c0_12, %c0_13] : memref<4x1xf32, #tpu.memory_space<vmem>>, vector<4x1xf32>
    %33 = vector.broadcast %32 : vector<4x1xf32> to vector<4x2048xf32>
    %34 = arith.addf %31, %33 : vector<4x2048xf32>
    %cst_14 = arith.constant 0.000000e+00 : f32
    %35 = vector.broadcast %cst_14 : f32 to vector<4x2048xf32>
    %36 = arith.maximumf %34, %35 : vector<4x2048xf32>
    %37 = vector.extract_strided_slice %36 {offsets = [0, 0], sizes = [4, 256], strides = [1, 1]} : vector<4x2048xf32> to vector<4x256xf32>
    %c0_15 = arith.constant 0 : index
    %c0_16 = arith.constant 0 : index
    %38 = vector.load %arg2[%c0_15, %c0_16] : memref<256x128xf32, #tpu.memory_space<vmem>>, vector<256x128xf32>
    %cst_17 = arith.constant dense<0.000000e+00> : vector<4x128xf32>
    %39 = tpu.matmul %37, %38, %cst_17 {dimension_numbers = #tpu.dot_dimension_numbers<[1], [0], [0], [1], [0, 0, 1, 1], [], []>} : vector<4x256xf32>, vector<256x128xf32>, vector<4x128xf32> -> vector<4x128xf32>
    %40 = vector.extract_strided_slice %36 {offsets = [0, 256], sizes = [4, 256], strides = [1, 1]} : vector<4x2048xf32> to vector<4x256xf32>
    %c0_18 = arith.constant 0 : index
    %c0_19 = arith.constant 0 : index
    %41 = vector.load %arg2[%c0_18, %c0_19] : memref<256x128xf32, #tpu.memory_space<vmem>>, vector<256x128xf32>
    %cst_20 = arith.constant dense<0.000000e+00> : vector<4x128xf32>
    %42 = tpu.matmul %40, %41, %cst_20 {dimension_numbers = #tpu.dot_dimension_numbers<[1], [0], [0], [1], [0, 0, 1, 1], [], []>} : vector<4x256xf32>, vector<256x128xf32>, vector<4x128xf32> -> vector<4x128xf32>
    %43 = vector.extract_strided_slice %36 {offsets = [0, 512], sizes = [4, 256], strides = [1, 1]} : vector<4x2048xf32> to vector<4x256xf32>
    %c0_21 = arith.constant 0 : index
    %c0_22 = arith.constant 0 : index
    %44 = vector.load %arg2[%c0_21, %c0_22] : memref<256x128xf32, #tpu.memory_space<vmem>>, vector<256x128xf32>
    %cst_23 = arith.constant dense<0.000000e+00> : vector<4x128xf32>
    %45 = tpu.matmul %43, %44, %cst_23 {dimension_numbers = #tpu.dot_dimension_numbers<[1], [0], [0], [1], [0, 0, 1, 1], [], []>} : vector<4x256xf32>, vector<256x128xf32>, vector<4x128xf32> -> vector<4x128xf32>
    %46 = vector.extract_strided_slice %36 {offsets = [0, 768], sizes = [4, 256], strides = [1, 1]} : vector<4x2048xf32> to vector<4x256xf32>
    %c0_24 = arith.constant 0 : index
    %c0_25 = arith.constant 0 : index
    %47 = vector.load %arg2[%c0_24, %c0_25] : memref<256x128xf32, #tpu.memory_space<vmem>>, vector<256x128xf32>
    %cst_26 = arith.constant dense<0.000000e+00> : vector<4x128xf32>
    %48 = tpu.matmul %46, %47, %cst_26 {dimension_numbers = #tpu.dot_dimension_numbers<[1], [0], [0], [1], [0, 0, 1, 1], [], []>} : vector<4x256xf32>, vector<256x128xf32>, vector<4x128xf32> -> vector<4x128xf32>
    %49 = vector.extract_strided_slice %36 {offsets = [0, 1024], sizes = [4, 256], strides = [1, 1]} : vector<4x2048xf32> to vector<4x256xf32>
    %c0_27 = arith.constant 0 : index
    %c0_28 = arith.constant 0 : index
    %50 = vector.load %arg2[%c0_27, %c0_28] : memref<256x128xf32, #tpu.memory_space<vmem>>, vector<256x128xf32>
    %cst_29 = arith.constant dense<0.000000e+00> : vector<4x128xf32>
    %51 = tpu.matmul %49, %50, %cst_29 {dimension_numbers = #tpu.dot_dimension_numbers<[1], [0], [0], [1], [0, 0, 1, 1], [], []>} : vector<4x256xf32>, vector<256x128xf32>, vector<4x128xf32> -> vector<4x128xf32>
    %52 = vector.extract_strided_slice %36 {offsets = [0, 1280], sizes = [4, 256], strides = [1, 1]} : vector<4x2048xf32> to vector<4x256xf32>
    %c0_30 = arith.constant 0 : index
    %c0_31 = arith.constant 0 : index
    %53 = vector.load %arg2[%c0_30, %c0_31] : memref<256x128xf32, #tpu.memory_space<vmem>>, vector<256x128xf32>
    %cst_32 = arith.constant dense<0.000000e+00> : vector<4x128xf32>
    %54 = tpu.matmul %52, %53, %cst_32 {dimension_numbers = #tpu.dot_dimension_numbers<[1], [0], [0], [1], [0, 0, 1, 1], [], []>} : vector<4x256xf32>, vector<256x128xf32>, vector<4x128xf32> -> vector<4x128xf32>
    %55 = vector.extract_strided_slice %36 {offsets = [0, 1536], sizes = [4, 256], strides = [1, 1]} : vector<4x2048xf32> to vector<4x256xf32>
    %c0_33 = arith.constant 0 : index
    %c0_34 = arith.constant 0 : index
    %56 = vector.load %arg2[%c0_33, %c0_34] : memref<256x128xf32, #tpu.memory_space<vmem>>, vector<256x128xf32>
    %cst_35 = arith.constant dense<0.000000e+00> : vector<4x128xf32>
    %57 = tpu.matmul %55, %56, %cst_35 {dimension_numbers = #tpu.dot_dimension_numbers<[1], [0], [0], [1], [0, 0, 1, 1], [], []>} : vector<4x256xf32>, vector<256x128xf32>, vector<4x128xf32> -> vector<4x128xf32>
    %58 = vector.extract_strided_slice %36 {offsets = [0, 1792], sizes = [4, 256], strides = [1, 1]} : vector<4x2048xf32> to vector<4x256xf32>
    %c0_36 = arith.constant 0 : index
    %c0_37 = arith.constant 0 : index
    %59 = vector.load %arg2[%c0_36, %c0_37] : memref<256x128xf32, #tpu.memory_space<vmem>>, vector<256x128xf32>
    %cst_38 = arith.constant dense<0.000000e+00> : vector<4x128xf32>
    %60 = tpu.matmul %58, %59, %cst_38 {dimension_numbers = #tpu.dot_dimension_numbers<[1], [0], [0], [1], [0, 0, 1, 1], [], []>} : vector<4x256xf32>, vector<256x128xf32>, vector<4x128xf32> -> vector<4x128xf32>
    %61 = tpu.concatenate %39, %42, %45, %48, %51, %54, %57, %60 in 1 : vector<4x128xf32>, vector<4x128xf32>, vector<4x128xf32>, vector<4x128xf32>, vector<4x128xf32>, vector<4x128xf32>, vector<4x128xf32>, vector<4x128xf32> -> vector<4x1024xf32>
    %62 = tpu.iota {dimensions = array<i32: 1>} : vector<1x1024xi32>
    %c127_i32 = arith.constant 127 : i32
    %63 = vector.broadcast %c127_i32 : i32 to vector<1x1024xi32>
    %64 = arith.andi %62, %63 : vector<1x1024xi32>
    %c1_i32_39 = arith.constant 1 : i32
    %65 = tpu.dynamic_rotate %61 by %c1_i32_39 dim 1 : vector<4x1024xf32>, i32 -> vector<4x1024xf32>
    %c1_i32_40 = arith.constant 1 : i32
    %66 = vector.broadcast %c1_i32_40 : i32 to vector<1x1024xi32>
    %67 = arith.cmpi sge, %64, %66 : vector<1x1024xi32>
    %cst_41 = arith.constant 0.000000e+00 : f32
    %68 = vector.shape_cast %67 : vector<1x1024xi1> to vector<1x1024xi1>
    %69 = vector.broadcast %68 : vector<1x1024xi1> to vector<4x1024xi1>
    %70 = vector.broadcast %cst_41 : f32 to vector<4x1024xf32>
    %71 = arith.select %69, %65, %70 : vector<4x1024xi1>, vector<4x1024xf32>
    %c0_42 = arith.constant 0 : index
    %c0_43 = arith.constant 0 : index
    %c0_44 = arith.constant 0 : index
    %72 = vector.load %arg6[%c0_42, %c0_43, %c0_44] : memref<3x8x4xf32, #tpu.memory_space<vmem>>, vector<1x8x4xf32>
    %73 = vector.shape_cast %72 : vector<1x8x4xf32> to vector<8x4xf32>
    %cst_45 = arith.constant dense<0.000000e+00> : vector<8x1024xf32>
    %74 = tpu.matmul %73, %71, %cst_45 {dimension_numbers = #tpu.dot_dimension_numbers<[1], [0], [0], [1], [0, 0, 1, 1], [], []>} : vector<8x4xf32>, vector<4x1024xf32>, vector<8x1024xf32> -> vector<8x1024xf32>
    %c1_46 = arith.constant 1 : index
    %c0_47 = arith.constant 0 : index
    %c0_48 = arith.constant 0 : index
    %75 = vector.load %arg6[%c1_46, %c0_47, %c0_48] : memref<3x8x4xf32, #tpu.memory_space<vmem>>, vector<1x8x4xf32>
    %76 = vector.shape_cast %75 : vector<1x8x4xf32> to vector<8x4xf32>
    %cst_49 = arith.constant dense<0.000000e+00> : vector<8x1024xf32>
    %77 = tpu.matmul %76, %61, %cst_49 {dimension_numbers = #tpu.dot_dimension_numbers<[1], [0], [0], [1], [0, 0, 1, 1], [], []>} : vector<8x4xf32>, vector<4x1024xf32>, vector<8x1024xf32> -> vector<8x1024xf32>
    %78 = arith.addf %74, %77 : vector<8x1024xf32>
    %c1023_i32 = arith.constant 1023 : i32
    %79 = tpu.dynamic_rotate %61 by %c1023_i32 dim 1 : vector<4x1024xf32>, i32 -> vector<4x1024xf32>
    %c127_i32_50 = arith.constant 127 : i32
    %80 = vector.broadcast %c127_i32_50 : i32 to vector<1x1024xi32>
    %81 = arith.cmpi slt, %64, %80 : vector<1x1024xi32>
    %cst_51 = arith.constant 0.000000e+00 : f32
    %82 = vector.shape_cast %81 : vector<1x1024xi1> to vector<1x1024xi1>
    %83 = vector.broadcast %82 : vector<1x1024xi1> to vector<4x1024xi1>
    %84 = vector.broadcast %cst_51 : f32 to vector<4x1024xf32>
    %85 = arith.select %83, %79, %84 : vector<4x1024xi1>, vector<4x1024xf32>
    %c2_52 = arith.constant 2 : index
    %c0_53 = arith.constant 0 : index
    %c0_54 = arith.constant 0 : index
    %86 = vector.load %arg6[%c2_52, %c0_53, %c0_54] : memref<3x8x4xf32, #tpu.memory_space<vmem>>, vector<1x8x4xf32>
    %87 = vector.shape_cast %86 : vector<1x8x4xf32> to vector<8x4xf32>
    %cst_55 = arith.constant dense<0.000000e+00> : vector<8x1024xf32>
    %88 = tpu.matmul %87, %85, %cst_55 {dimension_numbers = #tpu.dot_dimension_numbers<[1], [0], [0], [1], [0, 0, 1, 1], [], []>} : vector<8x4xf32>, vector<4x1024xf32>, vector<8x1024xf32> -> vector<8x1024xf32>
    %89 = arith.addf %78, %88 : vector<8x1024xf32>
    %c0_56 = arith.constant 0 : index
    %c0_57 = arith.constant 0 : index
    %90 = vector.load %arg7[%c0_56, %c0_57] : memref<8x1xf32, #tpu.memory_space<vmem>>, vector<8x1xf32>
    %91 = vector.broadcast %90 : vector<8x1xf32> to vector<8x1024xf32>
    %92 = arith.addf %89, %91 : vector<8x1024xf32>
    %cst_58 = arith.constant 0.000000e+00 : f32
    %93 = vector.broadcast %cst_58 : f32 to vector<8x1024xf32>
    %94 = arith.maximumf %92, %93 : vector<8x1024xf32>
    %95 = vector.extract_strided_slice %94 {offsets = [0, 0], sizes = [8, 256], strides = [1, 1]} : vector<8x1024xf32> to vector<8x256xf32>
    %c0_59 = arith.constant 0 : index
    %c0_60 = arith.constant 0 : index
    %96 = vector.load %arg2[%c0_59, %c0_60] : memref<256x128xf32, #tpu.memory_space<vmem>>, vector<256x128xf32>
    %cst_61 = arith.constant dense<0.000000e+00> : vector<8x128xf32>
    %97 = tpu.matmul %95, %96, %cst_61 {dimension_numbers = #tpu.dot_dimension_numbers<[1], [0], [0], [1], [0, 0, 1, 1], [], []>} : vector<8x256xf32>, vector<256x128xf32>, vector<8x128xf32> -> vector<8x128xf32>
    %98 = vector.extract_strided_slice %94 {offsets = [0, 256], sizes = [8, 256], strides = [1, 1]} : vector<8x1024xf32> to vector<8x256xf32>
    %c0_62 = arith.constant 0 : index
    %c0_63 = arith.constant 0 : index
    %99 = vector.load %arg2[%c0_62, %c0_63] : memref<256x128xf32, #tpu.memory_space<vmem>>, vector<256x128xf32>
    %cst_64 = arith.constant dense<0.000000e+00> : vector<8x128xf32>
    %100 = tpu.matmul %98, %99, %cst_64 {dimension_numbers = #tpu.dot_dimension_numbers<[1], [0], [0], [1], [0, 0, 1, 1], [], []>} : vector<8x256xf32>, vector<256x128xf32>, vector<8x128xf32> -> vector<8x128xf32>
    %101 = vector.extract_strided_slice %94 {offsets = [0, 512], sizes = [8, 256], strides = [1, 1]} : vector<8x1024xf32> to vector<8x256xf32>
    %c0_65 = arith.constant 0 : index
    %c0_66 = arith.constant 0 : index
    %102 = vector.load %arg2[%c0_65, %c0_66] : memref<256x128xf32, #tpu.memory_space<vmem>>, vector<256x128xf32>
    %cst_67 = arith.constant dense<0.000000e+00> : vector<8x128xf32>
    %103 = tpu.matmul %101, %102, %cst_67 {dimension_numbers = #tpu.dot_dimension_numbers<[1], [0], [0], [1], [0, 0, 1, 1], [], []>} : vector<8x256xf32>, vector<256x128xf32>, vector<8x128xf32> -> vector<8x128xf32>
    %104 = vector.extract_strided_slice %94 {offsets = [0, 768], sizes = [8, 256], strides = [1, 1]} : vector<8x1024xf32> to vector<8x256xf32>
    %c0_68 = arith.constant 0 : index
    %c0_69 = arith.constant 0 : index
    %105 = vector.load %arg2[%c0_68, %c0_69] : memref<256x128xf32, #tpu.memory_space<vmem>>, vector<256x128xf32>
    %cst_70 = arith.constant dense<0.000000e+00> : vector<8x128xf32>
    %106 = tpu.matmul %104, %105, %cst_70 {dimension_numbers = #tpu.dot_dimension_numbers<[1], [0], [0], [1], [0, 0, 1, 1], [], []>} : vector<8x256xf32>, vector<256x128xf32>, vector<8x128xf32> -> vector<8x128xf32>
    %107 = tpu.concatenate %97, %100, %103, %106 in 1 : vector<8x128xf32>, vector<8x128xf32>, vector<8x128xf32>, vector<8x128xf32> -> vector<8x512xf32>
    %108 = tpu.iota {dimensions = array<i32: 1>} : vector<1x512xi32>
    %c63_i32 = arith.constant 63 : i32
    %109 = vector.broadcast %c63_i32 : i32 to vector<1x512xi32>
    %110 = arith.andi %108, %109 : vector<1x512xi32>
    %c1_i32_71 = arith.constant 1 : i32
    %111 = tpu.dynamic_rotate %107 by %c1_i32_71 dim 1 : vector<8x512xf32>, i32 -> vector<8x512xf32>
    %c1_i32_72 = arith.constant 1 : i32
    %112 = vector.broadcast %c1_i32_72 : i32 to vector<1x512xi32>
    %113 = arith.cmpi sge, %110, %112 : vector<1x512xi32>
    %cst_73 = arith.constant 0.000000e+00 : f32
    %114 = vector.shape_cast %113 : vector<1x512xi1> to vector<1x512xi1>
    %115 = vector.broadcast %114 : vector<1x512xi1> to vector<8x512xi1>
    %116 = vector.broadcast %cst_73 : f32 to vector<8x512xf32>
    %117 = arith.select %115, %111, %116 : vector<8x512xi1>, vector<8x512xf32>
    %c0_74 = arith.constant 0 : index
    %c0_75 = arith.constant 0 : index
    %c0_76 = arith.constant 0 : index
    %118 = vector.load %arg8[%c0_74, %c0_75, %c0_76] : memref<3x16x8xf32, #tpu.memory_space<vmem>>, vector<1x16x8xf32>
    %119 = vector.shape_cast %118 : vector<1x16x8xf32> to vector<16x8xf32>
    %cst_77 = arith.constant dense<0.000000e+00> : vector<16x512xf32>
    %120 = tpu.matmul %119, %117, %cst_77 {dimension_numbers = #tpu.dot_dimension_numbers<[1], [0], [0], [1], [0, 0, 1, 1], [], []>} : vector<16x8xf32>, vector<8x512xf32>, vector<16x512xf32> -> vector<16x512xf32>
    %c1_78 = arith.constant 1 : index
    %c0_79 = arith.constant 0 : index
    %c0_80 = arith.constant 0 : index
    %121 = vector.load %arg8[%c1_78, %c0_79, %c0_80] : memref<3x16x8xf32, #tpu.memory_space<vmem>>, vector<1x16x8xf32>
    %122 = vector.shape_cast %121 : vector<1x16x8xf32> to vector<16x8xf32>
    %cst_81 = arith.constant dense<0.000000e+00> : vector<16x512xf32>
    %123 = tpu.matmul %122, %107, %cst_81 {dimension_numbers = #tpu.dot_dimension_numbers<[1], [0], [0], [1], [0, 0, 1, 1], [], []>} : vector<16x8xf32>, vector<8x512xf32>, vector<16x512xf32> -> vector<16x512xf32>
    %124 = arith.addf %120, %123 : vector<16x512xf32>
    %c511_i32 = arith.constant 511 : i32
    %125 = tpu.dynamic_rotate %107 by %c511_i32 dim 1 : vector<8x512xf32>, i32 -> vector<8x512xf32>
    %c63_i32_82 = arith.constant 63 : i32
    %126 = vector.broadcast %c63_i32_82 : i32 to vector<1x512xi32>
    %127 = arith.cmpi slt, %110, %126 : vector<1x512xi32>
    %cst_83 = arith.constant 0.000000e+00 : f32
    %128 = vector.shape_cast %127 : vector<1x512xi1> to vector<1x512xi1>
    %129 = vector.broadcast %128 : vector<1x512xi1> to vector<8x512xi1>
    %130 = vector.broadcast %cst_83 : f32 to vector<8x512xf32>
    %131 = arith.select %129, %125, %130 : vector<8x512xi1>, vector<8x512xf32>
    %c2_84 = arith.constant 2 : index
    %c0_85 = arith.constant 0 : index
    %c0_86 = arith.constant 0 : index
    %132 = vector.load %arg8[%c2_84, %c0_85, %c0_86] : memref<3x16x8xf32, #tpu.memory_space<vmem>>, vector<1x16x8xf32>
    %133 = vector.shape_cast %132 : vector<1x16x8xf32> to vector<16x8xf32>
    %cst_87 = arith.constant dense<0.000000e+00> : vector<16x512xf32>
    %134 = tpu.matmul %133, %131, %cst_87 {dimension_numbers = #tpu.dot_dimension_numbers<[1], [0], [0], [1], [0, 0, 1, 1], [], []>} : vector<16x8xf32>, vector<8x512xf32>, vector<16x512xf32> -> vector<16x512xf32>
    %135 = arith.addf %124, %134 : vector<16x512xf32>
    %c0_88 = arith.constant 0 : index
    %c0_89 = arith.constant 0 : index
    %136 = vector.load %arg9[%c0_88, %c0_89] : memref<16x1xf32, #tpu.memory_space<vmem>>, vector<16x1xf32>
    %137 = vector.broadcast %136 : vector<16x1xf32> to vector<16x512xf32>
    %138 = arith.addf %135, %137 : vector<16x512xf32>
    %cst_90 = arith.constant 0.000000e+00 : f32
    %139 = vector.broadcast %cst_90 : f32 to vector<16x512xf32>
    %140 = arith.maximumf %138, %139 : vector<16x512xf32>
    %141 = vector.extract_strided_slice %140 {offsets = [0, 0], sizes = [16, 256], strides = [1, 1]} : vector<16x512xf32> to vector<16x256xf32>
    %c0_91 = arith.constant 0 : index
    %c0_92 = arith.constant 0 : index
    %142 = vector.load %arg2[%c0_91, %c0_92] : memref<256x128xf32, #tpu.memory_space<vmem>>, vector<256x128xf32>
    %cst_93 = arith.constant dense<0.000000e+00> : vector<16x128xf32>
    %143 = tpu.matmul %141, %142, %cst_93 {dimension_numbers = #tpu.dot_dimension_numbers<[1], [0], [0], [1], [0, 0, 1, 1], [], []>} : vector<16x256xf32>, vector<256x128xf32>, vector<16x128xf32> -> vector<16x128xf32>
    %144 = vector.extract_strided_slice %140 {offsets = [0, 256], sizes = [16, 256], strides = [1, 1]} : vector<16x512xf32> to vector<16x256xf32>
    %c0_94 = arith.constant 0 : index
    %c0_95 = arith.constant 0 : index
    %145 = vector.load %arg2[%c0_94, %c0_95] : memref<256x128xf32, #tpu.memory_space<vmem>>, vector<256x128xf32>
    %cst_96 = arith.constant dense<0.000000e+00> : vector<16x128xf32>
    %146 = tpu.matmul %144, %145, %cst_96 {dimension_numbers = #tpu.dot_dimension_numbers<[1], [0], [0], [1], [0, 0, 1, 1], [], []>} : vector<16x256xf32>, vector<256x128xf32>, vector<16x128xf32> -> vector<16x128xf32>
    %147 = tpu.concatenate %143, %146 in 1 : vector<16x128xf32>, vector<16x128xf32> -> vector<16x256xf32>
    %148 = tpu.iota {dimensions = array<i32: 1>} : vector<1x256xi32>
    %c31_i32 = arith.constant 31 : i32
    %149 = vector.broadcast %c31_i32 : i32 to vector<1x256xi32>
    %150 = arith.andi %148, %149 : vector<1x256xi32>
    %c1_i32_97 = arith.constant 1 : i32
    %151 = tpu.dynamic_rotate %147 by %c1_i32_97 dim 1 : vector<16x256xf32>, i32 -> vector<16x256xf32>
    %c1_i32_98 = arith.constant 1 : i32
    %152 = vector.broadcast %c1_i32_98 : i32 to vector<1x256xi32>
    %153 = arith.cmpi sge, %150, %152 : vector<1x256xi32>
    %cst_99 = arith.constant 0.000000e+00 : f32
    %154 = vector.shape_cast %153 : vector<1x256xi1> to vector<1x256xi1>
    %155 = vector.broadcast %154 : vector<1x256xi1> to vector<16x256xi1>
    %156 = vector.broadcast %cst_99 : f32 to vector<16x256xf32>
    %157 = arith.select %155, %151, %156 : vector<16x256xi1>, vector<16x256xf32>
    %c0_100 = arith.constant 0 : index
    %c0_101 = arith.constant 0 : index
    %c0_102 = arith.constant 0 : index
    %158 = vector.load %arg10[%c0_100, %c0_101, %c0_102] : memref<3x32x16xf32, #tpu.memory_space<vmem>>, vector<1x32x16xf32>
    %159 = vector.shape_cast %158 : vector<1x32x16xf32> to vector<32x16xf32>
    %cst_103 = arith.constant dense<0.000000e+00> : vector<32x256xf32>
    %160 = tpu.matmul %159, %157, %cst_103 {dimension_numbers = #tpu.dot_dimension_numbers<[1], [0], [0], [1], [0, 0, 1, 1], [], []>} : vector<32x16xf32>, vector<16x256xf32>, vector<32x256xf32> -> vector<32x256xf32>
    %c1_104 = arith.constant 1 : index
    %c0_105 = arith.constant 0 : index
    %c0_106 = arith.constant 0 : index
    %161 = vector.load %arg10[%c1_104, %c0_105, %c0_106] : memref<3x32x16xf32, #tpu.memory_space<vmem>>, vector<1x32x16xf32>
    %162 = vector.shape_cast %161 : vector<1x32x16xf32> to vector<32x16xf32>
    %cst_107 = arith.constant dense<0.000000e+00> : vector<32x256xf32>
    %163 = tpu.matmul %162, %147, %cst_107 {dimension_numbers = #tpu.dot_dimension_numbers<[1], [0], [0], [1], [0, 0, 1, 1], [], []>} : vector<32x16xf32>, vector<16x256xf32>, vector<32x256xf32> -> vector<32x256xf32>
    %164 = arith.addf %160, %163 : vector<32x256xf32>
    %c255_i32_108 = arith.constant 255 : i32
    %165 = tpu.dynamic_rotate %147 by %c255_i32_108 dim 1 : vector<16x256xf32>, i32 -> vector<16x256xf32>
    %c31_i32_109 = arith.constant 31 : i32
    %166 = vector.broadcast %c31_i32_109 : i32 to vector<1x256xi32>
    %167 = arith.cmpi slt, %150, %166 : vector<1x256xi32>
    %cst_110 = arith.constant 0.000000e+00 : f32
    %168 = vector.shape_cast %167 : vector<1x256xi1> to vector<1x256xi1>
    %169 = vector.broadcast %168 : vector<1x256xi1> to vector<16x256xi1>
    %170 = vector.broadcast %cst_110 : f32 to vector<16x256xf32>
    %171 = arith.select %169, %165, %170 : vector<16x256xi1>, vector<16x256xf32>
    %c2_111 = arith.constant 2 : index
    %c0_112 = arith.constant 0 : index
    %c0_113 = arith.constant 0 : index
    %172 = vector.load %arg10[%c2_111, %c0_112, %c0_113] : memref<3x32x16xf32, #tpu.memory_space<vmem>>, vector<1x32x16xf32>
    %173 = vector.shape_cast %172 : vector<1x32x16xf32> to vector<32x16xf32>
    %cst_114 = arith.constant dense<0.000000e+00> : vector<32x256xf32>
    %174 = tpu.matmul %173, %171, %cst_114 {dimension_numbers = #tpu.dot_dimension_numbers<[1], [0], [0], [1], [0, 0, 1, 1], [], []>} : vector<32x16xf32>, vector<16x256xf32>, vector<32x256xf32> -> vector<32x256xf32>
    %175 = arith.addf %164, %174 : vector<32x256xf32>
    %c0_115 = arith.constant 0 : index
    %c0_116 = arith.constant 0 : index
    %176 = vector.load %arg11[%c0_115, %c0_116] : memref<32x1xf32, #tpu.memory_space<vmem>>, vector<32x1xf32>
    %177 = vector.broadcast %176 : vector<32x1xf32> to vector<32x256xf32>
    %178 = arith.addf %175, %177 : vector<32x256xf32>
    %cst_117 = arith.constant 0.000000e+00 : f32
    %179 = vector.broadcast %cst_117 : f32 to vector<32x256xf32>
    %180 = arith.maximumf %178, %179 : vector<32x256xf32>
    %c0_118 = arith.constant 0 : index
    %c0_119 = arith.constant 0 : index
    %181 = vector.load %arg2[%c0_118, %c0_119] : memref<256x128xf32, #tpu.memory_space<vmem>>, vector<256x128xf32>
    %cst_120 = arith.constant dense<0.000000e+00> : vector<32x128xf32>
    %182 = tpu.matmul %180, %181, %cst_120 {dimension_numbers = #tpu.dot_dimension_numbers<[1], [0], [0], [1], [0, 0, 1, 1], [], []>} : vector<32x256xf32>, vector<256x128xf32>, vector<32x128xf32> -> vector<32x128xf32>
    %183 = tpu.iota {dimensions = array<i32: 1>} : vector<1x128xi32>
    %c15_i32 = arith.constant 15 : i32
    %184 = vector.broadcast %c15_i32 : i32 to vector<1x128xi32>
    %185 = arith.andi %183, %184 : vector<1x128xi32>
    %c1_i32_121 = arith.constant 1 : i32
    %186 = tpu.dynamic_rotate %182 by %c1_i32_121 dim 1 : vector<32x128xf32>, i32 -> vector<32x128xf32>
    %c1_i32_122 = arith.constant 1 : i32
    %187 = vector.broadcast %c1_i32_122 : i32 to vector<1x128xi32>
    %188 = arith.cmpi sge, %185, %187 : vector<1x128xi32>
    %cst_123 = arith.constant 0.000000e+00 : f32
    %189 = vector.shape_cast %188 : vector<1x128xi1> to vector<1x128xi1>
    %190 = vector.broadcast %189 : vector<1x128xi1> to vector<32x128xi1>
    %191 = vector.broadcast %cst_123 : f32 to vector<32x128xf32>
    %192 = arith.select %190, %186, %191 : vector<32x128xi1>, vector<32x128xf32>
    %c0_124 = arith.constant 0 : index
    %c0_125 = arith.constant 0 : index
    %c0_126 = arith.constant 0 : index
    %193 = vector.load %arg12[%c0_124, %c0_125, %c0_126] : memref<3x64x32xf32, #tpu.memory_space<vmem>>, vector<1x64x32xf32>
    %194 = vector.shape_cast %193 : vector<1x64x32xf32> to vector<64x32xf32>
    %cst_127 = arith.constant dense<0.000000e+00> : vector<64x128xf32>
    %195 = tpu.matmul %194, %192, %cst_127 {dimension_numbers = #tpu.dot_dimension_numbers<[1], [0], [0], [1], [0, 0, 1, 1], [], []>} : vector<64x32xf32>, vector<32x128xf32>, vector<64x128xf32> -> vector<64x128xf32>
    %c1_128 = arith.constant 1 : index
    %c0_129 = arith.constant 0 : index
    %c0_130 = arith.constant 0 : index
    %196 = vector.load %arg12[%c1_128, %c0_129, %c0_130] : memref<3x64x32xf32, #tpu.memory_space<vmem>>, vector<1x64x32xf32>
    %197 = vector.shape_cast %196 : vector<1x64x32xf32> to vector<64x32xf32>
    %cst_131 = arith.constant dense<0.000000e+00> : vector<64x128xf32>
    %198 = tpu.matmul %197, %182, %cst_131 {dimension_numbers = #tpu.dot_dimension_numbers<[1], [0], [0], [1], [0, 0, 1, 1], [], []>} : vector<64x32xf32>, vector<32x128xf32>, vector<64x128xf32> -> vector<64x128xf32>
    %199 = arith.addf %195, %198 : vector<64x128xf32>
    %c127_i32_132 = arith.constant 127 : i32
    %200 = tpu.dynamic_rotate %182 by %c127_i32_132 dim 1 : vector<32x128xf32>, i32 -> vector<32x128xf32>
    %c15_i32_133 = arith.constant 15 : i32
    %201 = vector.broadcast %c15_i32_133 : i32 to vector<1x128xi32>
    %202 = arith.cmpi slt, %185, %201 : vector<1x128xi32>
    %cst_134 = arith.constant 0.000000e+00 : f32
    %203 = vector.shape_cast %202 : vector<1x128xi1> to vector<1x128xi1>
    %204 = vector.broadcast %203 : vector<1x128xi1> to vector<32x128xi1>
    %205 = vector.broadcast %cst_134 : f32 to vector<32x128xf32>
    %206 = arith.select %204, %200, %205 : vector<32x128xi1>, vector<32x128xf32>
    %c2_135 = arith.constant 2 : index
    %c0_136 = arith.constant 0 : index
    %c0_137 = arith.constant 0 : index
    %207 = vector.load %arg12[%c2_135, %c0_136, %c0_137] : memref<3x64x32xf32, #tpu.memory_space<vmem>>, vector<1x64x32xf32>
    %208 = vector.shape_cast %207 : vector<1x64x32xf32> to vector<64x32xf32>
    %cst_138 = arith.constant dense<0.000000e+00> : vector<64x128xf32>
    %209 = tpu.matmul %208, %206, %cst_138 {dimension_numbers = #tpu.dot_dimension_numbers<[1], [0], [0], [1], [0, 0, 1, 1], [], []>} : vector<64x32xf32>, vector<32x128xf32>, vector<64x128xf32> -> vector<64x128xf32>
    %210 = arith.addf %199, %209 : vector<64x128xf32>
    %c0_139 = arith.constant 0 : index
    %c0_140 = arith.constant 0 : index
    %211 = vector.load %arg13[%c0_139, %c0_140] : memref<64x1xf32, #tpu.memory_space<vmem>>, vector<64x1xf32>
    %212 = vector.broadcast %211 : vector<64x1xf32> to vector<64x128xf32>
    %213 = arith.addf %210, %212 : vector<64x128xf32>
    %cst_141 = arith.constant 0.000000e+00 : f32
    %214 = vector.broadcast %cst_141 : f32 to vector<64x128xf32>
    %215 = arith.maximumf %213, %214 : vector<64x128xf32>
    %c0_142 = arith.constant 0 : index
    %c0_143 = arith.constant 0 : index
    %216 = vector.load %arg2[%c0_142, %c0_143] : memref<256x128xf32, #tpu.memory_space<vmem>>, vector<128x64xf32>
    %cst_144 = arith.constant dense<0.000000e+00> : vector<64x64xf32>
    %217 = tpu.matmul %215, %216, %cst_144 {dimension_numbers = #tpu.dot_dimension_numbers<[1], [0], [0], [1], [0, 0, 1, 1], [], []>} : vector<64x128xf32>, vector<128x64xf32>, vector<64x64xf32> -> vector<64x64xf32>
    %218 = tpu.iota {dimensions = array<i32: 1>} : vector<1x64xi32>
    %c7_i32 = arith.constant 7 : i32
    %219 = vector.broadcast %c7_i32 : i32 to vector<1x64xi32>
    %220 = arith.andi %218, %219 : vector<1x64xi32>
    %c1_i32_145 = arith.constant 1 : i32
    %221 = tpu.dynamic_rotate %217 by %c1_i32_145 dim 1 : vector<64x64xf32>, i32 -> vector<64x64xf32>
    %c1_i32_146 = arith.constant 1 : i32
    %222 = vector.broadcast %c1_i32_146 : i32 to vector<1x64xi32>
    %223 = arith.cmpi sge, %220, %222 : vector<1x64xi32>
    %cst_147 = arith.constant 0.000000e+00 : f32
    %224 = vector.shape_cast %223 : vector<1x64xi1> to vector<1x64xi1>
    %225 = vector.broadcast %224 : vector<1x64xi1> to vector<64x64xi1>
    %226 = vector.broadcast %cst_147 : f32 to vector<64x64xf32>
    %227 = arith.select %225, %221, %226 : vector<64x64xi1>, vector<64x64xf32>
    %c0_148 = arith.constant 0 : index
    %c0_149 = arith.constant 0 : index
    %c0_150 = arith.constant 0 : index
    %228 = vector.load %arg14[%c0_148, %c0_149, %c0_150] : memref<3x128x64xf32, #tpu.memory_space<vmem>>, vector<1x128x64xf32>
    %229 = vector.shape_cast %228 : vector<1x128x64xf32> to vector<128x64xf32>
    %cst_151 = arith.constant dense<0.000000e+00> : vector<128x64xf32>
    %230 = tpu.matmul %229, %227, %cst_151 {dimension_numbers = #tpu.dot_dimension_numbers<[1], [0], [0], [1], [0, 0, 1, 1], [], []>} : vector<128x64xf32>, vector<64x64xf32>, vector<128x64xf32> -> vector<128x64xf32>
    %c1_152 = arith.constant 1 : index
    %c0_153 = arith.constant 0 : index
    %c0_154 = arith.constant 0 : index
    %231 = vector.load %arg14[%c1_152, %c0_153, %c0_154] : memref<3x128x64xf32, #tpu.memory_space<vmem>>, vector<1x128x64xf32>
    %232 = vector.shape_cast %231 : vector<1x128x64xf32> to vector<128x64xf32>
    %cst_155 = arith.constant dense<0.000000e+00> : vector<128x64xf32>
    %233 = tpu.matmul %232, %217, %cst_155 {dimension_numbers = #tpu.dot_dimension_numbers<[1], [0], [0], [1], [0, 0, 1, 1], [], []>} : vector<128x64xf32>, vector<64x64xf32>, vector<128x64xf32> -> vector<128x64xf32>
    %234 = arith.addf %230, %233 : vector<128x64xf32>
    %c63_i32_156 = arith.constant 63 : i32
    %235 = tpu.dynamic_rotate %217 by %c63_i32_156 dim 1 : vector<64x64xf32>, i32 -> vector<64x64xf32>
    %c7_i32_157 = arith.constant 7 : i32
    %236 = vector.broadcast %c7_i32_157 : i32 to vector<1x64xi32>
    %237 = arith.cmpi slt, %220, %236 : vector<1x64xi32>
    %cst_158 = arith.constant 0.000000e+00 : f32
    %238 = vector.shape_cast %237 : vector<1x64xi1> to vector<1x64xi1>
    %239 = vector.broadcast %238 : vector<1x64xi1> to vector<64x64xi1>
    %240 = vector.broadcast %cst_158 : f32 to vector<64x64xf32>
    %241 = arith.select %239, %235, %240 : vector<64x64xi1>, vector<64x64xf32>
    %c2_159 = arith.constant 2 : index
    %c0_160 = arith.constant 0 : index
    %c0_161 = arith.constant 0 : index
    %242 = vector.load %arg14[%c2_159, %c0_160, %c0_161] : memref<3x128x64xf32, #tpu.memory_space<vmem>>, vector<1x128x64xf32>
    %243 = vector.shape_cast %242 : vector<1x128x64xf32> to vector<128x64xf32>
    %cst_162 = arith.constant dense<0.000000e+00> : vector<128x64xf32>
    %244 = tpu.matmul %243, %241, %cst_162 {dimension_numbers = #tpu.dot_dimension_numbers<[1], [0], [0], [1], [0, 0, 1, 1], [], []>} : vector<128x64xf32>, vector<64x64xf32>, vector<128x64xf32> -> vector<128x64xf32>
    %245 = arith.addf %234, %244 : vector<128x64xf32>
    %c0_163 = arith.constant 0 : index
    %c0_164 = arith.constant 0 : index
    %246 = vector.load %arg15[%c0_163, %c0_164] : memref<128x1xf32, #tpu.memory_space<vmem>>, vector<128x1xf32>
    %247 = vector.broadcast %246 : vector<128x1xf32> to vector<128x64xf32>
    %248 = arith.addf %245, %247 : vector<128x64xf32>
    %cst_165 = arith.constant 0.000000e+00 : f32
    %249 = vector.broadcast %cst_165 : f32 to vector<128x64xf32>
    %250 = arith.maximumf %248, %249 : vector<128x64xf32>
    %c0_166 = arith.constant 0 : index
    %c0_167 = arith.constant 0 : index
    %251 = vector.load %arg2[%c0_166, %c0_167] : memref<256x128xf32, #tpu.memory_space<vmem>>, vector<64x32xf32>
    %cst_168 = arith.constant dense<0.000000e+00> : vector<128x32xf32>
    %252 = tpu.matmul %250, %251, %cst_168 {dimension_numbers = #tpu.dot_dimension_numbers<[1], [0], [0], [1], [0, 0, 1, 1], [], []>} : vector<128x64xf32>, vector<64x32xf32>, vector<128x32xf32> -> vector<128x32xf32>
    %253 = tpu.iota {dimensions = array<i32: 1>} : vector<1x32xi32>
    %c3_i32 = arith.constant 3 : i32
    %254 = vector.broadcast %c3_i32 : i32 to vector<1x32xi32>
    %255 = arith.andi %253, %254 : vector<1x32xi32>
    %c1_i32_169 = arith.constant 1 : i32
    %256 = tpu.dynamic_rotate %252 by %c1_i32_169 dim 1 : vector<128x32xf32>, i32 -> vector<128x32xf32>
    %c1_i32_170 = arith.constant 1 : i32
    %257 = vector.broadcast %c1_i32_170 : i32 to vector<1x32xi32>
    %258 = arith.cmpi sge, %255, %257 : vector<1x32xi32>
    %cst_171 = arith.constant 0.000000e+00 : f32
    %259 = vector.shape_cast %258 : vector<1x32xi1> to vector<1x32xi1>
    %260 = vector.broadcast %259 : vector<1x32xi1> to vector<128x32xi1>
    %261 = vector.broadcast %cst_171 : f32 to vector<128x32xf32>
    %262 = arith.select %260, %256, %261 : vector<128x32xi1>, vector<128x32xf32>
    %c0_172 = arith.constant 0 : index
    %c0_173 = arith.constant 0 : index
    %c0_174 = arith.constant 0 : index
    %263 = vector.load %arg16[%c0_172, %c0_173, %c0_174] : memref<3x256x128xf32, #tpu.memory_space<vmem>>, vector<1x256x128xf32>
    %264 = vector.shape_cast %263 : vector<1x256x128xf32> to vector<256x128xf32>
    %cst_175 = arith.constant dense<0.000000e+00> : vector<256x32xf32>
    %265 = tpu.matmul %264, %262, %cst_175 {dimension_numbers = #tpu.dot_dimension_numbers<[1], [0], [0], [1], [0, 0, 1, 1], [], []>} : vector<256x128xf32>, vector<128x32xf32>, vector<256x32xf32> -> vector<256x32xf32>
    %c1_176 = arith.constant 1 : index
    %c0_177 = arith.constant 0 : index
    %c0_178 = arith.constant 0 : index
    %266 = vector.load %arg16[%c1_176, %c0_177, %c0_178] : memref<3x256x128xf32, #tpu.memory_space<vmem>>, vector<1x256x128xf32>
    %267 = vector.shape_cast %266 : vector<1x256x128xf32> to vector<256x128xf32>
    %cst_179 = arith.constant dense<0.000000e+00> : vector<256x32xf32>
    %268 = tpu.matmul %267, %252, %cst_179 {dimension_numbers = #tpu.dot_dimension_numbers<[1], [0], [0], [1], [0, 0, 1, 1], [], []>} : vector<256x128xf32>, vector<128x32xf32>, vector<256x32xf32> -> vector<256x32xf32>
    %269 = arith.addf %265, %268 : vector<256x32xf32>
    %c31_i32_180 = arith.constant 31 : i32
    %270 = tpu.dynamic_rotate %252 by %c31_i32_180 dim 1 : vector<128x32xf32>, i32 -> vector<128x32xf32>
    %c3_i32_181 = arith.constant 3 : i32
    %271 = vector.broadcast %c3_i32_181 : i32 to vector<1x32xi32>
    %272 = arith.cmpi slt, %255, %271 : vector<1x32xi32>
    %cst_182 = arith.constant 0.000000e+00 : f32
    %273 = vector.shape_cast %272 : vector<1x32xi1> to vector<1x32xi1>
    %274 = vector.broadcast %273 : vector<1x32xi1> to vector<128x32xi1>
    %275 = vector.broadcast %cst_182 : f32 to vector<128x32xf32>
    %276 = arith.select %274, %270, %275 : vector<128x32xi1>, vector<128x32xf32>
    %c2_183 = arith.constant 2 : index
    %c0_184 = arith.constant 0 : index
    %c0_185 = arith.constant 0 : index
    %277 = vector.load %arg16[%c2_183, %c0_184, %c0_185] : memref<3x256x128xf32, #tpu.memory_space<vmem>>, vector<1x256x128xf32>
    %278 = vector.shape_cast %277 : vector<1x256x128xf32> to vector<256x128xf32>
    %cst_186 = arith.constant dense<0.000000e+00> : vector<256x32xf32>
    %279 = tpu.matmul %278, %276, %cst_186 {dimension_numbers = #tpu.dot_dimension_numbers<[1], [0], [0], [1], [0, 0, 1, 1], [], []>} : vector<256x128xf32>, vector<128x32xf32>, vector<256x32xf32> -> vector<256x32xf32>
    %280 = arith.addf %269, %279 : vector<256x32xf32>
    %c0_187 = arith.constant 0 : index
    %c0_188 = arith.constant 0 : index
    %281 = vector.load %arg17[%c0_187, %c0_188] : memref<256x1xf32, #tpu.memory_space<vmem>>, vector<256x1xf32>
    %282 = vector.broadcast %281 : vector<256x1xf32> to vector<256x32xf32>
    %283 = arith.addf %280, %282 : vector<256x32xf32>
    %cst_189 = arith.constant 0.000000e+00 : f32
    %284 = vector.broadcast %cst_189 : f32 to vector<256x32xf32>
    %285 = arith.maximumf %283, %284 : vector<256x32xf32>
    %c0_190 = arith.constant 0 : index
    %c0_191 = arith.constant 0 : index
    %286 = vector.load %arg19[%c0_190, %c0_191] : memref<16x1xf32, #tpu.memory_space<vmem>>, vector<16x1xf32>
    %c0_192 = arith.constant 0 : index
    %c0_193 = arith.constant 0 : index
    %c0_194 = arith.constant 0 : index
    %287 = vector.load %arg3[%c0_192, %c0_193, %c0_194] : memref<2x32x8xf32, #tpu.memory_space<vmem>>, vector<1x32x8xf32>
    %288 = vector.shape_cast %287 : vector<1x32x8xf32> to vector<32x8xf32>
    %cst_195 = arith.constant dense<0.000000e+00> : vector<256x8xf32>
    %289 = tpu.matmul %285, %288, %cst_195 {dimension_numbers = #tpu.dot_dimension_numbers<[1], [0], [0], [1], [0, 0, 1, 1], [], []>} : vector<256x32xf32>, vector<32x8xf32>, vector<256x8xf32> -> vector<256x8xf32>
    %c0_196 = arith.constant 0 : index
    %c0_197 = arith.constant 0 : index
    %c0_198 = arith.constant 0 : index
    %290 = vector.load %arg18[%c0_196, %c0_197, %c0_198] : memref<2x16x256xf32, #tpu.memory_space<vmem>>, vector<1x16x256xf32>
    %291 = vector.shape_cast %290 : vector<1x16x256xf32> to vector<16x256xf32>
    %cst_199 = arith.constant dense<0.000000e+00> : vector<16x8xf32>
    %292 = tpu.matmul %291, %289, %cst_199 {dimension_numbers = #tpu.dot_dimension_numbers<[1], [0], [0], [1], [0, 0, 1, 1], [], []>} : vector<16x256xf32>, vector<256x8xf32>, vector<16x8xf32> -> vector<16x8xf32>
    %293 = vector.broadcast %286 : vector<16x1xf32> to vector<16x8xf32>
    %294 = arith.addf %293, %292 : vector<16x8xf32>
    %c1_200 = arith.constant 1 : index
    %c0_201 = arith.constant 0 : index
    %c0_202 = arith.constant 0 : index
    %295 = vector.load %arg3[%c1_200, %c0_201, %c0_202] : memref<2x32x8xf32, #tpu.memory_space<vmem>>, vector<1x32x8xf32>
    %296 = vector.shape_cast %295 : vector<1x32x8xf32> to vector<32x8xf32>
    %cst_203 = arith.constant dense<0.000000e+00> : vector<256x8xf32>
    %297 = tpu.matmul %285, %296, %cst_203 {dimension_numbers = #tpu.dot_dimension_numbers<[1], [0], [0], [1], [0, 0, 1, 1], [], []>} : vector<256x32xf32>, vector<32x8xf32>, vector<256x8xf32> -> vector<256x8xf32>
    %c1_204 = arith.constant 1 : index
    %c0_205 = arith.constant 0 : index
    %c0_206 = arith.constant 0 : index
    %298 = vector.load %arg18[%c1_204, %c0_205, %c0_206] : memref<2x16x256xf32, #tpu.memory_space<vmem>>, vector<1x16x256xf32>
    %299 = vector.shape_cast %298 : vector<1x16x256xf32> to vector<16x256xf32>
    %cst_207 = arith.constant dense<0.000000e+00> : vector<16x8xf32>
    %300 = tpu.matmul %299, %297, %cst_207 {dimension_numbers = #tpu.dot_dimension_numbers<[1], [0], [0], [1], [0, 0, 1, 1], [], []>} : vector<16x256xf32>, vector<256x8xf32>, vector<16x8xf32> -> vector<16x8xf32>
    %301 = arith.addf %294, %300 : vector<16x8xf32>
    %302 = tpu.transpose %301, [1, 0] : vector<16x8xf32> -> vector<8x16xf32>
    %c0_208 = arith.constant 0 : index
    %c0_209 = arith.constant 0 : index
    %303 = vector.load %arg20[%c0_208, %c0_209] : memref<8x16xf32, #tpu.memory_space<vmem>>, vector<8x16xf32>
    tpu.vector_store %arg20[%c0_208, %c0_209], %302 {strides = array<i32>} : memref<8x16xf32, #tpu.memory_space<vmem>>, vector<8x16xf32>,
    return
  }
  func.func @transform_0(%arg0: i32) -> (i32, i32, i32) {
    %c0_i32 = arith.constant 0 : i32
    %c0_i32_0 = arith.constant 0 : i32
    %c0_i32_1 = arith.constant 0 : i32
    return %arg0, %c0_i32, %c0_i32_0 : i32, i32, i32
  }
  func.func @transform_1(%arg0: i32) -> (i32, i32) {
    %c0_i32 = arith.constant 0 : i32
    %c0_i32_0 = arith.constant 0 : i32
    %c0_i32_1 = arith.constant 0 : i32
    return %c0_i32, %c0_i32_0 : i32, i32
  }
  func.func @transform_2(%arg0: i32) -> (i32, i32, i32) {
    %c0_i32 = arith.constant 0 : i32
    %c0_i32_0 = arith.constant 0 : i32
    %c0_i32_1 = arith.constant 0 : i32
    %c0_i32_2 = arith.constant 0 : i32
    return %c0_i32, %c0_i32_0, %c0_i32_1 : i32, i32, i32
  }
  func.func @transform_3(%arg0: i32) -> (i32, i32, i32) {
    %c0_i32 = arith.constant 0 : i32
    %c0_i32_0 = arith.constant 0 : i32
    %c0_i32_1 = arith.constant 0 : i32
    %c0_i32_2 = arith.constant 0 : i32
    return %c0_i32, %c0_i32_0, %c0_i32_1 : i32, i32, i32
  }
  func.func @transform_4(%arg0: i32) -> (i32, i32) {
    %c0_i32 = arith.constant 0 : i32
    %c0_i32_0 = arith.constant 0 : i32
    %c0_i32_1 = arith.constant 0 : i32
    return %c0_i32, %c0_i32_0 : i32, i32
  }
  func.func @transform_5(%arg0: i32) -> (i32, i32, i32) {
    %c0_i32 = arith.constant 0 : i32
    %c0_i32_0 = arith.constant 0 : i32
    %c0_i32_1 = arith.constant 0 : i32
    %c0_i32_2 = arith.constant 0 : i32
    return %c0_i32, %c0_i32_0, %c0_i32_1 : i32, i32, i32
  }
  func.func @transform_6(%arg0: i32) -> (i32, i32) {
    %c0_i32 = arith.constant 0 : i32
    %c0_i32_0 = arith.constant 0 : i32
    %c0_i32_1 = arith.constant 0 : i32
    return %c0_i32, %c0_i32_0 : i32, i32
  }
  func.func @transform_7(%arg0: i32) -> (i32, i32, i32) {
    %c0_i32 = arith.constant 0 : i32
    %c0_i32_0 = arith.constant 0 : i32
    %c0_i32_1 = arith.constant 0 : i32
    %c0_i32_2 = arith.constant 0 : i32
    return %c0_i32, %c0_i32_0, %c0_i32_1 : i32, i32, i32
  }
  func.func @transform_8(%arg0: i32) -> (i32, i32) {
    %c0_i32 = arith.constant 0 : i32
    %c0_i32_0 = arith.constant 0 : i32
    %c0_i32_1 = arith.constant 0 : i32
    return %c0_i32, %c0_i32_0 : i32, i32
  }
  func.func @transform_9(%arg0: i32) -> (i32, i32, i32) {
    %c0_i32 = arith.constant 0 : i32
    %c0_i32_0 = arith.constant 0 : i32
    %c0_i32_1 = arith.constant 0 : i32
    %c0_i32_2 = arith.constant 0 : i32
    return %c0_i32, %c0_i32_0, %c0_i32_1 : i32, i32, i32
  }
  func.func @transform_10(%arg0: i32) -> (i32, i32) {
    %c0_i32 = arith.constant 0 : i32
    %c0_i32_0 = arith.constant 0 : i32
    %c0_i32_1 = arith.constant 0 : i32
    return %c0_i32, %c0_i32_0 : i32, i32
  }
  func.func @transform_11(%arg0: i32) -> (i32, i32, i32) {
    %c0_i32 = arith.constant 0 : i32
    %c0_i32_0 = arith.constant 0 : i32
    %c0_i32_1 = arith.constant 0 : i32
    %c0_i32_2 = arith.constant 0 : i32
    return %c0_i32, %c0_i32_0, %c0_i32_1 : i32, i32, i32
  }
  func.func @transform_12(%arg0: i32) -> (i32, i32) {
    %c0_i32 = arith.constant 0 : i32
    %c0_i32_0 = arith.constant 0 : i32
    %c0_i32_1 = arith.constant 0 : i32
    return %c0_i32, %c0_i32_0 : i32, i32
  }
  func.func @transform_13(%arg0: i32) -> (i32, i32, i32) {
    %c0_i32 = arith.constant 0 : i32
    %c0_i32_0 = arith.constant 0 : i32
    %c0_i32_1 = arith.constant 0 : i32
    %c0_i32_2 = arith.constant 0 : i32
    return %c0_i32, %c0_i32_0, %c0_i32_1 : i32, i32, i32
  }
  func.func @transform_14(%arg0: i32) -> (i32, i32) {
    %c0_i32 = arith.constant 0 : i32
    %c0_i32_0 = arith.constant 0 : i32
    %c0_i32_1 = arith.constant 0 : i32
    return %c0_i32, %c0_i32_0 : i32, i32
  }
  func.func @transform_15(%arg0: i32) -> (i32, i32, i32) {
    %c0_i32 = arith.constant 0 : i32
    %c0_i32_0 = arith.constant 0 : i32
    %c0_i32_1 = arith.constant 0 : i32
    %c0_i32_2 = arith.constant 0 : i32
    return %c0_i32, %c0_i32_0, %c0_i32_1 : i32, i32, i32
  }
  func.func @transform_16(%arg0: i32) -> (i32, i32) {
    %c0_i32 = arith.constant 0 : i32
    %c0_i32_0 = arith.constant 0 : i32
    %c0_i32_1 = arith.constant 0 : i32
    return %c0_i32, %c0_i32_0 : i32, i32
  }
  func.func @transform_17(%arg0: i32) -> (i32, i32, i32) {
    %c0_i32 = arith.constant 0 : i32
    %c0_i32_0 = arith.constant 0 : i32
    %c0_i32_1 = arith.constant 0 : i32
    %c0_i32_2 = arith.constant 0 : i32
    return %c0_i32, %c0_i32_0, %c0_i32_1 : i32, i32, i32
  }
  func.func @transform_18(%arg0: i32) -> (i32, i32) {
    %c0_i32 = arith.constant 0 : i32
    %c0_i32_0 = arith.constant 0 : i32
    %c0_i32_1 = arith.constant 0 : i32
    return %c0_i32, %c0_i32_0 : i32, i32
  }
  func.func @transform_19(%arg0: i32) -> (i32, i32) {
    %c0_i32 = arith.constant 0 : i32
    %c0_i32_0 = arith.constant 0 : i32
    return %arg0, %c0_i32 : i32, i32
  }
}

</mosaic_0001>

<llo_original>
// kernel: ascad_branch_forward.1
$region0: #{ascad_branch_forward.1}
  #allocation0 [shape = 'u32[]', space=smem, size = 0x4, offset = 0x4, fixed_abs, tag = 'smem constant byte address 0x4 - core index']
  #allocation1 [shape = 'u32[144,128]{1,0:T(1,128)}', space=vmem, size = 0x12000, scoped, tag = 'internal scratch']
  %s0 = inlined_call_operand.vmem [shape: f32[2,1,2048], index: 0, kind: input, shape index: {}]
  %s1 = inlined_call_operand.vmem [shape: f32[256,128], index: 1, kind: input, shape index: {}]
  %s2 = inlined_call_operand.vmem [shape: f32[2,32,8], index: 2, kind: input, shape index: {}]
  %s3 = inlined_call_operand.vmem [shape: f32[3,4,1], index: 3, kind: input, shape index: {}]
  %s4 = inlined_call_operand.vmem [shape: f32[4,1], index: 4, kind: input, shape index: {}]
  %s5 = inlined_call_operand.vmem [shape: f32[3,8,4], index: 5, kind: input, shape index: {}]
  %s6 = inlined_call_operand.vmem [shape: f32[8,1], index: 6, kind: input, shape index: {}]
  %s7 = inlined_call_operand.vmem [shape: f32[3,16,8], index: 7, kind: input, shape index: {}]
  %s8 = inlined_call_operand.vmem [shape: f32[16,1], index: 8, kind: input, shape index: {}]
  %s9 = inlined_call_operand.vmem [shape: f32[3,32,16], index: 9, kind: input, shape index: {}]
  %s10 = inlined_call_operand.vmem [shape: f32[32,1], index: 10, kind: input, shape index: {}]
  %s11 = inlined_call_operand.vmem [shape: f32[3,64,32], index: 11, kind: input, shape index: {}]
  %s12 = inlined_call_operand.vmem [shape: f32[64,1], index: 12, kind: input, shape index: {}]
  %s13 = inlined_call_operand.vmem [shape: f32[3,128,64], index: 13, kind: input, shape index: {}]
  %s14 = inlined_call_operand.vmem [shape: f32[128,1], index: 14, kind: input, shape index: {}]
  %s15 = inlined_call_operand.vmem [shape: f32[3,256,128], index: 15, kind: input, shape index: {}]
  %s16 = inlined_call_operand.vmem [shape: f32[256,1], index: 16, kind: input, shape index: {}]
  %s17 = inlined_call_operand.vmem [shape: f32[2,16,256], index: 17, kind: input, shape index: {}]
  %s18 = inlined_call_operand.vmem [shape: f32[16,1], index: 18, kind: input, shape index: {}]
  %s19 = inlined_call_operand.hbm [shape: f32[16,16], index: 19, kind: output, shape index: {}]
  %s20 = sld [smem:[#allocation0]]
  $region109: #{ascad_branch_forward.1} parent=0
    _
  %s22 = ssub.s32 1, %s20
  %s23 = scalar_select 0, %s22, %s20
  $region1: #{ascad_branch_forward.1} parent=0
    #allocation2 [shape = 'u8[8192]{0}', space=vmem, size = 0x2000, scoped, tag = 'output window, operand 0']
    #allocation3 [shape = 's32[2]{0}', space=sflag, size = 0x8, scoped, tag = 'scoped memory for ascad_branch_forward.1']
    %24 = vsyncpa [#allocation3], 0
    %s25 = scalar_lea.sflag [#allocation3], 1
    %26 = vsyncpa %s25, 0
    loop: start=0, step=1, limit=4
    $region2: #{ascad_branch_forward.1} parent=1 // loop_pre_header
      _
    $region3: #{ascad_branch_forward.1} parent=1 // loop_header
      %s28 = sphi 0, %s32
      %p29 = scmp.ge.s32.totalorder %s28, 4
      %s38 = sphi 0, %s40
      %s41 = sphi 0, %s38
      %s42 = sphi 0, %s41
      %s58 = sphi 0, %s42
      %s62 = sphi 0, %s62
      %s64 = sphi 0, %s62
      %s65 = sphi 0, %s64
      %s79 = sphi 0, %s65
      %s83 = sphi 0, %s83
      %s85 = sphi 0, %s83
      %s86 = sphi 0, %s85
      %s100 = sphi 0, %s86
      %s104 = sphi 0, %s104
      %s106 = sphi 0, %s104
      %s107 = sphi 0, %s106
      %s121 = sphi 0, %s107
      %s125 = sphi 0, %s125
      %s127 = sphi 0, %s125
      %s128 = sphi 0, %s127
      %s142 = sphi 0, %s128
      %s146 = sphi 0, %s146
      %s148 = sphi 0, %s146
      %s149 = sphi 0, %s148
      %s163 = sphi 0, %s149
      %s167 = sphi 0, %s167
      %s169 = sphi 0, %s167
      %s170 = sphi 0, %s169
      %s184 = sphi 0, %s170
      %s188 = sphi 0, %s188
      %s190 = sphi 0, %s188
      %s191 = sphi 0, %s190
      %s205 = sphi 0, %s191
      %s209 = sphi 0, %s209
      %s211 = sphi 0, %s209
      %s212 = sphi 0, %s211
      %s226 = sphi 0, %s212
      %s230 = sphi 0, %s230
      %s232 = sphi 0, %s230
      %s233 = sphi 0, %s232
      %s247 = sphi 0, %s233
      %s251 = sphi 0, %s251
      %s253 = sphi 0, %s251
      %s254 = sphi 0, %s253
      %s268 = sphi 0, %s254
      %s272 = sphi 0, %s272
      %s274 = sphi 0, %s272
      %s275 = sphi 0, %s274
      %s289 = sphi 0, %s275
      %s293 = sphi 0, %s293
      %s295 = sphi 0, %s293
      %s296 = sphi 0, %s295
      %s310 = sphi 0, %s296
      %s314 = sphi 0, %s314
      %s316 = sphi 0, %s314
      %s317 = sphi 0, %s316
      %s331 = sphi 0, %s317
      %s335 = sphi 0, %s335
      %s337 = sphi 0, %s335
      %s338 = sphi 0, %s337
      %s352 = sphi 0, %s338
      %s356 = sphi 0, %s356
      %s358 = sphi 0, %s356
      %s359 = sphi 0, %s358
      %s373 = sphi 0, %s359
      %s377 = sphi 0, %s377
      %s379 = sphi 0, %s377
      %s380 = sphi 0, %s379
      %s394 = sphi 0, %s380
      %s398 = sphi 0, %s398
      %s400 = sphi 0, %s398
      %s401 = sphi 0, %s400
      %s415 = sphi 0, %s401
      %s419 = sphi 0, %s419
      %s421 = sphi 0, %s419
      %s422 = sphi 0, %s421
      %s436 = sphi 0, %s422
      %s442 = sphi 0, %s444
      %s445 = sphi 0, %s442
      %s446 = sphi 0, %s445
      %s462 = sphi 0, %s446
    $region4: #{ascad_branch_forward.1} parent=1 // loop_header_branch
      %31 = sbr.rel (%p29) target = $region8
    $region5: #{ascad_branch_forward.1} parent=1 // loop_body
      %s33 = ssub.s32 %s28, 1
      %s34 = ssub.s32 %s28, 2
      %s35 = sadd.s32 %s28, 1
      %s36 = ssub.s32 %s28, %s35
      %p37 = scmp.eq.s32.totalorder %s36, 0
      %s39 = sadd.s32 %s38, 1
      %s40 = scalar_select %p37, %s38, %s39
      %p43 = pneg %p37
      %p44 = scmp.eq.s32.totalorder %s28, 1
      %p45 = por %p43, %p44
      %p46 = scmp.ne.s32.totalorder %s38, %s41
      %p47 = scmp.eq.s32.totalorder %s28, 0
      %p48 = por %p46, %p47
      %p49 = scmp.ne.s32.totalorder %s38, %s41
      %p50 = scmp.eq.s32.totalorder %s33, 1
      %p51 = por %p49, %p50
      %p52 = scmp.ne.s32.totalorder %s41, %s42
      %p53 = scmp.eq.s32.totalorder %s33, 0
      %p54 = por %p52, %p53
      %p55 = scmp.ne.s32.totalorder %s41, %s42
      %p56 = scmp.eq.s32.totalorder %s34, 1
      %p57 = por %p55, %p56
      %p59 = scmp.ne.s32.totalorder %s42, %s58
      %p60 = scmp.eq.s32.totalorder %s34, 0
      %p61 = por %p59, %p60
      %s63 = sadd.s32 %s62, 1
      %p66 = scmp.eq.s32.totalorder %s28, 1
      %p67 = scmp.ne.s32.totalorder %s62, %s64
      %p68 = scmp.eq.s32.totalorder %s28, 0
      %p69 = por %p67, %p68
      %p70 = scmp.ne.s32.totalorder %s62, %s64
      %p71 = scmp.eq.s32.totalorder %s33, 1
      %p72 = por %p70, %p71
      %p73 = scmp.ne.s32.totalorder %s64, %s65
      %p74 = scmp.eq.s32.totalorder %s33, 0
      %p75 = por %p73, %p74
      %p76 = scmp.ne.s32.totalorder %s64, %s65
      %p77 = scmp.eq.s32.totalorder %s34, 1
      %p78 = por %p76, %p77
      %p80 = scmp.ne.s32.totalorder %s65, %s79
      %p81 = scmp.eq.s32.totalorder %s34, 0
      %p82 = por %p80, %p81
      %s84 = sadd.s32 %s83, 1
      %p87 = scmp.eq.s32.totalorder %s28, 1
      %p88 = scmp.ne.s32.totalorder %s83, %s85
      %p89 = scmp.eq.s32.totalorder %s28, 0
      %p90 = por %p88, %p89
      %p91 = scmp.ne.s32.totalorder %s83, %s85
      %p92 = scmp.eq.s32.totalorder %s33, 1
      %p93 = por %p91, %p92
      %p94 = scmp.ne.s32.totalorder %s85, %s86
      %p95 = scmp.eq.s32.totalorder %s33, 0
      %p96 = por %p94, %p95
      %p97 = scmp.ne.s32.totalorder %s85, %s86
      %p98 = scmp.eq.s32.totalorder %s34, 1
      %p99 = por %p97, %p98
      %p101 = scmp.ne.s32.totalorder %s86, %s100
      %p102 = scmp.eq.s32.totalorder %s34, 0
      %p103 = por %p101, %p102
      %s105 = sadd.s32 %s104, 1
      %p108 = scmp.eq.s32.totalorder %s28, 1
      %p109 = scmp.ne.s32.totalorder %s104, %s106
      %p110 = scmp.eq.s32.totalorder %s28, 0
      %p111 = por %p109, %p110
      %p112 = scmp.ne.s32.totalorder %s104, %s106
      %p113 = scmp.eq.s32.totalorder %s33, 1
      %p114 = por %p112, %p113
      %p115 = scmp.ne.s32.totalorder %s106, %s107
      %p116 = scmp.eq.s32.totalorder %s33, 0
      %p117 = por %p115, %p116
      %p118 = scmp.ne.s32.totalorder %s106, %s107
      %p119 = scmp.eq.s32.totalorder %s34, 1
      %p120 = por %p118, %p119
      %p122 = scmp.ne.s32.totalorder %s107, %s121
      %p123 = scmp.eq.s32.totalorder %s34, 0
      %p124 = por %p122, %p123
      %s126 = sadd.s32 %s125, 1
      %p129 = scmp.eq.s32.totalorder %s28, 1
      %p130 = scmp.ne.s32.totalorder %s125, %s127
      %p131 = scmp.eq.s32.totalorder %s28, 0
      %p132 = por %p130, %p131
      %p133 = scmp.ne.s32.totalorder %s125, %s127
      %p134 = scmp.eq.s32.totalorder %s33, 1
      %p135 = por %p133, %p134
      %p136 = scmp.ne.s32.totalorder %s127, %s128
      %p137 = scmp.eq.s32.totalorder %s33, 0
      %p138 = por %p136, %p137
      %p139 = scmp.ne.s32.totalorder %s127, %s128
      %p140 = scmp.eq.s32.totalorder %s34, 1
      %p141 = por %p139, %p140
      %p143 = scmp.ne.s32.totalorder %s128, %s142
      %p144 = scmp.eq.s32.totalorder %s34, 0
      %p145 = por %p143, %p144
      %s147 = sadd.s32 %s146, 1
      %p150 = scmp.eq.s32.totalorder %s28, 1
      %p151 = scmp.ne.s32.totalorder %s146, %s148
      %p152 = scmp.eq.s32.totalorder %s28, 0
      %p153 = por %p151, %p152
      %p154 = scmp.ne.s32.totalorder %s146, %s148
      %p155 = scmp.eq.s32.totalorder %s33, 1
      %p156 = por %p154, %p155
      %p157 = scmp.ne.s32.totalorder %s148, %s149
      %p158 = scmp.eq.s32.totalorder %s33, 0
      %p159 = por %p157, %p158
      %p160 = scmp.ne.s32.totalorder %s148, %s149
      %p161 = scmp.eq.s32.totalorder %s34, 1
      %p162 = por %p160, %p161
      %p164 = scmp.ne.s32.totalorder %s149, %s163
      %p165 = scmp.eq.s32.totalorder %s34, 0
      %p166 = por %p164, %p165
      %s168 = sadd.s32 %s167, 1
      %p171 = scmp.eq.s32.totalorder %s28, 1
      %p172 = scmp.ne.s32.totalorder %s167, %s169
      %p173 = scmp.eq.s32.totalorder %s28, 0
      %p174 = por %p172, %p173
      %p175 = scmp.ne.s32.totalorder %s167, %s169
      %p176 = scmp.eq.s32.totalorder %s33, 1
      %p177 = por %p175, %p176
      %p178 = scmp.ne.s32.totalorder %s169, %s170
      %p179 = scmp.eq.s32.totalorder %s33, 0
      %p180 = por %p178, %p179
      %p181 = scmp.ne.s32.totalorder %s169, %s170
      %p182 = scmp.eq.s32.totalorder %s34, 1
      %p183 = por %p181, %p182
      %p185 = scmp.ne.s32.totalorder %s170, %s184
      %p186 = scmp.eq.s32.totalorder %s34, 0
      %p187 = por %p185, %p186
      %s189 = sadd.s32 %s188, 1
      %p192 = scmp.eq.s32.totalorder %s28, 1
      %p193 = scmp.ne.s32.totalorder %s188, %s190
      %p194 = scmp.eq.s32.totalorder %s28, 0
      %p195 = por %p193, %p194
      %p196 = scmp.ne.s32.totalorder %s188, %s190
      %p197 = scmp.eq.s32.totalorder %s33, 1
      %p198 = por %p196, %p197
      %p199 = scmp.ne.s32.totalorder %s190, %s191
      %p200 = scmp.eq.s32.totalorder %s33, 0
      %p201 = por %p199, %p200
      %p202 = scmp.ne.s32.totalorder %s190, %s191
      %p203 = scmp.eq.s32.totalorder %s34, 1
      %p204 = por %p202, %p203
      %p206 = scmp.ne.s32.totalorder %s191, %s205
      %p207 = scmp.eq.s32.totalorder %s34, 0
      %p208 = por %p206, %p207
      %s210 = sadd.s32 %s209, 1
      %p213 = scmp.eq.s32.totalorder %s28, 1
      %p214 = scmp.ne.s32.totalorder %s209, %s211
      %p215 = scmp.eq.s32.totalorder %s28, 0
      %p216 = por %p214, %p215
      %p217 = scmp.ne.s32.totalorder %s209, %s211
      %p218 = scmp.eq.s32.totalorder %s33, 1
      %p219 = por %p217, %p218
      %p220 = scmp.ne.s32.totalorder %s211, %s212
      %p221 = scmp.eq.s32.totalorder %s33, 0
      %p222 = por %p220, %p221
      %p223 = scmp.ne.s32.totalorder %s211, %s212
      %p224 = scmp.eq.s32.totalorder %s34, 1
      %p225 = por %p223, %p224
      %p227 = scmp.ne.s32.totalorder %s212, %s226
      %p228 = scmp.eq.s32.totalorder %s34, 0
      %p229 = por %p227, %p228
      %s231 = sadd.s32 %s230, 1
      %p234 = scmp.eq.s32.totalorder %s28, 1
      %p235 = scmp.ne.s32.totalorder %s230, %s232
      %p236 = scmp.eq.s32.totalorder %s28, 0
      %p237 = por %p235, %p236
      %p238 = scmp.ne.s32.totalorder %s230, %s232
      %p239 = scmp.eq.s32.totalorder %s33, 1
      %p240 = por %p238, %p239
      %p241 = scmp.ne.s32.totalorder %s232, %s233
      %p242 = scmp.eq.s32.totalorder %s33, 0
      %p243 = por %p241, %p242
      %p244 = scmp.ne.s32.totalorder %s232, %s233
      %p245 = scmp.eq.s32.totalorder %s34, 1
      %p246 = por %p244, %p245
      %p248 = scmp.ne.s32.totalorder %s233, %s247
      %p249 = scmp.eq.s32.totalorder %s34, 0
      %p250 = por %p248, %p249
      %s252 = sadd.s32 %s251, 1
      %p255 = scmp.eq.s32.totalorder %s28, 1
      %p256 = scmp.ne.s32.totalorder %s251, %s253
      %p257 = scmp.eq.s32.totalorder %s28, 0
      %p258 = por %p256, %p257
      %p259 = scmp.ne.s32.totalorder %s251, %s253
      %p260 = scmp.eq.s32.totalorder %s33, 1
      %p261 = por %p259, %p260
      %p262 = scmp.ne.s32.totalorder %s253, %s254
      %p263 = scmp.eq.s32.totalorder %s33, 0
      %p264 = por %p262, %p263
      %p265 = scmp.ne.s32.totalorder %s253, %s254
      %p266 = scmp.eq.s32.totalorder %s34, 1
      %p267 = por %p265, %p266
      %p269 = scmp.ne.s32.totalorder %s254, %s268
      %p270 = scmp.eq.s32.totalorder %s34, 0
      %p271 = por %p269, %p270
      %s273 = sadd.s32 %s272, 1
      %p276 = scmp.eq.s32.totalorder %s28, 1
      %p277 = scmp.ne.s32.totalorder %s272, %s274
      %p278 = scmp.eq.s32.totalorder %s28, 0
      %p279 = por %p277, %p278
      %p280 = scmp.ne.s32.totalorder %s272, %s274
      %p281 = scmp.eq.s32.totalorder %s33, 1
      %p282 = por %p280, %p281
      %p283 = scmp.ne.s32.totalorder %s274, %s275
      %p284 = scmp.eq.s32.totalorder %s33, 0
      %p285 = por %p283, %p284
      %p286 = scmp.ne.s32.totalorder %s274, %s275
      %p287 = scmp.eq.s32.totalorder %s34, 1
      %p288 = por %p286, %p287
      %p290 = scmp.ne.s32.totalorder %s275, %s289
      %p291 = scmp.eq.s32.totalorder %s34, 0
      %p292 = por %p290, %p291
      %s294 = sadd.s32 %s293, 1
      %p297 = scmp.eq.s32.totalorder %s28, 1
      %p298 = scmp.ne.s32.totalorder %s293, %s295
      %p299 = scmp.eq.s32.totalorder %s28, 0
      %p300 = por %p298, %p299
      %p301 = scmp.ne.s32.totalorder %s293, %s295
      %p302 = scmp.eq.s32.totalorder %s33, 1
      %p303 = por %p301, %p302
      %p304 = scmp.ne.s32.totalorder %s295, %s296
      %p305 = scmp.eq.s32.totalorder %s33, 0
      %p306 = por %p304, %p305
      %p307 = scmp.ne.s32.totalorder %s295, %s296
      %p308 = scmp.eq.s32.totalorder %s34, 1
      %p309 = por %p307, %p308
      %p311 = scmp.ne.s32.totalorder %s296, %s310
      %p312 = scmp.eq.s32.totalorder %s34, 0
      %p313 = por %p311, %p312
      %s315 = sadd.s32 %s314, 1
      %p318 = scmp.eq.s32.totalorder %s28, 1
      %p319 = scmp.ne.s32.totalorder %s314, %s316
      %p320 = scmp.eq.s32.totalorder %s28, 0
      %p321 = por %p319, %p320
      %p322 = scmp.ne.s32.totalorder %s314, %s316
      %p323 = scmp.eq.s32.totalorder %s33, 1
      %p324 = por %p322, %p323
      %p325 = scmp.ne.s32.totalorder %s316, %s317
      %p326 = scmp.eq.s32.totalorder %s33, 0
      %p327 = por %p325, %p326
      %p328 = scmp.ne.s32.totalorder %s316, %s317
      %p329 = scmp.eq.s32.totalorder %s34, 1
      %p330 = por %p328, %p329
      %p332 = scmp.ne.s32.totalorder %s317, %s331
      %p333 = scmp.eq.s32.totalorder %s34, 0
      %p334 = por %p332, %p333
      %s336 = sadd.s32 %s335, 1
      %p339 = scmp.eq.s32.totalorder %s28, 1
      %p340 = scmp.ne.s32.totalorder %s335, %s337
      %p341 = scmp.eq.s32.totalorder %s28, 0
      %p342 = por %p340, %p341
      %p343 = scmp.ne.s32.totalorder %s335, %s337
      %p344 = scmp.eq.s32.totalorder %s33, 1
      %p345 = por %p343, %p344
      %p346 = scmp.ne.s32.totalorder %s337, %s338
      %p347 = scmp.eq.s32.totalorder %s33, 0
      %p348 = por %p346, %p347
      %p349 = scmp.ne.s32.totalorder %s337, %s338
      %p350 = scmp.eq.s32.totalorder %s34, 1
      %p351 = por %p349, %p350
      %p353 = scmp.ne.s32.totalorder %s338, %s352
      %p354 = scmp.eq.s32.totalorder %s34, 0
      %p355 = por %p353, %p354
      %s357 = sadd.s32 %s356, 1
      %p360 = scmp.eq.s32.totalorder %s28, 1
      %p361 = scmp.ne.s32.totalorder %s356, %s358
      %p362 = scmp.eq.s32.totalorder %s28, 0
      %p363 = por %p361, %p362
      %p364 = scmp.ne.s32.totalorder %s356, %s358
      %p365 = scmp.eq.s32.totalorder %s33, 1
      %p366 = por %p364, %p365
      %p367 = scmp.ne.s32.totalorder %s358, %s359
      %p368 = scmp.eq.s32.totalorder %s33, 0
      %p369 = por %p367, %p368
      %p370 = scmp.ne.s32.totalorder %s358, %s359
      %p371 = scmp.eq.s32.totalorder %s34, 1
      %p372 = por %p370, %p371
      %p374 = scmp.ne.s32.totalorder %s359, %s373
      %p375 = scmp.eq.s32.totalorder %s34, 0
      %p376 = por %p374, %p375
      %s378 = sadd.s32 %s377, 1
      %p381 = scmp.eq.s32.totalorder %s28, 1
      %p382 = scmp.ne.s32.totalorder %s377, %s379
      %p383 = scmp.eq.s32.totalorder %s28, 0
      %p384 = por %p382, %p383
      %p385 = scmp.ne.s32.totalorder %s377, %s379
      %p386 = scmp.eq.s32.totalorder %s33, 1
      %p387 = por %p385, %p386
      %p388 = scmp.ne.s32.totalorder %s379, %s380
      %p389 = scmp.eq.s32.totalorder %s33, 0
      %p390 = por %p388, %p389
      %p391 = scmp.ne.s32.totalorder %s379, %s380
      %p392 = scmp.eq.s32.totalorder %s34, 1
      %p393 = por %p391, %p392
      %p395 = scmp.ne.s32.totalorder %s380, %s394
      %p396 = scmp.eq.s32.totalorder %s34, 0
      %p397 = por %p395, %p396
      %s399 = sadd.s32 %s398, 1
      %p402 = scmp.eq.s32.totalorder %s28, 1
      %p403 = scmp.ne.s32.totalorder %s398, %s400
      %p404 = scmp.eq.s32.totalorder %s28, 0
      %p405 = por %p403, %p404
      %p406 = scmp.ne.s32.totalorder %s398, %s400
      %p407 = scmp.eq.s32.totalorder %s33, 1
      %p408 = por %p406, %p407
      %p409 = scmp.ne.s32.totalorder %s400, %s401
      %p410 = scmp.eq.s32.totalorder %s33, 0
      %p411 = por %p409, %p410
      %p412 = scmp.ne.s32.totalorder %s400, %s401
      %p413 = scmp.eq.s32.totalorder %s34, 1
      %p414 = por %p412, %p413
      %p416 = scmp.ne.s32.totalorder %s401, %s415
      %p417 = scmp.eq.s32.totalorder %s34, 0
      %p418 = por %p416, %p417
      %s420 = sadd.s32 %s419, 1
      %p423 = scmp.eq.s32.totalorder %s28, 1
      %p424 = scmp.ne.s32.totalorder %s419, %s421
      %p425 = scmp.eq.s32.totalorder %s28, 0
      %p426 = por %p424, %p425
      %p427 = scmp.ne.s32.totalorder %s419, %s421
      %p428 = scmp.eq.s32.totalorder %s33, 1
      %p429 = por %p427, %p428
      %p430 = scmp.ne.s32.totalorder %s421, %s422
      %p431 = scmp.eq.s32.totalorder %s33, 0
      %p432 = por %p430, %p431
      %p433 = scmp.ne.s32.totalorder %s421, %s422
      %p434 = scmp.eq.s32.totalorder %s34, 1
      %p435 = por %p433, %p434
      %p437 = scmp.ne.s32.totalorder %s422, %s436
      %p438 = scmp.eq.s32.totalorder %s34, 0
      %p439 = por %p437, %p438
      %s440 = ssub.s32 %s28, %s35
      %p441 = scmp.eq.s32.totalorder %s440, 0
      %s443 = sadd.s32 %s442, 1
      %s444 = scalar_select %p441, %s442, %s443
      %p447 = pneg %p441
      %p448 = scmp.eq.s32.totalorder %s28, 1
      %p449 = por %p447, %p448
      %p450 = scmp.ne.s32.totalorder %s442, %s445
      %p451 = scmp.eq.s32.totalorder %s28, 0
      %p452 = por %p450, %p451
      %p453 = scmp.ne.s32.totalorder %s442, %s445
      %p454 = scmp.eq.s32.totalorder %s33, 1
      %p455 = por %p453, %p454
      %p456 = scmp.ne.s32.totalorder %s445, %s446
      %p457 = scmp.eq.s32.totalorder %s33, 0
      %p458 = por %p456, %p457
      %p459 = scmp.ne.s32.totalorder %s445, %s446
      %p460 = scmp.eq.s32.totalorder %s34, 1
      %p461 = por %p459, %p460
      %p463 = scmp.ne.s32.totalorder %s446, %s462
      %p464 = scmp.eq.s32.totalorder %s34, 0
      %p465 = por %p463, %p464
      %p466 = scmp.le.s32.totalorder 1, %s28
      %p467 = scmp.lt.s32.totalorder %s28, 3
      %p468 = pnand %p466, %p467
      %p469 = pneg %p468
      // Predicated region
      $region9: #{ascad_branch_forward.1} parent=5 // pred_check
        _
      $region10: #{ascad_branch_forward.1} parent=5 // pred_check_branch
        %471 = sbr.rel (%p468) target = $region12
      $region11: #{ascad_branch_forward.1} parent=5 // pred_region
        %s472 = ssub.s32 %s28, 1
        // Predicated region
        $region13: #{ascad_branch_forward.1} parent=11 // pred_check
          %p473 = pneg %p75
        $region14: #{ascad_branch_forward.1} parent=11 // pred_check_branch
          %475 = sbr.rel (%p473) target = $region16
        $region15: #{ascad_branch_forward.1} parent=11 // pred_region
          _
        $region16: #{ascad_branch_forward.1} parent=11 // pred_fallthru
          _
        // Predicated region
        $region17: #{ascad_branch_forward.1} parent=11 // pred_check
          %p476 = pneg %p96
        $region18: #{ascad_branch_forward.1} parent=11 // pred_check_branch
          %478 = sbr.rel (%p476) target = $region20
        $region19: #{ascad_branch_forward.1} parent=11 // pred_region
          _
        $region20: #{ascad_branch_forward.1} parent=11 // pred_fallthru
          _
        // Predicated region
        $region21: #{ascad_branch_forward.1} parent=11 // pred_check
          %p479 = pneg %p117
        $region22: #{ascad_branch_forward.1} parent=11 // pred_check_branch
          %481 = sbr.rel (%p479) target = $region24
        $region23: #{ascad_branch_forward.1} parent=11 // pred_region
          _
        $region24: #{ascad_branch_forward.1} parent=11 // pred_fallthru
          _
        // Predicated region
        $region25: #{ascad_branch_forward.1} parent=11 // pred_check
          %p482 = pneg %p138
        $region26: #{ascad_branch_forward.1} parent=11 // pred_check_branch
          %484 = sbr.rel (%p482) target = $region28
        $region27: #{ascad_branch_forward.1} parent=11 // pred_region
          _
        $region28: #{ascad_branch_forward.1} parent=11 // pred_fallthru
          _
        // Predicated region
        $region29: #{ascad_branch_forward.1} parent=11 // pred_check
          %p485 = pneg %p159
        $region30: #{ascad_branch_forward.1} parent=11 // pred_check_branch
          %487 = sbr.rel (%p485) target = $region32
        $region31: #{ascad_branch_forward.1} parent=11 // pred_region
          _
        $region32: #{ascad_branch_forward.1} parent=11 // pred_fallthru
          _
        // Predicated region
        $region33: #{ascad_branch_forward.1} parent=11 // pred_check
          %p488 = pneg %p180
        $region34: #{ascad_branch_forward.1} parent=11 // pred_check_branch
          %490 = sbr.rel (%p488) target = $region36
        $region35: #{ascad_branch_forward.1} parent=11 // pred_region
          _
        $region36: #{ascad_branch_forward.1} parent=11 // pred_fallthru
          _
        // Predicated region
        $region37: #{ascad_branch_forward.1} parent=11 // pred_check
          %p491 = pneg %p201
        $region38: #{ascad_branch_forward.1} parent=11 // pred_check_branch
          %493 = sbr.rel (%p491) target = $region40
        $region39: #{ascad_branch_forward.1} parent=11 // pred_region
          _
        $region40: #{ascad_branch_forward.1} parent=11 // pred_fallthru
          _
        // Predicated region
        $region41: #{ascad_branch_forward.1} parent=11 // pred_check
          %p494 = pneg %p222
        $region42: #{ascad_branch_forward.1} parent=11 // pred_check_branch
          %496 = sbr.rel (%p494) target = $region44
        $region43: #{ascad_branch_forward.1} parent=11 // pred_region
          _
        $region44: #{ascad_branch_forward.1} parent=11 // pred_fallthru
          _
        // Predicated region
        $region45: #{ascad_branch_forward.1} parent=11 // pred_check
          %p497 = pneg %p243
        $region46: #{ascad_branch_forward.1} parent=11 // pred_check_branch
          %499 = sbr.rel (%p497) target = $region48
        $region47: #{ascad_branch_forward.1} parent=11 // pred_region
          _
        $region48: #{ascad_branch_forward.1} parent=11 // pred_fallthru
          _
        // Predicated region
        $region49: #{ascad_branch_forward.1} parent=11 // pred_check
          %p500 = pneg %p264
        $region50: #{ascad_branch_forward.1} parent=11 // pred_check_branch
          %502 = sbr.rel (%p500) target = $region52
        $region51: #{ascad_branch_forward.1} parent=11 // pred_region
          _
        $region52: #{ascad_branch_forward.1} parent=11 // pred_fallthru
          _
        // Predicated region
        $region53: #{ascad_branch_forward.1} parent=11 // pred_check
          %p503 = pneg %p285
        $region54: #{ascad_branch_forward.1} parent=11 // pred_check_branch
          %505 = sbr.rel (%p503) target = $region56
        $region55: #{ascad_branch_forward.1} parent=11 // pred_region
          _
        $region56: #{ascad_branch_forward.1} parent=11 // pred_fallthru
          _
        // Predicated region
        $region57: #{ascad_branch_forward.1} parent=11 // pred_check
          %p506 = pneg %p306
        $region58: #{ascad_branch_forward.1} parent=11 // pred_check_branch
          %508 = sbr.rel (%p506) target = $region60
        $region59: #{ascad_branch_forward.1} parent=11 // pred_region
          _
        $region60: #{ascad_branch_forward.1} parent=11 // pred_fallthru
          _
        // Predicated region
        $region61: #{ascad_branch_forward.1} parent=11 // pred_check
          %p509 = pneg %p327
        $region62: #{ascad_branch_forward.1} parent=11 // pred_check_branch
          %511 = sbr.rel (%p509) target = $region64
        $region63: #{ascad_branch_forward.1} parent=11 // pred_region
          _
        $region64: #{ascad_branch_forward.1} parent=11 // pred_fallthru
          _
        // Predicated region
        $region65: #{ascad_branch_forward.1} parent=11 // pred_check
          %p512 = pneg %p348
        $region66: #{ascad_branch_forward.1} parent=11 // pred_check_branch
          %514 = sbr.rel (%p512) target = $region68
        $region67: #{ascad_branch_forward.1} parent=11 // pred_region
          _
        $region68: #{ascad_branch_forward.1} parent=11 // pred_fallthru
          _
        // Predicated region
        $region69: #{ascad_branch_forward.1} parent=11 // pred_check
          %p515 = pneg %p369
        $region70: #{ascad_branch_forward.1} parent=11 // pred_check_branch
          %517 = sbr.rel (%p515) target = $region72
        $region71: #{ascad_branch_forward.1} parent=11 // pred_region
          _
        $region72: #{ascad_branch_forward.1} parent=11 // pred_fallthru
          _
        // Predicated region
        $region73: #{ascad_branch_forward.1} parent=11 // pred_check
          %p518 = pneg %p390
        $region74: #{ascad_branch_forward.1} parent=11 // pred_check_branch
          %520 = sbr.rel (%p518) target = $region76
        $region75: #{ascad_branch_forward.1} parent=11 // pred_region
          _
        $region76: #{ascad_branch_forward.1} parent=11 // pred_fallthru
          _
        // Predicated region
        $region77: #{ascad_branch_forward.1} parent=11 // pred_check
          %p521 = pneg %p411
        $region78: #{ascad_branch_forward.1} parent=11 // pred_check_branch
          %523 = sbr.rel (%p521) target = $region80
        $region79: #{ascad_branch_forward.1} parent=11 // pred_region
          _
        $region80: #{ascad_branch_forward.1} parent=11 // pred_fallthru
          _
        // Predicated region
        $region81: #{ascad_branch_forward.1} parent=11 // pred_check
          %p524 = pneg %p432
        $region82: #{ascad_branch_forward.1} parent=11 // pred_check_branch
          %526 = sbr.rel (%p524) target = $region84
        $region83: #{ascad_branch_forward.1} parent=11 // pred_region
          _
        $region84: #{ascad_branch_forward.1} parent=11 // pred_fallthru
          _
      $region12: #{ascad_branch_forward.1} parent=5 // pred_fallthru
        _
      %p527 = scmp.lt.s32.totalorder %s28, 2
      // Predicated region
      $region85: #{ascad_branch_forward.1} parent=5 // pred_check
        %p528 = pneg %p527
      $region86: #{ascad_branch_forward.1} parent=5 // pred_check_branch
        %530 = sbr.rel (%p528) target = $region88
      $region87: #{ascad_branch_forward.1} parent=5 // pred_region
        // Predicated region
        $region89: #{ascad_branch_forward.1} parent=87 // pred_check
          %p531 = pneg %p48
        $region90: #{ascad_branch_forward.1} parent=87 // pred_check_branch
          %533 = sbr.rel (%p531) target = $region92
        $region91: #{ascad_branch_forward.1} parent=87 // pred_region
          %p534 = scmp.lt.s32.totalorder %s28, 1
          %s535 = scalar_select %p534, %s28, 1
          %s536 = smul.addr %s535, 16
          %s537 = scalar_lea.vmem %s0, %s536
        $region92: #{ascad_branch_forward.1} parent=87 // pred_fallthru
          _
      $region88: #{ascad_branch_forward.1} parent=5 // pred_fallthru
        _
      %p538 = scmp.le.s32.totalorder 1, %s28
      %p539 = scmp.lt.s32.totalorder %s28, 3
      %p540 = pnand %p538, %p539
      %p541 = pneg %p540
      // Predicated region
      $region93: #{ascad_branch_forward.1} parent=5 // pred_check
        _
      $region94: #{ascad_branch_forward.1} parent=5 // pred_check_branch
        %543 = sbr.rel (%p540) target = $region96
      $region95: #{ascad_branch_forward.1} parent=5 // pred_region
        %s544 = ssub.s32 %s28, 1
        %p545 = scmp.lt.s32.totalorder %s33, 1
        %s546 = scalar_select %p545, %s33, 1
        %s547 = smul.addr %s546, 16
        %s548 = scalar_lea.vmem %s0, %s547
        %p549 = pneg %p54
        %p550 = pneg %p51
        %p551 = pneg %p75
        %p552 = pneg %p72
        %p553 = pneg %p96
        %p554 = pneg %p93
        %p555 = pneg %p117
        %p556 = pneg %p114
        %p557 = pneg %p138
        %p558 = pneg %p135
        %p559 = pneg %p159
        %p560 = pneg %p156
        %p561 = pneg %p180
        %p562 = pneg %p177
        %p563 = pneg %p201
        %p564 = pneg %p198
        %p565 = pneg %p222
        %p566 = pneg %p219
        %p567 = pneg %p243
        %p568 = pneg %p240
        %p569 = pneg %p264
        %p570 = pneg %p261
        %p571 = pneg %p285
        %p572 = pneg %p282
        %p573 = pneg %p306
        %p574 = pneg %p303
        %p575 = pneg %p327
        %p576 = pneg %p324
        %p577 = pneg %p348
        %p578 = pneg %p345
        %p579 = pneg %p369
        %p580 = pneg %p366
        %p581 = pneg %p390
        %p582 = pneg %p387
        %p583 = pneg %p411
        %p584 = pneg %p408
        %p585 = pneg %p432
        %p586 = pneg %p429
        %p587 = pneg %p458
        %p588 = pneg %p455
        %s589 = sand.u32 %s445, 1
        %s590 = scalar_lea.sflag [#allocation3], %s589
        %s591 = sand.u32 %s445, 1
        %s592 = smul.addr %s591, 8
        %s593 = scalar_lea.vmem [#allocation2], %s592
        %p594 = scmp.lt.s32.totalorder %s33, 1
        %s595 = scalar_select %p594, %s33, 1
        %s596 = smul.addr %s595, 16
        %s597 = scalar_lea.vmem %s0, %s596
        %v598 = vld [vmem:[%s597] sm:$0xff]
        %v599 = vld [vmem:[%s597 + $0x8] sm:$0xff]
        %v600 = vlaneseq
        %v601 = vand.u32 %v600, 127
        %v602 = vadd.s32 %v601, 128
        %v603 = vadd.s32 %v601, 256
        %v604 = vadd.s32 %v601, 384
        %v605 = vadd.s32 %v601, 512
        %v606 = vadd.s32 %v601, 640
        %v607 = vadd.s32 %v601, 768
        %v608 = vadd.s32 %v601, 896
        %v609 = vadd.s32 %v601, 1024
        %v610 = vadd.s32 %v601, 1152
        %v611 = vadd.s32 %v601, 1280
        %v612 = vadd.s32 %v601, 1408
        %v613 = vadd.s32 %v601, 1536
        %v614 = vadd.s32 %v601, 1664
        %v615 = vadd.s32 %v601, 1792
        %v616 = vadd.s32 %v601, 1920
        %v617 = vand.u32 %v601, 255
        %v618 = vand.u32 %v602, 255
        %v619 = vand.u32 %v603, 255
        %v620 = vand.u32 %v604, 255
        %v621 = vand.u32 %v605, 255
        %v622 = vand.u32 %v606, 255
        %v623 = vand.u32 %v607, 255
        %v624 = vand.u32 %v608, 255
        %v625 = vand.u32 %v609, 255
        %v626 = vand.u32 %v610, 255
        %v627 = vand.u32 %v611, 255
        %v628 = vand.u32 %v612, 255
        %v629 = vand.u32 %v613, 255
        %v630 = vand.u32 %v614, 255
        %v631 = vand.u32 %v615, 255
        %v632 = vand.u32 %v616, 255
        %v635 = vlaneseq
        %v636 = vshrl.u32 %v635, 7
        %v637 = vsub.s32 0, %v636
        %v638 = vrot.slane %v598, %v637
        %v639 = vlaneseq
        %v640 = vshrl.u32 %v639, 7
        %v641 = vsub.s32 1, %v640
        %v642 = vrot.slane %v598, %v641
        %v643 = vlaneseq
        %v644 = vshrl.u32 %v643, 7
        %v645 = vsub.s32 2, %v644
        %v646 = vrot.slane %v598, %v645
        %v647 = vlaneseq
        %v648 = vshrl.u32 %v647, 7
        %v649 = vsub.s32 3, %v648
        %v650 = vrot.slane %v598, %v649
        %v651 = vlaneseq
        %v652 = vshrl.u32 %v651, 7
        %v653 = vsub.s32 4, %v652
        %v654 = vrot.slane %v598, %v653
        %v655 = vlaneseq
        %v656 = vshrl.u32 %v655, 7
        %v657 = vsub.s32 5, %v656
        %v658 = vrot.slane %v598, %v657
        %v659 = vlaneseq
        %v660 = vshrl.u32 %v659, 7
        %v661 = vsub.s32 6, %v660
        %v662 = vrot.slane %v598, %v661
        %v663 = vlaneseq
        %v664 = vshrl.u32 %v663, 7
        %v665 = vsub.s32 7, %v664
        %v666 = vrot.slane %v598, %v665
        %v667 = vlaneseq
        %v668 = vshrl.u32 %v667, 7
        %v669 = vsub.s32 0, %v668
        %v670 = vrot.slane %v599, %v669
        %v671 = vlaneseq
        %v672 = vshrl.u32 %v671, 7
        %v673 = vsub.s32 1, %v672
        %v674 = vrot.slane %v599, %v673
        %v675 = vlaneseq
        %v676 = vshrl.u32 %v675, 7
        %v677 = vsub.s32 2, %v676
        %v678 = vrot.slane %v599, %v677
        %v679 = vlaneseq
        %v680 = vshrl.u32 %v679, 7
        %v681 = vsub.s32 3, %v680
        %v682 = vrot.slane %v599, %v681
        %v683 = vlaneseq
        %v684 = vshrl.u32 %v683, 7
        %v685 = vsub.s32 4, %v684
        %v686 = vrot.slane %v599, %v685
        %v687 = vlaneseq
        %v688 = vshrl.u32 %v687, 7
        %v689 = vsub.s32 5, %v688
        %v690 = vrot.slane %v599, %v689
        %v691 = vlaneseq
        %v692 = vshrl.u32 %v691, 7
        %v693 = vsub.s32 6, %v692
        %v694 = vrot.slane %v599, %v693
        %v695 = vlaneseq
        %v696 = vshrl.u32 %v695, 7
        %v697 = vsub.s32 7, %v696
        %v698 = vrot.slane %v599, %v697
        %715 = vrot.lane.b32.xlu0 %v638, 1
        %v716 = vpop.permute.xlu0 %715
        %717 = vrot.lane.b32.xlu0 %v642, 1
        %v718 = vpop.permute.xlu0 %717
        %719 = vrot.lane.b32.xlu0 %v646, 1
        %v720 = vpop.permute.xlu0 %719
        %721 = vrot.lane.b32.xlu0 %v650, 1
        %v722 = vpop.permute.xlu0 %721
        %723 = vrot.lane.b32.xlu0 %v654, 1
        %v724 = vpop.permute.xlu0 %723
        %725 = vrot.lane.b32.xlu0 %v658, 1
        %v726 = vpop.permute.xlu0 %725
        %727 = vrot.lane.b32.xlu0 %v662, 1
        %v728 = vpop.permute.xlu0 %727
        %729 = vrot.lane.b32.xlu0 %v666, 1
        %v730 = vpop.permute.xlu0 %729
        %731 = vrot.lane.b32.xlu0 %v670, 1
        %v732 = vpop.permute.xlu0 %731
        %733 = vrot.lane.b32.xlu0 %v674, 1
        %v734 = vpop.permute.xlu0 %733
        %735 = vrot.lane.b32.xlu0 %v678, 1
        %v736 = vpop.permute.xlu0 %735
        %737 = vrot.lane.b32.xlu0 %v682, 1
        %v738 = vpop.permute.xlu0 %737
        %739 = vrot.lane.b32.xlu0 %v686, 1
        %v740 = vpop.permute.xlu0 %739
        %741 = vrot.lane.b32.xlu0 %v690, 1
        %v742 = vpop.permute.xlu0 %741
        %743 = vrot.lane.b32.xlu0 %v694, 1
        %v744 = vpop.permute.xlu0 %743
        %745 = vrot.lane.b32.xlu0 %v698, 1
        %v746 = vpop.permute.xlu0 %745
        %vm747 = vcmp.lt.s32.totalorder %v601, 1
        %v748 = vsel %vm747, %v744, %v746
        %v749 = vsel %vm747, %v742, %v744
        %v750 = vsel %vm747, %v740, %v742
        %v751 = vsel %vm747, %v738, %v740
        %v752 = vsel %vm747, %v736, %v738
        %v753 = vsel %vm747, %v734, %v736
        %v754 = vsel %vm747, %v732, %v734
        %v755 = vsel %vm747, %v730, %v732
        %v756 = vsel %vm747, %v728, %v730
        %v757 = vsel %vm747, %v726, %v728
        %v758 = vsel %vm747, %v724, %v726
        %v759 = vsel %vm747, %v722, %v724
        %v760 = vsel %vm747, %v720, %v722
        %v761 = vsel %vm747, %v718, %v720
        %v762 = vsel %vm747, %v716, %v718
        %v763 = vsel %vm747, %v746, %v716
        %vm764 = vcmp.ge.s32.totalorder %v617, 1
        %vm765 = vcmp.ge.s32.totalorder %v618, 1
        %vm766 = vcmp.ge.s32.totalorder %v619, 1
        %vm767 = vcmp.ge.s32.totalorder %v620, 1
        %vm768 = vcmp.ge.s32.totalorder %v621, 1
        %vm769 = vcmp.ge.s32.totalorder %v622, 1
        %vm770 = vcmp.ge.s32.totalorder %v623, 1
        %vm771 = vcmp.ge.s32.totalorder %v624, 1
        %vm772 = vcmp.ge.s32.totalorder %v625, 1
        %vm773 = vcmp.ge.s32.totalorder %v626, 1
        %vm774 = vcmp.ge.s32.totalorder %v627, 1
        %vm775 = vcmp.ge.s32.totalorder %v628, 1
        %vm776 = vcmp.ge.s32.totalorder %v629, 1
        %vm777 = vcmp.ge.s32.totalorder %v630, 1
        %vm778 = vcmp.ge.s32.totalorder %v631, 1
        %vm779 = vcmp.ge.s32.totalorder %v632, 1
        %v780 = vsel %vm764, %v763, 0.0
        %v781 = vsel %vm765, %v762, 0.0
        %v782 = vsel %vm766, %v761, 0.0
        %v783 = vsel %vm767, %v760, 0.0
        %v784 = vsel %vm768, %v759, 0.0
        %v785 = vsel %vm769, %v758, 0.0
        %v786 = vsel %vm770, %v757, 0.0
        %v787 = vsel %vm771, %v756, 0.0
        %v788 = vsel %vm772, %v755, 0.0
        %v789 = vsel %vm773, %v754, 0.0
        %v790 = vsel %vm774, %v753, 0.0
        %v791 = vsel %vm775, %v752, 0.0
        %v792 = vsel %vm776, %v751, 0.0
        %v793 = vsel %vm777, %v750, 0.0
        %v794 = vsel %vm778, %v749, 0.0
        %v795 = vsel %vm779, %v748, 0.0
        %v796 = vld [vmem:[%s3] sm:$0xf]
        %798 = vset.pattern.permute.xlu0 0
        %799 = vperm.xlu0 %798, %v796
        %v800 = vpop.permute.xlu0 %799
        %v802 = vlaneseq
        %v803 = vshrl.u32 %v802, 7
        %v804 = vsub.s32 0, %v803
        %v805 = vrot.slane %v780, %v804
        %v806 = vlaneseq
        %v807 = vshrl.u32 %v806, 7
        %v808 = vsub.s32 0, %v807
        %v809 = vrot.slane %v781, %v808
        %v810 = vlaneseq
        %v811 = vshrl.u32 %v810, 7
        %v812 = vsub.s32 0, %v811
        %v813 = vrot.slane %v782, %v812
        %v814 = vlaneseq
        %v815 = vshrl.u32 %v814, 7
        %v816 = vsub.s32 0, %v815
        %v817 = vrot.slane %v783, %v816
        %v818 = vlaneseq
        %v819 = vshrl.u32 %v818, 7
        %v820 = vsub.s32 0, %v819
        %v821 = vrot.slane %v784, %v820
        %v822 = vlaneseq
        %v823 = vshrl.u32 %v822, 7
        %v824 = vsub.s32 0, %v823
        %v825 = vrot.slane %v785, %v824
        %v826 = vlaneseq
        %v827 = vshrl.u32 %v826, 7
        %v828 = vsub.s32 0, %v827
        %v829 = vrot.slane %v786, %v828
        %v830 = vlaneseq
        %v831 = vshrl.u32 %v830, 7
        %v832 = vsub.s32 0, %v831
        %v833 = vrot.slane %v787, %v832
        %v834 = vlaneseq
        %v835 = vshrl.u32 %v834, 7
        %v836 = vsub.s32 0, %v835
        %v837 = vrot.slane %v788, %v836
        %v838 = vlaneseq
        %v839 = vshrl.u32 %v838, 7
        %v840 = vsub.s32 0, %v839
        %v841 = vrot.slane %v789, %v840
        %v842 = vlaneseq
        %v843 = vshrl.u32 %v842, 7
        %v844 = vsub.s32 0, %v843
        %v845 = vrot.slane %v790, %v844
        %v846 = vlaneseq
        %v847 = vshrl.u32 %v846, 7
        %v848 = vsub.s32 0, %v847
        %v849 = vrot.slane %v791, %v848
        %v850 = vlaneseq
        %v851 = vshrl.u32 %v850, 7
        %v852 = vsub.s32 0, %v851
        %v853 = vrot.slane %v792, %v852
        %v854 = vlaneseq
        %v855 = vshrl.u32 %v854, 7
        %v856 = vsub.s32 0, %v855
        %v857 = vrot.slane %v793, %v856
        %v858 = vlaneseq
        %v859 = vshrl.u32 %v858, 7
        %v860 = vsub.s32 0, %v859
        %v861 = vrot.slane %v794, %v860
        %v862 = vlaneseq
        %v863 = vshrl.u32 %v862, 7
        %v864 = vsub.s32 0, %v863
        %v865 = vrot.slane %v795, %v864
        %v866 = vmul.f32 %v800, %v805
        %v867 = vmul.f32 %v800, %v809
        %v868 = vmul.f32 %v800, %v813
        %v869 = vmul.f32 %v800, %v817
        %v870 = vmul.f32 %v800, %v821
        %v871 = vmul.f32 %v800, %v825
        %v872 = vmul.f32 %v800, %v829
        %v873 = vmul.f32 %v800, %v833
        %v874 = vmul.f32 %v800, %v837
        %v875 = vmul.f32 %v800, %v841
        %v876 = vmul.f32 %v800, %v845
        %v877 = vmul.f32 %v800, %v849
        %v878 = vmul.f32 %v800, %v853
        %v879 = vmul.f32 %v800, %v857
        %v880 = vmul.f32 %v800, %v861
        %v881 = vmul.f32 %v800, %v865
        %s882 = scalar_lea.vmem %s3, 4
        %v883 = vld [vmem:[%s882] sm:$0xf]
        %885 = vset.pattern.permute.xlu0 0
        %886 = vperm.xlu0 %885, %v883
        %v887 = vpop.permute.xlu0 %886
        %v889 = vmul.f32 %v887, %v638
        %v890 = vmul.f32 %v887, %v642
        %v891 = vmul.f32 %v887, %v646
        %v892 = vmul.f32 %v887, %v650
        %v893 = vmul.f32 %v887, %v654
        %v894 = vmul.f32 %v887, %v658
        %v895 = vmul.f32 %v887, %v662
        %v896 = vmul.f32 %v887, %v666
        %v897 = vmul.f32 %v887, %v670
        %v898 = vmul.f32 %v887, %v674
        %v899 = vmul.f32 %v887, %v678
        %v900 = vmul.f32 %v887, %v682
        %v901 = vmul.f32 %v887, %v686
        %v902 = vmul.f32 %v887, %v690
        %v903 = vmul.f32 %v887, %v694
        %v904 = vmul.f32 %v887, %v698
        %v905 = vadd.f32 %v866, %v889
        %v906 = vadd.f32 %v867, %v890
        %v907 = vadd.f32 %v868, %v891
        %v908 = vadd.f32 %v869, %v892
        %v909 = vadd.f32 %v870, %v893
        %v910 = vadd.f32 %v871, %v894
        %v911 = vadd.f32 %v872, %v895
        %v912 = vadd.f32 %v873, %v896
        %v913 = vadd.f32 %v874, %v897
        %v914 = vadd.f32 %v875, %v898
        %v915 = vadd.f32 %v876, %v899
        %v916 = vadd.f32 %v877, %v900
        %v917 = vadd.f32 %v878, %v901
        %v918 = vadd.f32 %v879, %v902
        %v919 = vadd.f32 %v880, %v903
        %v920 = vadd.f32 %v881, %v904
        %921 = vrot.lane.b32.xlu0 %v638, 127
        %v922 = vpop.permute.xlu0 %921
        %923 = vrot.lane.b32.xlu0 %v642, 127
        %v924 = vpop.permute.xlu0 %923
        %925 = vrot.lane.b32.xlu0 %v646, 127
        %v926 = vpop.permute.xlu0 %925
        %927 = vrot.lane.b32.xlu0 %v650, 127
        %v928 = vpop.permute.xlu0 %927
        %929 = vrot.lane.b32.xlu0 %v654, 127
        %v930 = vpop.permute.xlu0 %929
        %931 = vrot.lane.b32.xlu0 %v658, 127
        %v932 = vpop.permute.xlu0 %931
        %933 = vrot.lane.b32.xlu0 %v662, 127
        %v934 = vpop.permute.xlu0 %933
        %935 = vrot.lane.b32.xlu0 %v666, 127
        %v936 = vpop.permute.xlu0 %935
        %937 = vrot.lane.b32.xlu0 %v670, 127
        %v938 = vpop.permute.xlu0 %937
        %939 = vrot.lane.b32.xlu0 %v674, 127
        %v940 = vpop.permute.xlu0 %939
        %941 = vrot.lane.b32.xlu0 %v678, 127
        %v942 = vpop.permute.xlu0 %941
        %943 = vrot.lane.b32.xlu0 %v682, 127
        %v944 = vpop.permute.xlu0 %943
        %945 = vrot.lane.b32.xlu0 %v686, 127
        %v946 = vpop.permute.xlu0 %945
        %947 = vrot.lane.b32.xlu0 %v690, 127
        %v948 = vpop.permute.xlu0 %947
        %949 = vrot.lane.b32.xlu0 %v694, 127
        %v950 = vpop.permute.xlu0 %949
        %951 = vrot.lane.b32.xlu0 %v698, 127
        %v952 = vpop.permute.xlu0 %951
        %vm953 = vcmp.lt.s32.totalorder %v601, 127
        %v954 = vsel %vm953, %v950, %v952
        %v955 = vsel %vm953, %v948, %v950
        %v956 = vsel %vm953, %v946, %v948
        %v957 = vsel %vm953, %v944, %v946
        %v958 = vsel %vm953, %v942, %v944
        %v959 = vsel %vm953, %v940, %v942
        %v960 = vsel %vm953, %v938, %v940
        %v961 = vsel %vm953, %v936, %v938
        %v962 = vsel %vm953, %v934, %v936
        %v963 = vsel %vm953, %v932, %v934
        %v964 = vsel %vm953, %v930, %v932
        %v965 = vsel %vm953, %v928, %v930
        %v966 = vsel %vm953, %v926, %v928
        %v967 = vsel %vm953, %v924, %v926
        %v968 = vsel %vm953, %v922, %v924
        %v969 = vsel %vm953, %v952, %v922
        %vm970 = vcmp.lt.s32.totalorder %v617, 255
        %vm971 = vcmp.lt.s32.totalorder %v618, 255
        %vm972 = vcmp.lt.s32.totalorder %v619, 255
        %vm973 = vcmp.lt.s32.totalorder %v620, 255
        %vm974 = vcmp.lt.s32.totalorder %v621, 255
        %vm975 = vcmp.lt.s32.totalorder %v622, 255
        %vm976 = vcmp.lt.s32.totalorder %v623, 255
        %vm977 = vcmp.lt.s32.totalorder %v624, 255
        %vm978 = vcmp.lt.s32.totalorder %v625, 255
        %vm979 = vcmp.lt.s32.totalorder %v626, 255
        %vm980 = vcmp.lt.s32.totalorder %v627, 255
        %vm981 = vcmp.lt.s32.totalorder %v628, 255
        %vm982 = vcmp.lt.s32.totalorder %v629, 255
        %vm983 = vcmp.lt.s32.totalorder %v630, 255
        %vm984 = vcmp.lt.s32.totalorder %v631, 255
        %vm985 = vcmp.lt.s32.totalorder %v632, 255
        %v986 = vsel %vm970, %v968, 0.0
        %v987 = vsel %vm971, %v967, 0.0
        %v988 = vsel %vm972, %v966, 0.0
        %v989 = vsel %vm973, %v965, 0.0
        %v990 = vsel %vm974, %v964, 0.0
        %v991 = vsel %vm975, %v963, 0.0
        %v992 = vsel %vm976, %v962, 0.0
        %v993 = vsel %vm977, %v961, 0.0
        %v994 = vsel %vm978, %v960, 0.0
        %v995 = vsel %vm979, %v959, 0.0
        %v996 = vsel %vm980, %v958, 0.0
        %v997 = vsel %vm981, %v957, 0.0
        %v998 = vsel %vm982, %v956, 0.0
        %v999 = vsel %vm983, %v955, 0.0
        %v1000 = vsel %vm984, %v954, 0.0
        %v1001 = vsel %vm985, %v969, 0.0
        %s1002 = scalar_lea.vmem %s3, 8
        %v1003 = vld [vmem:[%s1002] sm:$0xf]
        %1005 = vset.pattern.permute.xlu0 0
        %1006 = vperm.xlu0 %1005, %v1003
        %v1007 = vpop.permute.xlu0 %1006
        %v1009 = vlaneseq
        %v1010 = vshrl.u32 %v1009, 7
        %v1011 = vsub.s32 0, %v1010
        %v1012 = vrot.slane %v986, %v1011
        %v1013 = vlaneseq
        %v1014 = vshrl.u32 %v1013, 7
        %v1015 = vsub.s32 0, %v1014
        %v1016 = vrot.slane %v987, %v1015
        %v1017 = vlaneseq
        %v1018 = vshrl.u32 %v1017, 7
        %v1019 = vsub.s32 0, %v1018
        %v1020 = vrot.slane %v988, %v1019
        %v1021 = vlaneseq
        %v1022 = vshrl.u32 %v1021, 7
        %v1023 = vsub.s32 0, %v1022
        %v1024 = vrot.slane %v989, %v1023
        %v1025 = vlaneseq
        %v1026 = vshrl.u32 %v1025, 7
        %v1027 = vsub.s32 0, %v1026
        %v1028 = vrot.slane %v990, %v1027
        %v1029 = vlaneseq
        %v1030 = vshrl.u32 %v1029, 7
        %v1031 = vsub.s32 0, %v1030
        %v1032 = vrot.slane %v991, %v1031
        %v1033 = vlaneseq
        %v1034 = vshrl.u32 %v1033, 7
        %v1035 = vsub.s32 0, %v1034
        %v1036 = vrot.slane %v992, %v1035
        %v1037 = vlaneseq
        %v1038 = vshrl.u32 %v1037, 7
        %v1039 = vsub.s32 0, %v1038
        %v1040 = vrot.slane %v993, %v1039
        %v1041 = vlaneseq
        %v1042 = vshrl.u32 %v1041, 7
        %v1043 = vsub.s32 0, %v1042
        %v1044 = vrot.slane %v994, %v1043
        %v1045 = vlaneseq
        %v1046 = vshrl.u32 %v1045, 7
        %v1047 = vsub.s32 0, %v1046
        %v1048 = vrot.slane %v995, %v1047
        %v1049 = vlaneseq
        %v1050 = vshrl.u32 %v1049, 7
        %v1051 = vsub.s32 0, %v1050
        %v1052 = vrot.slane %v996, %v1051
        %v1053 = vlaneseq
        %v1054 = vshrl.u32 %v1053, 7
        %v1055 = vsub.s32 0, %v1054
        %v1056 = vrot.slane %v997, %v1055
        %v1057 = vlaneseq
        %v1058 = vshrl.u32 %v1057, 7
        %v1059 = vsub.s32 0, %v1058
        %v1060 = vrot.slane %v998, %v1059
        %v1061 = vlaneseq
        %v1062 = vshrl.u32 %v1061, 7
        %v1063 = vsub.s32 0, %v1062
        %v1064 = vrot.slane %v999, %v1063
        %v1065 = vlaneseq
        %v1066 = vshrl.u32 %v1065, 7
        %v1067 = vsub.s32 0, %v1066
        %v1068 = vrot.slane %v1000, %v1067
        %v1069 = vlaneseq
        %v1070 = vshrl.u32 %v1069, 7
        %v1071 = vsub.s32 0, %v1070
        %v1072 = vrot.slane %v1001, %v1071
        %v1073 = vmul.f32 %v1007, %v1012
        %v1074 = vmul.f32 %v1007, %v1016
        %v1075 = vmul.f32 %v1007, %v1020
        %v1076 = vmul.f32 %v1007, %v1024
        %v1077 = vmul.f32 %v1007, %v1028
        %v1078 = vmul.f32 %v1007, %v1032
        %v1079 = vmul.f32 %v1007, %v1036
        %v1080 = vmul.f32 %v1007, %v1040
        %v1081 = vmul.f32 %v1007, %v1044
        %v1082 = vmul.f32 %v1007, %v1048
        %v1083 = vmul.f32 %v1007, %v1052
        %v1084 = vmul.f32 %v1007, %v1056
        %v1085 = vmul.f32 %v1007, %v1060
        %v1086 = vmul.f32 %v1007, %v1064
        %v1087 = vmul.f32 %v1007, %v1068
        %v1088 = vmul.f32 %v1007, %v1072
        %v1089 = vadd.f32 %v905, %v1073
        %v1090 = vadd.f32 %v906, %v1074
        %v1091 = vadd.f32 %v907, %v1075
        %v1092 = vadd.f32 %v908, %v1076
        %v1093 = vadd.f32 %v909, %v1077
        %v1094 = vadd.f32 %v910, %v1078
        %v1095 = vadd.f32 %v911, %v1079
        %v1096 = vadd.f32 %v912, %v1080
        %v1097 = vadd.f32 %v913, %v1081
        %v1098 = vadd.f32 %v914, %v1082
        %v1099 = vadd.f32 %v915, %v1083
        %v1100 = vadd.f32 %v916, %v1084
        %v1101 = vadd.f32 %v917, %v1085
        %v1102 = vadd.f32 %v918, %v1086
        %v1103 = vadd.f32 %v919, %v1087
        %v1104 = vadd.f32 %v920, %v1088
        %v1105 = vld [vmem:[%s4] sm:$0xf]
        %1107 = vset.pattern.permute.xlu0 0
        %1108 = vperm.xlu0 %1107, %v1105
        %v1109 = vpop.permute.xlu0 %1108
        %v1111 = vadd.f32 %v1089, %v1109
        %v1112 = vadd.f32 %v1090, %v1109
        %v1113 = vadd.f32 %v1091, %v1109
        %v1114 = vadd.f32 %v1092, %v1109
        %v1115 = vadd.f32 %v1093, %v1109
        %v1116 = vadd.f32 %v1094, %v1109
        %v1117 = vadd.f32 %v1095, %v1109
        %v1118 = vadd.f32 %v1096, %v1109
        %v1119 = vadd.f32 %v1097, %v1109
        %v1120 = vadd.f32 %v1098, %v1109
        %v1121 = vadd.f32 %v1099, %v1109
        %v1122 = vadd.f32 %v1100, %v1109
        %v1123 = vadd.f32 %v1101, %v1109
        %v1124 = vadd.f32 %v1102, %v1109
        %v1125 = vadd.f32 %v1103, %v1109
        %v1126 = vadd.f32 %v1104, %v1109
        %v1127 = vmax.f32 %v1111, 0.0
        %v1128 = vmax.f32 %v1112, 0.0
        %v1129 = vmax.f32 %v1113, 0.0
        %v1130 = vmax.f32 %v1114, 0.0
        %v1131 = vmax.f32 %v1115, 0.0
        %v1132 = vmax.f32 %v1116, 0.0
        %v1133 = vmax.f32 %v1117, 0.0
        %v1134 = vmax.f32 %v1118, 0.0
        %v1135 = vmax.f32 %v1119, 0.0
        %v1136 = vmax.f32 %v1120, 0.0
        %v1137 = vmax.f32 %v1121, 0.0
        %v1138 = vmax.f32 %v1122, 0.0
        %v1139 = vmax.f32 %v1123, 0.0
        %v1140 = vmax.f32 %v1124, 0.0
        %v1141 = vmax.f32 %v1125, 0.0
        %v1142 = vmax.f32 %v1126, 0.0
        %v1143 = vld [vmem:[%s1] sm:$0xff]
        %v1144 = vld [vmem:[%s1 + $0x8] sm:$0xff]
        %v1145 = vld [vmem:[%s1 + $0x10] sm:$0xff]
        %v1146 = vld [vmem:[%s1 + $0x18] sm:$0xff]
        %v1147 = vld [vmem:[%s1 + $0x20] sm:$0xff]
        %v1148 = vld [vmem:[%s1 + $0x28] sm:$0xff]
        %v1149 = vld [vmem:[%s1 + $0x30] sm:$0xff]
        %v1150 = vld [vmem:[%s1 + $0x38] sm:$0xff]
        %v1151 = vld [vmem:[%s1 + $0x40] sm:$0xff]
        %v1152 = vld [vmem:[%s1 + $0x48] sm:$0xff]
        %v1153 = vld [vmem:[%s1 + $0x50] sm:$0xff]
        %v1154 = vld [vmem:[%s1 + $0x58] sm:$0xff]
        %v1155 = vld [vmem:[%s1 + $0x60] sm:$0xff]
        %v1156 = vld [vmem:[%s1 + $0x68] sm:$0xff]
        %v1157 = vld [vmem:[%s1 + $0x70] sm:$0xff]
        %v1158 = vld [vmem:[%s1 + $0x78] sm:$0xff]
        %v1159 = vld [vmem:[%s1 + $0x80] sm:$0xff]
        %v1160 = vld [vmem:[%s1 + $0x88] sm:$0xff]
        %v1161 = vld [vmem:[%s1 + $0x90] sm:$0xff]
        %v1162 = vld [vmem:[%s1 + $0x98] sm:$0xff]
        %v1163 = vld [vmem:[%s1 + $0xa0] sm:$0xff]
        %v1164 = vld [vmem:[%s1 + $0xa8] sm:$0xff]
        %v1165 = vld [vmem:[%s1 + $0xb0] sm:$0xff]
        %v1166 = vld [vmem:[%s1 + $0xb8] sm:$0xff]
        %v1167 = vld [vmem:[%s1 + $0xc0] sm:$0xff]
        %v1168 = vld [vmem:[%s1 + $0xc8] sm:$0xff]
        %v1169 = vld [vmem:[%s1 + $0xd0] sm:$0xff]
        %v1170 = vld [vmem:[%s1 + $0xd8] sm:$0xff]
        %v1171 = vld [vmem:[%s1 + $0xe0] sm:$0xff]
        %v1172 = vld [vmem:[%s1 + $0xe8] sm:$0xff]
        %v1173 = vld [vmem:[%s1 + $0xf0] sm:$0xff]
        %v1174 = vld [vmem:[%s1 + $0xf8] sm:$0xff]
        %1175 = vmatprep.subr.mxu0 0.0
        %1176 = vmatpush1.msra.mxu0 %v1143
        %1177 = vmatprep.subr.mxu0 0.0
        %1178 = vmatpush1.msra.mxu0 %v1144
        %1179 = vmatprep.subr.mxu0 0.0
        %1180 = vmatpush1.msra.mxu0 %v1145
        %1181 = vmatprep.subr.mxu0 0.0
        %1182 = vmatpush1.msra.mxu0 %v1146
        %1183 = vmatprep.subr.mxu0 0.0
        %1184 = vmatpush1.msra.mxu0 %v1147
        %1185 = vmatprep.subr.mxu0 0.0
        %1186 = vmatpush1.msra.mxu0 %v1148
        %1187 = vmatprep.subr.mxu0 0.0
        %1188 = vmatpush1.msra.mxu0 %v1149
        %1189 = vmatprep.subr.mxu0 0.0
        %1190 = vmatpush1.msra.mxu0 %v1150
        %1191 = vmatprep.subr.mxu0 0.0
        %1192 = vmatpush1.msra.mxu0 %v1151
        %1193 = vmatprep.subr.mxu0 0.0
        %1194 = vmatpush1.msra.mxu0 %v1152
        %1195 = vmatprep.subr.mxu0 0.0
        %1196 = vmatpush1.msra.mxu0 %v1153
        %1197 = vmatprep.subr.mxu0 0.0
        %1198 = vmatpush1.msra.mxu0 %v1154
        %1199 = vmatprep.subr.mxu0 0.0
        %1200 = vmatpush1.msra.mxu0 %v1155
        %1201 = vmatprep.subr.mxu0 0.0
        %1202 = vmatpush1.msra.mxu0 %v1156
        %1203 = vmatprep.subr.mxu0 0.0
        %1204 = vmatpush1.msra.mxu0 %v1157
        %1205 = vmatprep.subr.mxu0 0.0
        %1206 = vmatpush1.msra.mxu0 %v1158
        %1207 = vmatprep.subr.mxu0 0.0
        %1208 = vmatpush1.msra.mxu0 %v1159
        %1209 = vmatprep.subr.mxu0 0.0
        %1210 = vmatpush1.msra.mxu0 %v1160
        %1211 = vmatprep.subr.mxu0 0.0
        %1212 = vmatpush1.msra.mxu0 %v1161
        %1213 = vmatprep.subr.mxu0 0.0
        %1214 = vmatpush1.msra.mxu0 %v1162
        %1215 = vmatprep.subr.mxu0 0.0
        %1216 = vmatpush1.msra.mxu0 %v1163
        %1217 = vmatprep.subr.mxu0 0.0
        %1218 = vmatpush1.msra.mxu0 %v1164
        %1219 = vmatprep.subr.mxu0 0.0
        %1220 = vmatpush1.msra.mxu0 %v1165
        %1221 = vmatprep.subr.mxu0 0.0
        %1222 = vmatpush1.msra.mxu0 %v1166
        %1223 = vmatprep.subr.mxu0 0.0
        %1224 = vmatpush1.msra.mxu0 %v1167
        %1225 = vmatprep.subr.mxu0 0.0
        %1226 = vmatpush1.msra.mxu0 %v1168
        %1227 = vmatprep.subr.mxu0 0.0
        %1228 = vmatpush1.msra.mxu0 %v1169
        %1229 = vmatprep.subr.mxu0 0.0
        %1230 = vmatpush1.msra.mxu0 %v1170
        %1231 = vmatprep.subr.mxu0 0.0
        %1232 = vmatpush1.msra.mxu0 %v1171
        %1233 = vmatprep.subr.mxu0 0.0
        %1234 = vmatpush1.msra.mxu0 %v1172
        %1235 = vmatprep.subr.mxu0 0.0
        %1236 = vmatpush1.msra.mxu0 %v1173
        %1237 = vmatprep.subr.mxu0 0.0
        %1238 = vmatpush1.msra.mxu0 %v1174
        %1239 = vmatprep.mubr.f32.mxu0 %v1128
        %1240 = vmatmul.mubr.f32.gmra.mrb[0].mxu0 %v1127
        %v1241 = vpop.f32.mrb[0].mxu0
        %v1242 = vadd.f32 0.0, %v1241
        %v1243 = vpop.f32.mrb[0].mxu0
        %1244 = vdwg.mxu0
        %1245 = vmatprep.subr.mxu0 0.0
        %1246 = vmatpush1.msra.mxu0 %v1143
        %1247 = vmatprep.subr.mxu0 0.0
        %1248 = vmatpush1.msra.mxu0 %v1144
        %1249 = vmatprep.subr.mxu0 0.0
        %1250 = vmatpush1.msra.mxu0 %v1145
        %1251 = vmatprep.subr.mxu0 0.0
        %1252 = vmatpush1.msra.mxu0 %v1146
        %1253 = vmatprep.subr.mxu0 0.0
        %1254 = vmatpush1.msra.mxu0 %v1147
        %1255 = vmatprep.subr.mxu0 0.0
        %1256 = vmatpush1.msra.mxu0 %v1148
        %1257 = vmatprep.subr.mxu0 0.0
        %1258 = vmatpush1.msra.mxu0 %v1149
        %1259 = vmatprep.subr.mxu0 0.0
        %1260 = vmatpush1.msra.mxu0 %v1150
        %1261 = vmatprep.subr.mxu0 0.0
        %1262 = vmatpush1.msra.mxu0 %v1151
        %1263 = vmatprep.subr.mxu0 0.0
        %1264 = vmatpush1.msra.mxu0 %v1152
        %1265 = vmatprep.subr.mxu0 0.0
        %1266 = vmatpush1.msra.mxu0 %v1153
        %1267 = vmatprep.subr.mxu0 0.0
        %1268 = vmatpush1.msra.mxu0 %v1154
        %1269 = vmatprep.subr.mxu0 0.0
        %1270 = vmatpush1.msra.mxu0 %v1155
        %1271 = vmatprep.subr.mxu0 0.0
        %1272 = vmatpush1.msra.mxu0 %v1156
        %1273 = vmatprep.subr.mxu0 0.0
        %1274 = vmatpush1.msra.mxu0 %v1157
        %1275 = vmatprep.subr.mxu0 0.0
        %1276 = vmatpush1.msra.mxu0 %v1158
        %1277 = vmatprep.subr.mxu0 0.0
        %1278 = vmatpush1.msra.mxu0 %v1159
        %1279 = vmatprep.subr.mxu0 0.0
        %1280 = vmatpush1.msra.mxu0 %v1160
        %1281 = vmatprep.subr.mxu0 0.0
        %1282 = vmatpush1.msra.mxu0 %v1161
        %1283 = vmatprep.subr.mxu0 0.0
        %1284 = vmatpush1.msra.mxu0 %v1162
        %1285 = vmatprep.subr.mxu0 0.0
        %1286 = vmatpush1.msra.mxu0 %v1163
        %1287 = vmatprep.subr.mxu0 0.0
        %1288 = vmatpush1.msra.mxu0 %v1164
        %1289 = vmatprep.subr.mxu0 0.0
        %1290 = vmatpush1.msra.mxu0 %v1165
        %1291 = vmatprep.subr.mxu0 0.0
        %1292 = vmatpush1.msra.mxu0 %v1166
        %1293 = vmatprep.subr.mxu0 0.0
        %1294 = vmatpush1.msra.mxu0 %v1167
        %1295 = vmatprep.subr.mxu0 0.0
        %1296 = vmatpush1.msra.mxu0 %v1168
        %1297 = vmatprep.subr.mxu0 0.0
        %1298 = vmatpush1.msra.mxu0 %v1169
        %1299 = vmatprep.subr.mxu0 0.0
        %1300 = vmatpush1.msra.mxu0 %v1170
        %1301 = vmatprep.subr.mxu0 0.0
        %1302 = vmatpush1.msra.mxu0 %v1171
        %1303 = vmatprep.subr.mxu0 0.0
        %1304 = vmatpush1.msra.mxu0 %v1172
        %1305 = vmatprep.subr.mxu0 0.0
        %1306 = vmatpush1.msra.mxu0 %v1173
        %1307 = vmatprep.subr.mxu0 0.0
        %1308 = vmatpush1.msra.mxu0 %v1174
        %1309 = vmatprep.mubr.f32.mxu0 %v1130
        %1310 = vmatmul.mubr.f32.gmra.mrb[0].mxu0 %v1129
        %v1311 = vpop.f32.mrb[0].mxu0
        %v1312 = vadd.f32 0.0, %v1311
        %v1313 = vpop.f32.mrb[0].mxu0
        %1314 = vdwg.mxu0
        %1315 = vmatprep.subr.mxu0 0.0
        %1316 = vmatpush1.msra.mxu0 %v1143
        %1317 = vmatprep.subr.mxu0 0.0
        %1318 = vmatpush1.msra.mxu0 %v1144
        %1319 = vmatprep.subr.mxu0 0.0
        %1320 = vmatpush1.msra.mxu0 %v1145
        %1321 = vmatprep.subr.mxu0 0.0
        %1322 = vmatpush1.msra.mxu0 %v1146
        %1323 = vmatprep.subr.mxu0 0.0
        %1324 = vmatpush1.msra.mxu0 %v1147
        %1325 = vmatprep.subr.mxu0 0.0
        %1326 = vmatpush1.msra.mxu0 %v1148
        %1327 = vmatprep.subr.mxu0 0.0
        %1328 = vmatpush1.msra.mxu0 %v1149
        %1329 = vmatprep.subr.mxu0 0.0
        %1330 = vmatpush1.msra.mxu0 %v1150
        %1331 = vmatprep.subr.mxu0 0.0
        %1332 = vmatpush1.msra.mxu0 %v1151
        %1333 = vmatprep.subr.mxu0 0.0
        %1334 = vmatpush1.msra.mxu0 %v1152
        %1335 = vmatprep.subr.mxu0 0.0
        %1336 = vmatpush1.msra.mxu0 %v1153
        %1337 = vmatprep.subr.mxu0 0.0
        %1338 = vmatpush1.msra.mxu0 %v1154
        %1339 = vmatprep.subr.mxu0 0.0
        %1340 = vmatpush1.msra.mxu0 %v1155
        %1341 = vmatprep.subr.mxu0 0.0
        %1342 = vmatpush1.msra.mxu0 %v1156
        %1343 = vmatprep.subr.mxu0 0.0
        %1344 = vmatpush1.msra.mxu0 %v1157
        %1345 = vmatprep.subr.mxu0 0.0
        %1346 = vmatpush1.msra.mxu0 %v1158
        %1347 = vmatprep.subr.mxu0 0.0
        %1348 = vmatpush1.msra.mxu0 %v1159
        %1349 = vmatprep.subr.mxu0 0.0
        %1350 = vmatpush1.msra.mxu0 %v1160
        %1351 = vmatprep.subr.mxu0 0.0
        %1352 = vmatpush1.msra.mxu0 %v1161
        %1353 = vmatprep.subr.mxu0 0.0
        %1354 = vmatpush1.msra.mxu0 %v1162
        %1355 = vmatprep.subr.mxu0 0.0
        %1356 = vmatpush1.msra.mxu0 %v1163
        %1357 = vmatprep.subr.mxu0 0.0
        %1358 = vmatpush1.msra.mxu0 %v1164
        %1359 = vmatprep.subr.mxu0 0.0
        %1360 = vmatpush1.msra.mxu0 %v1165
        %1361 = vmatprep.subr.mxu0 0.0
        %1362 = vmatpush1.msra.mxu0 %v1166
        %1363 = vmatprep.subr.mxu0 0.0
        %1364 = vmatpush1.msra.mxu0 %v1167
        %1365 = vmatprep.subr.mxu0 0.0
        %1366 = vmatpush1.msra.mxu0 %v1168
        %1367 = vmatprep.subr.mxu0 0.0
        %1368 = vmatpush1.msra.mxu0 %v1169
        %1369 = vmatprep.subr.mxu0 0.0
        %1370 = vmatpush1.msra.mxu0 %v1170
        %1371 = vmatprep.subr.mxu0 0.0
        %1372 = vmatpush1.msra.mxu0 %v1171
        %1373 = vmatprep.subr.mxu0 0.0
        %1374 = vmatpush1.msra.mxu0 %v1172
        %1375 = vmatprep.subr.mxu0 0.0
        %1376 = vmatpush1.msra.mxu0 %v1173
        %1377 = vmatprep.subr.mxu0 0.0
        %1378 = vmatpush1.msra.mxu0 %v1174
        %1379 = vmatprep.mubr.f32.mxu0 %v1132
        %1380 = vmatmul.mubr.f32.gmra.mrb[0].mxu0 %v1131
        %v1381 = vpop.f32.mrb[0].mxu0
        %v1382 = vadd.f32 0.0, %v1381
        %v1383 = vpop.f32.mrb[0].mxu0
        %1384 = vdwg.mxu0
        %1385 = vmatprep.subr.mxu0 0.0
        %1386 = vmatpush1.msra.mxu0 %v1143
        %1387 = vmatprep.subr.mxu0 0.0
        %1388 = vmatpush1.msra.mxu0 %v1144
        %1389 = vmatprep.subr.mxu0 0.0
        %1390 = vmatpush1.msra.mxu0 %v1145
        %1391 = vmatprep.subr.mxu0 0.0
        %1392 = vmatpush1.msra.mxu0 %v1146
        %1393 = vmatprep.subr.mxu0 0.0
        %1394 = vmatpush1.msra.mxu0 %v1147
        %1395 = vmatprep.subr.mxu0 0.0
        %1396 = vmatpush1.msra.mxu0 %v1148
        %1397 = vmatprep.subr.mxu0 0.0
        %1398 = vmatpush1.msra.mxu0 %v1149
        %1399 = vmatprep.subr.mxu0 0.0
        %1400 = vmatpush1.msra.mxu0 %v1150
        %1401 = vmatprep.subr.mxu0 0.0
        %1402 = vmatpush1.msra.mxu0 %v1151
        %1403 = vmatprep.subr.mxu0 0.0
        %1404 = vmatpush1.msra.mxu0 %v1152
        %1405 = vmatprep.subr.mxu0 0.0
        %1406 = vmatpush1.msra.mxu0 %v1153
        %1407 = vmatprep.subr.mxu0 0.0
        %1408 = vmatpush1.msra.mxu0 %v1154
        %1409 = vmatprep.subr.mxu0 0.0
        %1410 = vmatpush1.msra.mxu0 %v1155
        %1411 = vmatprep.subr.mxu0 0.0
        %1412 = vmatpush1.msra.mxu0 %v1156
        %1413 = vmatprep.subr.mxu0 0.0
        %1414 = vmatpush1.msra.mxu0 %v1157
        %1415 = vmatprep.subr.mxu0 0.0
        %1416 = vmatpush1.msra.mxu0 %v1158
        %1417 = vmatprep.subr.mxu0 0.0
        %1418 = vmatpush1.msra.mxu0 %v1159
        %1419 = vmatprep.subr.mxu0 0.0
        %1420 = vmatpush1.msra.mxu0 %v1160
        %1421 = vmatprep.subr.mxu0 0.0
        %1422 = vmatpush1.msra.mxu0 %v1161
        %1423 = vmatprep.subr.mxu0 0.0
        %1424 = vmatpush1.msra.mxu0 %v1162
        %1425 = vmatprep.subr.mxu0 0.0
        %1426 = vmatpush1.msra.mxu0 %v1163
        %1427 = vmatprep.subr.mxu0 0.0
        %1428 = vmatpush1.msra.mxu0 %v1164
        %1429 = vmatprep.subr.mxu0 0.0
        %1430 = vmatpush1.msra.mxu0 %v1165
        %1431 = vmatprep.subr.mxu0 0.0
        %1432 = vmatpush1.msra.mxu0 %v1166
        %1433 = vmatprep.subr.mxu0 0.0
        %1434 = vmatpush1.msra.mxu0 %v1167
        %1435 = vmatprep.subr.mxu0 0.0
        %1436 = vmatpush1.msra.mxu0 %v1168
        %1437 = vmatprep.subr.mxu0 0.0
        %1438 = vmatpush1.msra.mxu0 %v1169
        %1439 = vmatprep.subr.mxu0 0.0
        %1440 = vmatpush1.msra.mxu0 %v1170
        %1441 = vmatprep.subr.mxu0 0.0
        %1442 = vmatpush1.msra.mxu0 %v1171
        %1443 = vmatprep.subr.mxu0 0.0
        %1444 = vmatpush1.msra.mxu0 %v1172
        %1445 = vmatprep.subr.mxu0 0.0
        %1446 = vmatpush1.msra.mxu0 %v1173
        %1447 = vmatprep.subr.mxu0 0.0
        %1448 = vmatpush1.msra.mxu0 %v1174
        %1449 = vmatprep.mubr.f32.mxu0 %v1134
        %1450 = vmatmul.mubr.f32.gmra.mrb[0].mxu0 %v1133
        %v1451 = vpop.f32.mrb[0].mxu0
        %v1452 = vadd.f32 0.0, %v1451
        %v1453 = vpop.f32.mrb[0].mxu0
        %1454 = vdwg.mxu0
        %1455 = vmatprep.subr.mxu0 0.0
        %1456 = vmatpush1.msra.mxu0 %v1143
        %1457 = vmatprep.subr.mxu0 0.0
        %1458 = vmatpush1.msra.mxu0 %v1144
        %1459 = vmatprep.subr.mxu0 0.0
        %1460 = vmatpush1.msra.mxu0 %v1145
        %1461 = vmatprep.subr.mxu0 0.0
        %1462 = vmatpush1.msra.mxu0 %v1146
        %1463 = vmatprep.subr.mxu0 0.0
        %1464 = vmatpush1.msra.mxu0 %v1147
        %1465 = vmatprep.subr.mxu0 0.0
        %1466 = vmatpush1.msra.mxu0 %v1148
        %1467 = vmatprep.subr.mxu0 0.0
        %1468 = vmatpush1.msra.mxu0 %v1149
        %1469 = vmatprep.subr.mxu0 0.0
        %1470 = vmatpush1.msra.mxu0 %v1150
        %1471 = vmatprep.subr.mxu0 0.0
        %1472 = vmatpush1.msra.mxu0 %v1151
        %1473 = vmatprep.subr.mxu0 0.0
        %1474 = vmatpush1.msra.mxu0 %v1152
        %1475 = vmatprep.subr.mxu0 0.0
        %1476 = vmatpush1.msra.mxu0 %v1153
        %1477 = vmatprep.subr.mxu0 0.0
        %1478 = vmatpush1.msra.mxu0 %v1154
        %1479 = vmatprep.subr.mxu0 0.0
        %1480 = vmatpush1.msra.mxu0 %v1155
        %1481 = vmatprep.subr.mxu0 0.0
        %1482 = vmatpush1.msra.mxu0 %v1156
        %1483 = vmatprep.subr.mxu0 0.0
        %1484 = vmatpush1.msra.mxu0 %v1157
        %1485 = vmatprep.subr.mxu0 0.0
        %1486 = vmatpush1.msra.mxu0 %v1158
        %1487 = vmatprep.subr.mxu0 0.0
        %1488 = vmatpush1.msra.mxu0 %v1159
        %1489 = vmatprep.subr.mxu0 0.0
        %1490 = vmatpush1.msra.mxu0 %v1160
        %1491 = vmatprep.subr.mxu0 0.0
        %1492 = vmatpush1.msra.mxu0 %v1161
        %1493 = vmatprep.subr.mxu0 0.0
        %1494 = vmatpush1.msra.mxu0 %v1162
        %1495 = vmatprep.subr.mxu0 0.0
        %1496 = vmatpush1.msra.mxu0 %v1163
        %1497 = vmatprep.subr.mxu0 0.0
        %1498 = vmatpush1.msra.mxu0 %v1164
        %1499 = vmatprep.subr.mxu0 0.0
        %1500 = vmatpush1.msra.mxu0 %v1165
        %1501 = vmatprep.subr.mxu0 0.0
        %1502 = vmatpush1.msra.mxu0 %v1166
        %1503 = vmatprep.subr.mxu0 0.0
        %1504 = vmatpush1.msra.mxu0 %v1167
        %1505 = vmatprep.subr.mxu0 0.0
        %1506 = vmatpush1.msra.mxu0 %v1168
        %1507 = vmatprep.subr.mxu0 0.0
        %1508 = vmatpush1.msra.mxu0 %v1169
        %1509 = vmatprep.subr.mxu0 0.0
        %1510 = vmatpush1.msra.mxu0 %v1170
        %1511 = vmatprep.subr.mxu0 0.0
        %1512 = vmatpush1.msra.mxu0 %v1171
        %1513 = vmatprep.subr.mxu0 0.0
        %1514 = vmatpush1.msra.mxu0 %v1172
        %1515 = vmatprep.subr.mxu0 0.0
        %1516 = vmatpush1.msra.mxu0 %v1173
        %1517 = vmatprep.subr.mxu0 0.0
        %1518 = vmatpush1.msra.mxu0 %v1174
        %1519 = vmatprep.mubr.f32.mxu0 %v1136
        %1520 = vmatmul.mubr.f32.gmra.mrb[0].mxu0 %v1135
        %v1521 = vpop.f32.mrb[0].mxu0
        %v1522 = vadd.f32 0.0, %v1521
        %v1523 = vpop.f32.mrb[0].mxu0
        %1524 = vdwg.mxu0
        %1525 = vmatprep.subr.mxu0 0.0
        %1526 = vmatpush1.msra.mxu0 %v1143
        %1527 = vmatprep.subr.mxu0 0.0
        %1528 = vmatpush1.msra.mxu0 %v1144
        %1529 = vmatprep.subr.mxu0 0.0
        %1530 = vmatpush1.msra.mxu0 %v1145
        %1531 = vmatprep.subr.mxu0 0.0
        %1532 = vmatpush1.msra.mxu0 %v1146
        %1533 = vmatprep.subr.mxu0 0.0
        %1534 = vmatpush1.msra.mxu0 %v1147
        %1535 = vmatprep.subr.mxu0 0.0
        %1536 = vmatpush1.msra.mxu0 %v1148
        %1537 = vmatprep.subr.mxu0 0.0
        %1538 = vmatpush1.msra.mxu0 %v1149
        %1539 = vmatprep.subr.mxu0 0.0
        %1540 = vmatpush1.msra.mxu0 %v1150
        %1541 = vmatprep.subr.mxu0 0.0
        %1542 = vmatpush1.msra.mxu0 %v1151
        %1543 = vmatprep.subr.mxu0 0.0
        %1544 = vmatpush1.msra.mxu0 %v1152
        %1545 = vmatprep.subr.mxu0 0.0
        %1546 = vmatpush1.msra.mxu0 %v1153
        %1547 = vmatprep.subr.mxu0 0.0
        %1548 = vmatpush1.msra.mxu0 %v1154
        %1549 = vmatprep.subr.mxu0 0.0
        %1550 = vmatpush1.msra.mxu0 %v1155
        %1551 = vmatprep.subr.mxu0 0.0
        %1552 = vmatpush1.msra.mxu0 %v1156
        %1553 = vmatprep.subr.mxu0 0.0
        %1554 = vmatpush1.msra.mxu0 %v1157
        %1555 = vmatprep.subr.mxu0 0.0
        %1556 = vmatpush1.msra.mxu0 %v1158
        %1557 = vmatprep.subr.mxu0 0.0
        %1558 = vmatpush1.msra.mxu0 %v1159
        %1559 = vmatprep.subr.mxu0 0.0
        %1560 = vmatpush1.msra.mxu0 %v1160
        %1561 = vmatprep.subr.mxu0 0.0
        %1562 = vmatpush1.msra.mxu0 %v1161
        %1563 = vmatprep.subr.mxu0 0.0
        %1564 = vmatpush1.msra.mxu0 %v1162
        %1565 = vmatprep.subr.mxu0 0.0
        %1566 = vmatpush1.msra.mxu0 %v1163
        %1567 = vmatprep.subr.mxu0 0.0
        %1568 = vmatpush1.msra.mxu0 %v1164
        %1569 = vmatprep.subr.mxu0 0.0
        %1570 = vmatpush1.msra.mxu0 %v1165
        %1571 = vmatprep.subr.mxu0 0.0
        %1572 = vmatpush1.msra.mxu0 %v1166
        %1573 = vmatprep.subr.mxu0 0.0
        %1574 = vmatpush1.msra.mxu0 %v1167
        %1575 = vmatprep.subr.mxu0 0.0
        %1576 = vmatpush1.msra.mxu0 %v1168
        %1577 = vmatprep.subr.mxu0 0.0
        %1578 = vmatpush1.msra.mxu0 %v1169
        %1579 = vmatprep.subr.mxu0 0.0
        %1580 = vmatpush1.msra.mxu0 %v1170
        %1581 = vmatprep.subr.mxu0 0.0
        %1582 = vmatpush1.msra.mxu0 %v1171
        %1583 = vmatprep.subr.mxu0 0.0
        %1584 = vmatpush1.msra.mxu0 %v1172
        %1585 = vmatprep.subr.mxu0 0.0
        %1586 = vmatpush1.msra.mxu0 %v1173
        %1587 = vmatprep.subr.mxu0 0.0
        %1588 = vmatpush1.msra.mxu0 %v1174
        %1589 = vmatprep.mubr.f32.mxu0 %v1138
        %1590 = vmatmul.mubr.f32.gmra.mrb[0].mxu0 %v1137
        %v1591 = vpop.f32.mrb[0].mxu0
        %v1592 = vadd.f32 0.0, %v1591
        %v1593 = vpop.f32.mrb[0].mxu0
        %1594 = vdwg.mxu0
        %1595 = vmatprep.subr.mxu0 0.0
        %1596 = vmatpush1.msra.mxu0 %v1143
        %1597 = vmatprep.subr.mxu0 0.0
        %1598 = vmatpush1.msra.mxu0 %v1144
        %1599 = vmatprep.subr.mxu0 0.0
        %1600 = vmatpush1.msra.mxu0 %v1145
        %1601 = vmatprep.subr.mxu0 0.0
        %1602 = vmatpush1.msra.mxu0 %v1146
        %1603 = vmatprep.subr.mxu0 0.0
        %1604 = vmatpush1.msra.mxu0 %v1147
        %1605 = vmatprep.subr.mxu0 0.0
        %1606 = vmatpush1.msra.mxu0 %v1148
        %1607 = vmatprep.subr.mxu0 0.0
        %1608 = vmatpush1.msra.mxu0 %v1149
        %1609 = vmatprep.subr.mxu0 0.0
        %1610 = vmatpush1.msra.mxu0 %v1150
        %1611 = vmatprep.subr.mxu0 0.0
        %1612 = vmatpush1.msra.mxu0 %v1151
        %1613 = vmatprep.subr.mxu0 0.0
        %1614 = vmatpush1.msra.mxu0 %v1152
        %1615 = vmatprep.subr.mxu0 0.0
        %1616 = vmatpush1.msra.mxu0 %v1153
        %1617 = vmatprep.subr.mxu0 0.0
        %1618 = vmatpush1.msra.mxu0 %v1154
        %1619 = vmatprep.subr.mxu0 0.0
        %1620 = vmatpush1.msra.mxu0 %v1155
        %1621 = vmatprep.subr.mxu0 0.0
        %1622 = vmatpush1.msra.mxu0 %v1156
        %1623 = vmatprep.subr.mxu0 0.0
        %1624 = vmatpush1.msra.mxu0 %v1157
        %1625 = vmatprep.subr.mxu0 0.0
        %1626 = vmatpush1.msra.mxu0 %v1158
        %1627 = vmatprep.subr.mxu0 0.0
        %1628 = vmatpush1.msra.mxu0 %v1159
        %1629 = vmatprep.subr.mxu0 0.0
        %1630 = vmatpush1.msra.mxu0 %v1160
        %1631 = vmatprep.subr.mxu0 0.0
        %1632 = vmatpush1.msra.mxu0 %v1161
        %1633 = vmatprep.subr.mxu0 0.0
        %1634 = vmatpush1.msra.mxu0 %v1162
        %1635 = vmatprep.subr.mxu0 0.0
        %1636 = vmatpush1.msra.mxu0 %v1163
        %1637 = vmatprep.subr.mxu0 0.0
        %1638 = vmatpush1.msra.mxu0 %v1164
        %1639 = vmatprep.subr.mxu0 0.0
        %1640 = vmatpush1.msra.mxu0 %v1165
        %1641 = vmatprep.subr.mxu0 0.0
        %1642 = vmatpush1.msra.mxu0 %v1166
        %1643 = vmatprep.subr.mxu0 0.0
        %1644 = vmatpush1.msra.mxu0 %v1167
        %1645 = vmatprep.subr.mxu0 0.0
        %1646 = vmatpush1.msra.mxu0 %v1168
        %1647 = vmatprep.subr.mxu0 0.0
        %1648 = vmatpush1.msra.mxu0 %v1169
        %1649 = vmatprep.subr.mxu0 0.0
        %1650 = vmatpush1.msra.mxu0 %v1170
        %1651 = vmatprep.subr.mxu0 0.0
        %1652 = vmatpush1.msra.mxu0 %v1171
        %1653 = vmatprep.subr.mxu0 0.0
        %1654 = vmatpush1.msra.mxu0 %v1172
        %1655 = vmatprep.subr.mxu0 0.0
        %1656 = vmatpush1.msra.mxu0 %v1173
        %1657 = vmatprep.subr.mxu0 0.0
        %1658 = vmatpush1.msra.mxu0 %v1174
        %1659 = vmatprep.mubr.f32.mxu0 %v1140
        %1660 = vmatmul.mubr.f32.gmra.mrb[0].mxu0 %v1139
        %v1661 = vpop.f32.mrb[0].mxu0
        %v1662 = vadd.f32 0.0, %v1661
        %v1663 = vpop.f32.mrb[0].mxu0
        %1664 = vdwg.mxu0
        %1665 = vmatprep.subr.mxu0 0.0
        %1666 = vmatpush1.msra.mxu0 %v1143
        %1667 = vmatprep.subr.mxu0 0.0
        %1668 = vmatpush1.msra.mxu0 %v1144
        %1669 = vmatprep.subr.mxu0 0.0
        %1670 = vmatpush1.msra.mxu0 %v1145
        %1671 = vmatprep.subr.mxu0 0.0
        %1672 = vmatpush1.msra.mxu0 %v1146
        %1673 = vmatprep.subr.mxu0 0.0
        %1674 = vmatpush1.msra.mxu0 %v1147
        %1675 = vmatprep.subr.mxu0 0.0
        %1676 = vmatpush1.msra.mxu0 %v1148
        %1677 = vmatprep.subr.mxu0 0.0
        %1678 = vmatpush1.msra.mxu0 %v1149
        %1679 = vmatprep.subr.mxu0 0.0
        %1680 = vmatpush1.msra.mxu0 %v1150
        %1681 = vmatprep.subr.mxu0 0.0
        %1682 = vmatpush1.msra.mxu0 %v1151
        %1683 = vmatprep.subr.mxu0 0.0
        %1684 = vmatpush1.msra.mxu0 %v1152
        %1685 = vmatprep.subr.mxu0 0.0
        %1686 = vmatpush1.msra.mxu0 %v1153
        %1687 = vmatprep.subr.mxu0 0.0
        %1688 = vmatpush1.msra.mxu0 %v1154
        %1689 = vmatprep.subr.mxu0 0.0
        %1690 = vmatpush1.msra.mxu0 %v1155
        %1691 = vmatprep.subr.mxu0 0.0
        %1692 = vmatpush1.msra.mxu0 %v1156
        %1693 = vmatprep.subr.mxu0 0.0
        %1694 = vmatpush1.msra.mxu0 %v1157
        %1695 = vmatprep.subr.mxu0 0.0
        %1696 = vmatpush1.msra.mxu0 %v1158
        %1697 = vmatprep.subr.mxu0 0.0
        %1698 = vmatpush1.msra.mxu0 %v1159
        %1699 = vmatprep.subr.mxu0 0.0
        %1700 = vmatpush1.msra.mxu0 %v1160
        %1701 = vmatprep.subr.mxu0 0.0
        %1702 = vmatpush1.msra.mxu0 %v1161
        %1703 = vmatprep.subr.mxu0 0.0
        %1704 = vmatpush1.msra.mxu0 %v1162
        %1705 = vmatprep.subr.mxu0 0.0
        %1706 = vmatpush1.msra.mxu0 %v1163
        %1707 = vmatprep.subr.mxu0 0.0
        %1708 = vmatpush1.msra.mxu0 %v1164
        %1709 = vmatprep.subr.mxu0 0.0
        %1710 = vmatpush1.msra.mxu0 %v1165
        %1711 = vmatprep.subr.mxu0 0.0
        %1712 = vmatpush1.msra.mxu0 %v1166
        %1713 = vmatprep.subr.mxu0 0.0
        %1714 = vmatpush1.msra.mxu0 %v1167
        %1715 = vmatprep.subr.mxu0 0.0
        %1716 = vmatpush1.msra.mxu0 %v1168
        %1717 = vmatprep.subr.mxu0 0.0
        %1718 = vmatpush1.msra.mxu0 %v1169
        %1719 = vmatprep.subr.mxu0 0.0
        %1720 = vmatpush1.msra.mxu0 %v1170
        %1721 = vmatprep.subr.mxu0 0.0
        %1722 = vmatpush1.msra.mxu0 %v1171
        %1723 = vmatprep.subr.mxu0 0.0
        %1724 = vmatpush1.msra.mxu0 %v1172
        %1725 = vmatprep.subr.mxu0 0.0
        %1726 = vmatpush1.msra.mxu0 %v1173
        %1727 = vmatprep.subr.mxu0 0.0
        %1728 = vmatpush1.msra.mxu0 %v1174
        %1729 = vmatprep.mubr.f32.mxu0 %v1142
        %1730 = vmatmul.mubr.f32.gmra.mrb[0].mxu0 %v1141
        %v1731 = vpop.f32.mrb[0].mxu0
        %v1732 = vadd.f32 0.0, %v1731
        %v1733 = vpop.f32.mrb[0].mxu0
        %1734 = vdwg.mxu0
        %v1735 = vand.u32 %v601, 127
        %v1736 = vand.u32 %v602, 127
        %v1737 = vand.u32 %v603, 127
        %v1738 = vand.u32 %v604, 127
        %v1739 = vand.u32 %v605, 127
        %v1740 = vand.u32 %v606, 127
        %v1741 = vand.u32 %v607, 127
        %v1742 = vand.u32 %v608, 127
        %1743 = vrot.lane.b32.xlu0 %v1242, 1
        %v1744 = vpop.permute.xlu0 %1743
        %1745 = vrot.lane.b32.xlu0 %v1312, 1
        %v1746 = vpop.permute.xlu0 %1745
        %1747 = vrot.lane.b32.xlu0 %v1382, 1
        %v1748 = vpop.permute.xlu0 %1747
        %1749 = vrot.lane.b32.xlu0 %v1452, 1
        %v1750 = vpop.permute.xlu0 %1749
        %1751 = vrot.lane.b32.xlu0 %v1522, 1
        %v1752 = vpop.permute.xlu0 %1751
        %1753 = vrot.lane.b32.xlu0 %v1592, 1
        %v1754 = vpop.permute.xlu0 %1753
        %1755 = vrot.lane.b32.xlu0 %v1662, 1
        %v1756 = vpop.permute.xlu0 %1755
        %1757 = vrot.lane.b32.xlu0 %v1732, 1
        %v1758 = vpop.permute.xlu0 %1757
        %v1759 = vsel %vm747, %v1756, %v1758
        %v1760 = vsel %vm747, %v1754, %v1756
        %v1761 = vsel %vm747, %v1752, %v1754
        %v1762 = vsel %vm747, %v1750, %v1752
        %v1763 = vsel %vm747, %v1748, %v1750
        %v1764 = vsel %vm747, %v1746, %v1748
        %v1765 = vsel %vm747, %v1744, %v1746
        %v1766 = vsel %vm747, %v1758, %v1744
        %vm1767 = vcmp.ge.s32.totalorder %v1735, 1
        %vm1768 = vcmp.ge.s32.totalorder %v1736, 1
        %vm1769 = vcmp.ge.s32.totalorder %v1737, 1
        %vm1770 = vcmp.ge.s32.totalorder %v1738, 1
        %vm1771 = vcmp.ge.s32.totalorder %v1739, 1
        %vm1772 = vcmp.ge.s32.totalorder %v1740, 1
        %vm1773 = vcmp.ge.s32.totalorder %v1741, 1
        %vm1774 = vcmp.ge.s32.totalorder %v1742, 1
        %v1775 = vsel %vm1767, 1, 0
        %v1776 = vsel %vm1768, 1, 0
        %v1777 = vsel %vm1769, 1, 0
        %v1778 = vsel %vm1770, 1, 0
        %v1779 = vsel %vm1771, 1, 0
        %v1780 = vsel %vm1772, 1, 0
        %v1781 = vsel %vm1773, 1, 0
        %v1782 = vsel %vm1774, 1, 0
        %vm1783 = vcmp.eq.s32.totalorder %v1775, 1
        %vm1784 = vcmp.eq.s32.totalorder %v1776, 1
        %vm1785 = vcmp.eq.s32.totalorder %v1777, 1
        %vm1786 = vcmp.eq.s32.totalorder %v1778, 1
        %vm1787 = vcmp.eq.s32.totalorder %v1779, 1
        %vm1788 = vcmp.eq.s32.totalorder %v1780, 1
        %vm1789 = vcmp.eq.s32.totalorder %v1781, 1
        %vm1790 = vcmp.eq.s32.totalorder %v1782, 1
        %v1791 = vsel %vm1783, %v1766, 0.0
        %v1792 = vsel %vm1784, %v1765, 0.0
        %v1793 = vsel %vm1785, %v1764, 0.0
        %v1794 = vsel %vm1786, %v1763, 0.0
        %v1795 = vsel %vm1787, %v1762, 0.0
        %v1796 = vsel %vm1788, %v1761, 0.0
        %v1797 = vsel %vm1789, %v1760, 0.0
        %v1798 = vsel %vm1790, %v1759, 0.0
        %v1799 = vld [vmem:[%s5] sm:$0xff]
        %s1800 = scalar_lea.vmem %s5, 8
        %v1801 = vld [vmem:[%s1800] sm:$0xff]
        %vm1802 = vcmask 31744
        %v1804 = vsel %vm1802, %v1801, 0
        %vm1806 = vcmask 1043456
        %v1808 = vsel %vm1806, %v1242, 0
        %v1811 = vsel %vm1806, %v1312, 0
        %v1814 = vsel %vm1806, %v1382, 0
        %v1817 = vsel %vm1806, %v1452, 0
        %v1820 = vsel %vm1806, %v1522, 0
        %v1823 = vsel %vm1806, %v1592, 0
        %v1826 = vsel %vm1806, %v1662, 0
        %v1829 = vsel %vm1806, %v1732, 0
        %1831 = vmatprep.subr.mxu0 %v1811
        %1832 = vmatpush1.msra.mxu0 %v1808
        %1833 = vmatprep.subr.mxu0 0.0
        %1834 = vmatpush1.msra.mxu0 0.0
        %1835 = vmatprep.subr.mxu0 0.0
        %1836 = vmatpush1.msra.mxu0 0.0
        %1837 = vmatprep.subr.mxu0 0.0
        %1838 = vmatpush1.msra.mxu0 0.0
        %1839 = vmatprep.subr.mxu0 0.0
        %1840 = vmatpush1.msra.mxu0 0.0
        %1841 = vmatprep.subr.mxu0 0.0
        %1842 = vmatpush1.msra.mxu0 0.0
        %1843 = vmatprep.subr.mxu0 0.0
        %1844 = vmatpush1.msra.mxu0 0.0
        %1845 = vmatprep.subr.mxu0 0.0
        %1846 = vmatpush1.msra.mxu0 0.0
        %1847 = vmatprep.subr.mxu0 0.0
        %1848 = vmatpush1.msra.mxu0 0.0
        %1849 = vmatprep.subr.mxu0 0.0
        %1850 = vmatpush1.msra.mxu0 0.0
        %1851 = vmatprep.subr.mxu0 0.0
        %1852 = vmatpush1.msra.mxu0 0.0
        %1853 = vmatprep.subr.mxu0 0.0
        %1854 = vmatpush1.msra.mxu0 0.0
        %1855 = vmatprep.subr.mxu0 0.0
        %1856 = vmatpush1.msra.mxu0 0.0
        %1857 = vmatprep.subr.mxu0 0.0
        %1858 = vmatpush1.msra.mxu0 0.0
        %1859 = vmatprep.subr.mxu0 0.0
        %1860 = vmatpush1.msra.mxu0 0.0
        %1861 = vmatprep.subr.mxu0 0.0
        %1862 = vmatpush1.msra.mxu0 0.0
        %1863 = vmatprep.subr.mxu0 0.0
        %1864 = vmatpush1.msra.mxu0 0.0
        %1865 = vmatprep.subr.mxu0 0.0
        %1866 = vmatpush1.msra.mxu0 0.0
        %1867 = vmatprep.subr.mxu0 0.0
        %1868 = vmatpush1.msra.mxu0 0.0
        %1869 = vmatprep.subr.mxu0 0.0
        %1870 = vmatpush1.msra.mxu0 0.0
        %1871 = vmatprep.subr.mxu0 0.0
        %1872 = vmatpush1.msra.mxu0 0.0
        %1873 = vmatprep.subr.mxu0 0.0
        %1874 = vmatpush1.msra.mxu0 0.0
        %1875 = vmatprep.subr.mxu0 0.0
        %1876 = vmatpush1.msra.mxu0 0.0
        %1877 = vmatprep.subr.mxu0 0.0
        %1878 = vmatpush1.msra.mxu0 0.0
        %1879 = vmatprep.subr.mxu0 0.0
        %1880 = vmatpush1.msra.mxu0 0.0
        %1881 = vmatprep.subr.mxu0 0.0
        %1882 = vmatpush1.msra.mxu0 0.0
        %1883 = vmatprep.subr.mxu0 0.0
        %1884 = vmatpush1.msra.mxu0 0.0
        %1885 = vmatprep.subr.mxu0 0.0
        %1886 = vmatpush1.msra.mxu0 0.0
        %1887 = vmatprep.subr.mxu0 0.0
        %1888 = vmatpush1.msra.mxu0 0.0
        %1889 = vmatprep.subr.mxu0 0.0
        %1890 = vmatpush1.msra.mxu0 0.0
        %1891 = vmatprep.subr.mxu0 0.0
        %1892 = vmatpush1.msra.mxu0 0.0
        %1893 = vmatprep.subr.mxu0 0.0
        %1894 = vmatpush1.msra.mxu0 0.0
        %1895 = vmatprep.mubr.f32.mxu0 0.0
        %1896 = vmatmul.mubr.f32.gmra.mrb[0].mxu0 %v1804
        %v1897 = vpop.f32.mrb[0].mxu0
        %v1898 = vadd.f32 0.0, %v1897
        %v1899 = vpop.f32.mrb[0].mxu0
        %v1900 = vadd.f32 0.0, %v1899
        %1901 = vdwg.mxu0
        %1902 = vmatprep.subr.mxu0 %v1817
        %1903 = vmatpush1.msra.mxu0 %v1814
        %1904 = vmatprep.subr.mxu0 0.0
        %1905 = vmatpush1.msra.mxu0 0.0
        %1906 = vmatprep.subr.mxu0 0.0
        %1907 = vmatpush1.msra.mxu0 0.0
        %1908 = vmatprep.subr.mxu0 0.0
        %1909 = vmatpush1.msra.mxu0 0.0
        %1910 = vmatprep.subr.mxu0 0.0
        %1911 = vmatpush1.msra.mxu0 0.0
        %1912 = vmatprep.subr.mxu0 0.0
        %1913 = vmatpush1.msra.mxu0 0.0
        %1914 = vmatprep.subr.mxu0 0.0
        %1915 = vmatpush1.msra.mxu0 0.0
        %1916 = vmatprep.subr.mxu0 0.0
        %1917 = vmatpush1.msra.mxu0 0.0
        %1918 = vmatprep.subr.mxu0 0.0
        %1919 = vmatpush1.msra.mxu0 0.0
        %1920 = vmatprep.subr.mxu0 0.0
        %1921 = vmatpush1.msra.mxu0 0.0
        %1922 = vmatprep.subr.mxu0 0.0
        %1923 = vmatpush1.msra.mxu0 0.0
        %1924 = vmatprep.subr.mxu0 0.0
        %1925 = vmatpush1.msra.mxu0 0.0
        %1926 = vmatprep.subr.mxu0 0.0
        %1927 = vmatpush1.msra.mxu0 0.0
        %1928 = vmatprep.subr.mxu0 0.0
        %1929 = vmatpush1.msra.mxu0 0.0
        %1930 = vmatprep.subr.mxu0 0.0
        %1931 = vmatpush1.msra.mxu0 0.0
        %1932 = vmatprep.subr.mxu0 0.0
        %1933 = vmatpush1.msra.mxu0 0.0
        %1934 = vmatprep.subr.mxu0 0.0
        %1935 = vmatpush1.msra.mxu0 0.0
        %1936 = vmatprep.subr.mxu0 0.0
        %1937 = vmatpush1.msra.mxu0 0.0
        %1938 = vmatprep.subr.mxu0 0.0
        %1939 = vmatpush1.msra.mxu0 0.0
        %1940 = vmatprep.subr.mxu0 0.0
        %1941 = vmatpush1.msra.mxu0 0.0
        %1942 = vmatprep.subr.mxu0 0.0
        %1943 = vmatpush1.msra.mxu0 0.0
        %1944 = vmatprep.subr.mxu0 0.0
        %1945 = vmatpush1.msra.mxu0 0.0
        %1946 = vmatprep.subr.mxu0 0.0
        %1947 = vmatpush1.msra.mxu0 0.0
        %1948 = vmatprep.subr.mxu0 0.0
        %1949 = vmatpush1.msra.mxu0 0.0
        %1950 = vmatprep.subr.mxu0 0.0
        %1951 = vmatpush1.msra.mxu0 0.0
        %1952 = vmatprep.subr.mxu0 0.0
        %1953 = vmatpush1.msra.mxu0 0.0
        %1954 = vmatprep.subr.mxu0 0.0
        %1955 = vmatpush1.msra.mxu0 0.0
        %1956 = vmatprep.subr.mxu0 0.0
        %1957 = vmatpush1.msra.mxu0 0.0
        %1958 = vmatprep.subr.mxu0 0.0
        %1959 = vmatpush1.msra.mxu0 0.0
        %1960 = vmatprep.subr.mxu0 0.0
        %1961 = vmatpush1.msra.mxu0 0.0
        %1962 = vmatprep.subr.mxu0 0.0
        %1963 = vmatpush1.msra.mxu0 0.0
        %1964 = vmatprep.subr.mxu0 0.0
        %1965 = vmatpush1.msra.mxu0 0.0
        %1966 = vmatprep.mubr.f32.mxu0 0.0
        %1967 = vmatmul.mubr.f32.gmra.mrb[0].mxu0 %v1804
        %v1968 = vpop.f32.mrb[0].mxu0
        %v1969 = vadd.f32 0.0, %v1968
        %v1970 = vpop.f32.mrb[0].mxu0
        %v1971 = vadd.f32 0.0, %v1970
        %1972 = vdwg.mxu0
        %1973 = vmatprep.subr.mxu0 %v1823
        %1974 = vmatpush1.msra.mxu0 %v1820
        %1975 = vmatprep.subr.mxu0 0.0
        %1976 = vmatpush1.msra.mxu0 0.0
        %1977 = vmatprep.subr.mxu0 0.0
        %1978 = vmatpush1.msra.mxu0 0.0
        %1979 = vmatprep.subr.mxu0 0.0
        %1980 = vmatpush1.msra.mxu0 0.0
        %1981 = vmatprep.subr.mxu0 0.0
        %1982 = vmatpush1.msra.mxu0 0.0
        %1983 = vmatprep.subr.mxu0 0.0
        %1984 = vmatpush1.msra.mxu0 0.0
        %1985 = vmatprep.subr.mxu0 0.0
        %1986 = vmatpush1.msra.mxu0 0.0
        %1987 = vmatprep.subr.mxu0 0.0
        %1988 = vmatpush1.msra.mxu0 0.0
        %1989 = vmatprep.subr.mxu0 0.0
        %1990 = vmatpush1.msra.mxu0 0.0
        %1991 = vmatprep.subr.mxu0 0.0
        %1992 = vmatpush1.msra.mxu0 0.0
        %1993 = vmatprep.subr.mxu0 0.0
        %1994 = vmatpush1.msra.mxu0 0.0
        %1995 = vmatprep.subr.mxu0 0.0
        %1996 = vmatpush1.msra.mxu0 0.0
        %1997 = vmatprep.subr.mxu0 0.0
        %1998 = vmatpush1.msra.mxu0 0.0
        %1999 = vmatprep.subr.mxu0 0.0
        %2000 = vmatpush1.msra.mxu0 0.0
        %2001 = vmatprep.subr.mxu0 0.0
        %2002 = vmatpush1.msra.mxu0 0.0
        %2003 = vmatprep.subr.mxu0 0.0
        %2004 = vmatpush1.msra.mxu0 0.0
        %2005 = vmatprep.subr.mxu0 0.0
        %2006 = vmatpush1.msra.mxu0 0.0
        %2007 = vmatprep.subr.mxu0 0.0
        %2008 = vmatpush1.msra.mxu0 0.0
        %2009 = vmatprep.subr.mxu0 0.0
        %2010 = vmatpush1.msra.mxu0 0.0
        %2011 = vmatprep.subr.mxu0 0.0
        %2012 = vmatpush1.msra.mxu0 0.0
        %2013 = vmatprep.subr.mxu0 0.0
        %2014 = vmatpush1.msra.mxu0 0.0
        %2015 = vmatprep.subr.mxu0 0.0
        %2016 = vmatpush1.msra.mxu0 0.0
        %2017 = vmatprep.subr.mxu0 0.0
        %2018 = vmatpush1.msra.mxu0 0.0
        %2019 = vmatprep.subr.mxu0 0.0
        %2020 = vmatpush1.msra.mxu0 0.0
        %2021 = vmatprep.subr.mxu0 0.0
        %2022 = vmatpush1.msra.mxu0 0.0
        %2023 = vmatprep.subr.mxu0 0.0
        %2024 = vmatpush1.msra.mxu0 0.0
        %2025 = vmatprep.subr.mxu0 0.0
        %2026 = vmatpush1.msra.mxu0 0.0
        %2027 = vmatprep.subr.mxu0 0.0
        %2028 = vmatpush1.msra.mxu0 0.0
        %2029 = vmatprep.subr.mxu0 0.0
        %2030 = vmatpush1.msra.mxu0 0.0
        %2031 = vmatprep.subr.mxu0 0.0
        %2032 = vmatpush1.msra.mxu0 0.0
        %2033 = vmatprep.subr.mxu0 0.0
        %2034 = vmatpush1.msra.mxu0 0.0
        %2035 = vmatprep.subr.mxu0 0.0
        %2036 = vmatpush1.msra.mxu0 0.0
        %2037 = vmatprep.mubr.f32.mxu0 0.0
        %2038 = vmatmul.mubr.f32.gmra.mrb[0].mxu0 %v1804
        %v2039 = vpop.f32.mrb[0].mxu0
        %v2040 = vadd.f32 0.0, %v2039
        %v2041 = vpop.f32.mrb[0].mxu0
        %v2042 = vadd.f32 0.0, %v2041
        %2043 = vdwg.mxu0
        %2044 = vmatprep.subr.mxu0 %v1829
        %2045 = vmatpush1.msra.mxu0 %v1826
        %2046 = vmatprep.subr.mxu0 0.0
        %2047 = vmatpush1.msra.mxu0 0.0
        %2048 = vmatprep.subr.mxu0 0.0
        %2049 = vmatpush1.msra.mxu0 0.0
        %2050 = vmatprep.subr.mxu0 0.0
        %2051 = vmatpush1.msra.mxu0 0.0
        %2052 = vmatprep.subr.mxu0 0.0
        %2053 = vmatpush1.msra.mxu0 0.0
        %2054 = vmatprep.subr.mxu0 0.0
        %2055 = vmatpush1.msra.mxu0 0.0
        %2056 = vmatprep.subr.mxu0 0.0
        %2057 = vmatpush1.msra.mxu0 0.0
        %2058 = vmatprep.subr.mxu0 0.0
        %2059 = vmatpush1.msra.mxu0 0.0
        %2060 = vmatprep.subr.mxu0 0.0
        %2061 = vmatpush1.msra.mxu0 0.0
        %2062 = vmatprep.subr.mxu0 0.0
        %2063 = vmatpush1.msra.mxu0 0.0
        %2064 = vmatprep.subr.mxu0 0.0
        %2065 = vmatpush1.msra.mxu0 0.0
        %2066 = vmatprep.subr.mxu0 0.0
        %2067 = vmatpush1.msra.mxu0 0.0
        %2068 = vmatprep.subr.mxu0 0.0
        %2069 = vmatpush1.msra.mxu0 0.0
        %2070 = vmatprep.subr.mxu0 0.0
        %2071 = vmatpush1.msra.mxu0 0.0
        %2072 = vmatprep.subr.mxu0 0.0
        %2073 = vmatpush1.msra.mxu0 0.0
        %2074 = vmatprep.subr.mxu0 0.0
        %2075 = vmatpush1.msra.mxu0 0.0
        %2076 = vmatprep.subr.mxu0 0.0
        %2077 = vmatpush1.msra.mxu0 0.0
        %2078 = vmatprep.subr.mxu0 0.0
        %2079 = vmatpush1.msra.mxu0 0.0
        %2080 = vmatprep.subr.mxu0 0.0
        %2081 = vmatpush1.msra.mxu0 0.0
        %2082 = vmatprep.subr.mxu0 0.0
        %2083 = vmatpush1.msra.mxu0 0.0
        %2084 = vmatprep.subr.mxu0 0.0
        %2085 = vmatpush1.msra.mxu0 0.0
        %2086 = vmatprep.subr.mxu0 0.0
        %2087 = vmatpush1.msra.mxu0 0.0
        %2088 = vmatprep.subr.mxu0 0.0
        %2089 = vmatpush1.msra.mxu0 0.0
        %2090 = vmatprep.subr.mxu0 0.0
        %2091 = vmatpush1.msra.mxu0 0.0
        %2092 = vmatprep.subr.mxu0 0.0
        %2093 = vmatpush1.msra.mxu0 0.0
        %2094 = vmatprep.subr.mxu0 0.0
        %2095 = vmatpush1.msra.mxu0 0.0
        %2096 = vmatprep.subr.mxu0 0.0
        %2097 = vmatpush1.msra.mxu0 0.0
        %2098 = vmatprep.subr.mxu0 0.0
        %2099 = vmatpush1.msra.mxu0 0.0
        %2100 = vmatprep.subr.mxu0 0.0
        %2101 = vmatpush1.msra.mxu0 0.0
        %2102 = vmatprep.subr.mxu0 0.0
        %2103 = vmatpush1.msra.mxu0 0.0
        %2104 = vmatprep.subr.mxu0 0.0
        %2105 = vmatpush1.msra.mxu0 0.0
        %2106 = vmatprep.subr.mxu0 0.0
        %2107 = vmatpush1.msra.mxu0 0.0
        %2108 = vmatprep.mubr.f32.mxu0 0.0
        %2109 = vmatmul.mubr.f32.gmra.mrb[0].mxu0 %v1804
        %v2110 = vpop.f32.mrb[0].mxu0
        %v2111 = vadd.f32 0.0, %v2110
        %v2112 = vpop.f32.mrb[0].mxu0
        %v2113 = vadd.f32 0.0, %v2112
        %2114 = vdwg.mxu0
        %v2116 = vsel %vm1802, %v1799, 0
        %v2119 = vsel %vm1806, %v1791, 0
        %v2122 = vsel %vm1806, %v1792, 0
        %v2125 = vsel %vm1806, %v1793, 0
        %v2128 = vsel %vm1806, %v1794, 0
        %v2131 = vsel %vm1806, %v1795, 0
        %v2134 = vsel %vm1806, %v1796, 0
        %v2137 = vsel %vm1806, %v1797, 0
        %v2140 = vsel %vm1806, %v1798, 0
        %2142 = vmatprep.subr.mxu0 %v2122
        %2143 = vmatpush1.msra.mxu0 %v2119
        %2144 = vmatprep.subr.mxu0 0.0
        %2145 = vmatpush1.msra.mxu0 0.0
        %2146 = vmatprep.subr.mxu0 0.0
        %2147 = vmatpush1.msra.mxu0 0.0
        %2148 = vmatprep.subr.mxu0 0.0
        %2149 = vmatpush1.msra.mxu0 0.0
        %2150 = vmatprep.subr.mxu0 0.0
        %2151 = vmatpush1.msra.mxu0 0.0
        %2152 = vmatprep.subr.mxu0 0.0
        %2153 = vmatpush1.msra.mxu0 0.0
        %2154 = vmatprep.subr.mxu0 0.0
        %2155 = vmatpush1.msra.mxu0 0.0
        %2156 = vmatprep.subr.mxu0 0.0
        %2157 = vmatpush1.msra.mxu0 0.0
        %2158 = vmatprep.subr.mxu0 0.0
        %2159 = vmatpush1.msra.mxu0 0.0
        %2160 = vmatprep.subr.mxu0 0.0
        %2161 = vmatpush1.msra.mxu0 0.0
        %2162 = vmatprep.subr.mxu0 0.0
        %2163 = vmatpush1.msra.mxu0 0.0
        %2164 = vmatprep.subr.mxu0 0.0
        %2165 = vmatpush1.msra.mxu0 0.0
        %2166 = vmatprep.subr.mxu0 0.0
        %2167 = vmatpush1.msra.mxu0 0.0
        %2168 = vmatprep.subr.mxu0 0.0
        %2169 = vmatpush1.msra.mxu0 0.0
        %2170 = vmatprep.subr.mxu0 0.0
        %2171 = vmatpush1.msra.mxu0 0.0
        %2172 = vmatprep.subr.mxu0 0.0
        %2173 = vmatpush1.msra.mxu0 0.0
        %2174 = vmatprep.subr.mxu0 0.0
        %2175 = vmatpush1.msra.mxu0 0.0
        %2176 = vmatprep.subr.mxu0 0.0
        %2177 = vmatpush1.msra.mxu0 0.0
        %2178 = vmatprep.subr.mxu0 0.0
        %2179 = vmatpush1.msra.mxu0 0.0
        %2180 = vmatprep.subr.mxu0 0.0
        %2181 = vmatpush1.msra.mxu0 0.0
        %2182 = vmatprep.subr.mxu0 0.0
        %2183 = vmatpush1.msra.mxu0 0.0
        %2184 = vmatprep.subr.mxu0 0.0
        %2185 = vmatpush1.msra.mxu0 0.0
        %2186 = vmatprep.subr.mxu0 0.0
        %2187 = vmatpush1.msra.mxu0 0.0
        %2188 = vmatprep.subr.mxu0 0.0
        %2189 = vmatpush1.msra.mxu0 0.0
        %2190 = vmatprep.subr.mxu0 0.0
        %2191 = vmatpush1.msra.mxu0 0.0
        %2192 = vmatprep.subr.mxu0 0.0
        %2193 = vmatpush1.msra.mxu0 0.0
        %2194 = vmatprep.subr.mxu0 0.0
        %2195 = vmatpush1.msra.mxu0 0.0
        %2196 = vmatprep.subr.mxu0 0.0
        %2197 = vmatpush1.msra.mxu0 0.0
        %2198 = vmatprep.subr.mxu0 0.0
        %2199 = vmatpush1.msra.mxu0 0.0
        %2200 = vmatprep.subr.mxu0 0.0
        %2201 = vmatpush1.msra.mxu0 0.0
        %2202 = vmatprep.subr.mxu0 0.0
        %2203 = vmatpush1.msra.mxu0 0.0
        %2204 = vmatprep.subr.mxu0 0.0
        %2205 = vmatpush1.msra.mxu0 0.0
        %2206 = vmatprep.mubr.f32.mxu0 0.0
        %2207 = vmatmul.mubr.f32.gmra.mrb[0].mxu0 %v2116
        %v2208 = vpop.f32.mrb[0].mxu0
        %v2209 = vadd.f32 %v1898, %v2208
        %v2210 = vpop.f32.mrb[0].mxu0
        %v2211 = vadd.f32 %v1900, %v2210
        %2212 = vdwg.mxu0
        %2213 = vmatprep.subr.mxu0 %v2128
        %2214 = vmatpush1.msra.mxu0 %v2125
        %2215 = vmatprep.subr.mxu0 0.0
        %2216 = vmatpush1.msra.mxu0 0.0
        %2217 = vmatprep.subr.mxu0 0.0
        %2218 = vmatpush1.msra.mxu0 0.0
        %2219 = vmatprep.subr.mxu0 0.0
        %2220 = vmatpush1.msra.mxu0 0.0
        %2221 = vmatprep.subr.mxu0 0.0
        %2222 = vmatpush1.msra.mxu0 0.0
        %2223 = vmatprep.subr.mxu0 0.0
        %2224 = vmatpush1.msra.mxu0 0.0
        %2225 = vmatprep.subr.mxu0 0.0
        %2226 = vmatpush1.msra.mxu0 0.0
        %2227 = vmatprep.subr.mxu0 0.0
        %2228 = vmatpush1.msra.mxu0 0.0
        %2229 = vmatprep.subr.mxu0 0.0
        %2230 = vmatpush1.msra.mxu0 0.0
        %2231 = vmatprep.subr.mxu0 0.0
        %2232 = vmatpush1.msra.mxu0 0.0
        %2233 = vmatprep.subr.mxu0 0.0
        %2234 = vmatpush1.msra.mxu0 0.0
        %2235 = vmatprep.subr.mxu0 0.0
        %2236 = vmatpush1.msra.mxu0 0.0
        %2237 = vmatprep.subr.mxu0 0.0
        %2238 = vmatpush1.msra.mxu0 0.0
        %2239 = vmatprep.subr.mxu0 0.0
        %2240 = vmatpush1.msra.mxu0 0.0
        %2241 = vmatprep.subr.mxu0 0.0
        %2242 = vmatpush1.msra.mxu0 0.0
        %2243 = vmatprep.subr.mxu0 0.0
        %2244 = vmatpush1.msra.mxu0 0.0
        %2245 = vmatprep.subr.mxu0 0.0
        %2246 = vmatpush1.msra.mxu0 0.0
        %2247 = vmatprep.subr.mxu0 0.0
        %2248 = vmatpush1.msra.mxu0 0.0
        %2249 = vmatprep.subr.mxu0 0.0
        %2250 = vmatpush1.msra.mxu0 0.0
        %2251 = vmatprep.subr.mxu0 0.0
        %2252 = vmatpush1.msra.mxu0 0.0
        %2253 = vmatprep.subr.mxu0 0.0
        %2254 = vmatpush1.msra.mxu0 0.0
        %2255 = vmatprep.subr.mxu0 0.0
        %2256 = vmatpush1.msra.mxu0 0.0
        %2257 = vmatprep.subr.mxu0 0.0
        %2258 = vmatpush1.msra.mxu0 0.0
        %2259 = vmatprep.subr.mxu0 0.0
        %2260 = vmatpush1.msra.mxu0 0.0
        %2261 = vmatprep.subr.mxu0 0.0
        %2262 = vmatpush1.msra.mxu0 0.0
        %2263 = vmatprep.subr.mxu0 0.0
        %2264 = vmatpush1.msra.mxu0 0.0
        %2265 = vmatprep.subr.mxu0 0.0
        %2266 = vmatpush1.msra.mxu0 0.0
        %2267 = vmatprep.subr.mxu0 0.0
        %2268 = vmatpush1.msra.mxu0 0.0
        %2269 = vmatprep.subr.mxu0 0.0
        %2270 = vmatpush1.msra.mxu0 0.0
        %2271 = vmatprep.subr.mxu0 0.0
        %2272 = vmatpush1.msra.mxu0 0.0
        %2273 = vmatprep.subr.mxu0 0.0
        %2274 = vmatpush1.msra.mxu0 0.0
        %2275 = vmatprep.subr.mxu0 0.0
        %2276 = vmatpush1.msra.mxu0 0.0
        %2277 = vmatprep.mubr.f32.mxu0 0.0
        %2278 = vmatmul.mubr.f32.gmra.mrb[0].mxu0 %v2116
        %v2279 = vpop.f32.mrb[0].mxu0
        %v2280 = vadd.f32 %v1969, %v2279
        %v2281 = vpop.f32.mrb[0].mxu0
        %v2282 = vadd.f32 %v1971, %v2281
        %2283 = vdwg.mxu0
        %2284 = vmatprep.subr.mxu0 %v2134
        %2285 = vmatpush1.msra.mxu0 %v2131
        %2286 = vmatprep.subr.mxu0 0.0
        %2287 = vmatpush1.msra.mxu0 0.0
        %2288 = vmatprep.subr.mxu0 0.0
        %2289 = vmatpush1.msra.mxu0 0.0
        %2290 = vmatprep.subr.mxu0 0.0
        %2291 = vmatpush1.msra.mxu0 0.0
        %2292 = vmatprep.subr.mxu0 0.0
        %2293 = vmatpush1.msra.mxu0 0.0
        %2294 = vmatprep.subr.mxu0 0.0
        %2295 = vmatpush1.msra.mxu0 0.0
        %2296 = vmatprep.subr.mxu0 0.0
        %2297 = vmatpush1.msra.mxu0 0.0
        %2298 = vmatprep.subr.mxu0 0.0
        %2299 = vmatpush1.msra.mxu0 0.0
        %2300 = vmatprep.subr.mxu0 0.0
        %2301 = vmatpush1.msra.mxu0 0.0
        %2302 = vmatprep.subr.mxu0 0.0
        %2303 = vmatpush1.msra.mxu0 0.0
        %2304 = vmatprep.subr.mxu0 0.0
        %2305 = vmatpush1.msra.mxu0 0.0
        %2306 = vmatprep.subr.mxu0 0.0
        %2307 = vmatpush1.msra.mxu0 0.0
        %2308 = vmatprep.subr.mxu0 0.0
        %2309 = vmatpush1.msra.mxu0 0.0
        %2310 = vmatprep.subr.mxu0 0.0
        %2311 = vmatpush1.msra.mxu0 0.0
        %2312 = vmatprep.subr.mxu0 0.0
        %2313 = vmatpush1.msra.mxu0 0.0
        %2314 = vmatprep.subr.mxu0 0.0
        %2315 = vmatpush1.msra.mxu0 0.0
        %2316 = vmatprep.subr.mxu0 0.0
        %2317 = vmatpush1.msra.mxu0 0.0
        %2318 = vmatprep.subr.mxu0 0.0
        %2319 = vmatpush1.msra.mxu0 0.0
        %2320 = vmatprep.subr.mxu0 0.0
        %2321 = vmatpush1.msra.mxu0 0.0
        %2322 = vmatprep.subr.mxu0 0.0
        %2323 = vmatpush1.msra.mxu0 0.0
        %2324 = vmatprep.subr.mxu0 0.0
        %2325 = vmatpush1.msra.mxu0 0.0
        %2326 = vmatprep.subr.mxu0 0.0
        %2327 = vmatpush1.msra.mxu0 0.0
        %2328 = vmatprep.subr.mxu0 0.0
        %2329 = vmatpush1.msra.mxu0 0.0
        %2330 = vmatprep.subr.mxu0 0.0
        %2331 = vmatpush1.msra.mxu0 0.0
        %2332 = vmatprep.subr.mxu0 0.0
        %2333 = vmatpush1.msra.mxu0 0.0
        %2334 = vmatprep.subr.mxu0 0.0
        %2335 = vmatpush1.msra.mxu0 0.0
        %2336 = vmatprep.subr.mxu0 0.0
        %2337 = vmatpush1.msra.mxu0 0.0
        %2338 = vmatprep.subr.mxu0 0.0
        %2339 = vmatpush1.msra.mxu0 0.0
        %2340 = vmatprep.subr.mxu0 0.0
        %2341 = vmatpush1.msra.mxu0 0.0
        %2342 = vmatprep.subr.mxu0 0.0
        %2343 = vmatpush1.msra.mxu0 0.0
        %2344 = vmatprep.subr.mxu0 0.0
        %2345 = vmatpush1.msra.mxu0 0.0
        %2346 = vmatprep.subr.mxu0 0.0
        %2347 = vmatpush1.msra.mxu0 0.0
        %2348 = vmatprep.mubr.f32.mxu0 0.0
        %2349 = vmatmul.mubr.f32.gmra.mrb[0].mxu0 %v2116
        %v2350 = vpop.f32.mrb[0].mxu0
        %v2351 = vadd.f32 %v2040, %v2350
        %v2352 = vpop.f32.mrb[0].mxu0
        %v2353 = vadd.f32 %v2042, %v2352
        %2354 = vdwg.mxu0
        %2355 = vmatprep.subr.mxu0 %v2140
        %2356 = vmatpush1.msra.mxu0 %v2137
        %2357 = vmatprep.subr.mxu0 0.0
        %2358 = vmatpush1.msra.mxu0 0.0
        %2359 = vmatprep.subr.mxu0 0.0
        %2360 = vmatpush1.msra.mxu0 0.0
        %2361 = vmatprep.subr.mxu0 0.0
        %2362 = vmatpush1.msra.mxu0 0.0
        %2363 = vmatprep.subr.mxu0 0.0
        %2364 = vmatpush1.msra.mxu0 0.0
        %2365 = vmatprep.subr.mxu0 0.0
        %2366 = vmatpush1.msra.mxu0 0.0
        %2367 = vmatprep.subr.mxu0 0.0
        %2368 = vmatpush1.msra.mxu0 0.0
        %2369 = vmatprep.subr.mxu0 0.0
        %2370 = vmatpush1.msra.mxu0 0.0
        %2371 = vmatprep.subr.mxu0 0.0
        %2372 = vmatpush1.msra.mxu0 0.0
        %2373 = vmatprep.subr.mxu0 0.0
        %2374 = vmatpush1.msra.mxu0 0.0
        %2375 = vmatprep.subr.mxu0 0.0
        %2376 = vmatpush1.msra.mxu0 0.0
        %2377 = vmatprep.subr.mxu0 0.0
        %2378 = vmatpush1.msra.mxu0 0.0
        %2379 = vmatprep.subr.mxu0 0.0
        %2380 = vmatpush1.msra.mxu0 0.0
        %2381 = vmatprep.subr.mxu0 0.0
        %2382 = vmatpush1.msra.mxu0 0.0
        %2383 = vmatprep.subr.mxu0 0.0
        %2384 = vmatpush1.msra.mxu0 0.0
        %2385 = vmatprep.subr.mxu0 0.0
        %2386 = vmatpush1.msra.mxu0 0.0
        %2387 = vmatprep.subr.mxu0 0.0
        %2388 = vmatpush1.msra.mxu0 0.0
        %2389 = vmatprep.subr.mxu0 0.0
        %2390 = vmatpush1.msra.mxu0 0.0
        %2391 = vmatprep.subr.mxu0 0.0
        %2392 = vmatpush1.msra.mxu0 0.0
        %2393 = vmatprep.subr.mxu0 0.0
        %2394 = vmatpush1.msra.mxu0 0.0
        %2395 = vmatprep.subr.mxu0 0.0
        %2396 = vmatpush1.msra.mxu0 0.0
        %2397 = vmatprep.subr.mxu0 0.0
        %2398 = vmatpush1.msra.mxu0 0.0
        %2399 = vmatprep.subr.mxu0 0.0
        %2400 = vmatpush1.msra.mxu0 0.0
        %2401 = vmatprep.subr.mxu0 0.0
        %2402 = vmatpush1.msra.mxu0 0.0
        %2403 = vmatprep.subr.mxu0 0.0
        %2404 = vmatpush1.msra.mxu0 0.0
        %2405 = vmatprep.subr.mxu0 0.0
        %2406 = vmatpush1.msra.mxu0 0.0
        %2407 = vmatprep.subr.mxu0 0.0
        %2408 = vmatpush1.msra.mxu0 0.0
        %2409 = vmatprep.subr.mxu0 0.0
        %2410 = vmatpush1.msra.mxu0 0.0
        %2411 = vmatprep.subr.mxu0 0.0
        %2412 = vmatpush1.msra.mxu0 0.0
        %2413 = vmatprep.subr.mxu0 0.0
        %2414 = vmatpush1.msra.mxu0 0.0
        %2415 = vmatprep.subr.mxu0 0.0
        %2416 = vmatpush1.msra.mxu0 0.0
        %2417 = vmatprep.subr.mxu0 0.0
        %2418 = vmatpush1.msra.mxu0 0.0
        %2419 = vmatprep.mubr.f32.mxu0 0.0
        %2420 = vmatmul.mubr.f32.gmra.mrb[0].mxu0 %v2116
        %v2421 = vpop.f32.mrb[0].mxu0
        %v2422 = vadd.f32 %v2111, %v2421
        %v2423 = vpop.f32.mrb[0].mxu0
        %v2424 = vadd.f32 %v2113, %v2423
        %2425 = vdwg.mxu0
        %2426 = vrot.lane.b32.xlu0 %v1242, 127
        %v2427 = vpop.permute.xlu0 %2426
        %2428 = vrot.lane.b32.xlu0 %v1312, 127
        %v2429 = vpop.permute.xlu0 %2428
        %2430 = vrot.lane.b32.xlu0 %v1382, 127
        %v2431 = vpop.permute.xlu0 %2430
        %2432 = vrot.lane.b32.xlu0 %v1452, 127
        %v2433 = vpop.permute.xlu0 %2432
        %2434 = vrot.lane.b32.xlu0 %v1522, 127
        %v2435 = vpop.permute.xlu0 %2434
        %2436 = vrot.lane.b32.xlu0 %v1592, 127
        %v2437 = vpop.permute.xlu0 %2436
        %2438 = vrot.lane.b32.xlu0 %v1662, 127
        %v2439 = vpop.permute.xlu0 %2438
        %2440 = vrot.lane.b32.xlu0 %v1732, 127
        %v2441 = vpop.permute.xlu0 %2440
        %v2442 = vsel %vm953, %v2439, %v2441
        %v2443 = vsel %vm953, %v2437, %v2439
        %v2444 = vsel %vm953, %v2435, %v2437
        %v2445 = vsel %vm953, %v2433, %v2435
        %v2446 = vsel %vm953, %v2431, %v2433
        %v2447 = vsel %vm953, %v2429, %v2431
        %v2448 = vsel %vm953, %v2427, %v2429
        %v2449 = vsel %vm953, %v2441, %v2427
        %vm2450 = vcmp.lt.s32.totalorder %v1735, 127
        %vm2451 = vcmp.lt.s32.totalorder %v1736, 127
        %vm2452 = vcmp.lt.s32.totalorder %v1737, 127
        %vm2453 = vcmp.lt.s32.totalorder %v1738, 127
        %vm2454 = vcmp.lt.s32.totalorder %v1739, 127
        %vm2455 = vcmp.lt.s32.totalorder %v1740, 127
        %vm2456 = vcmp.lt.s32.totalorder %v1741, 127
        %vm2457 = vcmp.lt.s32.totalorder %v1742, 127
        %v2458 = vsel %vm2450, 1, 0
        %v2459 = vsel %vm2451, 1, 0
        %v2460 = vsel %vm2452, 1, 0
        %v2461 = vsel %vm2453, 1, 0
        %v2462 = vsel %vm2454, 1, 0
        %v2463 = vsel %vm2455, 1, 0
        %v2464 = vsel %vm2456, 1, 0
        %v2465 = vsel %vm2457, 1, 0
        %vm2466 = vcmp.eq.s32.totalorder %v2458, 1
        %vm2467 = vcmp.eq.s32.totalorder %v2459, 1
        %vm2468 = vcmp.eq.s32.totalorder %v2460, 1
        %vm2469 = vcmp.eq.s32.totalorder %v2461, 1
        %vm2470 = vcmp.eq.s32.totalorder %v2462, 1
        %vm2471 = vcmp.eq.s32.totalorder %v2463, 1
        %vm2472 = vcmp.eq.s32.totalorder %v2464, 1
        %vm2473 = vcmp.eq.s32.totalorder %v2465, 1
        %v2474 = vsel %vm2466, %v2448, 0.0
        %v2475 = vsel %vm2467, %v2447, 0.0
        %v2476 = vsel %vm2468, %v2446, 0.0
        %v2477 = vsel %vm2469, %v2445, 0.0
        %v2478 = vsel %vm2470, %v2444, 0.0
        %v2479 = vsel %vm2471, %v2443, 0.0
        %v2480 = vsel %vm2472, %v2442, 0.0
        %v2481 = vsel %vm2473, %v2449, 0.0
        %s2482 = scalar_lea.vmem %s5, 16
        %v2483 = vld [vmem:[%s2482] sm:$0xff]
        %v2485 = vsel %vm1802, %v2483, 0
        %v2488 = vsel %vm1806, %v2474, 0
        %v2491 = vsel %vm1806, %v2475, 0
        %v2494 = vsel %vm1806, %v2476, 0
        %v2497 = vsel %vm1806, %v2477, 0
        %v2500 = vsel %vm1806, %v2478, 0
        %v2503 = vsel %vm1806, %v2479, 0
        %v2506 = vsel %vm1806, %v2480, 0
        %v2509 = vsel %vm1806, %v2481, 0
        %2511 = vmatprep.subr.mxu0 %v2491
        %2512 = vmatpush1.msra.mxu0 %v2488
        %2513 = vmatprep.subr.mxu0 0.0
        %2514 = vmatpush1.msra.mxu0 0.0
        %2515 = vmatprep.subr.mxu0 0.0
        %2516 = vmatpush1.msra.mxu0 0.0
        %2517 = vmatprep.subr.mxu0 0.0
        %2518 = vmatpush1.msra.mxu0 0.0
        %2519 = vmatprep.subr.mxu0 0.0
        %2520 = vmatpush1.msra.mxu0 0.0
        %2521 = vmatprep.subr.mxu0 0.0
        %2522 = vmatpush1.msra.mxu0 0.0
        %2523 = vmatprep.subr.mxu0 0.0
        %2524 = vmatpush1.msra.mxu0 0.0
        %2525 = vmatprep.subr.mxu0 0.0
        %2526 = vmatpush1.msra.mxu0 0.0
        %2527 = vmatprep.subr.mxu0 0.0
        %2528 = vmatpush1.msra.mxu0 0.0
        %2529 = vmatprep.subr.mxu0 0.0
        %2530 = vmatpush1.msra.mxu0 0.0
        %2531 = vmatprep.subr.mxu0 0.0
        %2532 = vmatpush1.msra.mxu0 0.0
        %2533 = vmatprep.subr.mxu0 0.0
        %2534 = vmatpush1.msra.mxu0 0.0
        %2535 = vmatprep.subr.mxu0 0.0
        %2536 = vmatpush1.msra.mxu0 0.0
        %2537 = vmatprep.subr.mxu0 0.0
        %2538 = vmatpush1.msra.mxu0 0.0
        %2539 = vmatprep.subr.mxu0 0.0
        %2540 = vmatpush1.msra.mxu0 0.0
        %2541 = vmatprep.subr.mxu0 0.0
        %2542 = vmatpush1.msra.mxu0 0.0
        %2543 = vmatprep.subr.mxu0 0.0
        %2544 = vmatpush1.msra.mxu0 0.0
        %2545 = vmatprep.subr.mxu0 0.0
        %2546 = vmatpush1.msra.mxu0 0.0
        %2547 = vmatprep.subr.mxu0 0.0
        %2548 = vmatpush1.msra.mxu0 0.0
        %2549 = vmatprep.subr.mxu0 0.0
        %2550 = vmatpush1.msra.mxu0 0.0
        %2551 = vmatprep.subr.mxu0 0.0
        %2552 = vmatpush1.msra.mxu0 0.0
        %2553 = vmatprep.subr.mxu0 0.0
        %2554 = vmatpush1.msra.mxu0 0.0
        %2555 = vmatprep.subr.mxu0 0.0
        %2556 = vmatpush1.msra.mxu0 0.0
        %2557 = vmatprep.subr.mxu0 0.0
        %2558 = vmatpush1.msra.mxu0 0.0
        %2559 = vmatprep.subr.mxu0 0.0
        %2560 = vmatpush1.msra.mxu0 0.0
        %2561 = vmatprep.subr.mxu0 0.0
        %2562 = vmatpush1.msra.mxu0 0.0
        %2563 = vmatprep.subr.mxu0 0.0
        %2564 = vmatpush1.msra.mxu0 0.0
        %2565 = vmatprep.subr.mxu0 0.0
        %2566 = vmatpush1.msra.mxu0 0.0
        %2567 = vmatprep.subr.mxu0 0.0
        %2568 = vmatpush1.msra.mxu0 0.0
        %2569 = vmatprep.subr.mxu0 0.0
        %2570 = vmatpush1.msra.mxu0 0.0
        %2571 = vmatprep.subr.mxu0 0.0
        %2572 = vmatpush1.msra.mxu0 0.0
        %2573 = vmatprep.subr.mxu0 0.0
        %2574 = vmatpush1.msra.mxu0 0.0
        %2575 = vmatprep.mubr.f32.mxu0 0.0
        %2576 = vmatmul.mubr.f32.gmra.mrb[0].mxu0 %v2485
        %v2577 = vpop.f32.mrb[0].mxu0
        %v2578 = vadd.f32 0.0, %v2577
        %v2579 = vpop.f32.mrb[0].mxu0
        %v2580 = vadd.f32 0.0, %v2579
        %2581 = vdwg.mxu0
        %2582 = vmatprep.subr.mxu0 %v2497
        %2583 = vmatpush1.msra.mxu0 %v2494
        %2584 = vmatprep.subr.mxu0 0.0
        %2585 = vmatpush1.msra.mxu0 0.0
        %2586 = vmatprep.subr.mxu0 0.0
        %2587 = vmatpush1.msra.mxu0 0.0
        %2588 = vmatprep.subr.mxu0 0.0
        %2589 = vmatpush1.msra.mxu0 0.0
        %2590 = vmatprep.subr.mxu0 0.0
        %2591 = vmatpush1.msra.mxu0 0.0
        %2592 = vmatprep.subr.mxu0 0.0
        %2593 = vmatpush1.msra.mxu0 0.0
        %2594 = vmatprep.subr.mxu0 0.0
        %2595 = vmatpush1.msra.mxu0 0.0
        %2596 = vmatprep.subr.mxu0 0.0
        %2597 = vmatpush1.msra.mxu0 0.0
        %2598 = vmatprep.subr.mxu0 0.0
        %2599 = vmatpush1.msra.mxu0 0.0
        %2600 = vmatprep.subr.mxu0 0.0
        %2601 = vmatpush1.msra.mxu0 0.0
        %2602 = vmatprep.subr.mxu0 0.0
        %2603 = vmatpush1.msra.mxu0 0.0
        %2604 = vmatprep.subr.mxu0 0.0
        %2605 = vmatpush1.msra.mxu0 0.0
        %2606 = vmatprep.subr.mxu0 0.0
        %2607 = vmatpush1.msra.mxu0 0.0
        %2608 = vmatprep.subr.mxu0 0.0
        %2609 = vmatpush1.msra.mxu0 0.0
        %2610 = vmatprep.subr.mxu0 0.0
        %2611 = vmatpush1.msra.mxu0 0.0
        %2612 = vmatprep.subr.mxu0 0.0
        %2613 = vmatpush1.msra.mxu0 0.0
        %2614 = vmatprep.subr.mxu0 0.0
        %2615 = vmatpush1.msra.mxu0 0.0
        %2616 = vmatprep.subr.mxu0 0.0
        %2617 = vmatpush1.msra.mxu0 0.0
        %2618 = vmatprep.subr.mxu0 0.0
        %2619 = vmatpush1.msra.mxu0 0.0
        %2620 = vmatprep.subr.mxu0 0.0
        %2621 = vmatpush1.msra.mxu0 0.0
        %2622 = vmatprep.subr.mxu0 0.0
        %2623 = vmatpush1.msra.mxu0 0.0
        %2624 = vmatprep.subr.mxu0 0.0
        %2625 = vmatpush1.msra.mxu0 0.0
        %2626 = vmatprep.subr.mxu0 0.0
        %2627 = vmatpush1.msra.mxu0 0.0
        %2628 = vmatprep.subr.mxu0 0.0
        %2629 = vmatpush1.msra.mxu0 0.0
        %2630 = vmatprep.subr.mxu0 0.0
        %2631 = vmatpush1.msra.mxu0 0.0
        %2632 = vmatprep.subr.mxu0 0.0
        %2633 = vmatpush1.msra.mxu0 0.0
        %2634 = vmatprep.subr.mxu0 0.0
        %2635 = vmatpush1.msra.mxu0 0.0
        %2636 = vmatprep.subr.mxu0 0.0
        %2637 = vmatpush1.msra.mxu0 0.0
        %2638 = vmatprep.subr.mxu0 0.0
        %2639 = vmatpush1.msra.mxu0 0.0
        %2640 = vmatprep.subr.mxu0 0.0
        %2641 = vmatpush1.msra.mxu0 0.0
        %2642 = vmatprep.subr.mxu0 0.0
        %2643 = vmatpush1.msra.mxu0 0.0
        %2644 = vmatprep.subr.mxu0 0.0
        %2645 = vmatpush1.msra.mxu0 0.0
        %2646 = vmatprep.mubr.f32.mxu0 0.0
        %2647 = vmatmul.mubr.f32.gmra.mrb[0].mxu0 %v2485
        %v2648 = vpop.f32.mrb[0].mxu0
        %v2649 = vadd.f32 0.0, %v2648
        %v2650 = vpop.f32.mrb[0].mxu0
        %v2651 = vadd.f32 0.0, %v2650
        %2652 = vdwg.mxu0
        %2653 = vmatprep.subr.mxu0 %v2503
        %2654 = vmatpush1.msra.mxu0 %v2500
        %2655 = vmatprep.subr.mxu0 0.0
        %2656 = vmatpush1.msra.mxu0 0.0
        %2657 = vmatprep.subr.mxu0 0.0
        %2658 = vmatpush1.msra.mxu0 0.0
        %2659 = vmatprep.subr.mxu0 0.0
        %2660 = vmatpush1.msra.mxu0 0.0
        %2661 = vmatprep.subr.mxu0 0.0
        %2662 = vmatpush1.msra.mxu0 0.0
        %2663 = vmatprep.subr.mxu0 0.0
        %2664 = vmatpush1.msra.mxu0 0.0
        %2665 = vmatprep.subr.mxu0 0.0
        %2666 = vmatpush1.msra.mxu0 0.0
        %2667 = vmatprep.subr.mxu0 0.0
        %2668 = vmatpush1.msra.mxu0 0.0
        %2669 = vmatprep.subr.mxu0 0.0
        %2670 = vmatpush1.msra.mxu0 0.0
        %2671 = vmatprep.subr.mxu0 0.0
        %2672 = vmatpush1.msra.mxu0 0.0
        %2673 = vmatprep.subr.mxu0 0.0
        %2674 = vmatpush1.msra.mxu0 0.0
        %2675 = vmatprep.subr.mxu0 0.0
        %2676 = vmatpush1.msra.mxu0 0.0
        %2677 = vmatprep.subr.mxu0 0.0
        %2678 = vmatpush1.msra.mxu0 0.0
        %2679 = vmatprep.subr.mxu0 0.0
        %2680 = vmatpush1.msra.mxu0 0.0
        %2681 = vmatprep.subr.mxu0 0.0
        %2682 = vmatpush1.msra.mxu0 0.0
        %2683 = vmatprep.subr.mxu0 0.0
        %2684 = vmatpush1.msra.mxu0 0.0
        %2685 = vmatprep.subr.mxu0 0.0
        %2686 = vmatpush1.msra.mxu0 0.0
        %2687 = vmatprep.subr.mxu0 0.0
        %2688 = vmatpush1.msra.mxu0 0.0
        %2689 = vmatprep.subr.mxu0 0.0
        %2690 = vmatpush1.msra.mxu0 0.0
        %2691 = vmatprep.subr.mxu0 0.0
        %2692 = vmatpush1.msra.mxu0 0.0
        %2693 = vmatprep.subr.mxu0 0.0
        %2694 = vmatpush1.msra.mxu0 0.0
        %2695 = vmatprep.subr.mxu0 0.0
        %2696 = vmatpush1.msra.mxu0 0.0
        %2697 = vmatprep.subr.mxu0 0.0
        %2698 = vmatpush1.msra.mxu0 0.0
        %2699 = vmatprep.subr.mxu0 0.0
        %2700 = vmatpush1.msra.mxu0 0.0
        %2701 = vmatprep.subr.mxu0 0.0
        %2702 = vmatpush1.msra.mxu0 0.0
        %2703 = vmatprep.subr.mxu0 0.0
        %2704 = vmatpush1.msra.mxu0 0.0
        %2705 = vmatprep.subr.mxu0 0.0
        %2706 = vmatpush1.msra.mxu0 0.0
        %2707 = vmatprep.subr.mxu0 0.0
        %2708 = vmatpush1.msra.mxu0 0.0
        %2709 = vmatprep.subr.mxu0 0.0
        %2710 = vmatpush1.msra.mxu0 0.0
        %2711 = vmatprep.subr.mxu0 0.0
        %2712 = vmatpush1.msra.mxu0 0.0
        %2713 = vmatprep.subr.mxu0 0.0
        %2714 = vmatpush1.msra.mxu0 0.0
        %2715 = vmatprep.subr.mxu0 0.0
        %2716 = vmatpush1.msra.mxu0 0.0
        %2717 = vmatprep.mubr.f32.mxu0 0.0
        %2718 = vmatmul.mubr.f32.gmra.mrb[0].mxu0 %v2485
        %v2719 = vpop.f32.mrb[0].mxu0
        %v2720 = vadd.f32 0.0, %v2719
        %v2721 = vpop.f32.mrb[0].mxu0
        %v2722 = vadd.f32 0.0, %v2721
        %2723 = vdwg.mxu0
        %2724 = vmatprep.subr.mxu0 %v2509
        %2725 = vmatpush1.msra.mxu0 %v2506
        %2726 = vmatprep.subr.mxu0 0.0
        %2727 = vmatpush1.msra.mxu0 0.0
        %2728 = vmatprep.subr.mxu0 0.0
        %2729 = vmatpush1.msra.mxu0 0.0
        %2730 = vmatprep.subr.mxu0 0.0
        %2731 = vmatpush1.msra.mxu0 0.0
        %2732 = vmatprep.subr.mxu0 0.0
        %2733 = vmatpush1.msra.mxu0 0.0
        %2734 = vmatprep.subr.mxu0 0.0
        %2735 = vmatpush1.msra.mxu0 0.0
        %2736 = vmatprep.subr.mxu0 0.0
        %2737 = vmatpush1.msra.mxu0 0.0
        %2738 = vmatprep.subr.mxu0 0.0
        %2739 = vmatpush1.msra.mxu0 0.0
        %2740 = vmatprep.subr.mxu0 0.0
        %2741 = vmatpush1.msra.mxu0 0.0
        %2742 = vmatprep.subr.mxu0 0.0
        %2743 = vmatpush1.msra.mxu0 0.0
        %2744 = vmatprep.subr.mxu0 0.0
        %2745 = vmatpush1.msra.mxu0 0.0
        %2746 = vmatprep.subr.mxu0 0.0
        %2747 = vmatpush1.msra.mxu0 0.0
        %2748 = vmatprep.subr.mxu0 0.0
        %2749 = vmatpush1.msra.mxu0 0.0
        %2750 = vmatprep.subr.mxu0 0.0
        %2751 = vmatpush1.msra.mxu0 0.0
        %2752 = vmatprep.subr.mxu0 0.0
        %2753 = vmatpush1.msra.mxu0 0.0
        %2754 = vmatprep.subr.mxu0 0.0
        %2755 = vmatpush1.msra.mxu0 0.0
        %2756 = vmatprep.subr.mxu0 0.0
        %2757 = vmatpush1.msra.mxu0 0.0
        %2758 = vmatprep.subr.mxu0 0.0
        %2759 = vmatpush1.msra.mxu0 0.0
        %2760 = vmatprep.subr.mxu0 0.0
        %2761 = vmatpush1.msra.mxu0 0.0
        %2762 = vmatprep.subr.mxu0 0.0
        %2763 = vmatpush1.msra.mxu0 0.0
        %2764 = vmatprep.subr.mxu0 0.0
        %2765 = vmatpush1.msra.mxu0 0.0
        %2766 = vmatprep.subr.mxu0 0.0
        %2767 = vmatpush1.msra.mxu0 0.0
        %2768 = vmatprep.subr.mxu0 0.0
        %2769 = vmatpush1.msra.mxu0 0.0
        %2770 = vmatprep.subr.mxu0 0.0
        %2771 = vmatpush1.msra.mxu0 0.0
        %2772 = vmatprep.subr.mxu0 0.0
        %2773 = vmatpush1.msra.mxu0 0.0
        %2774 = vmatprep.subr.mxu0 0.0
        %2775 = vmatpush1.msra.mxu0 0.0
        %2776 = vmatprep.subr.mxu0 0.0
        %2777 = vmatpush1.msra.mxu0 0.0
        %2778 = vmatprep.subr.mxu0 0.0
        %2779 = vmatpush1.msra.mxu0 0.0
        %2780 = vmatprep.subr.mxu0 0.0
        %2781 = vmatpush1.msra.mxu0 0.0
        %2782 = vmatprep.subr.mxu0 0.0
        %2783 = vmatpush1.msra.mxu0 0.0
        %2784 = vmatprep.subr.mxu0 0.0
        %2785 = vmatpush1.msra.mxu0 0.0
        %2786 = vmatprep.subr.mxu0 0.0
        %2787 = vmatpush1.msra.mxu0 0.0
        %2788 = vmatprep.mubr.f32.mxu0 0.0
        %2789 = vmatmul.mubr.f32.gmra.mrb[0].mxu0 %v2485
        %v2790 = vpop.f32.mrb[0].mxu0
        %v2791 = vadd.f32 0.0, %v2790
        %v2792 = vpop.f32.mrb[0].mxu0
        %v2793 = vadd.f32 0.0, %v2792
        %2794 = vdwg.mxu0
        %v2795 = vadd.f32 %v2209, %v2578
        %v2796 = vadd.f32 %v2211, %v2580
        %v2797 = vadd.f32 %v2280, %v2649
        %v2798 = vadd.f32 %v2282, %v2651
        %v2799 = vadd.f32 %v2351, %v2720
        %v2800 = vadd.f32 %v2353, %v2722
        %v2801 = vadd.f32 %v2422, %v2791
        %v2802 = vadd.f32 %v2424, %v2793
        %v2803 = vld [vmem:[%s6] sm:$0xff]
        %2805 = vset.pattern.permute.xlu0 0
        %2806 = vperm.xlu0 %2805, %v2803
        %v2807 = vpop.permute.xlu0 %2806
        %v2809 = vadd.f32 %v2795, %v2807
        %v2810 = vadd.f32 %v2796, %v2807
        %v2811 = vadd.f32 %v2797, %v2807
        %v2812 = vadd.f32 %v2798, %v2807
        %v2813 = vadd.f32 %v2799, %v2807
        %v2814 = vadd.f32 %v2800, %v2807
        %v2815 = vadd.f32 %v2801, %v2807
        %v2816 = vadd.f32 %v2802, %v2807
        %v2817 = vmax.f32 %v2809, 0.0
        %v2818 = vmax.f32 %v2810, 0.0
        %v2819 = vmax.f32 %v2811, 0.0
        %v2820 = vmax.f32 %v2812, 0.0
        %v2821 = vmax.f32 %v2813, 0.0
        %v2822 = vmax.f32 %v2814, 0.0
        %v2823 = vmax.f32 %v2815, 0.0
        %v2824 = vmax.f32 %v2816, 0.0
        %2825 = vmatprep.subr.mxu0 0.0
        %2826 = vmatpush1.msra.mxu0 %v1143
        %2827 = vmatprep.subr.mxu0 0.0
        %2828 = vmatpush1.msra.mxu0 %v1144
        %2829 = vmatprep.subr.mxu0 0.0
        %2830 = vmatpush1.msra.mxu0 %v1145
        %2831 = vmatprep.subr.mxu0 0.0
        %2832 = vmatpush1.msra.mxu0 %v1146
        %2833 = vmatprep.subr.mxu0 0.0
        %2834 = vmatpush1.msra.mxu0 %v1147
        %2835 = vmatprep.subr.mxu0 0.0
        %2836 = vmatpush1.msra.mxu0 %v1148
        %2837 = vmatprep.subr.mxu0 0.0
        %2838 = vmatpush1.msra.mxu0 %v1149
        %2839 = vmatprep.subr.mxu0 0.0
        %2840 = vmatpush1.msra.mxu0 %v1150
        %2841 = vmatprep.subr.mxu0 0.0
        %2842 = vmatpush1.msra.mxu0 %v1151
        %2843 = vmatprep.subr.mxu0 0.0
        %2844 = vmatpush1.msra.mxu0 %v1152
        %2845 = vmatprep.subr.mxu0 0.0
        %2846 = vmatpush1.msra.mxu0 %v1153
        %2847 = vmatprep.subr.mxu0 0.0
        %2848 = vmatpush1.msra.mxu0 %v1154
        %2849 = vmatprep.subr.mxu0 0.0
        %2850 = vmatpush1.msra.mxu0 %v1155
        %2851 = vmatprep.subr.mxu0 0.0
        %2852 = vmatpush1.msra.mxu0 %v1156
        %2853 = vmatprep.subr.mxu0 0.0
        %2854 = vmatpush1.msra.mxu0 %v1157
        %2855 = vmatprep.subr.mxu0 0.0
        %2856 = vmatpush1.msra.mxu0 %v1158
        %2857 = vmatprep.subr.mxu0 0.0
        %2858 = vmatpush1.msra.mxu0 %v1159
        %2859 = vmatprep.subr.mxu0 0.0
        %2860 = vmatpush1.msra.mxu0 %v1160
        %2861 = vmatprep.subr.mxu0 0.0
        %2862 = vmatpush1.msra.mxu0 %v1161
        %2863 = vmatprep.subr.mxu0 0.0
        %2864 = vmatpush1.msra.mxu0 %v1162
        %2865 = vmatprep.subr.mxu0 0.0
        %2866 = vmatpush1.msra.mxu0 %v1163
        %2867 = vmatprep.subr.mxu0 0.0
        %2868 = vmatpush1.msra.mxu0 %v1164
        %2869 = vmatprep.subr.mxu0 0.0
        %2870 = vmatpush1.msra.mxu0 %v1165
        %2871 = vmatprep.subr.mxu0 0.0
        %2872 = vmatpush1.msra.mxu0 %v1166
        %2873 = vmatprep.subr.mxu0 0.0
        %2874 = vmatpush1.msra.mxu0 %v1167
        %2875 = vmatprep.subr.mxu0 0.0
        %2876 = vmatpush1.msra.mxu0 %v1168
        %2877 = vmatprep.subr.mxu0 0.0
        %2878 = vmatpush1.msra.mxu0 %v1169
        %2879 = vmatprep.subr.mxu0 0.0
        %2880 = vmatpush1.msra.mxu0 %v1170
        %2881 = vmatprep.subr.mxu0 0.0
        %2882 = vmatpush1.msra.mxu0 %v1171
        %2883 = vmatprep.subr.mxu0 0.0
        %2884 = vmatpush1.msra.mxu0 %v1172
        %2885 = vmatprep.subr.mxu0 0.0
        %2886 = vmatpush1.msra.mxu0 %v1173
        %2887 = vmatprep.subr.mxu0 0.0
        %2888 = vmatpush1.msra.mxu0 %v1174
        %2889 = vmatprep.mubr.f32.mxu0 %v2818
        %2890 = vmatmul.mubr.f32.gmra.mrb[0].mxu0 %v2817
        %v2891 = vpop.f32.mrb[0].mxu0
        %v2892 = vadd.f32 0.0, %v2891
        %v2893 = vpop.f32.mrb[0].mxu0
        %2894 = vdwg.mxu0
        %2895 = vmatprep.subr.mxu0 0.0
        %2896 = vmatpush1.msra.mxu0 %v1143
        %2897 = vmatprep.subr.mxu0 0.0
        %2898 = vmatpush1.msra.mxu0 %v1144
        %2899 = vmatprep.subr.mxu0 0.0
        %2900 = vmatpush1.msra.mxu0 %v1145
        %2901 = vmatprep.subr.mxu0 0.0
        %2902 = vmatpush1.msra.mxu0 %v1146
        %2903 = vmatprep.subr.mxu0 0.0
        %2904 = vmatpush1.msra.mxu0 %v1147
        %2905 = vmatprep.subr.mxu0 0.0
        %2906 = vmatpush1.msra.mxu0 %v1148
        %2907 = vmatprep.subr.mxu0 0.0
        %2908 = vmatpush1.msra.mxu0 %v1149
        %2909 = vmatprep.subr.mxu0 0.0
        %2910 = vmatpush1.msra.mxu0 %v1150
        %2911 = vmatprep.subr.mxu0 0.0
        %2912 = vmatpush1.msra.mxu0 %v1151
        %2913 = vmatprep.subr.mxu0 0.0
        %2914 = vmatpush1.msra.mxu0 %v1152
        %2915 = vmatprep.subr.mxu0 0.0
        %2916 = vmatpush1.msra.mxu0 %v1153
        %2917 = vmatprep.subr.mxu0 0.0
        %2918 = vmatpush1.msra.mxu0 %v1154
        %2919 = vmatprep.subr.mxu0 0.0
        %2920 = vmatpush1.msra.mxu0 %v1155
        %2921 = vmatprep.subr.mxu0 0.0
        %2922 = vmatpush1.msra.mxu0 %v1156
        %2923 = vmatprep.subr.mxu0 0.0
        %2924 = vmatpush1.msra.mxu0 %v1157
        %2925 = vmatprep.subr.mxu0 0.0
        %2926 = vmatpush1.msra.mxu0 %v1158
        %2927 = vmatprep.subr.mxu0 0.0
        %2928 = vmatpush1.msra.mxu0 %v1159
        %2929 = vmatprep.subr.mxu0 0.0
        %2930 = vmatpush1.msra.mxu0 %v1160
        %2931 = vmatprep.subr.mxu0 0.0
        %2932 = vmatpush1.msra.mxu0 %v1161
        %2933 = vmatprep.subr.mxu0 0.0
        %2934 = vmatpush1.msra.mxu0 %v1162
        %2935 = vmatprep.subr.mxu0 0.0
        %2936 = vmatpush1.msra.mxu0 %v1163
        %2937 = vmatprep.subr.mxu0 0.0
        %2938 = vmatpush1.msra.mxu0 %v1164
        %2939 = vmatprep.subr.mxu0 0.0
        %2940 = vmatpush1.msra.mxu0 %v1165
        %2941 = vmatprep.subr.mxu0 0.0
        %2942 = vmatpush1.msra.mxu0 %v1166
        %2943 = vmatprep.subr.mxu0 0.0
        %2944 = vmatpush1.msra.mxu0 %v1167
        %2945 = vmatprep.subr.mxu0 0.0
        %2946 = vmatpush1.msra.mxu0 %v1168
        %2947 = vmatprep.subr.mxu0 0.0
        %2948 = vmatpush1.msra.mxu0 %v1169
        %2949 = vmatprep.subr.mxu0 0.0
        %2950 = vmatpush1.msra.mxu0 %v1170
        %2951 = vmatprep.subr.mxu0 0.0
        %2952 = vmatpush1.msra.mxu0 %v1171
        %2953 = vmatprep.subr.mxu0 0.0
        %2954 = vmatpush1.msra.mxu0 %v1172
        %2955 = vmatprep.subr.mxu0 0.0
        %2956 = vmatpush1.msra.mxu0 %v1173
        %2957 = vmatprep.subr.mxu0 0.0
        %2958 = vmatpush1.msra.mxu0 %v1174
        %2959 = vmatprep.mubr.f32.mxu0 %v2820
        %2960 = vmatmul.mubr.f32.gmra.mrb[0].mxu0 %v2819
        %v2961 = vpop.f32.mrb[0].mxu0
        %v2962 = vadd.f32 0.0, %v2961
        %v2963 = vpop.f32.mrb[0].mxu0
        %2964 = vdwg.mxu0
        %2965 = vmatprep.subr.mxu0 0.0
        %2966 = vmatpush1.msra.mxu0 %v1143
        %2967 = vmatprep.subr.mxu0 0.0
        %2968 = vmatpush1.msra.mxu0 %v1144
        %2969 = vmatprep.subr.mxu0 0.0
        %2970 = vmatpush1.msra.mxu0 %v1145
        %2971 = vmatprep.subr.mxu0 0.0
        %2972 = vmatpush1.msra.mxu0 %v1146
        %2973 = vmatprep.subr.mxu0 0.0
        %2974 = vmatpush1.msra.mxu0 %v1147
        %2975 = vmatprep.subr.mxu0 0.0
        %2976 = vmatpush1.msra.mxu0 %v1148
        %2977 = vmatprep.subr.mxu0 0.0
        %2978 = vmatpush1.msra.mxu0 %v1149
        %2979 = vmatprep.subr.mxu0 0.0
        %2980 = vmatpush1.msra.mxu0 %v1150
        %2981 = vmatprep.subr.mxu0 0.0
        %2982 = vmatpush1.msra.mxu0 %v1151
        %2983 = vmatprep.subr.mxu0 0.0
        %2984 = vmatpush1.msra.mxu0 %v1152
        %2985 = vmatprep.subr.mxu0 0.0
        %2986 = vmatpush1.msra.mxu0 %v1153
        %2987 = vmatprep.subr.mxu0 0.0
        %2988 = vmatpush1.msra.mxu0 %v1154
        %2989 = vmatprep.subr.mxu0 0.0
        %2990 = vmatpush1.msra.mxu0 %v1155
        %2991 = vmatprep.subr.mxu0 0.0
        %2992 = vmatpush1.msra.mxu0 %v1156
        %2993 = vmatprep.subr.mxu0 0.0
        %2994 = vmatpush1.msra.mxu0 %v1157
        %2995 = vmatprep.subr.mxu0 0.0
        %2996 = vmatpush1.msra.mxu0 %v1158
        %2997 = vmatprep.subr.mxu0 0.0
        %2998 = vmatpush1.msra.mxu0 %v1159
        %2999 = vmatprep.subr.mxu0 0.0
        %3000 = vmatpush1.msra.mxu0 %v1160
        %3001 = vmatprep.subr.mxu0 0.0
        %3002 = vmatpush1.msra.mxu0 %v1161
        %3003 = vmatprep.subr.mxu0 0.0
        %3004 = vmatpush1.msra.mxu0 %v1162
        %3005 = vmatprep.subr.mxu0 0.0
        %3006 = vmatpush1.msra.mxu0 %v1163
        %3007 = vmatprep.subr.mxu0 0.0
        %3008 = vmatpush1.msra.mxu0 %v1164
        %3009 = vmatprep.subr.mxu0 0.0
        %3010 = vmatpush1.msra.mxu0 %v1165
        %3011 = vmatprep.subr.mxu0 0.0
        %3012 = vmatpush1.msra.mxu0 %v1166
        %3013 = vmatprep.subr.mxu0 0.0
        %3014 = vmatpush1.msra.mxu0 %v1167
        %3015 = vmatprep.subr.mxu0 0.0
        %3016 = vmatpush1.msra.mxu0 %v1168
        %3017 = vmatprep.subr.mxu0 0.0
        %3018 = vmatpush1.msra.mxu0 %v1169
        %3019 = vmatprep.subr.mxu0 0.0
        %3020 = vmatpush1.msra.mxu0 %v1170
        %3021 = vmatprep.subr.mxu0 0.0
        %3022 = vmatpush1.msra.mxu0 %v1171
        %3023 = vmatprep.subr.mxu0 0.0
        %3024 = vmatpush1.msra.mxu0 %v1172
        %3025 = vmatprep.subr.mxu0 0.0
        %3026 = vmatpush1.msra.mxu0 %v1173
        %3027 = vmatprep.subr.mxu0 0.0
        %3028 = vmatpush1.msra.mxu0 %v1174
        %3029 = vmatprep.mubr.f32.mxu0 %v2822
        %3030 = vmatmul.mubr.f32.gmra.mrb[0].mxu0 %v2821
        %v3031 = vpop.f32.mrb[0].mxu0
        %v3032 = vadd.f32 0.0, %v3031
        %v3033 = vpop.f32.mrb[0].mxu0
        %3034 = vdwg.mxu0
        %3035 = vmatprep.subr.mxu0 0.0
        %3036 = vmatpush1.msra.mxu0 %v1143
        %3037 = vmatprep.subr.mxu0 0.0
        %3038 = vmatpush1.msra.mxu0 %v1144
        %3039 = vmatprep.subr.mxu0 0.0
        %3040 = vmatpush1.msra.mxu0 %v1145
        %3041 = vmatprep.subr.mxu0 0.0
        %3042 = vmatpush1.msra.mxu0 %v1146
        %3043 = vmatprep.subr.mxu0 0.0
        %3044 = vmatpush1.msra.mxu0 %v1147
        %3045 = vmatprep.subr.mxu0 0.0
        %3046 = vmatpush1.msra.mxu0 %v1148
        %3047 = vmatprep.subr.mxu0 0.0
        %3048 = vmatpush1.msra.mxu0 %v1149
        %3049 = vmatprep.subr.mxu0 0.0
        %3050 = vmatpush1.msra.mxu0 %v1150
        %3051 = vmatprep.subr.mxu0 0.0
        %3052 = vmatpush1.msra.mxu0 %v1151
        %3053 = vmatprep.subr.mxu0 0.0
        %3054 = vmatpush1.msra.mxu0 %v1152
        %3055 = vmatprep.subr.mxu0 0.0
        %3056 = vmatpush1.msra.mxu0 %v1153
        %3057 = vmatprep.subr.mxu0 0.0
        %3058 = vmatpush1.msra.mxu0 %v1154
        %3059 = vmatprep.subr.mxu0 0.0
        %3060 = vmatpush1.msra.mxu0 %v1155
        %3061 = vmatprep.subr.mxu0 0.0
        %3062 = vmatpush1.msra.mxu0 %v1156
        %3063 = vmatprep.subr.mxu0 0.0
        %3064 = vmatpush1.msra.mxu0 %v1157
        %3065 = vmatprep.subr.mxu0 0.0
        %3066 = vmatpush1.msra.mxu0 %v1158
        %3067 = vmatprep.subr.mxu0 0.0
        %3068 = vmatpush1.msra.mxu0 %v1159
        %3069 = vmatprep.subr.mxu0 0.0
        %3070 = vmatpush1.msra.mxu0 %v1160
        %3071 = vmatprep.subr.mxu0 0.0
        %3072 = vmatpush1.msra.mxu0 %v1161
        %3073 = vmatprep.subr.mxu0 0.0
        %3074 = vmatpush1.msra.mxu0 %v1162
        %3075 = vmatprep.subr.mxu0 0.0
        %3076 = vmatpush1.msra.mxu0 %v1163
        %3077 = vmatprep.subr.mxu0 0.0
        %3078 = vmatpush1.msra.mxu0 %v1164
        %3079 = vmatprep.subr.mxu0 0.0
        %3080 = vmatpush1.msra.mxu0 %v1165
        %3081 = vmatprep.subr.mxu0 0.0
        %3082 = vmatpush1.msra.mxu0 %v1166
        %3083 = vmatprep.subr.mxu0 0.0
        %3084 = vmatpush1.msra.mxu0 %v1167
        %3085 = vmatprep.subr.mxu0 0.0
        %3086 = vmatpush1.msra.mxu0 %v1168
        %3087 = vmatprep.subr.mxu0 0.0
        %3088 = vmatpush1.msra.mxu0 %v1169
        %3089 = vmatprep.subr.mxu0 0.0
        %3090 = vmatpush1.msra.mxu0 %v1170
        %3091 = vmatprep.subr.mxu0 0.0
        %3092 = vmatpush1.msra.mxu0 %v1171
        %3093 = vmatprep.subr.mxu0 0.0
        %3094 = vmatpush1.msra.mxu0 %v1172
        %3095 = vmatprep.subr.mxu0 0.0
        %3096 = vmatpush1.msra.mxu0 %v1173
        %3097 = vmatprep.subr.mxu0 0.0
        %3098 = vmatpush1.msra.mxu0 %v1174
        %3099 = vmatprep.mubr.f32.mxu0 %v2824
        %3100 = vmatmul.mubr.f32.gmra.mrb[0].mxu0 %v2823
        %v3101 = vpop.f32.mrb[0].mxu0
        %v3102 = vadd.f32 0.0, %v3101
        %v3103 = vpop.f32.mrb[0].mxu0
        %3104 = vdwg.mxu0
        %v3105 = vand.u32 %v601, 63
        %v3106 = vand.u32 %v602, 63
        %v3107 = vand.u32 %v603, 63
        %v3108 = vand.u32 %v604, 63
        %3109 = vrot.lane.b32.xlu0 %v2892, 1
        %v3110 = vpop.permute.xlu0 %3109
        %3111 = vrot.lane.b32.xlu0 %v2962, 1
        %v3112 = vpop.permute.xlu0 %3111
        %3113 = vrot.lane.b32.xlu0 %v3032, 1
        %v3114 = vpop.permute.xlu0 %3113
        %3115 = vrot.lane.b32.xlu0 %v3102, 1
        %v3116 = vpop.permute.xlu0 %3115
        %v3117 = vsel %vm747, %v3114, %v3116
        %v3118 = vsel %vm747, %v3112, %v3114
        %v3119 = vsel %vm747, %v3110, %v3112
        %v3120 = vsel %vm747, %v3116, %v3110
        %vm3121 = vcmp.ge.s32.totalorder %v3105, 1
        %vm3122 = vcmp.ge.s32.totalorder %v3106, 1
        %vm3123 = vcmp.ge.s32.totalorder %v3107, 1
        %vm3124 = vcmp.ge.s32.totalorder %v3108, 1
        %v3125 = vsel %vm3121, 1, 0
        %v3126 = vsel %vm3122, 1, 0
        %v3127 = vsel %vm3123, 1, 0
        %v3128 = vsel %vm3124, 1, 0
        %vm3129 = vcmp.eq.s32.totalorder %v3125, 1
        %vm3130 = vcmp.eq.s32.totalorder %v3126, 1
        %vm3131 = vcmp.eq.s32.totalorder %v3127, 1
        %vm3132 = vcmp.eq.s32.totalorder %v3128, 1
        %v3133 = vsel %vm3129, %v3120, 0.0
        %v3134 = vsel %vm3130, %v3119, 0.0
        %v3135 = vsel %vm3131, %v3118, 0.0
        %v3136 = vsel %vm3132, %v3117, 0.0
        %v3137 = vld [vmem:[%s7] sm:$0xff]
        %v3138 = vld [vmem:[%s7 + $0x8] sm:$0xff]
        %s3139 = scalar_lea.vmem %s7, 16
        %v3140 = vld [vmem:[%s3139] sm:$0xff]
        %v3141 = vld [vmem:[%s3139 + $0x8] sm:$0xff]
        %vm3142 = vcmask 64512
        %v3144 = vsel %vm3142, %v3140, 0
        %v3147 = vsel %vm3142, %v3141, 0
        %3149 = vmatprep.subr.mxu0 %v2962
        %3150 = vmatpush1.msra.mxu0 %v2892
        %3151 = vmatprep.subr.mxu0 0.0
        %3152 = vmatpush1.msra.mxu0 0.0
        %3153 = vmatprep.subr.mxu0 0.0
        %3154 = vmatpush1.msra.mxu0 0.0
        %3155 = vmatprep.subr.mxu0 0.0
        %3156 = vmatpush1.msra.mxu0 0.0
        %3157 = vmatprep.subr.mxu0 0.0
        %3158 = vmatpush1.msra.mxu0 0.0
        %3159 = vmatprep.subr.mxu0 0.0
        %3160 = vmatpush1.msra.mxu0 0.0
        %3161 = vmatprep.subr.mxu0 0.0
        %3162 = vmatpush1.msra.mxu0 0.0
        %3163 = vmatprep.subr.mxu0 0.0
        %3164 = vmatpush1.msra.mxu0 0.0
        %3165 = vmatprep.subr.mxu0 0.0
        %3166 = vmatpush1.msra.mxu0 0.0
        %3167 = vmatprep.subr.mxu0 0.0
        %3168 = vmatpush1.msra.mxu0 0.0
        %3169 = vmatprep.subr.mxu0 0.0
        %3170 = vmatpush1.msra.mxu0 0.0
        %3171 = vmatprep.subr.mxu0 0.0
        %3172 = vmatpush1.msra.mxu0 0.0
        %3173 = vmatprep.subr.mxu0 0.0
        %3174 = vmatpush1.msra.mxu0 0.0
        %3175 = vmatprep.subr.mxu0 0.0
        %3176 = vmatpush1.msra.mxu0 0.0
        %3177 = vmatprep.subr.mxu0 0.0
        %3178 = vmatpush1.msra.mxu0 0.0
        %3179 = vmatprep.subr.mxu0 0.0
        %3180 = vmatpush1.msra.mxu0 0.0
        %3181 = vmatprep.subr.mxu0 0.0
        %3182 = vmatpush1.msra.mxu0 0.0
        %3183 = vmatprep.subr.mxu0 0.0
        %3184 = vmatpush1.msra.mxu0 0.0
        %3185 = vmatprep.subr.mxu0 0.0
        %3186 = vmatpush1.msra.mxu0 0.0
        %3187 = vmatprep.subr.mxu0 0.0
        %3188 = vmatpush1.msra.mxu0 0.0
        %3189 = vmatprep.subr.mxu0 0.0
        %3190 = vmatpush1.msra.mxu0 0.0
        %3191 = vmatprep.subr.mxu0 0.0
        %3192 = vmatpush1.msra.mxu0 0.0
        %3193 = vmatprep.subr.mxu0 0.0
        %3194 = vmatpush1.msra.mxu0 0.0
        %3195 = vmatprep.subr.mxu0 0.0
        %3196 = vmatpush1.msra.mxu0 0.0
        %3197 = vmatprep.subr.mxu0 0.0
        %3198 = vmatpush1.msra.mxu0 0.0
        %3199 = vmatprep.subr.mxu0 0.0
        %3200 = vmatpush1.msra.mxu0 0.0
        %3201 = vmatprep.subr.mxu0 0.0
        %3202 = vmatpush1.msra.mxu0 0.0
        %3203 = vmatprep.subr.mxu0 0.0
        %3204 = vmatpush1.msra.mxu0 0.0
        %3205 = vmatprep.subr.mxu0 0.0
        %3206 = vmatpush1.msra.mxu0 0.0
        %3207 = vmatprep.subr.mxu0 0.0
        %3208 = vmatpush1.msra.mxu0 0.0
        %3209 = vmatprep.subr.mxu0 0.0
        %3210 = vmatpush1.msra.mxu0 0.0
        %3211 = vmatprep.subr.mxu0 0.0
        %3212 = vmatpush1.msra.mxu0 0.0
        %3213 = vmatprep.mubr.f32.mxu0 0.0
        %3214 = vmatmul.mubr.f32.gmra.mrb[0].mxu0 %v3144
        %v3215 = vpop.f32.mrb[0].mxu0
        %v3216 = vadd.f32 0.0, %v3215
        %v3217 = vpop.f32.mrb[0].mxu0
        %v3218 = vadd.f32 0.0, %v3217
        %3219 = vmatprep.mubr.f32.mxu0 0.0
        %3220 = vmatmul.mubr.f32.gmra.mrb[0].mxu0 %v3147
        %v3221 = vpop.f32.mrb[0].mxu0
        %v3222 = vadd.f32 0.0, %v3221
        %v3223 = vpop.f32.mrb[0].mxu0
        %v3224 = vadd.f32 0.0, %v3223
        %3225 = vdwg.mxu0
        %3226 = vmatprep.subr.mxu0 %v3102
        %3227 = vmatpush1.msra.mxu0 %v3032
        %3228 = vmatprep.subr.mxu0 0.0
        %3229 = vmatpush1.msra.mxu0 0.0
        %3230 = vmatprep.subr.mxu0 0.0
        %3231 = vmatpush1.msra.mxu0 0.0
        %3232 = vmatprep.subr.mxu0 0.0
        %3233 = vmatpush1.msra.mxu0 0.0
        %3234 = vmatprep.subr.mxu0 0.0
        %3235 = vmatpush1.msra.mxu0 0.0
        %3236 = vmatprep.subr.mxu0 0.0
        %3237 = vmatpush1.msra.mxu0 0.0
        %3238 = vmatprep.subr.mxu0 0.0
        %3239 = vmatpush1.msra.mxu0 0.0
        %3240 = vmatprep.subr.mxu0 0.0
        %3241 = vmatpush1.msra.mxu0 0.0
        %3242 = vmatprep.subr.mxu0 0.0
        %3243 = vmatpush1.msra.mxu0 0.0
        %3244 = vmatprep.subr.mxu0 0.0
        %3245 = vmatpush1.msra.mxu0 0.0
        %3246 = vmatprep.subr.mxu0 0.0
        %3247 = vmatpush1.msra.mxu0 0.0
        %3248 = vmatprep.subr.mxu0 0.0
        %3249 = vmatpush1.msra.mxu0 0.0
        %3250 = vmatprep.subr.mxu0 0.0
        %3251 = vmatpush1.msra.mxu0 0.0
        %3252 = vmatprep.subr.mxu0 0.0
        %3253 = vmatpush1.msra.mxu0 0.0
        %3254 = vmatprep.subr.mxu0 0.0
        %3255 = vmatpush1.msra.mxu0 0.0
        %3256 = vmatprep.subr.mxu0 0.0
        %3257 = vmatpush1.msra.mxu0 0.0
        %3258 = vmatprep.subr.mxu0 0.0
        %3259 = vmatpush1.msra.mxu0 0.0
        %3260 = vmatprep.subr.mxu0 0.0
        %3261 = vmatpush1.msra.mxu0 0.0
        %3262 = vmatprep.subr.mxu0 0.0
        %3263 = vmatpush1.msra.mxu0 0.0
        %3264 = vmatprep.subr.mxu0 0.0
        %3265 = vmatpush1.msra.mxu0 0.0
        %3266 = vmatprep.subr.mxu0 0.0
        %3267 = vmatpush1.msra.mxu0 0.0
        %3268 = vmatprep.subr.mxu0 0.0
        %3269 = vmatpush1.msra.mxu0 0.0
        %3270 = vmatprep.subr.mxu0 0.0
        %3271 = vmatpush1.msra.mxu0 0.0
        %3272 = vmatprep.subr.mxu0 0.0
        %3273 = vmatpush1.msra.mxu0 0.0
        %3274 = vmatprep.subr.mxu0 0.0
        %3275 = vmatpush1.msra.mxu0 0.0
        %3276 = vmatprep.subr.mxu0 0.0
        %3277 = vmatpush1.msra.mxu0 0.0
        %3278 = vmatprep.subr.mxu0 0.0
        %3279 = vmatpush1.msra.mxu0 0.0
        %3280 = vmatprep.subr.mxu0 0.0
        %3281 = vmatpush1.msra.mxu0 0.0
        %3282 = vmatprep.subr.mxu0 0.0
        %3283 = vmatpush1.msra.mxu0 0.0
        %3284 = vmatprep.subr.mxu0 0.0
        %3285 = vmatpush1.msra.mxu0 0.0
        %3286 = vmatprep.subr.mxu0 0.0
        %3287 = vmatpush1.msra.mxu0 0.0
        %3288 = vmatprep.subr.mxu0 0.0
        %3289 = vmatpush1.msra.mxu0 0.0
        %3290 = vmatprep.mubr.f32.mxu0 0.0
        %3291 = vmatmul.mubr.f32.gmra.mrb[0].mxu0 %v3144
        %v3292 = vpop.f32.mrb[0].mxu0
        %v3293 = vadd.f32 0.0, %v3292
        %v3294 = vpop.f32.mrb[0].mxu0
        %v3295 = vadd.f32 0.0, %v3294
        %3296 = vmatprep.mubr.f32.mxu0 0.0
        %3297 = vmatmul.mubr.f32.gmra.mrb[0].mxu0 %v3147
        %v3298 = vpop.f32.mrb[0].mxu0
        %v3299 = vadd.f32 0.0, %v3298
        %v3300 = vpop.f32.mrb[0].mxu0
        %v3301 = vadd.f32 0.0, %v3300
        %3302 = vdwg.mxu0
        %v3304 = vsel %vm3142, %v3137, 0
        %v3307 = vsel %vm3142, %v3138, 0
        %3309 = vmatprep.subr.mxu0 %v3134
        %3310 = vmatpush1.msra.mxu0 %v3133
        %3311 = vmatprep.subr.mxu0 0.0
        %3312 = vmatpush1.msra.mxu0 0.0
        %3313 = vmatprep.subr.mxu0 0.0
        %3314 = vmatpush1.msra.mxu0 0.0
        %3315 = vmatprep.subr.mxu0 0.0
        %3316 = vmatpush1.msra.mxu0 0.0
        %3317 = vmatprep.subr.mxu0 0.0
        %3318 = vmatpush1.msra.mxu0 0.0
        %3319 = vmatprep.subr.mxu0 0.0
        %3320 = vmatpush1.msra.mxu0 0.0
        %3321 = vmatprep.subr.mxu0 0.0
        %3322 = vmatpush1.msra.mxu0 0.0
        %3323 = vmatprep.subr.mxu0 0.0
        %3324 = vmatpush1.msra.mxu0 0.0
        %3325 = vmatprep.subr.mxu0 0.0
        %3326 = vmatpush1.msra.mxu0 0.0
        %3327 = vmatprep.subr.mxu0 0.0
        %3328 = vmatpush1.msra.mxu0 0.0
        %3329 = vmatprep.subr.mxu0 0.0
        %3330 = vmatpush1.msra.mxu0 0.0
        %3331 = vmatprep.subr.mxu0 0.0
        %3332 = vmatpush1.msra.mxu0 0.0
        %3333 = vmatprep.subr.mxu0 0.0
        %3334 = vmatpush1.msra.mxu0 0.0
        %3335 = vmatprep.subr.mxu0 0.0
        %3336 = vmatpush1.msra.mxu0 0.0
        %3337 = vmatprep.subr.mxu0 0.0
        %3338 = vmatpush1.msra.mxu0 0.0
        %3339 = vmatprep.subr.mxu0 0.0
        %3340 = vmatpush1.msra.mxu0 0.0
        %3341 = vmatprep.subr.mxu0 0.0
        %3342 = vmatpush1.msra.mxu0 0.0
        %3343 = vmatprep.subr.mxu0 0.0
        %3344 = vmatpush1.msra.mxu0 0.0
        %3345 = vmatprep.subr.mxu0 0.0
        %3346 = vmatpush1.msra.mxu0 0.0
        %3347 = vmatprep.subr.mxu0 0.0
        %3348 = vmatpush1.msra.mxu0 0.0
        %3349 = vmatprep.subr.mxu0 0.0
        %3350 = vmatpush1.msra.mxu0 0.0
        %3351 = vmatprep.subr.mxu0 0.0
        %3352 = vmatpush1.msra.mxu0 0.0
        %3353 = vmatprep.subr.mxu0 0.0
        %3354 = vmatpush1.msra.mxu0 0.0
        %3355 = vmatprep.subr.mxu0 0.0
        %3356 = vmatpush1.msra.mxu0 0.0
        %3357 = vmatprep.subr.mxu0 0.0
        %3358 = vmatpush1.msra.mxu0 0.0
        %3359 = vmatprep.subr.mxu0 0.0
        %3360 = vmatpush1.msra.mxu0 0.0
        %3361 = vmatprep.subr.mxu0 0.0
        %3362 = vmatpush1.msra.mxu0 0.0
        %3363 = vmatprep.subr.mxu0 0.0
        %3364 = vmatpush1.msra.mxu0 0.0
        %3365 = vmatprep.subr.mxu0 0.0
        %3366 = vmatpush1.msra.mxu0 0.0
        %3367 = vmatprep.subr.mxu0 0.0
        %3368 = vmatpush1.msra.mxu0 0.0
        %3369 = vmatprep.subr.mxu0 0.0
        %3370 = vmatpush1.msra.mxu0 0.0
        %3371 = vmatprep.subr.mxu0 0.0
        %3372 = vmatpush1.msra.mxu0 0.0
        %3373 = vmatprep.mubr.f32.mxu0 0.0
        %3374 = vmatmul.mubr.f32.gmra.mrb[0].mxu0 %v3304
        %v3375 = vpop.f32.mrb[0].mxu0
        %v3376 = vadd.f32 %v3216, %v3375
        %v3377 = vpop.f32.mrb[0].mxu0
        %v3378 = vadd.f32 %v3218, %v3377
        %3379 = vmatprep.mubr.f32.mxu0 0.0
        %3380 = vmatmul.mubr.f32.gmra.mrb[0].mxu0 %v3307
        %v3381 = vpop.f32.mrb[0].mxu0
        %v3382 = vadd.f32 %v3222, %v3381
        %v3383 = vpop.f32.mrb[0].mxu0
        %v3384 = vadd.f32 %v3224, %v3383
        %3385 = vdwg.mxu0
        %3386 = vmatprep.subr.mxu0 %v3136
        %3387 = vmatpush1.msra.mxu0 %v3135
        %3388 = vmatprep.subr.mxu0 0.0
        %3389 = vmatpush1.msra.mxu0 0.0
        %3390 = vmatprep.subr.mxu0 0.0
        %3391 = vmatpush1.msra.mxu0 0.0
        %3392 = vmatprep.subr.mxu0 0.0
        %3393 = vmatpush1.msra.mxu0 0.0
        %3394 = vmatprep.subr.mxu0 0.0
        %3395 = vmatpush1.msra.mxu0 0.0
        %3396 = vmatprep.subr.mxu0 0.0
        %3397 = vmatpush1.msra.mxu0 0.0
        %3398 = vmatprep.subr.mxu0 0.0
        %3399 = vmatpush1.msra.mxu0 0.0
        %3400 = vmatprep.subr.mxu0 0.0
        %3401 = vmatpush1.msra.mxu0 0.0
        %3402 = vmatprep.subr.mxu0 0.0
        %3403 = vmatpush1.msra.mxu0 0.0
        %3404 = vmatprep.subr.mxu0 0.0
        %3405 = vmatpush1.msra.mxu0 0.0
        %3406 = vmatprep.subr.mxu0 0.0
        %3407 = vmatpush1.msra.mxu0 0.0
        %3408 = vmatprep.subr.mxu0 0.0
        %3409 = vmatpush1.msra.mxu0 0.0
        %3410 = vmatprep.subr.mxu0 0.0
        %3411 = vmatpush1.msra.mxu0 0.0
        %3412 = vmatprep.subr.mxu0 0.0
        %3413 = vmatpush1.msra.mxu0 0.0
        %3414 = vmatprep.subr.mxu0 0.0
        %3415 = vmatpush1.msra.mxu0 0.0
        %3416 = vmatprep.subr.mxu0 0.0
        %3417 = vmatpush1.msra.mxu0 0.0
        %3418 = vmatprep.subr.mxu0 0.0
        %3419 = vmatpush1.msra.mxu0 0.0
        %3420 = vmatprep.subr.mxu0 0.0
        %3421 = vmatpush1.msra.mxu0 0.0
        %3422 = vmatprep.subr.mxu0 0.0
        %3423 = vmatpush1.msra.mxu0 0.0
        %3424 = vmatprep.subr.mxu0 0.0
        %3425 = vmatpush1.msra.mxu0 0.0
        %3426 = vmatprep.subr.mxu0 0.0
        %3427 = vmatpush1.msra.mxu0 0.0
        %3428 = vmatprep.subr.mxu0 0.0
        %3429 = vmatpush1.msra.mxu0 0.0
        %3430 = vmatprep.subr.mxu0 0.0
        %3431 = vmatpush1.msra.mxu0 0.0
        %3432 = vmatprep.subr.mxu0 0.0
        %3433 = vmatpush1.msra.mxu0 0.0
        %3434 = vmatprep.subr.mxu0 0.0
        %3435 = vmatpush1.msra.mxu0 0.0
        %3436 = vmatprep.subr.mxu0 0.0
        %3437 = vmatpush1.msra.mxu0 0.0
        %3438 = vmatprep.subr.mxu0 0.0
        %3439 = vmatpush1.msra.mxu0 0.0
        %3440 = vmatprep.subr.mxu0 0.0
        %3441 = vmatpush1.msra.mxu0 0.0
        %3442 = vmatprep.subr.mxu0 0.0
        %3443 = vmatpush1.msra.mxu0 0.0
        %3444 = vmatprep.subr.mxu0 0.0
        %3445 = vmatpush1.msra.mxu0 0.0
        %3446 = vmatprep.subr.mxu0 0.0
        %3447 = vmatpush1.msra.mxu0 0.0
        %3448 = vmatprep.subr.mxu0 0.0
        %3449 = vmatpush1.msra.mxu0 0.0
        %3450 = vmatprep.mubr.f32.mxu0 0.0
        %3451 = vmatmul.mubr.f32.gmra.mrb[0].mxu0 %v3304
        %v3452 = vpop.f32.mrb[0].mxu0
        %v3453 = vadd.f32 %v3293, %v3452
        %v3454 = vpop.f32.mrb[0].mxu0
        %v3455 = vadd.f32 %v3295, %v3454
        %3456 = vmatprep.mubr.f32.mxu0 0.0
        %3457 = vmatmul.mubr.f32.gmra.mrb[0].mxu0 %v3307
        %v3458 = vpop.f32.mrb[0].mxu0
        %v3459 = vadd.f32 %v3299, %v3458
        %v3460 = vpop.f32.mrb[0].mxu0
        %v3461 = vadd.f32 %v3301, %v3460
        %3462 = vdwg.mxu0
        %3463 = vrot.lane.b32.xlu0 %v2892, 127
        %v3464 = vpop.permute.xlu0 %3463
        %3465 = vrot.lane.b32.xlu0 %v2962, 127
        %v3466 = vpop.permute.xlu0 %3465
        %3467 = vrot.lane.b32.xlu0 %v3032, 127
        %v3468 = vpop.permute.xlu0 %3467
        %3469 = vrot.lane.b32.xlu0 %v3102, 127
        %v3470 = vpop.permute.xlu0 %3469
        %v3471 = vsel %vm953, %v3468, %v3470
        %v3472 = vsel %vm953, %v3466, %v3468
        %v3473 = vsel %vm953, %v3464, %v3466
        %v3474 = vsel %vm953, %v3470, %v3464
        %vm3475 = vcmp.lt.s32.totalorder %v3105, 63
        %vm3476 = vcmp.lt.s32.totalorder %v3106, 63
        %vm3477 = vcmp.lt.s32.totalorder %v3107, 63
        %vm3478 = vcmp.lt.s32.totalorder %v3108, 63
        %v3479 = vsel %vm3475, 1, 0
        %v3480 = vsel %vm3476, 1, 0
        %v3481 = vsel %vm3477, 1, 0
        %v3482 = vsel %vm3478, 1, 0
        %vm3483 = vcmp.eq.s32.totalorder %v3479, 1
        %vm3484 = vcmp.eq.s32.totalorder %v3480, 1
        %vm3485 = vcmp.eq.s32.totalorder %v3481, 1
        %vm3486 = vcmp.eq.s32.totalorder %v3482, 1
        %v3487 = vsel %vm3483, %v3473, 0.0
        %v3488 = vsel %vm3484, %v3472, 0.0
        %v3489 = vsel %vm3485, %v3471, 0.0
        %v3490 = vsel %vm3486, %v3474, 0.0
        %s3491 = scalar_lea.vmem %s7, 32
        %v3492 = vld [vmem:[%s3491] sm:$0xff]
        %v3493 = vld [vmem:[%s3491 + $0x8] sm:$0xff]
        %v3495 = vsel %vm3142, %v3492, 0
        %v3498 = vsel %vm3142, %v3493, 0
        %3500 = vmatprep.subr.mxu0 %v3488
        %3501 = vmatpush1.msra.mxu0 %v3487
        %3502 = vmatprep.subr.mxu0 0.0
        %3503 = vmatpush1.msra.mxu0 0.0
        %3504 = vmatprep.subr.mxu0 0.0
        %3505 = vmatpush1.msra.mxu0 0.0
        %3506 = vmatprep.subr.mxu0 0.0
        %3507 = vmatpush1.msra.mxu0 0.0
        %3508 = vmatprep.subr.mxu0 0.0
        %3509 = vmatpush1.msra.mxu0 0.0
        %3510 = vmatprep.subr.mxu0 0.0
        %3511 = vmatpush1.msra.mxu0 0.0
        %3512 = vmatprep.subr.mxu0 0.0
        %3513 = vmatpush1.msra.mxu0 0.0
        %3514 = vmatprep.subr.mxu0 0.0
        %3515 = vmatpush1.msra.mxu0 0.0
        %3516 = vmatprep.subr.mxu0 0.0
        %3517 = vmatpush1.msra.mxu0 0.0
        %3518 = vmatprep.subr.mxu0 0.0
        %3519 = vmatpush1.msra.mxu0 0.0
        %3520 = vmatprep.subr.mxu0 0.0
        %3521 = vmatpush1.msra.mxu0 0.0
        %3522 = vmatprep.subr.mxu0 0.0
        %3523 = vmatpush1.msra.mxu0 0.0
        %3524 = vmatprep.subr.mxu0 0.0
        %3525 = vmatpush1.msra.mxu0 0.0
        %3526 = vmatprep.subr.mxu0 0.0
        %3527 = vmatpush1.msra.mxu0 0.0
        %3528 = vmatprep.subr.mxu0 0.0
        %3529 = vmatpush1.msra.mxu0 0.0
        %3530 = vmatprep.subr.mxu0 0.0
        %3531 = vmatpush1.msra.mxu0 0.0
        %3532 = vmatprep.subr.mxu0 0.0
        %3533 = vmatpush1.msra.mxu0 0.0
        %3534 = vmatprep.subr.mxu0 0.0
        %3535 = vmatpush1.msra.mxu0 0.0
        %3536 = vmatprep.subr.mxu0 0.0
        %3537 = vmatpush1.msra.mxu0 0.0
        %3538 = vmatprep.subr.mxu0 0.0
        %3539 = vmatpush1.msra.mxu0 0.0
        %3540 = vmatprep.subr.mxu0 0.0
        %3541 = vmatpush1.msra.mxu0 0.0
        %3542 = vmatprep.subr.mxu0 0.0
        %3543 = vmatpush1.msra.mxu0 0.0
        %3544 = vmatprep.subr.mxu0 0.0
        %3545 = vmatpush1.msra.mxu0 0.0
        %3546 = vmatprep.subr.mxu0 0.0
        %3547 = vmatpush1.msra.mxu0 0.0
        %3548 = vmatprep.subr.mxu0 0.0
        %3549 = vmatpush1.msra.mxu0 0.0
        %3550 = vmatprep.subr.mxu0 0.0
        %3551 = vmatpush1.msra.mxu0 0.0
        %3552 = vmatprep.subr.mxu0 0.0
        %3553 = vmatpush1.msra.mxu0 0.0
        %3554 = vmatprep.subr.mxu0 0.0
        %3555 = vmatpush1.msra.mxu0 0.0
        %3556 = vmatprep.subr.mxu0 0.0
        %3557 = vmatpush1.msra.mxu0 0.0
        %3558 = vmatprep.subr.mxu0 0.0
        %3559 = vmatpush1.msra.mxu0 0.0
        %3560 = vmatprep.subr.mxu0 0.0
        %3561 = vmatpush1.msra.mxu0 0.0
        %3562 = vmatprep.subr.mxu0 0.0
        %3563 = vmatpush1.msra.mxu0 0.0
        %3564 = vmatprep.mubr.f32.mxu0 0.0
        %3565 = vmatmul.mubr.f32.gmra.mrb[0].mxu0 %v3495
        %v3566 = vpop.f32.mrb[0].mxu0
        %v3567 = vadd.f32 0.0, %v3566
        %v3568 = vpop.f32.mrb[0].mxu0
        %v3569 = vadd.f32 0.0, %v3568
        %3570 = vmatprep.mubr.f32.mxu0 0.0
        %3571 = vmatmul.mubr.f32.gmra.mrb[0].mxu0 %v3498
        %v3572 = vpop.f32.mrb[0].mxu0
        %v3573 = vadd.f32 0.0, %v3572
        %v3574 = vpop.f32.mrb[0].mxu0
        %v3575 = vadd.f32 0.0, %v3574
        %3576 = vdwg.mxu0
        %3577 = vmatprep.subr.mxu0 %v3490
        %3578 = vmatpush1.msra.mxu0 %v3489
        %3579 = vmatprep.subr.mxu0 0.0
        %3580 = vmatpush1.msra.mxu0 0.0
        %3581 = vmatprep.subr.mxu0 0.0
        %3582 = vmatpush1.msra.mxu0 0.0
        %3583 = vmatprep.subr.mxu0 0.0
        %3584 = vmatpush1.msra.mxu0 0.0
        %3585 = vmatprep.subr.mxu0 0.0
        %3586 = vmatpush1.msra.mxu0 0.0
        %3587 = vmatprep.subr.mxu0 0.0
        %3588 = vmatpush1.msra.mxu0 0.0
        %3589 = vmatprep.subr.mxu0 0.0
        %3590 = vmatpush1.msra.mxu0 0.0
        %3591 = vmatprep.subr.mxu0 0.0
        %3592 = vmatpush1.msra.mxu0 0.0
        %3593 = vmatprep.subr.mxu0 0.0
        %3594 = vmatpush1.msra.mxu0 0.0
        %3595 = vmatprep.subr.mxu0 0.0
        %3596 = vmatpush1.msra.mxu0 0.0
        %3597 = vmatprep.subr.mxu0 0.0
        %3598 = vmatpush1.msra.mxu0 0.0
        %3599 = vmatprep.subr.mxu0 0.0
        %3600 = vmatpush1.msra.mxu0 0.0
        %3601 = vmatprep.subr.mxu0 0.0
        %3602 = vmatpush1.msra.mxu0 0.0
        %3603 = vmatprep.subr.mxu0 0.0
        %3604 = vmatpush1.msra.mxu0 0.0
        %3605 = vmatprep.subr.mxu0 0.0
        %3606 = vmatpush1.msra.mxu0 0.0
        %3607 = vmatprep.subr.mxu0 0.0
        %3608 = vmatpush1.msra.mxu0 0.0
        %3609 = vmatprep.subr.mxu0 0.0
        %3610 = vmatpush1.msra.mxu0 0.0
        %3611 = vmatprep.subr.mxu0 0.0
        %3612 = vmatpush1.msra.mxu0 0.0
        %3613 = vmatprep.subr.mxu0 0.0
        %3614 = vmatpush1.msra.mxu0 0.0
        %3615 = vmatprep.subr.mxu0 0.0
        %3616 = vmatpush1.msra.mxu0 0.0
        %3617 = vmatprep.subr.mxu0 0.0
        %3618 = vmatpush1.msra.mxu0 0.0
        %3619 = vmatprep.subr.mxu0 0.0
        %3620 = vmatpush1.msra.mxu0 0.0
        %3621 = vmatprep.subr.mxu0 0.0
        %3622 = vmatpush1.msra.mxu0 0.0
        %3623 = vmatprep.subr.mxu0 0.0
        %3624 = vmatpush1.msra.mxu0 0.0
        %3625 = vmatprep.subr.mxu0 0.0
        %3626 = vmatpush1.msra.mxu0 0.0
        %3627 = vmatprep.subr.mxu0 0.0
        %3628 = vmatpush1.msra.mxu0 0.0
        %3629 = vmatprep.subr.mxu0 0.0
        %3630 = vmatpush1.msra.mxu0 0.0
        %3631 = vmatprep.subr.mxu0 0.0
        %3632 = vmatpush1.msra.mxu0 0.0
        %3633 = vmatprep.subr.mxu0 0.0
        %3634 = vmatpush1.msra.mxu0 0.0
        %3635 = vmatprep.subr.mxu0 0.0
        %3636 = vmatpush1.msra.mxu0 0.0
        %3637 = vmatprep.subr.mxu0 0.0
        %3638 = vmatpush1.msra.mxu0 0.0
        %3639 = vmatprep.subr.mxu0 0.0
        %3640 = vmatpush1.msra.mxu0 0.0
        %3641 = vmatprep.mubr.f32.mxu0 0.0
        %3642 = vmatmul.mubr.f32.gmra.mrb[0].mxu0 %v3495
        %v3643 = vpop.f32.mrb[0].mxu0
        %v3644 = vadd.f32 0.0, %v3643
        %v3645 = vpop.f32.mrb[0].mxu0
        %v3646 = vadd.f32 0.0, %v3645
        %3647 = vmatprep.mubr.f32.mxu0 0.0
        %3648 = vmatmul.mubr.f32.gmra.mrb[0].mxu0 %v3498
        %v3649 = vpop.f32.mrb[0].mxu0
        %v3650 = vadd.f32 0.0, %v3649
        %v3651 = vpop.f32.mrb[0].mxu0
        %v3652 = vadd.f32 0.0, %v3651
        %3653 = vdwg.mxu0
        %v3654 = vadd.f32 %v3376, %v3567
        %v3655 = vadd.f32 %v3378, %v3569
        %v3656 = vadd.f32 %v3453, %v3644
        %v3657 = vadd.f32 %v3455, %v3646
        %v3658 = vadd.f32 %v3382, %v3573
        %v3659 = vadd.f32 %v3384, %v3575
        %v3660 = vadd.f32 %v3459, %v3650
        %v3661 = vadd.f32 %v3461, %v3652
        %v3662 = vld [vmem:[%s8] sm:$0xff]
        %v3663 = vld [vmem:[%s8 + $0x8] sm:$0xff]
        %3665 = vset.pattern.permute.xlu0 0
        %3666 = vperm.xlu0 %3665, %v3662
        %v3667 = vpop.permute.xlu0 %3666
        %3670 = vset.pattern.permute.xlu0 0
        %3671 = vperm.xlu0 %3670, %v3663
        %v3672 = vpop.permute.xlu0 %3671
        %v3674 = vadd.f32 %v3654, %v3667
        %v3675 = vadd.f32 %v3655, %v3667
        %v3676 = vadd.f32 %v3656, %v3667
        %v3677 = vadd.f32 %v3657, %v3667
        %v3678 = vadd.f32 %v3658, %v3672
        %v3679 = vadd.f32 %v3659, %v3672
        %v3680 = vadd.f32 %v3660, %v3672
        %v3681 = vadd.f32 %v3661, %v3672
        %v3682 = vmax.f32 %v3674, 0.0
        %v3683 = vmax.f32 %v3675, 0.0
        %v3684 = vmax.f32 %v3676, 0.0
        %v3685 = vmax.f32 %v3677, 0.0
        %v3686 = vmax.f32 %v3678, 0.0
        %v3687 = vmax.f32 %v3679, 0.0
        %v3688 = vmax.f32 %v3680, 0.0
        %v3689 = vmax.f32 %v3681, 0.0
        %3690 = vmatprep.subr.mxu0 0.0
        %3691 = vmatpush1.msra.mxu0 %v1143
        %3692 = vmatprep.subr.mxu0 0.0
        %3693 = vmatpush1.msra.mxu0 %v1144
        %3694 = vmatprep.subr.mxu0 0.0
        %3695 = vmatpush1.msra.mxu0 %v1145
        %3696 = vmatprep.subr.mxu0 0.0
        %3697 = vmatpush1.msra.mxu0 %v1146
        %3698 = vmatprep.subr.mxu0 0.0
        %3699 = vmatpush1.msra.mxu0 %v1147
        %3700 = vmatprep.subr.mxu0 0.0
        %3701 = vmatpush1.msra.mxu0 %v1148
        %3702 = vmatprep.subr.mxu0 0.0
        %3703 = vmatpush1.msra.mxu0 %v1149
        %3704 = vmatprep.subr.mxu0 0.0
        %3705 = vmatpush1.msra.mxu0 %v1150
        %3706 = vmatprep.subr.mxu0 0.0
        %3707 = vmatpush1.msra.mxu0 %v1151
        %3708 = vmatprep.subr.mxu0 0.0
        %3709 = vmatpush1.msra.mxu0 %v1152
        %3710 = vmatprep.subr.mxu0 0.0
        %3711 = vmatpush1.msra.mxu0 %v1153
        %3712 = vmatprep.subr.mxu0 0.0
        %3713 = vmatpush1.msra.mxu0 %v1154
        %3714 = vmatprep.subr.mxu0 0.0
        %3715 = vmatpush1.msra.mxu0 %v1155
        %3716 = vmatprep.subr.mxu0 0.0
        %3717 = vmatpush1.msra.mxu0 %v1156
        %3718 = vmatprep.subr.mxu0 0.0
        %3719 = vmatpush1.msra.mxu0 %v1157
        %3720 = vmatprep.subr.mxu0 0.0
        %3721 = vmatpush1.msra.mxu0 %v1158
        %3722 = vmatprep.subr.mxu0 0.0
        %3723 = vmatpush1.msra.mxu0 %v1159
        %3724 = vmatprep.subr.mxu0 0.0
        %3725 = vmatpush1.msra.mxu0 %v1160
        %3726 = vmatprep.subr.mxu0 0.0
        %3727 = vmatpush1.msra.mxu0 %v1161
        %3728 = vmatprep.subr.mxu0 0.0
        %3729 = vmatpush1.msra.mxu0 %v1162
        %3730 = vmatprep.subr.mxu0 0.0
        %3731 = vmatpush1.msra.mxu0 %v1163
        %3732 = vmatprep.subr.mxu0 0.0
        %3733 = vmatpush1.msra.mxu0 %v1164
        %3734 = vmatprep.subr.mxu0 0.0
        %3735 = vmatpush1.msra.mxu0 %v1165
        %3736 = vmatprep.subr.mxu0 0.0
        %3737 = vmatpush1.msra.mxu0 %v1166
        %3738 = vmatprep.subr.mxu0 0.0
        %3739 = vmatpush1.msra.mxu0 %v1167
        %3740 = vmatprep.subr.mxu0 0.0
        %3741 = vmatpush1.msra.mxu0 %v1168
        %3742 = vmatprep.subr.mxu0 0.0
        %3743 = vmatpush1.msra.mxu0 %v1169
        %3744 = vmatprep.subr.mxu0 0.0
        %3745 = vmatpush1.msra.mxu0 %v1170
        %3746 = vmatprep.subr.mxu0 0.0
        %3747 = vmatpush1.msra.mxu0 %v1171
        %3748 = vmatprep.subr.mxu0 0.0
        %3749 = vmatpush1.msra.mxu0 %v1172
        %3750 = vmatprep.subr.mxu0 0.0
        %3751 = vmatpush1.msra.mxu0 %v1173
        %3752 = vmatprep.subr.mxu0 0.0
        %3753 = vmatpush1.msra.mxu0 %v1174
        %3754 = vmatprep.mubr.f32.mxu0 %v3683
        %3755 = vmatmul.mubr.f32.gmra.mrb[0].mxu0 %v3682
        %v3756 = vpop.f32.mrb[0].mxu0
        %v3757 = vadd.f32 0.0, %v3756
        %v3758 = vpop.f32.mrb[0].mxu0
        %3759 = vmatprep.mubr.f32.mxu0 %v3687
        %3760 = vmatmul.mubr.f32.gmra.mrb[0].mxu0 %v3686
        %v3761 = vpop.f32.mrb[0].mxu0
        %v3762 = vadd.f32 0.0, %v3761
        %v3763 = vpop.f32.mrb[0].mxu0
        %3764 = vdwg.mxu0
        %3765 = vmatprep.subr.mxu0 0.0
        %3766 = vmatpush1.msra.mxu0 %v1143
        %3767 = vmatprep.subr.mxu0 0.0
        %3768 = vmatpush1.msra.mxu0 %v1144
        %3769 = vmatprep.subr.mxu0 0.0
        %3770 = vmatpush1.msra.mxu0 %v1145
        %3771 = vmatprep.subr.mxu0 0.0
        %3772 = vmatpush1.msra.mxu0 %v1146
        %3773 = vmatprep.subr.mxu0 0.0
        %3774 = vmatpush1.msra.mxu0 %v1147
        %3775 = vmatprep.subr.mxu0 0.0
        %3776 = vmatpush1.msra.mxu0 %v1148
        %3777 = vmatprep.subr.mxu0 0.0
        %3778 = vmatpush1.msra.mxu0 %v1149
        %3779 = vmatprep.subr.mxu0 0.0
        %3780 = vmatpush1.msra.mxu0 %v1150
        %3781 = vmatprep.subr.mxu0 0.0
        %3782 = vmatpush1.msra.mxu0 %v1151
        %3783 = vmatprep.subr.mxu0 0.0
        %3784 = vmatpush1.msra.mxu0 %v1152
        %3785 = vmatprep.subr.mxu0 0.0
        %3786 = vmatpush1.msra.mxu0 %v1153
        %3787 = vmatprep.subr.mxu0 0.0
        %3788 = vmatpush1.msra.mxu0 %v1154
        %3789 = vmatprep.subr.mxu0 0.0
        %3790 = vmatpush1.msra.mxu0 %v1155
        %3791 = vmatprep.subr.mxu0 0.0
        %3792 = vmatpush1.msra.mxu0 %v1156
        %3793 = vmatprep.subr.mxu0 0.0
        %3794 = vmatpush1.msra.mxu0 %v1157
        %3795 = vmatprep.subr.mxu0 0.0
        %3796 = vmatpush1.msra.mxu0 %v1158
        %3797 = vmatprep.subr.mxu0 0.0
        %3798 = vmatpush1.msra.mxu0 %v1159
        %3799 = vmatprep.subr.mxu0 0.0
        %3800 = vmatpush1.msra.mxu0 %v1160
        %3801 = vmatprep.subr.mxu0 0.0
        %3802 = vmatpush1.msra.mxu0 %v1161
        %3803 = vmatprep.subr.mxu0 0.0
        %3804 = vmatpush1.msra.mxu0 %v1162
        %3805 = vmatprep.subr.mxu0 0.0
        %3806 = vmatpush1.msra.mxu0 %v1163
        %3807 = vmatprep.subr.mxu0 0.0
        %3808 = vmatpush1.msra.mxu0 %v1164
        %3809 = vmatprep.subr.mxu0 0.0
        %3810 = vmatpush1.msra.mxu0 %v1165
        %3811 = vmatprep.subr.mxu0 0.0
        %3812 = vmatpush1.msra.mxu0 %v1166
        %3813 = vmatprep.subr.mxu0 0.0
        %3814 = vmatpush1.msra.mxu0 %v1167
        %3815 = vmatprep.subr.mxu0 0.0
        %3816 = vmatpush1.msra.mxu0 %v1168
        %3817 = vmatprep.subr.mxu0 0.0
        %3818 = vmatpush1.msra.mxu0 %v1169
        %3819 = vmatprep.subr.mxu0 0.0
        %3820 = vmatpush1.msra.mxu0 %v1170
        %3821 = vmatprep.subr.mxu0 0.0
        %3822 = vmatpush1.msra.mxu0 %v1171
        %3823 = vmatprep.subr.mxu0 0.0
        %3824 = vmatpush1.msra.mxu0 %v1172
        %3825 = vmatprep.subr.mxu0 0.0
        %3826 = vmatpush1.msra.mxu0 %v1173
        %3827 = vmatprep.subr.mxu0 0.0
        %3828 = vmatpush1.msra.mxu0 %v1174
        %3829 = vmatprep.mubr.f32.mxu0 %v3685
        %3830 = vmatmul.mubr.f32.gmra.mrb[0].mxu0 %v3684
        %v3831 = vpop.f32.mrb[0].mxu0
        %v3832 = vadd.f32 0.0, %v3831
        %v3833 = vpop.f32.mrb[0].mxu0
        %3834 = vmatprep.mubr.f32.mxu0 %v3689
        %3835 = vmatmul.mubr.f32.gmra.mrb[0].mxu0 %v3688
        %v3836 = vpop.f32.mrb[0].mxu0
        %v3837 = vadd.f32 0.0, %v3836
        %v3838 = vpop.f32.mrb[0].mxu0
        %3839 = vdwg.mxu0
        %v3840 = vand.u32 %v601, 31
        %v3841 = vand.u32 %v602, 31
        %3842 = vrot.lane.b32.xlu0 %v3757, 1
        %v3843 = vpop.permute.xlu0 %3842
        %3844 = vrot.lane.b32.xlu0 %v3762, 1
        %v3845 = vpop.permute.xlu0 %3844
        %3846 = vrot.lane.b32.xlu0 %v3832, 1
        %v3847 = vpop.permute.xlu0 %3846
        %3848 = vrot.lane.b32.xlu0 %v3837, 1
        %v3849 = vpop.permute.xlu0 %3848
        %v3850 = vsel %vm747, %v3843, %v3847
        %v3851 = vsel %vm747, %v3845, %v3849
        %v3852 = vsel %vm747, %v3847, %v3843
        %v3853 = vsel %vm747, %v3849, %v3845
        %vm3854 = vcmp.ge.s32.totalorder %v3840, 1
        %vm3855 = vcmp.ge.s32.totalorder %v3841, 1
        %v3856 = vsel %vm3854, 1, 0
        %v3857 = vsel %vm3855, 1, 0
        %vm3858 = vcmp.eq.s32.totalorder %v3856, 1
        %vm3859 = vcmp.eq.s32.totalorder %v3857, 1
        %v3860 = vsel %vm3858, %v3852, 0.0
        %v3861 = vsel %vm3859, %v3850, 0.0
        %v3862 = vsel %vm3858, %v3853, 0.0
        %v3863 = vsel %vm3859, %v3851, 0.0
        %v3864 = vld [vmem:[%s9] sm:$0xff]
        %v3865 = vld [vmem:[%s9 + $0x8] sm:$0xff]
        %v3866 = vld [vmem:[%s9 + $0x10] sm:$0xff]
        %v3867 = vld [vmem:[%s9 + $0x18] sm:$0xff]
        %s3868 = scalar_lea.vmem %s9, 32
        %v3869 = vld [vmem:[%s3868] sm:$0xff]
        %v3870 = vld [vmem:[%s3868 + $0x8] sm:$0xff]
        %v3871 = vld [vmem:[%s3868 + $0x10] sm:$0xff]
        %v3872 = vld [vmem:[%s3868 + $0x18] sm:$0xff]
        %vm3873 = vcmask 130048
        %v3875 = vsel %vm3873, %v3869, 0
        %v3878 = vsel %vm3873, %v3870, 0
        %v3881 = vsel %vm3873, %v3871, 0
        %v3884 = vsel %vm3873, %v3872, 0
        %3886 = vmatprep.subr.mxu0 %v3832
        %3887 = vmatpush1.msra.mxu0 %v3757
        %3888 = vmatprep.subr.mxu0 %v3837
        %3889 = vmatpush1.msra.mxu0 %v3762
        %3890 = vmatprep.subr.mxu0 0.0
        %3891 = vmatpush1.msra.mxu0 0.0
        %3892 = vmatprep.subr.mxu0 0.0
        %3893 = vmatpush1.msra.mxu0 0.0
        %3894 = vmatprep.subr.mxu0 0.0
        %3895 = vmatpush1.msra.mxu0 0.0
        %3896 = vmatprep.subr.mxu0 0.0
        %3897 = vmatpush1.msra.mxu0 0.0
        %3898 = vmatprep.subr.mxu0 0.0
        %3899 = vmatpush1.msra.mxu0 0.0
        %3900 = vmatprep.subr.mxu0 0.0
        %3901 = vmatpush1.msra.mxu0 0.0
        %3902 = vmatprep.subr.mxu0 0.0
        %3903 = vmatpush1.msra.mxu0 0.0
        %3904 = vmatprep.subr.mxu0 0.0
        %3905 = vmatpush1.msra.mxu0 0.0
        %3906 = vmatprep.subr.mxu0 0.0
        %3907 = vmatpush1.msra.mxu0 0.0
        %3908 = vmatprep.subr.mxu0 0.0
        %3909 = vmatpush1.msra.mxu0 0.0
        %3910 = vmatprep.subr.mxu0 0.0
        %3911 = vmatpush1.msra.mxu0 0.0
        %3912 = vmatprep.subr.mxu0 0.0
        %3913 = vmatpush1.msra.mxu0 0.0
        %3914 = vmatprep.subr.mxu0 0.0
        %3915 = vmatpush1.msra.mxu0 0.0
        %3916 = vmatprep.subr.mxu0 0.0
        %3917 = vmatpush1.msra.mxu0 0.0
        %3918 = vmatprep.subr.mxu0 0.0
        %3919 = vmatpush1.msra.mxu0 0.0
        %3920 = vmatprep.subr.mxu0 0.0
        %3921 = vmatpush1.msra.mxu0 0.0
        %3922 = vmatprep.subr.mxu0 0.0
        %3923 = vmatpush1.msra.mxu0 0.0
        %3924 = vmatprep.subr.mxu0 0.0
        %3925 = vmatpush1.msra.mxu0 0.0
        %3926 = vmatprep.subr.mxu0 0.0
        %3927 = vmatpush1.msra.mxu0 0.0
        %3928 = vmatprep.subr.mxu0 0.0
        %3929 = vmatpush1.msra.mxu0 0.0
        %3930 = vmatprep.subr.mxu0 0.0
        %3931 = vmatpush1.msra.mxu0 0.0
        %3932 = vmatprep.subr.mxu0 0.0
        %3933 = vmatpush1.msra.mxu0 0.0
        %3934 = vmatprep.subr.mxu0 0.0
        %3935 = vmatpush1.msra.mxu0 0.0
        %3936 = vmatprep.subr.mxu0 0.0
        %3937 = vmatpush1.msra.mxu0 0.0
        %3938 = vmatprep.subr.mxu0 0.0
        %3939 = vmatpush1.msra.mxu0 0.0
        %3940 = vmatprep.subr.mxu0 0.0
        %3941 = vmatpush1.msra.mxu0 0.0
        %3942 = vmatprep.subr.mxu0 0.0
        %3943 = vmatpush1.msra.mxu0 0.0
        %3944 = vmatprep.subr.mxu0 0.0
        %3945 = vmatpush1.msra.mxu0 0.0
        %3946 = vmatprep.subr.mxu0 0.0
        %3947 = vmatpush1.msra.mxu0 0.0
        %3948 = vmatprep.subr.mxu0 0.0
        %3949 = vmatpush1.msra.mxu0 0.0
        %3950 = vmatprep.mubr.f32.mxu0 0.0
        %3951 = vmatmul.mubr.f32.gmra.mrb[0].mxu0 %v3875
        %v3952 = vpop.f32.mrb[0].mxu0
        %v3953 = vadd.f32 0.0, %v3952
        %v3954 = vpop.f32.mrb[0].mxu0
        %v3955 = vadd.f32 0.0, %v3954
        %3956 = vmatprep.mubr.f32.mxu0 0.0
        %3957 = vmatmul.mubr.f32.gmra.mrb[0].mxu0 %v3878
        %v3958 = vpop.f32.mrb[0].mxu0
        %v3959 = vadd.f32 0.0, %v3958
        %v3960 = vpop.f32.mrb[0].mxu0
        %v3961 = vadd.f32 0.0, %v3960
        %3962 = vmatprep.mubr.f32.mxu0 0.0
        %3963 = vmatmul.mubr.f32.gmra.mrb[0].mxu0 %v3881
        %v3964 = vpop.f32.mrb[0].mxu0
        %v3965 = vadd.f32 0.0, %v3964
        %v3966 = vpop.f32.mrb[0].mxu0
        %v3967 = vadd.f32 0.0, %v3966
        %3968 = vmatprep.mubr.f32.mxu0 0.0
        %3969 = vmatmul.mubr.f32.gmra.mrb[0].mxu0 %v3884
        %v3970 = vpop.f32.mrb[0].mxu0
        %v3971 = vadd.f32 0.0, %v3970
        %v3972 = vpop.f32.mrb[0].mxu0
        %v3973 = vadd.f32 0.0, %v3972
        %3974 = vdwg.mxu0
        %v3976 = vsel %vm3873, %v3864, 0
        %v3979 = vsel %vm3873, %v3865, 0
        %v3982 = vsel %vm3873, %v3866, 0
        %v3985 = vsel %vm3873, %v3867, 0
        %3987 = vmatprep.subr.mxu0 %v3861
        %3988 = vmatpush1.msra.mxu0 %v3860
        %3989 = vmatprep.subr.mxu0 %v3863
        %3990 = vmatpush1.msra.mxu0 %v3862
        %3991 = vmatprep.subr.mxu0 0.0
        %3992 = vmatpush1.msra.mxu0 0.0
        %3993 = vmatprep.subr.mxu0 0.0
        %3994 = vmatpush1.msra.mxu0 0.0
        %3995 = vmatprep.subr.mxu0 0.0
        %3996 = vmatpush1.msra.mxu0 0.0
        %3997 = vmatprep.subr.mxu0 0.0
        %3998 = vmatpush1.msra.mxu0 0.0
        %3999 = vmatprep.subr.mxu0 0.0
        %4000 = vmatpush1.msra.mxu0 0.0
        %4001 = vmatprep.subr.mxu0 0.0
        %4002 = vmatpush1.msra.mxu0 0.0
        %4003 = vmatprep.subr.mxu0 0.0
        %4004 = vmatpush1.msra.mxu0 0.0
        %4005 = vmatprep.subr.mxu0 0.0
        %4006 = vmatpush1.msra.mxu0 0.0
        %4007 = vmatprep.subr.mxu0 0.0
        %4008 = vmatpush1.msra.mxu0 0.0
        %4009 = vmatprep.subr.mxu0 0.0
        %4010 = vmatpush1.msra.mxu0 0.0
        %4011 = vmatprep.subr.mxu0 0.0
        %4012 = vmatpush1.msra.mxu0 0.0
        %4013 = vmatprep.subr.mxu0 0.0
        %4014 = vmatpush1.msra.mxu0 0.0
        %4015 = vmatprep.subr.mxu0 0.0
        %4016 = vmatpush1.msra.mxu0 0.0
        %4017 = vmatprep.subr.mxu0 0.0
        %4018 = vmatpush1.msra.mxu0 0.0
        %4019 = vmatprep.subr.mxu0 0.0
        %4020 = vmatpush1.msra.mxu0 0.0
        %4021 = vmatprep.subr.mxu0 0.0
        %4022 = vmatpush1.msra.mxu0 0.0
        %4023 = vmatprep.subr.mxu0 0.0
        %4024 = vmatpush1.msra.mxu0 0.0
        %4025 = vmatprep.subr.mxu0 0.0
        %4026 = vmatpush1.msra.mxu0 0.0
        %4027 = vmatprep.subr.mxu0 0.0
        %4028 = vmatpush1.msra.mxu0 0.0
        %4029 = vmatprep.subr.mxu0 0.0
        %4030 = vmatpush1.msra.mxu0 0.0
        %4031 = vmatprep.subr.mxu0 0.0
        %4032 = vmatpush1.msra.mxu0 0.0
        %4033 = vmatprep.subr.mxu0 0.0
        %4034 = vmatpush1.msra.mxu0 0.0
        %4035 = vmatprep.subr.mxu0 0.0
        %4036 = vmatpush1.msra.mxu0 0.0
        %4037 = vmatprep.subr.mxu0 0.0
        %4038 = vmatpush1.msra.mxu0 0.0
        %4039 = vmatprep.subr.mxu0 0.0
        %4040 = vmatpush1.msra.mxu0 0.0
        %4041 = vmatprep.subr.mxu0 0.0
        %4042 = vmatpush1.msra.mxu0 0.0
        %4043 = vmatprep.subr.mxu0 0.0
        %4044 = vmatpush1.msra.mxu0 0.0
        %4045 = vmatprep.subr.mxu0 0.0
        %4046 = vmatpush1.msra.mxu0 0.0
        %4047 = vmatprep.subr.mxu0 0.0
        %4048 = vmatpush1.msra.mxu0 0.0
        %4049 = vmatprep.subr.mxu0 0.0
        %4050 = vmatpush1.msra.mxu0 0.0
        %4051 = vmatprep.mubr.f32.mxu0 0.0
        %4052 = vmatmul.mubr.f32.gmra.mrb[0].mxu0 %v3976
        %v4053 = vpop.f32.mrb[0].mxu0
        %v4054 = vadd.f32 %v3953, %v4053
        %v4055 = vpop.f32.mrb[0].mxu0
        %v4056 = vadd.f32 %v3955, %v4055
        %4057 = vmatprep.mubr.f32.mxu0 0.0
        %4058 = vmatmul.mubr.f32.gmra.mrb[0].mxu0 %v3979
        %v4059 = vpop.f32.mrb[0].mxu0
        %v4060 = vadd.f32 %v3959, %v4059
        %v4061 = vpop.f32.mrb[0].mxu0
        %v4062 = vadd.f32 %v3961, %v4061
        %4063 = vmatprep.mubr.f32.mxu0 0.0
        %4064 = vmatmul.mubr.f32.gmra.mrb[0].mxu0 %v3982
        %v4065 = vpop.f32.mrb[0].mxu0
        %v4066 = vadd.f32 %v3965, %v4065
        %v4067 = vpop.f32.mrb[0].mxu0
        %v4068 = vadd.f32 %v3967, %v4067
        %4069 = vmatprep.mubr.f32.mxu0 0.0
        %4070 = vmatmul.mubr.f32.gmra.mrb[0].mxu0 %v3985
        %v4071 = vpop.f32.mrb[0].mxu0
        %v4072 = vadd.f32 %v3971, %v4071
        %v4073 = vpop.f32.mrb[0].mxu0
        %v4074 = vadd.f32 %v3973, %v4073
        %4075 = vdwg.mxu0
        %4076 = vrot.lane.b32.xlu0 %v3757, 127
        %v4077 = vpop.permute.xlu0 %4076
        %4078 = vrot.lane.b32.xlu0 %v3762, 127
        %v4079 = vpop.permute.xlu0 %4078
        %4080 = vrot.lane.b32.xlu0 %v3832, 127
        %v4081 = vpop.permute.xlu0 %4080
        %4082 = vrot.lane.b32.xlu0 %v3837, 127
        %v4083 = vpop.permute.xlu0 %4082
        %v4084 = vsel %vm953, %v4077, %v4081
        %v4085 = vsel %vm953, %v4079, %v4083
        %v4086 = vsel %vm953, %v4081, %v4077
        %v4087 = vsel %vm953, %v4083, %v4079
        %vm4088 = vcmp.lt.s32.totalorder %v3840, 31
        %vm4089 = vcmp.lt.s32.totalorder %v3841, 31
        %v4090 = vsel %vm4088, 1, 0
        %v4091 = vsel %vm4089, 1, 0
        %vm4092 = vcmp.eq.s32.totalorder %v4090, 1
        %vm4093 = vcmp.eq.s32.totalorder %v4091, 1
        %v4094 = vsel %vm4092, %v4084, 0.0
        %v4095 = vsel %vm4093, %v4086, 0.0
        %v4096 = vsel %vm4092, %v4085, 0.0
        %v4097 = vsel %vm4093, %v4087, 0.0
        %s4098 = scalar_lea.vmem %s9, 64
        %v4099 = vld [vmem:[%s4098] sm:$0xff]
        %v4100 = vld [vmem:[%s4098 + $0x8] sm:$0xff]
        %v4101 = vld [vmem:[%s4098 + $0x10] sm:$0xff]
        %v4102 = vld [vmem:[%s4098 + $0x18] sm:$0xff]
        %v4104 = vsel %vm3873, %v4099, 0
        %v4107 = vsel %vm3873, %v4100, 0
        %v4110 = vsel %vm3873, %v4101, 0
        %v4113 = vsel %vm3873, %v4102, 0
        %4115 = vmatprep.subr.mxu0 %v4095
        %4116 = vmatpush1.msra.mxu0 %v4094
        %4117 = vmatprep.subr.mxu0 %v4097
        %4118 = vmatpush1.msra.mxu0 %v4096
        %4119 = vmatprep.subr.mxu0 0.0
        %4120 = vmatpush1.msra.mxu0 0.0
        %4121 = vmatprep.subr.mxu0 0.0
        %4122 = vmatpush1.msra.mxu0 0.0
        %4123 = vmatprep.subr.mxu0 0.0
        %4124 = vmatpush1.msra.mxu0 0.0
        %4125 = vmatprep.subr.mxu0 0.0
        %4126 = vmatpush1.msra.mxu0 0.0
        %4127 = vmatprep.subr.mxu0 0.0
        %4128 = vmatpush1.msra.mxu0 0.0
        %4129 = vmatprep.subr.mxu0 0.0
        %4130 = vmatpush1.msra.mxu0 0.0
        %4131 = vmatprep.subr.mxu0 0.0
        %4132 = vmatpush1.msra.mxu0 0.0
        %4133 = vmatprep.subr.mxu0 0.0
        %4134 = vmatpush1.msra.mxu0 0.0
        %4135 = vmatprep.subr.mxu0 0.0
        %4136 = vmatpush1.msra.mxu0 0.0
        %4137 = vmatprep.subr.mxu0 0.0
        %4138 = vmatpush1.msra.mxu0 0.0
        %4139 = vmatprep.subr.mxu0 0.0
        %4140 = vmatpush1.msra.mxu0 0.0
        %4141 = vmatprep.subr.mxu0 0.0
        %4142 = vmatpush1.msra.mxu0 0.0
        %4143 = vmatprep.subr.mxu0 0.0
        %4144 = vmatpush1.msra.mxu0 0.0
        %4145 = vmatprep.subr.mxu0 0.0
        %4146 = vmatpush1.msra.mxu0 0.0
        %4147 = vmatprep.subr.mxu0 0.0
        %4148 = vmatpush1.msra.mxu0 0.0
        %4149 = vmatprep.subr.mxu0 0.0
        %4150 = vmatpush1.msra.mxu0 0.0
        %4151 = vmatprep.subr.mxu0 0.0
        %4152 = vmatpush1.msra.mxu0 0.0
        %4153 = vmatprep.subr.mxu0 0.0
        %4154 = vmatpush1.msra.mxu0 0.0
        %4155 = vmatprep.subr.mxu0 0.0
        %4156 = vmatpush1.msra.mxu0 0.0
        %4157 = vmatprep.subr.mxu0 0.0
        %4158 = vmatpush1.msra.mxu0 0.0
        %4159 = vmatprep.subr.mxu0 0.0
        %4160 = vmatpush1.msra.mxu0 0.0
        %4161 = vmatprep.subr.mxu0 0.0
        %4162 = vmatpush1.msra.mxu0 0.0
        %4163 = vmatprep.subr.mxu0 0.0
        %4164 = vmatpush1.msra.mxu0 0.0
        %4165 = vmatprep.subr.mxu0 0.0
        %4166 = vmatpush1.msra.mxu0 0.0
        %4167 = vmatprep.subr.mxu0 0.0
        %4168 = vmatpush1.msra.mxu0 0.0
        %4169 = vmatprep.subr.mxu0 0.0
        %4170 = vmatpush1.msra.mxu0 0.0
        %4171 = vmatprep.subr.mxu0 0.0
        %4172 = vmatpush1.msra.mxu0 0.0
        %4173 = vmatprep.subr.mxu0 0.0
        %4174 = vmatpush1.msra.mxu0 0.0
        %4175 = vmatprep.subr.mxu0 0.0
        %4176 = vmatpush1.msra.mxu0 0.0
        %4177 = vmatprep.subr.mxu0 0.0
        %4178 = vmatpush1.msra.mxu0 0.0
        %4179 = vmatprep.mubr.f32.mxu0 0.0
        %4180 = vmatmul.mubr.f32.gmra.mrb[0].mxu0 %v4104
        %v4181 = vpop.f32.mrb[0].mxu0
        %v4182 = vadd.f32 0.0, %v4181
        %v4183 = vpop.f32.mrb[0].mxu0
        %v4184 = vadd.f32 0.0, %v4183
        %4185 = vmatprep.mubr.f32.mxu0 0.0
        %4186 = vmatmul.mubr.f32.gmra.mrb[0].mxu0 %v4107
        %v4187 = vpop.f32.mrb[0].mxu0
        %v4188 = vadd.f32 0.0, %v4187
        %v4189 = vpop.f32.mrb[0].mxu0
        %v4190 = vadd.f32 0.0, %v4189
        %4191 = vmatprep.mubr.f32.mxu0 0.0
        %4192 = vmatmul.mubr.f32.gmra.mrb[0].mxu0 %v4110
        %v4193 = vpop.f32.mrb[0].mxu0
        %v4194 = vadd.f32 0.0, %v4193
        %v4195 = vpop.f32.mrb[0].mxu0
        %v4196 = vadd.f32 0.0, %v4195
        %4197 = vmatprep.mubr.f32.mxu0 0.0
        %4198 = vmatmul.mubr.f32.gmra.mrb[0].mxu0 %v4113
        %v4199 = vpop.f32.mrb[0].mxu0
        %v4200 = vadd.f32 0.0, %v4199
        %v4201 = vpop.f32.mrb[0].mxu0
        %v4202 = vadd.f32 0.0, %v4201
        %4203 = vdwg.mxu0
        %v4204 = vadd.f32 %v4054, %v4182
        %v4205 = vadd.f32 %v4056, %v4184
        %v4206 = vadd.f32 %v4060, %v4188
        %v4207 = vadd.f32 %v4062, %v4190
        %v4208 = vadd.f32 %v4066, %v4194
        %v4209 = vadd.f32 %v4068, %v4196
        %v4210 = vadd.f32 %v4072, %v4200
        %v4211 = vadd.f32 %v4074, %v4202
        %v4212 = vld [vmem:[%s10] sm:$0xff]
        %v4213 = vld [vmem:[%s10 + $0x8] sm:$0xff]
        %v4214 = vld [vmem:[%s10 + $0x10] sm:$0xff]
        %v4215 = vld [vmem:[%s10 + $0x18] sm:$0xff]
        %4217 = vset.pattern.permute.xlu0 0
        %4218 = vperm.xlu0 %4217, %v4212
        %v4219 = vpop.permute.xlu0 %4218
        %4222 = vset.pattern.permute.xlu0 0
        %4223 = vperm.xlu0 %4222, %v4213
        %v4224 = vpop.permute.xlu0 %4223
        %4227 = vset.pattern.permute.xlu0 0
        %4228 = vperm.xlu0 %4227, %v4214
        %v4229 = vpop.permute.xlu0 %4228
        %4232 = vset.pattern.permute.xlu0 0
        %4233 = vperm.xlu0 %4232, %v4215
        %v4234 = vpop.permute.xlu0 %4233
        %v4236 = vadd.f32 %v4204, %v4219
        %v4237 = vadd.f32 %v4205, %v4219
        %v4238 = vadd.f32 %v4206, %v4224
        %v4239 = vadd.f32 %v4207, %v4224
        %v4240 = vadd.f32 %v4208, %v4229
        %v4241 = vadd.f32 %v4209, %v4229
        %v4242 = vadd.f32 %v4210, %v4234
        %v4243 = vadd.f32 %v4211, %v4234
        %v4244 = vmax.f32 %v4236, 0.0
        %v4245 = vmax.f32 %v4237, 0.0
        %v4246 = vmax.f32 %v4238, 0.0
        %v4247 = vmax.f32 %v4239, 0.0
        %v4248 = vmax.f32 %v4240, 0.0
        %v4249 = vmax.f32 %v4241, 0.0
        %v4250 = vmax.f32 %v4242, 0.0
        %v4251 = vmax.f32 %v4243, 0.0
        %4252 = vmatprep.subr.mxu0 0.0
        %4253 = vmatpush1.msra.mxu0 %v1143
        %4254 = vmatprep.subr.mxu0 0.0
        %4255 = vmatpush1.msra.mxu0 %v1144
        %4256 = vmatprep.subr.mxu0 0.0
        %4257 = vmatpush1.msra.mxu0 %v1145
        %4258 = vmatprep.subr.mxu0 0.0
        %4259 = vmatpush1.msra.mxu0 %v1146
        %4260 = vmatprep.subr.mxu0 0.0
        %4261 = vmatpush1.msra.mxu0 %v1147
        %4262 = vmatprep.subr.mxu0 0.0
        %4263 = vmatpush1.msra.mxu0 %v1148
        %4264 = vmatprep.subr.mxu0 0.0
        %4265 = vmatpush1.msra.mxu0 %v1149
        %4266 = vmatprep.subr.mxu0 0.0
        %4267 = vmatpush1.msra.mxu0 %v1150
        %4268 = vmatprep.subr.mxu0 0.0
        %4269 = vmatpush1.msra.mxu0 %v1151
        %4270 = vmatprep.subr.mxu0 0.0
        %4271 = vmatpush1.msra.mxu0 %v1152
        %4272 = vmatprep.subr.mxu0 0.0
        %4273 = vmatpush1.msra.mxu0 %v1153
        %4274 = vmatprep.subr.mxu0 0.0
        %4275 = vmatpush1.msra.mxu0 %v1154
        %4276 = vmatprep.subr.mxu0 0.0
        %4277 = vmatpush1.msra.mxu0 %v1155
        %4278 = vmatprep.subr.mxu0 0.0
        %4279 = vmatpush1.msra.mxu0 %v1156
        %4280 = vmatprep.subr.mxu0 0.0
        %4281 = vmatpush1.msra.mxu0 %v1157
        %4282 = vmatprep.subr.mxu0 0.0
        %4283 = vmatpush1.msra.mxu0 %v1158
        %4284 = vmatprep.subr.mxu0 0.0
        %4285 = vmatpush1.msra.mxu0 %v1159
        %4286 = vmatprep.subr.mxu0 0.0
        %4287 = vmatpush1.msra.mxu0 %v1160
        %4288 = vmatprep.subr.mxu0 0.0
        %4289 = vmatpush1.msra.mxu0 %v1161
        %4290 = vmatprep.subr.mxu0 0.0
        %4291 = vmatpush1.msra.mxu0 %v1162
        %4292 = vmatprep.subr.mxu0 0.0
        %4293 = vmatpush1.msra.mxu0 %v1163
        %4294 = vmatprep.subr.mxu0 0.0
        %4295 = vmatpush1.msra.mxu0 %v1164
        %4296 = vmatprep.subr.mxu0 0.0
        %4297 = vmatpush1.msra.mxu0 %v1165
        %4298 = vmatprep.subr.mxu0 0.0
        %4299 = vmatpush1.msra.mxu0 %v1166
        %4300 = vmatprep.subr.mxu0 0.0
        %4301 = vmatpush1.msra.mxu0 %v1167
        %4302 = vmatprep.subr.mxu0 0.0
        %4303 = vmatpush1.msra.mxu0 %v1168
        %4304 = vmatprep.subr.mxu0 0.0
        %4305 = vmatpush1.msra.mxu0 %v1169
        %4306 = vmatprep.subr.mxu0 0.0
        %4307 = vmatpush1.msra.mxu0 %v1170
        %4308 = vmatprep.subr.mxu0 0.0
        %4309 = vmatpush1.msra.mxu0 %v1171
        %4310 = vmatprep.subr.mxu0 0.0
        %4311 = vmatpush1.msra.mxu0 %v1172
        %4312 = vmatprep.subr.mxu0 0.0
        %4313 = vmatpush1.msra.mxu0 %v1173
        %4314 = vmatprep.subr.mxu0 0.0
        %4315 = vmatpush1.msra.mxu0 %v1174
        %4316 = vmatprep.mubr.f32.mxu0 %v4245
        %4317 = vmatmul.mubr.f32.gmra.mrb[0].mxu0 %v4244
        %v4318 = vpop.f32.mrb[0].mxu0
        %v4319 = vadd.f32 0.0, %v4318
        %v4320 = vpop.f32.mrb[0].mxu0
        %4321 = vmatprep.mubr.f32.mxu0 %v4247
        %4322 = vmatmul.mubr.f32.gmra.mrb[0].mxu0 %v4246
        %v4323 = vpop.f32.mrb[0].mxu0
        %v4324 = vadd.f32 0.0, %v4323
        %v4325 = vpop.f32.mrb[0].mxu0
        %4326 = vmatprep.mubr.f32.mxu0 %v4249
        %4327 = vmatmul.mubr.f32.gmra.mrb[0].mxu0 %v4248
        %v4328 = vpop.f32.mrb[0].mxu0
        %v4329 = vadd.f32 0.0, %v4328
        %v4330 = vpop.f32.mrb[0].mxu0
        %4331 = vmatprep.mubr.f32.mxu0 %v4251
        %4332 = vmatmul.mubr.f32.gmra.mrb[0].mxu0 %v4250
        %v4333 = vpop.f32.mrb[0].mxu0
        %v4334 = vadd.f32 0.0, %v4333
        %v4335 = vpop.f32.mrb[0].mxu0
        %4336 = vdwg.mxu0
        %v4337 = vand.u32 %v601, 15
        %4338 = vrot.lane.b32.xlu0 %v4319, 1
        %v4339 = vpop.permute.xlu0 %4338
        %4340 = vrot.lane.b32.xlu0 %v4324, 1
        %v4341 = vpop.permute.xlu0 %4340
        %4342 = vrot.lane.b32.xlu0 %v4329, 1
        %v4343 = vpop.permute.xlu0 %4342
        %4344 = vrot.lane.b32.xlu0 %v4334, 1
        %v4345 = vpop.permute.xlu0 %4344
        %vm4346 = vcmp.ge.s32.totalorder %v4337, 1
        %v4347 = vsel %vm4346, 1, 0
        %vm4348 = vcmp.eq.s32.totalorder %v4347, 1
        %v4349 = vsel %vm4348, %v4339, 0.0
        %v4350 = vsel %vm4348, %v4341, 0.0
        %v4351 = vsel %vm4348, %v4343, 0.0
        %v4352 = vsel %vm4348, %v4345, 0.0
        %v4353 = vld [vmem:[%s11] sm:$0xff]
        %v4354 = vld [vmem:[%s11 + $0x8] sm:$0xff]
        %v4355 = vld [vmem:[%s11 + $0x10] sm:$0xff]
        %v4356 = vld [vmem:[%s11 + $0x18] sm:$0xff]
        %v4357 = vld [vmem:[%s11 + $0x20] sm:$0xff]
        %v4358 = vld [vmem:[%s11 + $0x28] sm:$0xff]
        %v4359 = vld [vmem:[%s11 + $0x30] sm:$0xff]
        %v4360 = vld [vmem:[%s11 + $0x38] sm:$0xff]
        %s4361 = scalar_lea.vmem %s11, 64
        %v4362 = vld [vmem:[%s4361] sm:$0xff]
        %v4363 = vld [vmem:[%s4361 + $0x8] sm:$0xff]
        %v4364 = vld [vmem:[%s4361 + $0x10] sm:$0xff]
        %v4365 = vld [vmem:[%s4361 + $0x18] sm:$0xff]
        %v4366 = vld [vmem:[%s4361 + $0x20] sm:$0xff]
        %v4367 = vld [vmem:[%s4361 + $0x28] sm:$0xff]
        %v4368 = vld [vmem:[%s4361 + $0x30] sm:$0xff]
        %v4369 = vld [vmem:[%s4361 + $0x38] sm:$0xff]
        %vm4370 = vcmask 261120
        %v4372 = vsel %vm4370, %v4362, 0
        %v4375 = vsel %vm4370, %v4363, 0
        %v4378 = vsel %vm4370, %v4364, 0
        %v4381 = vsel %vm4370, %v4365, 0
        %v4384 = vsel %vm4370, %v4366, 0
        %v4387 = vsel %vm4370, %v4367, 0
        %v4390 = vsel %vm4370, %v4368, 0
        %v4393 = vsel %vm4370, %v4369, 0
        %4395 = vmatprep.subr.mxu0 0.0
        %4396 = vmatpush1.msra.mxu0 %v4319
        %4397 = vmatprep.subr.mxu0 0.0
        %4398 = vmatpush1.msra.mxu0 %v4324
        %4399 = vmatprep.subr.mxu0 0.0
        %4400 = vmatpush1.msra.mxu0 %v4329
        %4401 = vmatprep.subr.mxu0 0.0
        %4402 = vmatpush1.msra.mxu0 %v4334
        %4403 = vmatprep.subr.mxu0 0.0
        %4404 = vmatpush1.msra.mxu0 0.0
        %4405 = vmatprep.subr.mxu0 0.0
        %4406 = vmatpush1.msra.mxu0 0.0
        %4407 = vmatprep.subr.mxu0 0.0
        %4408 = vmatpush1.msra.mxu0 0.0
        %4409 = vmatprep.subr.mxu0 0.0
        %4410 = vmatpush1.msra.mxu0 0.0
        %4411 = vmatprep.subr.mxu0 0.0
        %4412 = vmatpush1.msra.mxu0 0.0
        %4413 = vmatprep.subr.mxu0 0.0
        %4414 = vmatpush1.msra.mxu0 0.0
        %4415 = vmatprep.subr.mxu0 0.0
        %4416 = vmatpush1.msra.mxu0 0.0
        %4417 = vmatprep.subr.mxu0 0.0
        %4418 = vmatpush1.msra.mxu0 0.0
        %4419 = vmatprep.subr.mxu0 0.0
        %4420 = vmatpush1.msra.mxu0 0.0
        %4421 = vmatprep.subr.mxu0 0.0
        %4422 = vmatpush1.msra.mxu0 0.0
        %4423 = vmatprep.subr.mxu0 0.0
        %4424 = vmatpush1.msra.mxu0 0.0
        %4425 = vmatprep.subr.mxu0 0.0
        %4426 = vmatpush1.msra.mxu0 0.0
        %4427 = vmatprep.subr.mxu0 0.0
        %4428 = vmatpush1.msra.mxu0 0.0
        %4429 = vmatprep.subr.mxu0 0.0
        %4430 = vmatpush1.msra.mxu0 0.0
        %4431 = vmatprep.subr.mxu0 0.0
        %4432 = vmatpush1.msra.mxu0 0.0
        %4433 = vmatprep.subr.mxu0 0.0
        %4434 = vmatpush1.msra.mxu0 0.0
        %4435 = vmatprep.subr.mxu0 0.0
        %4436 = vmatpush1.msra.mxu0 0.0
        %4437 = vmatprep.subr.mxu0 0.0
        %4438 = vmatpush1.msra.mxu0 0.0
        %4439 = vmatprep.subr.mxu0 0.0
        %4440 = vmatpush1.msra.mxu0 0.0
        %4441 = vmatprep.subr.mxu0 0.0
        %4442 = vmatpush1.msra.mxu0 0.0
        %4443 = vmatprep.subr.mxu0 0.0
        %4444 = vmatpush1.msra.mxu0 0.0
        %4445 = vmatprep.subr.mxu0 0.0
        %4446 = vmatpush1.msra.mxu0 0.0
        %4447 = vmatprep.subr.mxu0 0.0
        %4448 = vmatpush1.msra.mxu0 0.0
        %4449 = vmatprep.subr.mxu0 0.0
        %4450 = vmatpush1.msra.mxu0 0.0
        %4451 = vmatprep.subr.mxu0 0.0
        %4452 = vmatpush1.msra.mxu0 0.0
        %4453 = vmatprep.subr.mxu0 0.0
        %4454 = vmatpush1.msra.mxu0 0.0
        %4455 = vmatprep.subr.mxu0 0.0
        %4456 = vmatpush1.msra.mxu0 0.0
        %4457 = vmatprep.subr.mxu0 0.0
        %4458 = vmatpush1.msra.mxu0 0.0
        %4459 = vmatprep.mubr.f32.mxu0 0.0
        %4460 = vmatmul.mubr.f32.gmra.mrb[0].mxu0 %v4372
        %v4461 = vpop.f32.mrb[0].mxu0
        %v4462 = vadd.f32 0.0, %v4461
        %v4463 = vpop.f32.mrb[0].mxu0
        %4464 = vmatprep.mubr.f32.mxu0 0.0
        %4465 = vmatmul.mubr.f32.gmra.mrb[0].mxu0 %v4375
        %v4466 = vpop.f32.mrb[0].mxu0
        %v4467 = vadd.f32 0.0, %v4466
        %v4468 = vpop.f32.mrb[0].mxu0
        %4469 = vmatprep.mubr.f32.mxu0 0.0
        %4470 = vmatmul.mubr.f32.gmra.mrb[0].mxu0 %v4378
        %v4471 = vpop.f32.mrb[0].mxu0
        %v4472 = vadd.f32 0.0, %v4471
        %v4473 = vpop.f32.mrb[0].mxu0
        %4474 = vmatprep.mubr.f32.mxu0 0.0
        %4475 = vmatmul.mubr.f32.gmra.mrb[0].mxu0 %v4381
        %v4476 = vpop.f32.mrb[0].mxu0
        %v4477 = vadd.f32 0.0, %v4476
        %v4478 = vpop.f32.mrb[0].mxu0
        %4479 = vmatprep.mubr.f32.mxu0 0.0
        %4480 = vmatmul.mubr.f32.gmra.mrb[0].mxu0 %v4384
        %v4481 = vpop.f32.mrb[0].mxu0
        %v4482 = vadd.f32 0.0, %v4481
        %v4483 = vpop.f32.mrb[0].mxu0
        %4484 = vmatprep.mubr.f32.mxu0 0.0
        %4485 = vmatmul.mubr.f32.gmra.mrb[0].mxu0 %v4387
        %v4486 = vpop.f32.mrb[0].mxu0
        %v4487 = vadd.f32 0.0, %v4486
        %v4488 = vpop.f32.mrb[0].mxu0
        %4489 = vmatprep.mubr.f32.mxu0 0.0
        %4490 = vmatmul.mubr.f32.gmra.mrb[0].mxu0 %v4390
        %v4491 = vpop.f32.mrb[0].mxu0
        %v4492 = vadd.f32 0.0, %v4491
        %v4493 = vpop.f32.mrb[0].mxu0
        %4494 = vmatprep.mubr.f32.mxu0 0.0
        %4495 = vmatmul.mubr.f32.gmra.mrb[0].mxu0 %v4393
        %v4496 = vpop.f32.mrb[0].mxu0
        %v4497 = vadd.f32 0.0, %v4496
        %v4498 = vpop.f32.mrb[0].mxu0
        %4499 = vdwg.mxu0
        %v4501 = vsel %vm4370, %v4353, 0
        %v4504 = vsel %vm4370, %v4354, 0
        %v4507 = vsel %vm4370, %v4355, 0
        %v4510 = vsel %vm4370, %v4356, 0
        %v4513 = vsel %vm4370, %v4357, 0
        %v4516 = vsel %vm4370, %v4358, 0
        %v4519 = vsel %vm4370, %v4359, 0
        %v4522 = vsel %vm4370, %v4360, 0
        %4524 = vmatprep.subr.mxu0 0.0
        %4525 = vmatpush1.msra.mxu0 %v4349
        %4526 = vmatprep.subr.mxu0 0.0
        %4527 = vmatpush1.msra.mxu0 %v4350
        %4528 = vmatprep.subr.mxu0 0.0
        %4529 = vmatpush1.msra.mxu0 %v4351
        %4530 = vmatprep.subr.mxu0 0.0
        %4531 = vmatpush1.msra.mxu0 %v4352
        %4532 = vmatprep.subr.mxu0 0.0
        %4533 = vmatpush1.msra.mxu0 0.0
        %4534 = vmatprep.subr.mxu0 0.0
        %4535 = vmatpush1.msra.mxu0 0.0
        %4536 = vmatprep.subr.mxu0 0.0
        %4537 = vmatpush1.msra.mxu0 0.0
        %4538 = vmatprep.subr.mxu0 0.0
        %4539 = vmatpush1.msra.mxu0 0.0
        %4540 = vmatprep.subr.mxu0 0.0
        %4541 = vmatpush1.msra.mxu0 0.0
        %4542 = vmatprep.subr.mxu0 0.0
        %4543 = vmatpush1.msra.mxu0 0.0
        %4544 = vmatprep.subr.mxu0 0.0
        %4545 = vmatpush1.msra.mxu0 0.0
        %4546 = vmatprep.subr.mxu0 0.0
        %4547 = vmatpush1.msra.mxu0 0.0
        %4548 = vmatprep.subr.mxu0 0.0
        %4549 = vmatpush1.msra.mxu0 0.0
        %4550 = vmatprep.subr.mxu0 0.0
        %4551 = vmatpush1.msra.mxu0 0.0
        %4552 = vmatprep.subr.mxu0 0.0
        %4553 = vmatpush1.msra.mxu0 0.0
        %4554 = vmatprep.subr.mxu0 0.0
        %4555 = vmatpush1.msra.mxu0 0.0
        %4556 = vmatprep.subr.mxu0 0.0
        %4557 = vmatpush1.msra.mxu0 0.0
        %4558 = vmatprep.subr.mxu0 0.0
        %4559 = vmatpush1.msra.mxu0 0.0
        %4560 = vmatprep.subr.mxu0 0.0
        %4561 = vmatpush1.msra.mxu0 0.0
        %4562 = vmatprep.subr.mxu0 0.0
        %4563 = vmatpush1.msra.mxu0 0.0
        %4564 = vmatprep.subr.mxu0 0.0
        %4565 = vmatpush1.msra.mxu0 0.0
        %4566 = vmatprep.subr.mxu0 0.0
        %4567 = vmatpush1.msra.mxu0 0.0
        %4568 = vmatprep.subr.mxu0 0.0
        %4569 = vmatpush1.msra.mxu0 0.0
        %4570 = vmatprep.subr.mxu0 0.0
        %4571 = vmatpush1.msra.mxu0 0.0
        %4572 = vmatprep.subr.mxu0 0.0
        %4573 = vmatpush1.msra.mxu0 0.0
        %4574 = vmatprep.subr.mxu0 0.0
        %4575 = vmatpush1.msra.mxu0 0.0
        %4576 = vmatprep.subr.mxu0 0.0
        %4577 = vmatpush1.msra.mxu0 0.0
        %4578 = vmatprep.subr.mxu0 0.0
        %4579 = vmatpush1.msra.mxu0 0.0
        %4580 = vmatprep.subr.mxu0 0.0
        %4581 = vmatpush1.msra.mxu0 0.0
        %4582 = vmatprep.subr.mxu0 0.0
        %4583 = vmatpush1.msra.mxu0 0.0
        %4584 = vmatprep.subr.mxu0 0.0
        %4585 = vmatpush1.msra.mxu0 0.0
        %4586 = vmatprep.subr.mxu0 0.0
        %4587 = vmatpush1.msra.mxu0 0.0
        %4588 = vmatprep.mubr.f32.mxu0 0.0
        %4589 = vmatmul.mubr.f32.gmra.mrb[0].mxu0 %v4501
        %v4590 = vpop.f32.mrb[0].mxu0
        %v4591 = vadd.f32 %v4462, %v4590
        %v4592 = vpop.f32.mrb[0].mxu0
        %4593 = vmatprep.mubr.f32.mxu0 0.0
        %4594 = vmatmul.mubr.f32.gmra.mrb[0].mxu0 %v4504
        %v4595 = vpop.f32.mrb[0].mxu0
        %v4596 = vadd.f32 %v4467, %v4595
        %v4597 = vpop.f32.mrb[0].mxu0
        %4598 = vmatprep.mubr.f32.mxu0 0.0
        %4599 = vmatmul.mubr.f32.gmra.mrb[0].mxu0 %v4507
        %v4600 = vpop.f32.mrb[0].mxu0
        %v4601 = vadd.f32 %v4472, %v4600
        %v4602 = vpop.f32.mrb[0].mxu0
        %4603 = vmatprep.mubr.f32.mxu0 0.0
        %4604 = vmatmul.mubr.f32.gmra.mrb[0].mxu0 %v4510
        %v4605 = vpop.f32.mrb[0].mxu0
        %v4606 = vadd.f32 %v4477, %v4605
        %v4607 = vpop.f32.mrb[0].mxu0
        %4608 = vmatprep.mubr.f32.mxu0 0.0
        %4609 = vmatmul.mubr.f32.gmra.mrb[0].mxu0 %v4513
        %v4610 = vpop.f32.mrb[0].mxu0
        %v4611 = vadd.f32 %v4482, %v4610
        %v4612 = vpop.f32.mrb[0].mxu0
        %4613 = vmatprep.mubr.f32.mxu0 0.0
        %4614 = vmatmul.mubr.f32.gmra.mrb[0].mxu0 %v4516
        %v4615 = vpop.f32.mrb[0].mxu0
        %v4616 = vadd.f32 %v4487, %v4615
        %v4617 = vpop.f32.mrb[0].mxu0
        %4618 = vmatprep.mubr.f32.mxu0 0.0
        %4619 = vmatmul.mubr.f32.gmra.mrb[0].mxu0 %v4519
        %v4620 = vpop.f32.mrb[0].mxu0
        %v4621 = vadd.f32 %v4492, %v4620
        %v4622 = vpop.f32.mrb[0].mxu0
        %4623 = vmatprep.mubr.f32.mxu0 0.0
        %4624 = vmatmul.mubr.f32.gmra.mrb[0].mxu0 %v4522
        %v4625 = vpop.f32.mrb[0].mxu0
        %v4626 = vadd.f32 %v4497, %v4625
        %v4627 = vpop.f32.mrb[0].mxu0
        %4628 = vdwg.mxu0
        %4629 = vrot.lane.b32.xlu0 %v4319, 127
        %v4630 = vpop.permute.xlu0 %4629
        %4631 = vrot.lane.b32.xlu0 %v4324, 127
        %v4632 = vpop.permute.xlu0 %4631
        %4633 = vrot.lane.b32.xlu0 %v4329, 127
        %v4634 = vpop.permute.xlu0 %4633
        %4635 = vrot.lane.b32.xlu0 %v4334, 127
        %v4636 = vpop.permute.xlu0 %4635
        %vm4637 = vcmp.lt.s32.totalorder %v4337, 15
        %v4638 = vsel %vm4637, 1, 0
        %vm4639 = vcmp.eq.s32.totalorder %v4638, 1
        %v4640 = vsel %vm4639, %v4630, 0.0
        %v4641 = vsel %vm4639, %v4632, 0.0
        %v4642 = vsel %vm4639, %v4634, 0.0
        %v4643 = vsel %vm4639, %v4636, 0.0
        %s4644 = scalar_lea.vmem %s11, 128
        %v4645 = vld [vmem:[%s4644] sm:$0xff]
        %v4646 = vld [vmem:[%s4644 + $0x8] sm:$0xff]
        %v4647 = vld [vmem:[%s4644 + $0x10] sm:$0xff]
        %v4648 = vld [vmem:[%s4644 + $0x18] sm:$0xff]
        %v4649 = vld [vmem:[%s4644 + $0x20] sm:$0xff]
        %v4650 = vld [vmem:[%s4644 + $0x28] sm:$0xff]
        %v4651 = vld [vmem:[%s4644 + $0x30] sm:$0xff]
        %v4652 = vld [vmem:[%s4644 + $0x38] sm:$0xff]
        %v4654 = vsel %vm4370, %v4645, 0
        %v4657 = vsel %vm4370, %v4646, 0
        %v4660 = vsel %vm4370, %v4647, 0
        %v4663 = vsel %vm4370, %v4648, 0
        %v4666 = vsel %vm4370, %v4649, 0
        %v4669 = vsel %vm4370, %v4650, 0
        %v4672 = vsel %vm4370, %v4651, 0
        %v4675 = vsel %vm4370, %v4652, 0
        %4677 = vmatprep.subr.mxu0 0.0
        %4678 = vmatpush1.msra.mxu0 %v4640
        %4679 = vmatprep.subr.mxu0 0.0
        %4680 = vmatpush1.msra.mxu0 %v4641
        %4681 = vmatprep.subr.mxu0 0.0
        %4682 = vmatpush1.msra.mxu0 %v4642
        %4683 = vmatprep.subr.mxu0 0.0
        %4684 = vmatpush1.msra.mxu0 %v4643
        %4685 = vmatprep.subr.mxu0 0.0
        %4686 = vmatpush1.msra.mxu0 0.0
        %4687 = vmatprep.subr.mxu0 0.0
        %4688 = vmatpush1.msra.mxu0 0.0
        %4689 = vmatprep.subr.mxu0 0.0
        %4690 = vmatpush1.msra.mxu0 0.0
        %4691 = vmatprep.subr.mxu0 0.0
        %4692 = vmatpush1.msra.mxu0 0.0
        %4693 = vmatprep.subr.mxu0 0.0
        %4694 = vmatpush1.msra.mxu0 0.0
        %4695 = vmatprep.subr.mxu0 0.0
        %4696 = vmatpush1.msra.mxu0 0.0
        %4697 = vmatprep.subr.mxu0 0.0
        %4698 = vmatpush1.msra.mxu0 0.0
        %4699 = vmatprep.subr.mxu0 0.0
        %4700 = vmatpush1.msra.mxu0 0.0
        %4701 = vmatprep.subr.mxu0 0.0
        %4702 = vmatpush1.msra.mxu0 0.0
        %4703 = vmatprep.subr.mxu0 0.0
        %4704 = vmatpush1.msra.mxu0 0.0
        %4705 = vmatprep.subr.mxu0 0.0
        %4706 = vmatpush1.msra.mxu0 0.0
        %4707 = vmatprep.subr.mxu0 0.0
        %4708 = vmatpush1.msra.mxu0 0.0
        %4709 = vmatprep.subr.mxu0 0.0
        %4710 = vmatpush1.msra.mxu0 0.0
        %4711 = vmatprep.subr.mxu0 0.0
        %4712 = vmatpush1.msra.mxu0 0.0
        %4713 = vmatprep.subr.mxu0 0.0
        %4714 = vmatpush1.msra.mxu0 0.0
        %4715 = vmatprep.subr.mxu0 0.0
        %4716 = vmatpush1.msra.mxu0 0.0
        %4717 = vmatprep.subr.mxu0 0.0
        %4718 = vmatpush1.msra.mxu0 0.0
        %4719 = vmatprep.subr.mxu0 0.0
        %4720 = vmatpush1.msra.mxu0 0.0
        %4721 = vmatprep.subr.mxu0 0.0
        %4722 = vmatpush1.msra.mxu0 0.0
        %4723 = vmatprep.subr.mxu0 0.0
        %4724 = vmatpush1.msra.mxu0 0.0
        %4725 = vmatprep.subr.mxu0 0.0
        %4726 = vmatpush1.msra.mxu0 0.0
        %4727 = vmatprep.subr.mxu0 0.0
        %4728 = vmatpush1.msra.mxu0 0.0
        %4729 = vmatprep.subr.mxu0 0.0
        %4730 = vmatpush1.msra.mxu0 0.0
        %4731 = vmatprep.subr.mxu0 0.0
        %4732 = vmatpush1.msra.mxu0 0.0
        %4733 = vmatprep.subr.mxu0 0.0
        %4734 = vmatpush1.msra.mxu0 0.0
        %4735 = vmatprep.subr.mxu0 0.0
        %4736 = vmatpush1.msra.mxu0 0.0
        %4737 = vmatprep.subr.mxu0 0.0
        %4738 = vmatpush1.msra.mxu0 0.0
        %4739 = vmatprep.subr.mxu0 0.0
        %4740 = vmatpush1.msra.mxu0 0.0
        %4741 = vmatprep.mubr.f32.mxu0 0.0
        %4742 = vmatmul.mubr.f32.gmra.mrb[0].mxu0 %v4654
        %v4743 = vpop.f32.mrb[0].mxu0
        %v4744 = vadd.f32 0.0, %v4743
        %v4745 = vpop.f32.mrb[0].mxu0
        %4746 = vmatprep.mubr.f32.mxu0 0.0
        %4747 = vmatmul.mubr.f32.gmra.mrb[0].mxu0 %v4657
        %v4748 = vpop.f32.mrb[0].mxu0
        %v4749 = vadd.f32 0.0, %v4748
        %v4750 = vpop.f32.mrb[0].mxu0
        %4751 = vmatprep.mubr.f32.mxu0 0.0
        %4752 = vmatmul.mubr.f32.gmra.mrb[0].mxu0 %v4660
        %v4753 = vpop.f32.mrb[0].mxu0
        %v4754 = vadd.f32 0.0, %v4753
        %v4755 = vpop.f32.mrb[0].mxu0
        %4756 = vmatprep.mubr.f32.mxu0 0.0
        %4757 = vmatmul.mubr.f32.gmra.mrb[0].mxu0 %v4663
        %v4758 = vpop.f32.mrb[0].mxu0
        %v4759 = vadd.f32 0.0, %v4758
        %v4760 = vpop.f32.mrb[0].mxu0
        %4761 = vmatprep.mubr.f32.mxu0 0.0
        %4762 = vmatmul.mubr.f32.gmra.mrb[0].mxu0 %v4666
        %v4763 = vpop.f32.mrb[0].mxu0
        %v4764 = vadd.f32 0.0, %v4763
        %v4765 = vpop.f32.mrb[0].mxu0
        %4766 = vmatprep.mubr.f32.mxu0 0.0
        %4767 = vmatmul.mubr.f32.gmra.mrb[0].mxu0 %v4669
        %v4768 = vpop.f32.mrb[0].mxu0
        %v4769 = vadd.f32 0.0, %v4768
        %v4770 = vpop.f32.mrb[0].mxu0
        %4771 = vmatprep.mubr.f32.mxu0 0.0
        %4772 = vmatmul.mubr.f32.gmra.mrb[0].mxu0 %v4672
        %v4773 = vpop.f32.mrb[0].mxu0
        %v4774 = vadd.f32 0.0, %v4773
        %v4775 = vpop.f32.mrb[0].mxu0
        %4776 = vmatprep.mubr.f32.mxu0 0.0
        %4777 = vmatmul.mubr.f32.gmra.mrb[0].mxu0 %v4675
        %v4778 = vpop.f32.mrb[0].mxu0
        %v4779 = vadd.f32 0.0, %v4778
        %v4780 = vpop.f32.mrb[0].mxu0
        %4781 = vdwg.mxu0
        %v4782 = vadd.f32 %v4591, %v4744
        %v4783 = vadd.f32 %v4596, %v4749
        %v4784 = vadd.f32 %v4601, %v4754
        %v4785 = vadd.f32 %v4606, %v4759
        %v4786 = vadd.f32 %v4611, %v4764
        %v4787 = vadd.f32 %v4616, %v4769
        %v4788 = vadd.f32 %v4621, %v4774
        %v4789 = vadd.f32 %v4626, %v4779
        %v4790 = vld [vmem:[%s12] sm:$0xff]
        %v4791 = vld [vmem:[%s12 + $0x8] sm:$0xff]
        %v4792 = vld [vmem:[%s12 + $0x10] sm:$0xff]
        %v4793 = vld [vmem:[%s12 + $0x18] sm:$0xff]
        %v4794 = vld [vmem:[%s12 + $0x20] sm:$0xff]
        %v4795 = vld [vmem:[%s12 + $0x28] sm:$0xff]
        %v4796 = vld [vmem:[%s12 + $0x30] sm:$0xff]
        %v4797 = vld [vmem:[%s12 + $0x38] sm:$0xff]
        %4799 = vset.pattern.permute.xlu0 0
        %4800 = vperm.xlu0 %4799, %v4790
        %v4801 = vpop.permute.xlu0 %4800
        %4804 = vset.pattern.permute.xlu0 0
        %4805 = vperm.xlu0 %4804, %v4791
        %v4806 = vpop.permute.xlu0 %4805
        %4809 = vset.pattern.permute.xlu0 0
        %4810 = vperm.xlu0 %4809, %v4792
        %v4811 = vpop.permute.xlu0 %4810
        %4814 = vset.pattern.permute.xlu0 0
        %4815 = vperm.xlu0 %4814, %v4793
        %v4816 = vpop.permute.xlu0 %4815
        %4819 = vset.pattern.permute.xlu0 0
        %4820 = vperm.xlu0 %4819, %v4794
        %v4821 = vpop.permute.xlu0 %4820
        %4824 = vset.pattern.permute.xlu0 0
        %4825 = vperm.xlu0 %4824, %v4795
        %v4826 = vpop.permute.xlu0 %4825
        %4829 = vset.pattern.permute.xlu0 0
        %4830 = vperm.xlu0 %4829, %v4796
        %v4831 = vpop.permute.xlu0 %4830
        %4834 = vset.pattern.permute.xlu0 0
        %4835 = vperm.xlu0 %4834, %v4797
        %v4836 = vpop.permute.xlu0 %4835
        %v4838 = vadd.f32 %v4782, %v4801
        %v4839 = vadd.f32 %v4783, %v4806
        %v4840 = vadd.f32 %v4784, %v4811
        %v4841 = vadd.f32 %v4785, %v4816
        %v4842 = vadd.f32 %v4786, %v4821
        %v4843 = vadd.f32 %v4787, %v4826
        %v4844 = vadd.f32 %v4788, %v4831
        %v4845 = vadd.f32 %v4789, %v4836
        %v4846 = vmax.f32 %v4838, 0.0
        %v4847 = vmax.f32 %v4839, 0.0
        %v4848 = vmax.f32 %v4840, 0.0
        %v4849 = vmax.f32 %v4841, 0.0
        %v4850 = vmax.f32 %v4842, 0.0
        %v4851 = vmax.f32 %v4843, 0.0
        %v4852 = vmax.f32 %v4844, 0.0
        %v4853 = vmax.f32 %v4845, 0.0
        %v4854 = vld [vmem:[%s1] sm:$0xff]
        %v4855 = vld [vmem:[%s1 + $0x8] sm:$0xff]
        %v4856 = vld [vmem:[%s1 + $0x10] sm:$0xff]
        %v4857 = vld [vmem:[%s1 + $0x18] sm:$0xff]
        %v4858 = vld [vmem:[%s1 + $0x20] sm:$0xff]
        %v4859 = vld [vmem:[%s1 + $0x28] sm:$0xff]
        %v4860 = vld [vmem:[%s1 + $0x30] sm:$0xff]
        %v4861 = vld [vmem:[%s1 + $0x38] sm:$0xff]
        %v4862 = vld [vmem:[%s1 + $0x40] sm:$0xff]
        %v4863 = vld [vmem:[%s1 + $0x48] sm:$0xff]
        %v4864 = vld [vmem:[%s1 + $0x50] sm:$0xff]
        %v4865 = vld [vmem:[%s1 + $0x58] sm:$0xff]
        %v4866 = vld [vmem:[%s1 + $0x60] sm:$0xff]
        %v4867 = vld [vmem:[%s1 + $0x68] sm:$0xff]
        %v4868 = vld [vmem:[%s1 + $0x70] sm:$0xff]
        %v4869 = vld [vmem:[%s1 + $0x78] sm:$0xff]
        %4870 = vmatprep.subr.mxu0 0.0
        %4871 = vmatpush1.msra.mxu0 %v4854
        %4872 = vmatprep.subr.mxu0 0.0
        %4873 = vmatpush1.msra.mxu0 %v4855
        %4874 = vmatprep.subr.mxu0 0.0
        %4875 = vmatpush1.msra.mxu0 %v4856
        %4876 = vmatprep.subr.mxu0 0.0
        %4877 = vmatpush1.msra.mxu0 %v4857
        %4878 = vmatprep.subr.mxu0 0.0
        %4879 = vmatpush1.msra.mxu0 %v4858
        %4880 = vmatprep.subr.mxu0 0.0
        %4881 = vmatpush1.msra.mxu0 %v4859
        %4882 = vmatprep.subr.mxu0 0.0
        %4883 = vmatpush1.msra.mxu0 %v4860
        %4884 = vmatprep.subr.mxu0 0.0
        %4885 = vmatpush1.msra.mxu0 %v4861
        %4886 = vmatprep.subr.mxu0 0.0
        %4887 = vmatpush1.msra.mxu0 %v4862
        %4888 = vmatprep.subr.mxu0 0.0
        %4889 = vmatpush1.msra.mxu0 %v4863
        %4890 = vmatprep.subr.mxu0 0.0
        %4891 = vmatpush1.msra.mxu0 %v4864
        %4892 = vmatprep.subr.mxu0 0.0
        %4893 = vmatpush1.msra.mxu0 %v4865
        %4894 = vmatprep.subr.mxu0 0.0
        %4895 = vmatpush1.msra.mxu0 %v4866
        %4896 = vmatprep.subr.mxu0 0.0
        %4897 = vmatpush1.msra.mxu0 %v4867
        %4898 = vmatprep.subr.mxu0 0.0
        %4899 = vmatpush1.msra.mxu0 %v4868
        %4900 = vmatprep.subr.mxu0 0.0
        %4901 = vmatpush1.msra.mxu0 %v4869
        %4902 = vmatprep.subr.mxu0 0.0
        %4903 = vmatpush1.msra.mxu0 0.0
        %4904 = vmatprep.subr.mxu0 0.0
        %4905 = vmatpush1.msra.mxu0 0.0
        %4906 = vmatprep.subr.mxu0 0.0
        %4907 = vmatpush1.msra.mxu0 0.0
        %4908 = vmatprep.subr.mxu0 0.0
        %4909 = vmatpush1.msra.mxu0 0.0
        %4910 = vmatprep.subr.mxu0 0.0
        %4911 = vmatpush1.msra.mxu0 0.0
        %4912 = vmatprep.subr.mxu0 0.0
        %4913 = vmatpush1.msra.mxu0 0.0
        %4914 = vmatprep.subr.mxu0 0.0
        %4915 = vmatpush1.msra.mxu0 0.0
        %4916 = vmatprep.subr.mxu0 0.0
        %4917 = vmatpush1.msra.mxu0 0.0
        %4918 = vmatprep.subr.mxu0 0.0
        %4919 = vmatpush1.msra.mxu0 0.0
        %4920 = vmatprep.subr.mxu0 0.0
        %4921 = vmatpush1.msra.mxu0 0.0
        %4922 = vmatprep.subr.mxu0 0.0
        %4923 = vmatpush1.msra.mxu0 0.0
        %4924 = vmatprep.subr.mxu0 0.0
        %4925 = vmatpush1.msra.mxu0 0.0
        %4926 = vmatprep.subr.mxu0 0.0
        %4927 = vmatpush1.msra.mxu0 0.0
        %4928 = vmatprep.subr.mxu0 0.0
        %4929 = vmatpush1.msra.mxu0 0.0
        %4930 = vmatprep.subr.mxu0 0.0
        %4931 = vmatpush1.msra.mxu0 0.0
        %4932 = vmatprep.subr.mxu0 0.0
        %4933 = vmatpush1.msra.mxu0 0.0
        %4934 = vmatprep.mubr.f32.mxu0 0.0
        %4935 = vmatmul.mubr.f32.gmra.mrb[0].mxu0 %v4846
        %v4936 = vpop.f32.mrb[0].mxu0
        %v4937 = vadd.f32 0.0, %v4936
        %v4938 = vpop.f32.mrb[0].mxu0
        %4939 = vmatprep.mubr.f32.mxu0 0.0
        %4940 = vmatmul.mubr.f32.gmra.mrb[0].mxu0 %v4847
        %v4941 = vpop.f32.mrb[0].mxu0
        %v4942 = vadd.f32 0.0, %v4941
        %v4943 = vpop.f32.mrb[0].mxu0
        %4944 = vmatprep.mubr.f32.mxu0 0.0
        %4945 = vmatmul.mubr.f32.gmra.mrb[0].mxu0 %v4848
        %v4946 = vpop.f32.mrb[0].mxu0
        %v4947 = vadd.f32 0.0, %v4946
        %v4948 = vpop.f32.mrb[0].mxu0
        %4949 = vmatprep.mubr.f32.mxu0 0.0
        %4950 = vmatmul.mubr.f32.gmra.mrb[0].mxu0 %v4849
        %v4951 = vpop.f32.mrb[0].mxu0
        %v4952 = vadd.f32 0.0, %v4951
        %v4953 = vpop.f32.mrb[0].mxu0
        %4954 = vmatprep.mubr.f32.mxu0 0.0
        %4955 = vmatmul.mubr.f32.gmra.mrb[0].mxu0 %v4850
        %v4956 = vpop.f32.mrb[0].mxu0
        %v4957 = vadd.f32 0.0, %v4956
        %v4958 = vpop.f32.mrb[0].mxu0
        %4959 = vmatprep.mubr.f32.mxu0 0.0
        %4960 = vmatmul.mubr.f32.gmra.mrb[0].mxu0 %v4851
        %v4961 = vpop.f32.mrb[0].mxu0
        %v4962 = vadd.f32 0.0, %v4961
        %v4963 = vpop.f32.mrb[0].mxu0
        %4964 = vmatprep.mubr.f32.mxu0 0.0
        %4965 = vmatmul.mubr.f32.gmra.mrb[0].mxu0 %v4852
        %v4966 = vpop.f32.mrb[0].mxu0
        %v4967 = vadd.f32 0.0, %v4966
        %v4968 = vpop.f32.mrb[0].mxu0
        %4969 = vmatprep.mubr.f32.mxu0 0.0
        %4970 = vmatmul.mubr.f32.gmra.mrb[0].mxu0 %v4853
        %v4971 = vpop.f32.mrb[0].mxu0
        %v4972 = vadd.f32 0.0, %v4971
        %v4973 = vpop.f32.mrb[0].mxu0
        %4974 = vdwg.mxu0
        %v4975 = vand.u32 %v601, 7
        %vm4976 = vcmask 1048064
        %4977 = vrot.lane.b32.xlu0 %v4937, 64
        %v4978 = vpop.permute.xlu0 %4977
        %v4979 = vsel %vm4976, %v4978, %v4937
        %4980 = vrot.lane.b32.xlu0 %v4942, 64
        %v4981 = vpop.permute.xlu0 %4980
        %v4982 = vsel %vm4976, %v4981, %v4942
        %4983 = vrot.lane.b32.xlu0 %v4947, 64
        %v4984 = vpop.permute.xlu0 %4983
        %v4985 = vsel %vm4976, %v4984, %v4947
        %4986 = vrot.lane.b32.xlu0 %v4952, 64
        %v4987 = vpop.permute.xlu0 %4986
        %v4988 = vsel %vm4976, %v4987, %v4952
        %4989 = vrot.lane.b32.xlu0 %v4957, 64
        %v4990 = vpop.permute.xlu0 %4989
        %v4991 = vsel %vm4976, %v4990, %v4957
        %4992 = vrot.lane.b32.xlu0 %v4962, 64
        %v4993 = vpop.permute.xlu0 %4992
        %v4994 = vsel %vm4976, %v4993, %v4962
        %4995 = vrot.lane.b32.xlu0 %v4967, 64
        %v4996 = vpop.permute.xlu0 %4995
        %v4997 = vsel %vm4976, %v4996, %v4967
        %4998 = vrot.lane.b32.xlu0 %v4972, 64
        %v4999 = vpop.permute.xlu0 %4998
        %v5000 = vsel %vm4976, %v4999, %v4972
        %5001 = vrot.lane.b32.xlu0 %v4979, 64
        %v5002 = vpop.permute.xlu0 %5001
        %5003 = vrot.lane.b32.xlu0 %v4982, 64
        %v5004 = vpop.permute.xlu0 %5003
        %5005 = vrot.lane.b32.xlu0 %v4985, 64
        %v5006 = vpop.permute.xlu0 %5005
        %5007 = vrot.lane.b32.xlu0 %v4988, 64
        %v5008 = vpop.permute.xlu0 %5007
        %5009 = vrot.lane.b32.xlu0 %v4991, 64
        %v5010 = vpop.permute.xlu0 %5009
        %5011 = vrot.lane.b32.xlu0 %v4994, 64
        %v5012 = vpop.permute.xlu0 %5011
        %5013 = vrot.lane.b32.xlu0 %v4997, 64
        %v5014 = vpop.permute.xlu0 %5013
        %5015 = vrot.lane.b32.xlu0 %v5000, 64
        %v5016 = vpop.permute.xlu0 %5015
        %v5017 = vsel %vm4976, %v5002, %v4937
        %v5018 = vsel %vm4976, %v5004, %v4942
        %v5019 = vsel %vm4976, %v5006, %v4947
        %v5020 = vsel %vm4976, %v5008, %v4952
        %v5021 = vsel %vm4976, %v5010, %v4957
        %v5022 = vsel %vm4976, %v5012, %v4962
        %v5023 = vsel %vm4976, %v5014, %v4967
        %v5024 = vsel %vm4976, %v5016, %v4972
        %vm5025 = vcmp.ge.s32.totalorder %v4975, 1
        %v5026 = vsel %vm5025, 1, 0
        %vm5027 = vcmp.eq.s32.totalorder %v5026, 1
        %5036 = vrot.lane.b32.xlu0 %v5017, 65
        %v5037 = vpop.permute.xlu0 %5036
        %5038 = vrot.lane.b32.xlu0 %v5018, 65
        %v5039 = vpop.permute.xlu0 %5038
        %5040 = vrot.lane.b32.xlu0 %v5019, 65
        %v5041 = vpop.permute.xlu0 %5040
        %5042 = vrot.lane.b32.xlu0 %v5020, 65
        %v5043 = vpop.permute.xlu0 %5042
        %5044 = vrot.lane.b32.xlu0 %v5021, 65
        %v5045 = vpop.permute.xlu0 %5044
        %5046 = vrot.lane.b32.xlu0 %v5022, 65
        %v5047 = vpop.permute.xlu0 %5046
        %5048 = vrot.lane.b32.xlu0 %v5023, 65
        %v5049 = vpop.permute.xlu0 %5048
        %5050 = vrot.lane.b32.xlu0 %v5024, 65
        %v5051 = vpop.permute.xlu0 %5050
        %v5060 = vsel %vm5027, %v5037, 0.0
        %v5061 = vsel %vm5027, %v5039, 0.0
        %v5062 = vsel %vm5027, %v5041, 0.0
        %v5063 = vsel %vm5027, %v5043, 0.0
        %v5064 = vsel %vm5027, %v5045, 0.0
        %v5065 = vsel %vm5027, %v5047, 0.0
        %v5066 = vsel %vm5027, %v5049, 0.0
        %v5067 = vsel %vm5027, %v5051, 0.0
        %v5068 = vld [vmem:[%s13] sm:$0xff]
        %v5069 = vld [vmem:[%s13 + $0x8] sm:$0xff]
        %v5070 = vld [vmem:[%s13 + $0x10] sm:$0xff]
        %v5071 = vld [vmem:[%s13 + $0x18] sm:$0xff]
        %v5072 = vld [vmem:[%s13 + $0x20] sm:$0xff]
        %v5073 = vld [vmem:[%s13 + $0x28] sm:$0xff]
        %v5074 = vld [vmem:[%s13 + $0x30] sm:$0xff]
        %v5075 = vld [vmem:[%s13 + $0x38] sm:$0xff]
        %v5076 = vld [vmem:[%s13 + $0x40] sm:$0xff]
        %v5077 = vld [vmem:[%s13 + $0x48] sm:$0xff]
        %v5078 = vld [vmem:[%s13 + $0x50] sm:$0xff]
        %v5079 = vld [vmem:[%s13 + $0x58] sm:$0xff]
        %v5080 = vld [vmem:[%s13 + $0x60] sm:$0xff]
        %v5081 = vld [vmem:[%s13 + $0x68] sm:$0xff]
        %v5082 = vld [vmem:[%s13 + $0x70] sm:$0xff]
        %v5083 = vld [vmem:[%s13 + $0x78] sm:$0xff]
        %s5084 = scalar_lea.vmem %s13, 128
        %v5085 = vld [vmem:[%s5084] sm:$0xff]
        %v5086 = vld [vmem:[%s5084 + $0x8] sm:$0xff]
        %v5087 = vld [vmem:[%s5084 + $0x10] sm:$0xff]
        %v5088 = vld [vmem:[%s5084 + $0x18] sm:$0xff]
        %v5089 = vld [vmem:[%s5084 + $0x20] sm:$0xff]
        %v5090 = vld [vmem:[%s5084 + $0x28] sm:$0xff]
        %v5091 = vld [vmem:[%s5084 + $0x30] sm:$0xff]
        %v5092 = vld [vmem:[%s5084 + $0x38] sm:$0xff]
        %v5093 = vld [vmem:[%s5084 + $0x40] sm:$0xff]
        %v5094 = vld [vmem:[%s5084 + $0x48] sm:$0xff]
        %v5095 = vld [vmem:[%s5084 + $0x50] sm:$0xff]
        %v5096 = vld [vmem:[%s5084 + $0x58] sm:$0xff]
        %v5097 = vld [vmem:[%s5084 + $0x60] sm:$0xff]
        %v5098 = vld [vmem:[%s5084 + $0x68] sm:$0xff]
        %v5099 = vld [vmem:[%s5084 + $0x70] sm:$0xff]
        %v5100 = vld [vmem:[%s5084 + $0x78] sm:$0xff]
        %vm5101 = vcmask 523264
        %v5103 = vsel %vm5101, %v5085, 0
        %v5106 = vsel %vm5101, %v5086, 0
        %v5109 = vsel %vm5101, %v5087, 0
        %v5112 = vsel %vm5101, %v5088, 0
        %v5115 = vsel %vm5101, %v5089, 0
        %v5118 = vsel %vm5101, %v5090, 0
        %v5121 = vsel %vm5101, %v5091, 0
        %v5124 = vsel %vm5101, %v5092, 0
        %v5127 = vsel %vm5101, %v5093, 0
        %v5130 = vsel %vm5101, %v5094, 0
        %v5133 = vsel %vm5101, %v5095, 0
        %v5136 = vsel %vm5101, %v5096, 0
        %v5139 = vsel %vm5101, %v5097, 0
        %v5142 = vsel %vm5101, %v5098, 0
        %v5145 = vsel %vm5101, %v5099, 0
        %v5148 = vsel %vm5101, %v5100, 0
        %5150 = vmatprep.subr.mxu0 0.0
        %5151 = vmatpush1.msra.mxu0 %v4937
        %5152 = vmatprep.subr.mxu0 0.0
        %5153 = vmatpush1.msra.mxu0 %v4942
        %5154 = vmatprep.subr.mxu0 0.0
        %5155 = vmatpush1.msra.mxu0 %v4947
        %5156 = vmatprep.subr.mxu0 0.0
        %5157 = vmatpush1.msra.mxu0 %v4952
        %5158 = vmatprep.subr.mxu0 0.0
        %5159 = vmatpush1.msra.mxu0 %v4957
        %5160 = vmatprep.subr.mxu0 0.0
        %5161 = vmatpush1.msra.mxu0 %v4962
        %5162 = vmatprep.subr.mxu0 0.0
        %5163 = vmatpush1.msra.mxu0 %v4967
        %5164 = vmatprep.subr.mxu0 0.0
        %5165 = vmatpush1.msra.mxu0 %v4972
        %5166 = vmatprep.subr.mxu0 0.0
        %5167 = vmatpush1.msra.mxu0 0.0
        %5168 = vmatprep.subr.mxu0 0.0
        %5169 = vmatpush1.msra.mxu0 0.0
        %5170 = vmatprep.subr.mxu0 0.0
        %5171 = vmatpush1.msra.mxu0 0.0
        %5172 = vmatprep.subr.mxu0 0.0
        %5173 = vmatpush1.msra.mxu0 0.0
        %5174 = vmatprep.subr.mxu0 0.0
        %5175 = vmatpush1.msra.mxu0 0.0
        %5176 = vmatprep.subr.mxu0 0.0
        %5177 = vmatpush1.msra.mxu0 0.0
        %5178 = vmatprep.subr.mxu0 0.0
        %5179 = vmatpush1.msra.mxu0 0.0
        %5180 = vmatprep.subr.mxu0 0.0
        %5181 = vmatpush1.msra.mxu0 0.0
        %5182 = vmatprep.subr.mxu0 0.0
        %5183 = vmatpush1.msra.mxu0 0.0
        %5184 = vmatprep.subr.mxu0 0.0
        %5185 = vmatpush1.msra.mxu0 0.0
        %5186 = vmatprep.subr.mxu0 0.0
        %5187 = vmatpush1.msra.mxu0 0.0
        %5188 = vmatprep.subr.mxu0 0.0
        %5189 = vmatpush1.msra.mxu0 0.0
        %5190 = vmatprep.subr.mxu0 0.0
        %5191 = vmatpush1.msra.mxu0 0.0
        %5192 = vmatprep.subr.mxu0 0.0
        %5193 = vmatpush1.msra.mxu0 0.0
        %5194 = vmatprep.subr.mxu0 0.0
        %5195 = vmatpush1.msra.mxu0 0.0
        %5196 = vmatprep.subr.mxu0 0.0
        %5197 = vmatpush1.msra.mxu0 0.0
        %5198 = vmatprep.subr.mxu0 0.0
        %5199 = vmatpush1.msra.mxu0 0.0
        %5200 = vmatprep.subr.mxu0 0.0
        %5201 = vmatpush1.msra.mxu0 0.0
        %5202 = vmatprep.subr.mxu0 0.0
        %5203 = vmatpush1.msra.mxu0 0.0
        %5204 = vmatprep.subr.mxu0 0.0
        %5205 = vmatpush1.msra.mxu0 0.0
        %5206 = vmatprep.subr.mxu0 0.0
        %5207 = vmatpush1.msra.mxu0 0.0
        %5208 = vmatprep.subr.mxu0 0.0
        %5209 = vmatpush1.msra.mxu0 0.0
        %5210 = vmatprep.subr.mxu0 0.0
        %5211 = vmatpush1.msra.mxu0 0.0
        %5212 = vmatprep.subr.mxu0 0.0
        %5213 = vmatpush1.msra.mxu0 0.0
        %5214 = vmatprep.mubr.f32.mxu0 0.0
        %5215 = vmatmul.mubr.f32.gmra.mrb[0].mxu0 %v5103
        %v5216 = vpop.f32.mrb[0].mxu0
        %v5217 = vadd.f32 0.0, %v5216
        %v5218 = vpop.f32.mrb[0].mxu0
        %5219 = vmatprep.mubr.f32.mxu0 0.0
        %5220 = vmatmul.mubr.f32.gmra.mrb[0].mxu0 %v5106
        %v5221 = vpop.f32.mrb[0].mxu0
        %v5222 = vadd.f32 0.0, %v5221
        %v5223 = vpop.f32.mrb[0].mxu0
        %5224 = vmatprep.mubr.f32.mxu0 0.0
        %5225 = vmatmul.mubr.f32.gmra.mrb[0].mxu0 %v5109
        %v5226 = vpop.f32.mrb[0].mxu0
        %v5227 = vadd.f32 0.0, %v5226
        %v5228 = vpop.f32.mrb[0].mxu0
        %5229 = vmatprep.mubr.f32.mxu0 0.0
        %5230 = vmatmul.mubr.f32.gmra.mrb[0].mxu0 %v5112
        %v5231 = vpop.f32.mrb[0].mxu0
        %v5232 = vadd.f32 0.0, %v5231
        %v5233 = vpop.f32.mrb[0].mxu0
        %5234 = vmatprep.mubr.f32.mxu0 0.0
        %5235 = vmatmul.mubr.f32.gmra.mrb[0].mxu0 %v5115
        %v5236 = vpop.f32.mrb[0].mxu0
        %v5237 = vadd.f32 0.0, %v5236
        %v5238 = vpop.f32.mrb[0].mxu0
        %5239 = vmatprep.mubr.f32.mxu0 0.0
        %5240 = vmatmul.mubr.f32.gmra.mrb[0].mxu0 %v5118
        %v5241 = vpop.f32.mrb[0].mxu0
        %v5242 = vadd.f32 0.0, %v5241
        %v5243 = vpop.f32.mrb[0].mxu0
        %5244 = vmatprep.mubr.f32.mxu0 0.0
        %5245 = vmatmul.mubr.f32.gmra.mrb[0].mxu0 %v5121
        %v5246 = vpop.f32.mrb[0].mxu0
        %v5247 = vadd.f32 0.0, %v5246
        %v5248 = vpop.f32.mrb[0].mxu0
        %5249 = vmatprep.mubr.f32.mxu0 0.0
        %5250 = vmatmul.mubr.f32.gmra.mrb[0].mxu0 %v5124
        %v5251 = vpop.f32.mrb[0].mxu0
        %v5252 = vadd.f32 0.0, %v5251
        %v5253 = vpop.f32.mrb[0].mxu0
        %5254 = vmatprep.mubr.f32.mxu0 0.0
        %5255 = vmatmul.mubr.f32.gmra.mrb[0].mxu0 %v5127
        %v5256 = vpop.f32.mrb[0].mxu0
        %v5257 = vadd.f32 0.0, %v5256
        %v5258 = vpop.f32.mrb[0].mxu0
        %5259 = vmatprep.mubr.f32.mxu0 0.0
        %5260 = vmatmul.mubr.f32.gmra.mrb[0].mxu0 %v5130
        %v5261 = vpop.f32.mrb[0].mxu0
        %v5262 = vadd.f32 0.0, %v5261
        %v5263 = vpop.f32.mrb[0].mxu0
        %5264 = vmatprep.mubr.f32.mxu0 0.0
        %5265 = vmatmul.mubr.f32.gmra.mrb[0].mxu0 %v5133
        %v5266 = vpop.f32.mrb[0].mxu0
        %v5267 = vadd.f32 0.0, %v5266
        %v5268 = vpop.f32.mrb[0].mxu0
        %5269 = vmatprep.mubr.f32.mxu0 0.0
        %5270 = vmatmul.mubr.f32.gmra.mrb[0].mxu0 %v5136
        %v5271 = vpop.f32.mrb[0].mxu0
        %v5272 = vadd.f32 0.0, %v5271
        %v5273 = vpop.f32.mrb[0].mxu0
        %5274 = vmatprep.mubr.f32.mxu0 0.0
        %5275 = vmatmul.mubr.f32.gmra.mrb[0].mxu0 %v5139
        %v5276 = vpop.f32.mrb[0].mxu0
        %v5277 = vadd.f32 0.0, %v5276
        %v5278 = vpop.f32.mrb[0].mxu0
        %5279 = vmatprep.mubr.f32.mxu0 0.0
        %5280 = vmatmul.mubr.f32.gmra.mrb[0].mxu0 %v5142
        %v5281 = vpop.f32.mrb[0].mxu0
        %v5282 = vadd.f32 0.0, %v5281
        %v5283 = vpop.f32.mrb[0].mxu0
        %5284 = vmatprep.mubr.f32.mxu0 0.0
        %5285 = vmatmul.mubr.f32.gmra.mrb[0].mxu0 %v5145
        %v5286 = vpop.f32.mrb[0].mxu0
        %v5287 = vadd.f32 0.0, %v5286
        %v5288 = vpop.f32.mrb[0].mxu0
        %5289 = vmatprep.mubr.f32.mxu0 0.0
        %5290 = vmatmul.mubr.f32.gmra.mrb[0].mxu0 %v5148
        %v5291 = vpop.f32.mrb[0].mxu0
        %v5292 = vadd.f32 0.0, %v5291
        %v5293 = vpop.f32.mrb[0].mxu0
        %5294 = vdwg.mxu0
        %v5296 = vsel %vm5101, %v5068, 0
        %v5299 = vsel %vm5101, %v5069, 0
        %v5302 = vsel %vm5101, %v5070, 0
        %v5305 = vsel %vm5101, %v5071, 0
        %v5308 = vsel %vm5101, %v5072, 0
        %v5311 = vsel %vm5101, %v5073, 0
        %v5314 = vsel %vm5101, %v5074, 0
        %v5317 = vsel %vm5101, %v5075, 0
        %v5320 = vsel %vm5101, %v5076, 0
        %v5323 = vsel %vm5101, %v5077, 0
        %v5326 = vsel %vm5101, %v5078, 0
        %v5329 = vsel %vm5101, %v5079, 0
        %v5332 = vsel %vm5101, %v5080, 0
        %v5335 = vsel %vm5101, %v5081, 0
        %v5338 = vsel %vm5101, %v5082, 0
        %v5341 = vsel %vm5101, %v5083, 0
        %5343 = vmatprep.subr.mxu0 0.0
        %5344 = vmatpush1.msra.mxu0 %v5060
        %5345 = vmatprep.subr.mxu0 0.0
        %5346 = vmatpush1.msra.mxu0 %v5061
        %5347 = vmatprep.subr.mxu0 0.0
        %5348 = vmatpush1.msra.mxu0 %v5062
        %5349 = vmatprep.subr.mxu0 0.0
        %5350 = vmatpush1.msra.mxu0 %v5063
        %5351 = vmatprep.subr.mxu0 0.0
        %5352 = vmatpush1.msra.mxu0 %v5064
        %5353 = vmatprep.subr.mxu0 0.0
        %5354 = vmatpush1.msra.mxu0 %v5065
        %5355 = vmatprep.subr.mxu0 0.0
        %5356 = vmatpush1.msra.mxu0 %v5066
        %5357 = vmatprep.subr.mxu0 0.0
        %5358 = vmatpush1.msra.mxu0 %v5067
        %5359 = vmatprep.subr.mxu0 0.0
        %5360 = vmatpush1.msra.mxu0 0.0
        %5361 = vmatprep.subr.mxu0 0.0
        %5362 = vmatpush1.msra.mxu0 0.0
        %5363 = vmatprep.subr.mxu0 0.0
        %5364 = vmatpush1.msra.mxu0 0.0
        %5365 = vmatprep.subr.mxu0 0.0
        %5366 = vmatpush1.msra.mxu0 0.0
        %5367 = vmatprep.subr.mxu0 0.0
        %5368 = vmatpush1.msra.mxu0 0.0
        %5369 = vmatprep.subr.mxu0 0.0
        %5370 = vmatpush1.msra.mxu0 0.0
        %5371 = vmatprep.subr.mxu0 0.0
        %5372 = vmatpush1.msra.mxu0 0.0
        %5373 = vmatprep.subr.mxu0 0.0
        %5374 = vmatpush1.msra.mxu0 0.0
        %5375 = vmatprep.subr.mxu0 0.0
        %5376 = vmatpush1.msra.mxu0 0.0
        %5377 = vmatprep.subr.mxu0 0.0
        %5378 = vmatpush1.msra.mxu0 0.0
        %5379 = vmatprep.subr.mxu0 0.0
        %5380 = vmatpush1.msra.mxu0 0.0
        %5381 = vmatprep.subr.mxu0 0.0
        %5382 = vmatpush1.msra.mxu0 0.0
        %5383 = vmatprep.subr.mxu0 0.0
        %5384 = vmatpush1.msra.mxu0 0.0
        %5385 = vmatprep.subr.mxu0 0.0
        %5386 = vmatpush1.msra.mxu0 0.0
        %5387 = vmatprep.subr.mxu0 0.0
        %5388 = vmatpush1.msra.mxu0 0.0
        %5389 = vmatprep.subr.mxu0 0.0
        %5390 = vmatpush1.msra.mxu0 0.0
        %5391 = vmatprep.subr.mxu0 0.0
        %5392 = vmatpush1.msra.mxu0 0.0
        %5393 = vmatprep.subr.mxu0 0.0
        %5394 = vmatpush1.msra.mxu0 0.0
        %5395 = vmatprep.subr.mxu0 0.0
        %5396 = vmatpush1.msra.mxu0 0.0
        %5397 = vmatprep.subr.mxu0 0.0
        %5398 = vmatpush1.msra.mxu0 0.0
        %5399 = vmatprep.subr.mxu0 0.0
        %5400 = vmatpush1.msra.mxu0 0.0
        %5401 = vmatprep.subr.mxu0 0.0
        %5402 = vmatpush1.msra.mxu0 0.0
        %5403 = vmatprep.subr.mxu0 0.0
        %5404 = vmatpush1.msra.mxu0 0.0
        %5405 = vmatprep.subr.mxu0 0.0
        %5406 = vmatpush1.msra.mxu0 0.0
        %5407 = vmatprep.mubr.f32.mxu0 0.0
        %5408 = vmatmul.mubr.f32.gmra.mrb[0].mxu0 %v5296
        %v5409 = vpop.f32.mrb[0].mxu0
        %v5410 = vadd.f32 %v5217, %v5409
        %v5411 = vpop.f32.mrb[0].mxu0
        %5412 = vmatprep.mubr.f32.mxu0 0.0
        %5413 = vmatmul.mubr.f32.gmra.mrb[0].mxu0 %v5299
        %v5414 = vpop.f32.mrb[0].mxu0
        %v5415 = vadd.f32 %v5222, %v5414
        %v5416 = vpop.f32.mrb[0].mxu0
        %5417 = vmatprep.mubr.f32.mxu0 0.0
        %5418 = vmatmul.mubr.f32.gmra.mrb[0].mxu0 %v5302
        %v5419 = vpop.f32.mrb[0].mxu0
        %v5420 = vadd.f32 %v5227, %v5419
        %v5421 = vpop.f32.mrb[0].mxu0
        %5422 = vmatprep.mubr.f32.mxu0 0.0
        %5423 = vmatmul.mubr.f32.gmra.mrb[0].mxu0 %v5305
        %v5424 = vpop.f32.mrb[0].mxu0
        %v5425 = vadd.f32 %v5232, %v5424
        %v5426 = vpop.f32.mrb[0].mxu0
        %5427 = vmatprep.mubr.f32.mxu0 0.0
        %5428 = vmatmul.mubr.f32.gmra.mrb[0].mxu0 %v5308
        %v5429 = vpop.f32.mrb[0].mxu0
        %v5430 = vadd.f32 %v5237, %v5429
        %v5431 = vpop.f32.mrb[0].mxu0
        %5432 = vmatprep.mubr.f32.mxu0 0.0
        %5433 = vmatmul.mubr.f32.gmra.mrb[0].mxu0 %v5311
        %v5434 = vpop.f32.mrb[0].mxu0
        %v5435 = vadd.f32 %v5242, %v5434
        %v5436 = vpop.f32.mrb[0].mxu0
        %5437 = vmatprep.mubr.f32.mxu0 0.0
        %5438 = vmatmul.mubr.f32.gmra.mrb[0].mxu0 %v5314
        %v5439 = vpop.f32.mrb[0].mxu0
        %v5440 = vadd.f32 %v5247, %v5439
        %v5441 = vpop.f32.mrb[0].mxu0
        %5442 = vmatprep.mubr.f32.mxu0 0.0
        %5443 = vmatmul.mubr.f32.gmra.mrb[0].mxu0 %v5317
        %v5444 = vpop.f32.mrb[0].mxu0
        %v5445 = vadd.f32 %v5252, %v5444
        %v5446 = vpop.f32.mrb[0].mxu0
        %5447 = vmatprep.mubr.f32.mxu0 0.0
        %5448 = vmatmul.mubr.f32.gmra.mrb[0].mxu0 %v5320
        %v5449 = vpop.f32.mrb[0].mxu0
        %v5450 = vadd.f32 %v5257, %v5449
        %v5451 = vpop.f32.mrb[0].mxu0
        %5452 = vmatprep.mubr.f32.mxu0 0.0
        %5453 = vmatmul.mubr.f32.gmra.mrb[0].mxu0 %v5323
        %v5454 = vpop.f32.mrb[0].mxu0
        %v5455 = vadd.f32 %v5262, %v5454
        %v5456 = vpop.f32.mrb[0].mxu0
        %5457 = vmatprep.mubr.f32.mxu0 0.0
        %5458 = vmatmul.mubr.f32.gmra.mrb[0].mxu0 %v5326
        %v5459 = vpop.f32.mrb[0].mxu0
        %v5460 = vadd.f32 %v5267, %v5459
        %v5461 = vpop.f32.mrb[0].mxu0
        %5462 = vmatprep.mubr.f32.mxu0 0.0
        %5463 = vmatmul.mubr.f32.gmra.mrb[0].mxu0 %v5329
        %v5464 = vpop.f32.mrb[0].mxu0
        %v5465 = vadd.f32 %v5272, %v5464
        %v5466 = vpop.f32.mrb[0].mxu0
        %5467 = vmatprep.mubr.f32.mxu0 0.0
        %5468 = vmatmul.mubr.f32.gmra.mrb[0].mxu0 %v5332
        %v5469 = vpop.f32.mrb[0].mxu0
        %v5470 = vadd.f32 %v5277, %v5469
        %v5471 = vpop.f32.mrb[0].mxu0
        %5472 = vmatprep.mubr.f32.mxu0 0.0
        %5473 = vmatmul.mubr.f32.gmra.mrb[0].mxu0 %v5335
        %v5474 = vpop.f32.mrb[0].mxu0
        %v5475 = vadd.f32 %v5282, %v5474
        %v5476 = vpop.f32.mrb[0].mxu0
        %5477 = vmatprep.mubr.f32.mxu0 0.0
        %5478 = vmatmul.mubr.f32.gmra.mrb[0].mxu0 %v5338
        %v5479 = vpop.f32.mrb[0].mxu0
        %v5480 = vadd.f32 %v5287, %v5479
        %v5481 = vpop.f32.mrb[0].mxu0
        %5482 = vmatprep.mubr.f32.mxu0 0.0
        %5483 = vmatmul.mubr.f32.gmra.mrb[0].mxu0 %v5341
        %v5484 = vpop.f32.mrb[0].mxu0
        %v5485 = vadd.f32 %v5292, %v5484
        %v5486 = vpop.f32.mrb[0].mxu0
        %5487 = vdwg.mxu0
        %vm5488 = vcmp.lt.s32.totalorder %v4975, 7
        %v5489 = vsel %vm5488, 1, 0
        %vm5490 = vcmp.eq.s32.totalorder %v5489, 1
        %5491 = vrot.lane.b32.xlu0 %v5017, 127
        %v5492 = vpop.permute.xlu0 %5491
        %5493 = vrot.lane.b32.xlu0 %v5018, 127
        %v5494 = vpop.permute.xlu0 %5493
        %5495 = vrot.lane.b32.xlu0 %v5019, 127
        %v5496 = vpop.permute.xlu0 %5495
        %5497 = vrot.lane.b32.xlu0 %v5020, 127
        %v5498 = vpop.permute.xlu0 %5497
        %5499 = vrot.lane.b32.xlu0 %v5021, 127
        %v5500 = vpop.permute.xlu0 %5499
        %5501 = vrot.lane.b32.xlu0 %v5022, 127
        %v5502 = vpop.permute.xlu0 %5501
        %5503 = vrot.lane.b32.xlu0 %v5023, 127
        %v5504 = vpop.permute.xlu0 %5503
        %5505 = vrot.lane.b32.xlu0 %v5024, 127
        %v5506 = vpop.permute.xlu0 %5505
        %v5515 = vsel %vm5490, %v5492, 0.0
        %v5516 = vsel %vm5490, %v5494, 0.0
        %v5517 = vsel %vm5490, %v5496, 0.0
        %v5518 = vsel %vm5490, %v5498, 0.0
        %v5519 = vsel %vm5490, %v5500, 0.0
        %v5520 = vsel %vm5490, %v5502, 0.0
        %v5521 = vsel %vm5490, %v5504, 0.0
        %v5522 = vsel %vm5490, %v5506, 0.0
        %s5523 = scalar_lea.vmem %s13, 256
        %v5524 = vld [vmem:[%s5523] sm:$0xff]
        %v5525 = vld [vmem:[%s5523 + $0x8] sm:$0xff]
        %v5526 = vld [vmem:[%s5523 + $0x10] sm:$0xff]
        %v5527 = vld [vmem:[%s5523 + $0x18] sm:$0xff]
        %v5528 = vld [vmem:[%s5523 + $0x20] sm:$0xff]
        %v5529 = vld [vmem:[%s5523 + $0x28] sm:$0xff]
        %v5530 = vld [vmem:[%s5523 + $0x30] sm:$0xff]
        %v5531 = vld [vmem:[%s5523 + $0x38] sm:$0xff]
        %v5532 = vld [vmem:[%s5523 + $0x40] sm:$0xff]
        %v5533 = vld [vmem:[%s5523 + $0x48] sm:$0xff]
        %v5534 = vld [vmem:[%s5523 + $0x50] sm:$0xff]
        %v5535 = vld [vmem:[%s5523 + $0x58] sm:$0xff]
        %v5536 = vld [vmem:[%s5523 + $0x60] sm:$0xff]
        %v5537 = vld [vmem:[%s5523 + $0x68] sm:$0xff]
        %v5538 = vld [vmem:[%s5523 + $0x70] sm:$0xff]
        %v5539 = vld [vmem:[%s5523 + $0x78] sm:$0xff]
        %v5541 = vsel %vm5101, %v5524, 0
        %v5544 = vsel %vm5101, %v5525, 0
        %v5547 = vsel %vm5101, %v5526, 0
        %v5550 = vsel %vm5101, %v5527, 0
        %v5553 = vsel %vm5101, %v5528, 0
        %v5556 = vsel %vm5101, %v5529, 0
        %v5559 = vsel %vm5101, %v5530, 0
        %v5562 = vsel %vm5101, %v5531, 0
        %v5565 = vsel %vm5101, %v5532, 0
        %v5568 = vsel %vm5101, %v5533, 0
        %v5571 = vsel %vm5101, %v5534, 0
        %v5574 = vsel %vm5101, %v5535, 0
        %v5577 = vsel %vm5101, %v5536, 0
        %v5580 = vsel %vm5101, %v5537, 0
        %v5583 = vsel %vm5101, %v5538, 0
        %v5586 = vsel %vm5101, %v5539, 0
        %5588 = vmatprep.subr.mxu0 0.0
        %5589 = vmatpush1.msra.mxu0 %v5515
        %5590 = vmatprep.subr.mxu0 0.0
        %5591 = vmatpush1.msra.mxu0 %v5516
        %5592 = vmatprep.subr.mxu0 0.0
        %5593 = vmatpush1.msra.mxu0 %v5517
        %5594 = vmatprep.subr.mxu0 0.0
        %5595 = vmatpush1.msra.mxu0 %v5518
        %5596 = vmatprep.subr.mxu0 0.0
        %5597 = vmatpush1.msra.mxu0 %v5519
        %5598 = vmatprep.subr.mxu0 0.0
        %5599 = vmatpush1.msra.mxu0 %v5520
        %5600 = vmatprep.subr.mxu0 0.0
        %5601 = vmatpush1.msra.mxu0 %v5521
        %5602 = vmatprep.subr.mxu0 0.0
        %5603 = vmatpush1.msra.mxu0 %v5522
        %5604 = vmatprep.subr.mxu0 0.0
        %5605 = vmatpush1.msra.mxu0 0.0
        %5606 = vmatprep.subr.mxu0 0.0
        %5607 = vmatpush1.msra.mxu0 0.0
        %5608 = vmatprep.subr.mxu0 0.0
        %5609 = vmatpush1.msra.mxu0 0.0
        %5610 = vmatprep.subr.mxu0 0.0
        %5611 = vmatpush1.msra.mxu0 0.0
        %5612 = vmatprep.subr.mxu0 0.0
        %5613 = vmatpush1.msra.mxu0 0.0
        %5614 = vmatprep.subr.mxu0 0.0
        %5615 = vmatpush1.msra.mxu0 0.0
        %5616 = vmatprep.subr.mxu0 0.0
        %5617 = vmatpush1.msra.mxu0 0.0
        %5618 = vmatprep.subr.mxu0 0.0
        %5619 = vmatpush1.msra.mxu0 0.0
        %5620 = vmatprep.subr.mxu0 0.0
        %5621 = vmatpush1.msra.mxu0 0.0
        %5622 = vmatprep.subr.mxu0 0.0
        %5623 = vmatpush1.msra.mxu0 0.0
        %5624 = vmatprep.subr.mxu0 0.0
        %5625 = vmatpush1.msra.mxu0 0.0
        %5626 = vmatprep.subr.mxu0 0.0
        %5627 = vmatpush1.msra.mxu0 0.0
        %5628 = vmatprep.subr.mxu0 0.0
        %5629 = vmatpush1.msra.mxu0 0.0
        %5630 = vmatprep.subr.mxu0 0.0
        %5631 = vmatpush1.msra.mxu0 0.0
        %5632 = vmatprep.subr.mxu0 0.0
        %5633 = vmatpush1.msra.mxu0 0.0
        %5634 = vmatprep.subr.mxu0 0.0
        %5635 = vmatpush1.msra.mxu0 0.0
        %5636 = vmatprep.subr.mxu0 0.0
        %5637 = vmatpush1.msra.mxu0 0.0
        %5638 = vmatprep.subr.mxu0 0.0
        %5639 = vmatpush1.msra.mxu0 0.0
        %5640 = vmatprep.subr.mxu0 0.0
        %5641 = vmatpush1.msra.mxu0 0.0
        %5642 = vmatprep.subr.mxu0 0.0
        %5643 = vmatpush1.msra.mxu0 0.0
        %5644 = vmatprep.subr.mxu0 0.0
        %5645 = vmatpush1.msra.mxu0 0.0
        %5646 = vmatprep.subr.mxu0 0.0
        %5647 = vmatpush1.msra.mxu0 0.0
        %5648 = vmatprep.subr.mxu0 0.0
        %5649 = vmatpush1.msra.mxu0 0.0
        %5650 = vmatprep.subr.mxu0 0.0
        %5651 = vmatpush1.msra.mxu0 0.0
        %5652 = vmatprep.mubr.f32.mxu0 0.0
        %5653 = vmatmul.mubr.f32.gmra.mrb[0].mxu0 %v5541
        %v5654 = vpop.f32.mrb[0].mxu0
        %v5655 = vadd.f32 0.0, %v5654
        %v5656 = vpop.f32.mrb[0].mxu0
        %5657 = vmatprep.mubr.f32.mxu0 0.0
        %5658 = vmatmul.mubr.f32.gmra.mrb[0].mxu0 %v5544
        %v5659 = vpop.f32.mrb[0].mxu0
        %v5660 = vadd.f32 0.0, %v5659
        %v5661 = vpop.f32.mrb[0].mxu0
        %5662 = vmatprep.mubr.f32.mxu0 0.0
        %5663 = vmatmul.mubr.f32.gmra.mrb[0].mxu0 %v5547
        %v5664 = vpop.f32.mrb[0].mxu0
        %v5665 = vadd.f32 0.0, %v5664
        %v5666 = vpop.f32.mrb[0].mxu0
        %5667 = vmatprep.mubr.f32.mxu0 0.0
        %5668 = vmatmul.mubr.f32.gmra.mrb[0].mxu0 %v5550
        %v5669 = vpop.f32.mrb[0].mxu0
        %v5670 = vadd.f32 0.0, %v5669
        %v5671 = vpop.f32.mrb[0].mxu0
        %5672 = vmatprep.mubr.f32.mxu0 0.0
        %5673 = vmatmul.mubr.f32.gmra.mrb[0].mxu0 %v5553
        %v5674 = vpop.f32.mrb[0].mxu0
        %v5675 = vadd.f32 0.0, %v5674
        %v5676 = vpop.f32.mrb[0].mxu0
        %5677 = vmatprep.mubr.f32.mxu0 0.0
        %5678 = vmatmul.mubr.f32.gmra.mrb[0].mxu0 %v5556
        %v5679 = vpop.f32.mrb[0].mxu0
        %v5680 = vadd.f32 0.0, %v5679
        %v5681 = vpop.f32.mrb[0].mxu0
        %5682 = vmatprep.mubr.f32.mxu0 0.0
        %5683 = vmatmul.mubr.f32.gmra.mrb[0].mxu0 %v5559
        %v5684 = vpop.f32.mrb[0].mxu0
        %v5685 = vadd.f32 0.0, %v5684
        %v5686 = vpop.f32.mrb[0].mxu0
        %5687 = vmatprep.mubr.f32.mxu0 0.0
        %5688 = vmatmul.mubr.f32.gmra.mrb[0].mxu0 %v5562
        %v5689 = vpop.f32.mrb[0].mxu0
        %v5690 = vadd.f32 0.0, %v5689
        %v5691 = vpop.f32.mrb[0].mxu0
        %5692 = vmatprep.mubr.f32.mxu0 0.0
        %5693 = vmatmul.mubr.f32.gmra.mrb[0].mxu0 %v5565
        %v5694 = vpop.f32.mrb[0].mxu0
        %v5695 = vadd.f32 0.0, %v5694
        %v5696 = vpop.f32.mrb[0].mxu0
        %5697 = vmatprep.mubr.f32.mxu0 0.0
        %5698 = vmatmul.mubr.f32.gmra.mrb[0].mxu0 %v5568
        %v5699 = vpop.f32.mrb[0].mxu0
        %v5700 = vadd.f32 0.0, %v5699
        %v5701 = vpop.f32.mrb[0].mxu0
        %5702 = vmatprep.mubr.f32.mxu0 0.0
        %5703 = vmatmul.mubr.f32.gmra.mrb[0].mxu0 %v5571
        %v5704 = vpop.f32.mrb[0].mxu0
        %v5705 = vadd.f32 0.0, %v5704
        %v5706 = vpop.f32.mrb[0].mxu0
        %5707 = vmatprep.mubr.f32.mxu0 0.0
        %5708 = vmatmul.mubr.f32.gmra.mrb[0].mxu0 %v5574
        %v5709 = vpop.f32.mrb[0].mxu0
        %v5710 = vadd.f32 0.0, %v5709
        %v5711 = vpop.f32.mrb[0].mxu0
        %5712 = vmatprep.mubr.f32.mxu0 0.0
        %5713 = vmatmul.mubr.f32.gmra.mrb[0].mxu0 %v5577
        %v5714 = vpop.f32.mrb[0].mxu0
        %v5715 = vadd.f32 0.0, %v5714
        %v5716 = vpop.f32.mrb[0].mxu0
        %5717 = vmatprep.mubr.f32.mxu0 0.0
        %5718 = vmatmul.mubr.f32.gmra.mrb[0].mxu0 %v5580
        %v5719 = vpop.f32.mrb[0].mxu0
        %v5720 = vadd.f32 0.0, %v5719
        %v5721 = vpop.f32.mrb[0].mxu0
        %5722 = vmatprep.mubr.f32.mxu0 0.0
        %5723 = vmatmul.mubr.f32.gmra.mrb[0].mxu0 %v5583
        %v5724 = vpop.f32.mrb[0].mxu0
        %v5725 = vadd.f32 0.0, %v5724
        %v5726 = vpop.f32.mrb[0].mxu0
        %5727 = vmatprep.mubr.f32.mxu0 0.0
        %5728 = vmatmul.mubr.f32.gmra.mrb[0].mxu0 %v5586
        %v5729 = vpop.f32.mrb[0].mxu0
        %v5730 = vadd.f32 0.0, %v5729
        %v5731 = vpop.f32.mrb[0].mxu0
        %5732 = vdwg.mxu0
        %v5733 = vadd.f32 %v5410, %v5655
        %v5734 = vadd.f32 %v5415, %v5660
        %v5735 = vadd.f32 %v5420, %v5665
        %v5736 = vadd.f32 %v5425, %v5670
        %v5737 = vadd.f32 %v5430, %v5675
        %v5738 = vadd.f32 %v5435, %v5680
        %v5739 = vadd.f32 %v5440, %v5685
        %v5740 = vadd.f32 %v5445, %v5690
        %v5741 = vadd.f32 %v5450, %v5695
        %v5742 = vadd.f32 %v5455, %v5700
        %v5743 = vadd.f32 %v5460, %v5705
        %v5744 = vadd.f32 %v5465, %v5710
        %v5745 = vadd.f32 %v5470, %v5715
        %v5746 = vadd.f32 %v5475, %v5720
        %v5747 = vadd.f32 %v5480, %v5725
        %v5748 = vadd.f32 %v5485, %v5730
        %v5749 = vld [vmem:[%s14] sm:$0xff]
        %v5750 = vld [vmem:[%s14 + $0x8] sm:$0xff]
        %v5751 = vld [vmem:[%s14 + $0x10] sm:$0xff]
        %v5752 = vld [vmem:[%s14 + $0x18] sm:$0xff]
        %v5753 = vld [vmem:[%s14 + $0x20] sm:$0xff]
        %v5754 = vld [vmem:[%s14 + $0x28] sm:$0xff]
        %v5755 = vld [vmem:[%s14 + $0x30] sm:$0xff]
        %v5756 = vld [vmem:[%s14 + $0x38] sm:$0xff]
        %v5757 = vld [vmem:[%s14 + $0x40] sm:$0xff]
        %v5758 = vld [vmem:[%s14 + $0x48] sm:$0xff]
        %v5759 = vld [vmem:[%s14 + $0x50] sm:$0xff]
        %v5760 = vld [vmem:[%s14 + $0x58] sm:$0xff]
        %v5761 = vld [vmem:[%s14 + $0x60] sm:$0xff]
        %v5762 = vld [vmem:[%s14 + $0x68] sm:$0xff]
        %v5763 = vld [vmem:[%s14 + $0x70] sm:$0xff]
        %v5764 = vld [vmem:[%s14 + $0x78] sm:$0xff]
        %5766 = vset.pattern.permute.xlu0 0
        %5767 = vperm.xlu0 %5766, %v5749
        %v5768 = vpop.permute.xlu0 %5767
        %5771 = vset.pattern.permute.xlu0 0
        %5772 = vperm.xlu0 %5771, %v5750
        %v5773 = vpop.permute.xlu0 %5772
        %5776 = vset.pattern.permute.xlu0 0
        %5777 = vperm.xlu0 %5776, %v5751
        %v5778 = vpop.permute.xlu0 %5777
        %5781 = vset.pattern.permute.xlu0 0
        %5782 = vperm.xlu0 %5781, %v5752
        %v5783 = vpop.permute.xlu0 %5782
        %5786 = vset.pattern.permute.xlu0 0
        %5787 = vperm.xlu0 %5786, %v5753
        %v5788 = vpop.permute.xlu0 %5787
        %5791 = vset.pattern.permute.xlu0 0
        %5792 = vperm.xlu0 %5791, %v5754
        %v5793 = vpop.permute.xlu0 %5792
        %5796 = vset.pattern.permute.xlu0 0
        %5797 = vperm.xlu0 %5796, %v5755
        %v5798 = vpop.permute.xlu0 %5797
        %5801 = vset.pattern.permute.xlu0 0
        %5802 = vperm.xlu0 %5801, %v5756
        %v5803 = vpop.permute.xlu0 %5802
        %5806 = vset.pattern.permute.xlu0 0
        %5807 = vperm.xlu0 %5806, %v5757
        %v5808 = vpop.permute.xlu0 %5807
        %5811 = vset.pattern.permute.xlu0 0
        %5812 = vperm.xlu0 %5811, %v5758
        %v5813 = vpop.permute.xlu0 %5812
        %5816 = vset.pattern.permute.xlu0 0
        %5817 = vperm.xlu0 %5816, %v5759
        %v5818 = vpop.permute.xlu0 %5817
        %5821 = vset.pattern.permute.xlu0 0
        %5822 = vperm.xlu0 %5821, %v5760
        %v5823 = vpop.permute.xlu0 %5822
        %5826 = vset.pattern.permute.xlu0 0
        %5827 = vperm.xlu0 %5826, %v5761
        %v5828 = vpop.permute.xlu0 %5827
        %5831 = vset.pattern.permute.xlu0 0
        %5832 = vperm.xlu0 %5831, %v5762
        %v5833 = vpop.permute.xlu0 %5832
        %5836 = vset.pattern.permute.xlu0 0
        %5837 = vperm.xlu0 %5836, %v5763
        %v5838 = vpop.permute.xlu0 %5837
        %5841 = vset.pattern.permute.xlu0 0
        %5842 = vperm.xlu0 %5841, %v5764
        %v5843 = vpop.permute.xlu0 %5842
        %v5845 = vadd.f32 %v5733, %v5768
        %v5846 = vadd.f32 %v5734, %v5773
        %v5847 = vadd.f32 %v5735, %v5778
        %v5848 = vadd.f32 %v5736, %v5783
        %v5849 = vadd.f32 %v5737, %v5788
        %v5850 = vadd.f32 %v5738, %v5793
        %v5851 = vadd.f32 %v5739, %v5798
        %v5852 = vadd.f32 %v5740, %v5803
        %v5853 = vadd.f32 %v5741, %v5808
        %v5854 = vadd.f32 %v5742, %v5813
        %v5855 = vadd.f32 %v5743, %v5818
        %v5856 = vadd.f32 %v5744, %v5823
        %v5857 = vadd.f32 %v5745, %v5828
        %v5858 = vadd.f32 %v5746, %v5833
        %v5859 = vadd.f32 %v5747, %v5838
        %v5860 = vadd.f32 %v5748, %v5843
        %v5861 = vmax.f32 %v5845, 0.0
        %v5862 = vmax.f32 %v5846, 0.0
        %v5863 = vmax.f32 %v5847, 0.0
        %v5864 = vmax.f32 %v5848, 0.0
        %v5865 = vmax.f32 %v5849, 0.0
        %v5866 = vmax.f32 %v5850, 0.0
        %v5867 = vmax.f32 %v5851, 0.0
        %v5868 = vmax.f32 %v5852, 0.0
        %v5869 = vmax.f32 %v5853, 0.0
        %v5870 = vmax.f32 %v5854, 0.0
        %v5871 = vmax.f32 %v5855, 0.0
        %v5872 = vmax.f32 %v5856, 0.0
        %v5873 = vmax.f32 %v5857, 0.0
        %v5874 = vmax.f32 %v5858, 0.0
        %v5875 = vmax.f32 %v5859, 0.0
        %v5876 = vmax.f32 %v5860, 0.0
        %v5877 = vld [vmem:[%s1] sm:$0xff]
        %v5878 = vld [vmem:[%s1 + $0x8] sm:$0xff]
        %v5879 = vld [vmem:[%s1 + $0x10] sm:$0xff]
        %v5880 = vld [vmem:[%s1 + $0x18] sm:$0xff]
        %v5881 = vld [vmem:[%s1 + $0x20] sm:$0xff]
        %v5882 = vld [vmem:[%s1 + $0x28] sm:$0xff]
        %v5883 = vld [vmem:[%s1 + $0x30] sm:$0xff]
        %v5884 = vld [vmem:[%s1 + $0x38] sm:$0xff]
        %v5886 = vsel %vm5101, %v5861, 0
        %v5889 = vsel %vm5101, %v5862, 0
        %v5892 = vsel %vm5101, %v5863, 0
        %v5895 = vsel %vm5101, %v5864, 0
        %v5898 = vsel %vm5101, %v5865, 0
        %v5901 = vsel %vm5101, %v5866, 0
        %v5904 = vsel %vm5101, %v5867, 0
        %v5907 = vsel %vm5101, %v5868, 0
        %v5910 = vsel %vm5101, %v5869, 0
        %v5913 = vsel %vm5101, %v5870, 0
        %v5916 = vsel %vm5101, %v5871, 0
        %v5919 = vsel %vm5101, %v5872, 0
        %v5922 = vsel %vm5101, %v5873, 0
        %v5925 = vsel %vm5101, %v5874, 0
        %v5928 = vsel %vm5101, %v5875, 0
        %v5931 = vsel %vm5101, %v5876, 0
        %5933 = vmatprep.subr.mxu0 0.0
        %5934 = vmatpush1.msra.mxu0 %v5877
        %5935 = vmatprep.subr.mxu0 0.0
        %5936 = vmatpush1.msra.mxu0 %v5878
        %5937 = vmatprep.subr.mxu0 0.0
        %5938 = vmatpush1.msra.mxu0 %v5879
        %5939 = vmatprep.subr.mxu0 0.0
        %5940 = vmatpush1.msra.mxu0 %v5880
        %5941 = vmatprep.subr.mxu0 0.0
        %5942 = vmatpush1.msra.mxu0 %v5881
        %5943 = vmatprep.subr.mxu0 0.0
        %5944 = vmatpush1.msra.mxu0 %v5882
        %5945 = vmatprep.subr.mxu0 0.0
        %5946 = vmatpush1.msra.mxu0 %v5883
        %5947 = vmatprep.subr.mxu0 0.0
        %5948 = vmatpush1.msra.mxu0 %v5884
        %5949 = vmatprep.subr.mxu0 0.0
        %5950 = vmatpush1.msra.mxu0 0.0
        %5951 = vmatprep.subr.mxu0 0.0
        %5952 = vmatpush1.msra.mxu0 0.0
        %5953 = vmatprep.subr.mxu0 0.0
        %5954 = vmatpush1.msra.mxu0 0.0
        %5955 = vmatprep.subr.mxu0 0.0
        %5956 = vmatpush1.msra.mxu0 0.0
        %5957 = vmatprep.subr.mxu0 0.0
        %5958 = vmatpush1.msra.mxu0 0.0
        %5959 = vmatprep.subr.mxu0 0.0
        %5960 = vmatpush1.msra.mxu0 0.0
        %5961 = vmatprep.subr.mxu0 0.0
        %5962 = vmatpush1.msra.mxu0 0.0
        %5963 = vmatprep.subr.mxu0 0.0
        %5964 = vmatpush1.msra.mxu0 0.0
        %5965 = vmatprep.subr.mxu0 0.0
        %5966 = vmatpush1.msra.mxu0 0.0
        %5967 = vmatprep.subr.mxu0 0.0
        %5968 = vmatpush1.msra.mxu0 0.0
        %5969 = vmatprep.subr.mxu0 0.0
        %5970 = vmatpush1.msra.mxu0 0.0
        %5971 = vmatprep.subr.mxu0 0.0
        %5972 = vmatpush1.msra.mxu0 0.0
        %5973 = vmatprep.subr.mxu0 0.0
        %5974 = vmatpush1.msra.mxu0 0.0
        %5975 = vmatprep.subr.mxu0 0.0
        %5976 = vmatpush1.msra.mxu0 0.0
        %5977 = vmatprep.subr.mxu0 0.0
        %5978 = vmatpush1.msra.mxu0 0.0
        %5979 = vmatprep.subr.mxu0 0.0
        %5980 = vmatpush1.msra.mxu0 0.0
        %5981 = vmatprep.subr.mxu0 0.0
        %5982 = vmatpush1.msra.mxu0 0.0
        %5983 = vmatprep.subr.mxu0 0.0
        %5984 = vmatpush1.msra.mxu0 0.0
        %5985 = vmatprep.subr.mxu0 0.0
        %5986 = vmatpush1.msra.mxu0 0.0
        %5987 = vmatprep.subr.mxu0 0.0
        %5988 = vmatpush1.msra.mxu0 0.0
        %5989 = vmatprep.subr.mxu0 0.0
        %5990 = vmatpush1.msra.mxu0 0.0
        %5991 = vmatprep.subr.mxu0 0.0
        %5992 = vmatpush1.msra.mxu0 0.0
        %5993 = vmatprep.subr.mxu0 0.0
        %5994 = vmatpush1.msra.mxu0 0.0
        %5995 = vmatprep.subr.mxu0 0.0
        %5996 = vmatpush1.msra.mxu0 0.0
        %5997 = vmatprep.mubr.f32.mxu0 0.0
        %5998 = vmatmul.mubr.f32.gmra.mrb[0].mxu0 %v5886
        %v5999 = vpop.f32.mrb[0].mxu0
        %v6000 = vadd.f32 0.0, %v5999
        %v6001 = vpop.f32.mrb[0].mxu0
        %6002 = vmatprep.mubr.f32.mxu0 0.0
        %6003 = vmatmul.mubr.f32.gmra.mrb[0].mxu0 %v5889
        %v6004 = vpop.f32.mrb[0].mxu0
        %v6005 = vadd.f32 0.0, %v6004
        %v6006 = vpop.f32.mrb[0].mxu0
        %6007 = vmatprep.mubr.f32.mxu0 0.0
        %6008 = vmatmul.mubr.f32.gmra.mrb[0].mxu0 %v5892
        %v6009 = vpop.f32.mrb[0].mxu0
        %v6010 = vadd.f32 0.0, %v6009
        %v6011 = vpop.f32.mrb[0].mxu0
        %6012 = vmatprep.mubr.f32.mxu0 0.0
        %6013 = vmatmul.mubr.f32.gmra.mrb[0].mxu0 %v5895
        %v6014 = vpop.f32.mrb[0].mxu0
        %v6015 = vadd.f32 0.0, %v6014
        %v6016 = vpop.f32.mrb[0].mxu0
        %6017 = vmatprep.mubr.f32.mxu0 0.0
        %6018 = vmatmul.mubr.f32.gmra.mrb[0].mxu0 %v5898
        %v6019 = vpop.f32.mrb[0].mxu0
        %v6020 = vadd.f32 0.0, %v6019
        %v6021 = vpop.f32.mrb[0].mxu0
        %6022 = vmatprep.mubr.f32.mxu0 0.0
        %6023 = vmatmul.mubr.f32.gmra.mrb[0].mxu0 %v5901
        %v6024 = vpop.f32.mrb[0].mxu0
        %v6025 = vadd.f32 0.0, %v6024
        %v6026 = vpop.f32.mrb[0].mxu0
        %6027 = vmatprep.mubr.f32.mxu0 0.0
        %6028 = vmatmul.mubr.f32.gmra.mrb[0].mxu0 %v5904
        %v6029 = vpop.f32.mrb[0].mxu0
        %v6030 = vadd.f32 0.0, %v6029
        %v6031 = vpop.f32.mrb[0].mxu0
        %6032 = vmatprep.mubr.f32.mxu0 0.0
        %6033 = vmatmul.mubr.f32.gmra.mrb[0].mxu0 %v5907
        %v6034 = vpop.f32.mrb[0].mxu0
        %v6035 = vadd.f32 0.0, %v6034
        %v6036 = vpop.f32.mrb[0].mxu0
        %6037 = vmatprep.mubr.f32.mxu0 0.0
        %6038 = vmatmul.mubr.f32.gmra.mrb[0].mxu0 %v5910
        %v6039 = vpop.f32.mrb[0].mxu0
        %v6040 = vadd.f32 0.0, %v6039
        %v6041 = vpop.f32.mrb[0].mxu0
        %6042 = vmatprep.mubr.f32.mxu0 0.0
        %6043 = vmatmul.mubr.f32.gmra.mrb[0].mxu0 %v5913
        %v6044 = vpop.f32.mrb[0].mxu0
        %v6045 = vadd.f32 0.0, %v6044
        %v6046 = vpop.f32.mrb[0].mxu0
        %6047 = vmatprep.mubr.f32.mxu0 0.0
        %6048 = vmatmul.mubr.f32.gmra.mrb[0].mxu0 %v5916
        %v6049 = vpop.f32.mrb[0].mxu0
        %v6050 = vadd.f32 0.0, %v6049
        %v6051 = vpop.f32.mrb[0].mxu0
        %6052 = vmatprep.mubr.f32.mxu0 0.0
        %6053 = vmatmul.mubr.f32.gmra.mrb[0].mxu0 %v5919
        %v6054 = vpop.f32.mrb[0].mxu0
        %v6055 = vadd.f32 0.0, %v6054
        %v6056 = vpop.f32.mrb[0].mxu0
        %6057 = vmatprep.mubr.f32.mxu0 0.0
        %6058 = vmatmul.mubr.f32.gmra.mrb[0].mxu0 %v5922
        %v6059 = vpop.f32.mrb[0].mxu0
        %v6060 = vadd.f32 0.0, %v6059
        %v6061 = vpop.f32.mrb[0].mxu0
        %6062 = vmatprep.mubr.f32.mxu0 0.0
        %6063 = vmatmul.mubr.f32.gmra.mrb[0].mxu0 %v5925
        %v6064 = vpop.f32.mrb[0].mxu0
        %v6065 = vadd.f32 0.0, %v6064
        %v6066 = vpop.f32.mrb[0].mxu0
        %6067 = vmatprep.mubr.f32.mxu0 0.0
        %6068 = vmatmul.mubr.f32.gmra.mrb[0].mxu0 %v5928
        %v6069 = vpop.f32.mrb[0].mxu0
        %v6070 = vadd.f32 0.0, %v6069
        %v6071 = vpop.f32.mrb[0].mxu0
        %6072 = vmatprep.mubr.f32.mxu0 0.0
        %6073 = vmatmul.mubr.f32.gmra.mrb[0].mxu0 %v5931
        %v6074 = vpop.f32.mrb[0].mxu0
        %v6075 = vadd.f32 0.0, %v6074
        %v6076 = vpop.f32.mrb[0].mxu0
        %6077 = vdwg.mxu0
        %v6078 = vand.u32 %v601, 3
        %vm6079 = vcmask 1047808
        %6080 = vrot.lane.b32.xlu0 %v6000, 32
        %v6081 = vpop.permute.xlu0 %6080
        %v6082 = vsel %vm6079, %v6081, %v6000
        %6083 = vrot.lane.b32.xlu0 %v6005, 32
        %v6084 = vpop.permute.xlu0 %6083
        %v6085 = vsel %vm6079, %v6084, %v6005
        %6086 = vrot.lane.b32.xlu0 %v6010, 32
        %v6087 = vpop.permute.xlu0 %6086
        %v6088 = vsel %vm6079, %v6087, %v6010
        %6089 = vrot.lane.b32.xlu0 %v6015, 32
        %v6090 = vpop.permute.xlu0 %6089
        %v6091 = vsel %vm6079, %v6090, %v6015
        %6092 = vrot.lane.b32.xlu0 %v6020, 32
        %v6093 = vpop.permute.xlu0 %6092
        %v6094 = vsel %vm6079, %v6093, %v6020
        %6095 = vrot.lane.b32.xlu0 %v6025, 32
        %v6096 = vpop.permute.xlu0 %6095
        %v6097 = vsel %vm6079, %v6096, %v6025
        %6098 = vrot.lane.b32.xlu0 %v6030, 32
        %v6099 = vpop.permute.xlu0 %6098
        %v6100 = vsel %vm6079, %v6099, %v6030
        %6101 = vrot.lane.b32.xlu0 %v6035, 32
        %v6102 = vpop.permute.xlu0 %6101
        %v6103 = vsel %vm6079, %v6102, %v6035
        %6104 = vrot.lane.b32.xlu0 %v6040, 32
        %v6105 = vpop.permute.xlu0 %6104
        %v6106 = vsel %vm6079, %v6105, %v6040
        %6107 = vrot.lane.b32.xlu0 %v6045, 32
        %v6108 = vpop.permute.xlu0 %6107
        %v6109 = vsel %vm6079, %v6108, %v6045
        %6110 = vrot.lane.b32.xlu0 %v6050, 32
        %v6111 = vpop.permute.xlu0 %6110
        %v6112 = vsel %vm6079, %v6111, %v6050
        %6113 = vrot.lane.b32.xlu0 %v6055, 32
        %v6114 = vpop.permute.xlu0 %6113
        %v6115 = vsel %vm6079, %v6114, %v6055
        %6116 = vrot.lane.b32.xlu0 %v6060, 32
        %v6117 = vpop.permute.xlu0 %6116
        %v6118 = vsel %vm6079, %v6117, %v6060
        %6119 = vrot.lane.b32.xlu0 %v6065, 32
        %v6120 = vpop.permute.xlu0 %6119
        %v6121 = vsel %vm6079, %v6120, %v6065
        %6122 = vrot.lane.b32.xlu0 %v6070, 32
        %v6123 = vpop.permute.xlu0 %6122
        %v6124 = vsel %vm6079, %v6123, %v6070
        %6125 = vrot.lane.b32.xlu0 %v6075, 32
        %v6126 = vpop.permute.xlu0 %6125
        %v6127 = vsel %vm6079, %v6126, %v6075
        %6128 = vrot.lane.b32.xlu0 %v6082, 32
        %v6129 = vpop.permute.xlu0 %6128
        %6130 = vrot.lane.b32.xlu0 %v6085, 32
        %v6131 = vpop.permute.xlu0 %6130
        %6132 = vrot.lane.b32.xlu0 %v6088, 32
        %v6133 = vpop.permute.xlu0 %6132
        %6134 = vrot.lane.b32.xlu0 %v6091, 32
        %v6135 = vpop.permute.xlu0 %6134
        %6136 = vrot.lane.b32.xlu0 %v6094, 32
        %v6137 = vpop.permute.xlu0 %6136
        %6138 = vrot.lane.b32.xlu0 %v6097, 32
        %v6139 = vpop.permute.xlu0 %6138
        %6140 = vrot.lane.b32.xlu0 %v6100, 32
        %v6141 = vpop.permute.xlu0 %6140
        %6142 = vrot.lane.b32.xlu0 %v6103, 32
        %v6143 = vpop.permute.xlu0 %6142
        %6144 = vrot.lane.b32.xlu0 %v6106, 32
        %v6145 = vpop.permute.xlu0 %6144
        %6146 = vrot.lane.b32.xlu0 %v6109, 32
        %v6147 = vpop.permute.xlu0 %6146
        %6148 = vrot.lane.b32.xlu0 %v6112, 32
        %v6149 = vpop.permute.xlu0 %6148
        %6150 = vrot.lane.b32.xlu0 %v6115, 32
        %v6151 = vpop.permute.xlu0 %6150
        %6152 = vrot.lane.b32.xlu0 %v6118, 32
        %v6153 = vpop.permute.xlu0 %6152
        %6154 = vrot.lane.b32.xlu0 %v6121, 32
        %v6155 = vpop.permute.xlu0 %6154
        %6156 = vrot.lane.b32.xlu0 %v6124, 32
        %v6157 = vpop.permute.xlu0 %6156
        %6158 = vrot.lane.b32.xlu0 %v6127, 32
        %v6159 = vpop.permute.xlu0 %6158
        %v6160 = vsel %vm6079, %v6129, %v6000
        %v6161 = vsel %vm6079, %v6131, %v6005
        %v6162 = vsel %vm6079, %v6133, %v6010
        %v6163 = vsel %vm6079, %v6135, %v6015
        %v6164 = vsel %vm6079, %v6137, %v6020
        %v6165 = vsel %vm6079, %v6139, %v6025
        %v6166 = vsel %vm6079, %v6141, %v6030
        %v6167 = vsel %vm6079, %v6143, %v6035
        %v6168 = vsel %vm6079, %v6145, %v6040
        %v6169 = vsel %vm6079, %v6147, %v6045
        %v6170 = vsel %vm6079, %v6149, %v6050
        %v6171 = vsel %vm6079, %v6151, %v6055
        %v6172 = vsel %vm6079, %v6153, %v6060
        %v6173 = vsel %vm6079, %v6155, %v6065
        %v6174 = vsel %vm6079, %v6157, %v6070
        %v6175 = vsel %vm6079, %v6159, %v6075
        %vm6176 = vcmp.ge.s32.totalorder %v6078, 1
        %v6177 = vsel %vm6176, 1, 0
        %vm6178 = vcmp.eq.s32.totalorder %v6177, 1
        %6195 = vrot.lane.b32.xlu0 %v6160, 97
        %v6196 = vpop.permute.xlu0 %6195
        %6197 = vrot.lane.b32.xlu0 %v6161, 97
        %v6198 = vpop.permute.xlu0 %6197
        %6199 = vrot.lane.b32.xlu0 %v6162, 97
        %v6200 = vpop.permute.xlu0 %6199
        %6201 = vrot.lane.b32.xlu0 %v6163, 97
        %v6202 = vpop.permute.xlu0 %6201
        %6203 = vrot.lane.b32.xlu0 %v6164, 97
        %v6204 = vpop.permute.xlu0 %6203
        %6205 = vrot.lane.b32.xlu0 %v6165, 97
        %v6206 = vpop.permute.xlu0 %6205
        %6207 = vrot.lane.b32.xlu0 %v6166, 97
        %v6208 = vpop.permute.xlu0 %6207
        %6209 = vrot.lane.b32.xlu0 %v6167, 97
        %v6210 = vpop.permute.xlu0 %6209
        %6211 = vrot.lane.b32.xlu0 %v6168, 97
        %v6212 = vpop.permute.xlu0 %6211
        %6213 = vrot.lane.b32.xlu0 %v6169, 97
        %v6214 = vpop.permute.xlu0 %6213
        %6215 = vrot.lane.b32.xlu0 %v6170, 97
        %v6216 = vpop.permute.xlu0 %6215
        %6217 = vrot.lane.b32.xlu0 %v6171, 97
        %v6218 = vpop.permute.xlu0 %6217
        %6219 = vrot.lane.b32.xlu0 %v6172, 97
        %v6220 = vpop.permute.xlu0 %6219
        %6221 = vrot.lane.b32.xlu0 %v6173, 97
        %v6222 = vpop.permute.xlu0 %6221
        %6223 = vrot.lane.b32.xlu0 %v6174, 97
        %v6224 = vpop.permute.xlu0 %6223
        %6225 = vrot.lane.b32.xlu0 %v6175, 97
        %v6226 = vpop.permute.xlu0 %6225
        %v6243 = vsel %vm6178, %v6196, 0.0
        %v6244 = vsel %vm6178, %v6198, 0.0
        %v6245 = vsel %vm6178, %v6200, 0.0
        %v6246 = vsel %vm6178, %v6202, 0.0
        %v6247 = vsel %vm6178, %v6204, 0.0
        %v6248 = vsel %vm6178, %v6206, 0.0
        %v6249 = vsel %vm6178, %v6208, 0.0
        %v6250 = vsel %vm6178, %v6210, 0.0
        %v6251 = vsel %vm6178, %v6212, 0.0
        %v6252 = vsel %vm6178, %v6214, 0.0
        %v6253 = vsel %vm6178, %v6216, 0.0
        %v6254 = vsel %vm6178, %v6218, 0.0
        %v6255 = vsel %vm6178, %v6220, 0.0
        %v6256 = vsel %vm6178, %v6222, 0.0
        %v6257 = vsel %vm6178, %v6224, 0.0
        %v6258 = vsel %vm6178, %v6226, 0.0
        %v6259 = vld [vmem:[%s15] sm:$0xff]
        %v6260 = vld [vmem:[%s15 + $0x8] sm:$0xff]
        %v6261 = vld [vmem:[%s15 + $0x10] sm:$0xff]
        %v6262 = vld [vmem:[%s15 + $0x18] sm:$0xff]
        %v6263 = vld [vmem:[%s15 + $0x20] sm:$0xff]
        %v6264 = vld [vmem:[%s15 + $0x28] sm:$0xff]
        %v6265 = vld [vmem:[%s15 + $0x30] sm:$0xff]
        %v6266 = vld [vmem:[%s15 + $0x38] sm:$0xff]
        %v6267 = vld [vmem:[%s15 + $0x40] sm:$0xff]
        %v6268 = vld [vmem:[%s15 + $0x48] sm:$0xff]
        %v6269 = vld [vmem:[%s15 + $0x50] sm:$0xff]
        %v6270 = vld [vmem:[%s15 + $0x58] sm:$0xff]
        %v6271 = vld [vmem:[%s15 + $0x60] sm:$0xff]
        %v6272 = vld [vmem:[%s15 + $0x68] sm:$0xff]
        %v6273 = vld [vmem:[%s15 + $0x70] sm:$0xff]
        %v6274 = vld [vmem:[%s15 + $0x78] sm:$0xff]
        %v6275 = vld [vmem:[%s15 + $0x80] sm:$0xff]
        %v6276 = vld [vmem:[%s15 + $0x88] sm:$0xff]
        %v6277 = vld [vmem:[%s15 + $0x90] sm:$0xff]
        %v6278 = vld [vmem:[%s15 + $0x98] sm:$0xff]
        %v6279 = vld [vmem:[%s15 + $0xa0] sm:$0xff]
        %v6280 = vld [vmem:[%s15 + $0xa8] sm:$0xff]
        %v6281 = vld [vmem:[%s15 + $0xb0] sm:$0xff]
        %v6282 = vld [vmem:[%s15 + $0xb8] sm:$0xff]
        %v6283 = vld [vmem:[%s15 + $0xc0] sm:$0xff]
        %v6284 = vld [vmem:[%s15 + $0xc8] sm:$0xff]
        %v6285 = vld [vmem:[%s15 + $0xd0] sm:$0xff]
        %v6286 = vld [vmem:[%s15 + $0xd8] sm:$0xff]
        %v6287 = vld [vmem:[%s15 + $0xe0] sm:$0xff]
        %v6288 = vld [vmem:[%s15 + $0xe8] sm:$0xff]
        %v6289 = vld [vmem:[%s15 + $0xf0] sm:$0xff]
        %v6290 = vld [vmem:[%s15 + $0xf8] sm:$0xff]
        %s6291 = scalar_lea.vmem %s15, 256
        %v6292 = vld [vmem:[%s6291] sm:$0xff]
        %v6293 = vld [vmem:[%s6291 + $0x8] sm:$0xff]
        %v6294 = vld [vmem:[%s6291 + $0x10] sm:$0xff]
        %v6295 = vld [vmem:[%s6291 + $0x18] sm:$0xff]
        %v6296 = vld [vmem:[%s6291 + $0x20] sm:$0xff]
        %v6297 = vld [vmem:[%s6291 + $0x28] sm:$0xff]
        %v6298 = vld [vmem:[%s6291 + $0x30] sm:$0xff]
        %v6299 = vld [vmem:[%s6291 + $0x38] sm:$0xff]
        %v6300 = vld [vmem:[%s6291 + $0x40] sm:$0xff]
        %v6301 = vld [vmem:[%s6291 + $0x48] sm:$0xff]
        %v6302 = vld [vmem:[%s6291 + $0x50] sm:$0xff]
        %v6303 = vld [vmem:[%s6291 + $0x58] sm:$0xff]
        %v6304 = vld [vmem:[%s6291 + $0x60] sm:$0xff]
        %v6305 = vld [vmem:[%s6291 + $0x68] sm:$0xff]
        %v6306 = vld [vmem:[%s6291 + $0x70] sm:$0xff]
        %v6307 = vld [vmem:[%s6291 + $0x78] sm:$0xff]
        %v6308 = vld [vmem:[%s6291 + $0x80] sm:$0xff]
        %v6309 = vld [vmem:[%s6291 + $0x88] sm:$0xff]
        %v6310 = vld [vmem:[%s6291 + $0x90] sm:$0xff]
        %v6311 = vld [vmem:[%s6291 + $0x98] sm:$0xff]
        %v6312 = vld [vmem:[%s6291 + $0xa0] sm:$0xff]
        %v6313 = vld [vmem:[%s6291 + $0xa8] sm:$0xff]
        %v6314 = vld [vmem:[%s6291 + $0xb0] sm:$0xff]
        %v6315 = vld [vmem:[%s6291 + $0xb8] sm:$0xff]
        %v6316 = vld [vmem:[%s6291 + $0xc0] sm:$0xff]
        %v6317 = vld [vmem:[%s6291 + $0xc8] sm:$0xff]
        %v6318 = vld [vmem:[%s6291 + $0xd0] sm:$0xff]
        %v6319 = vld [vmem:[%s6291 + $0xd8] sm:$0xff]
        %v6320 = vld [vmem:[%s6291 + $0xe0] sm:$0xff]
        %v6321 = vld [vmem:[%s6291 + $0xe8] sm:$0xff]
        %v6322 = vld [vmem:[%s6291 + $0xf0] sm:$0xff]
        %v6323 = vld [vmem:[%s6291 + $0xf8] sm:$0xff]
        %6324 = vmatprep.subr.mxu0 0.0
        %6325 = vmatpush1.msra.mxu0 %v6000
        %6326 = vmatprep.subr.mxu0 0.0
        %6327 = vmatpush1.msra.mxu0 %v6005
        %6328 = vmatprep.subr.mxu0 0.0
        %6329 = vmatpush1.msra.mxu0 %v6010
        %6330 = vmatprep.subr.mxu0 0.0
        %6331 = vmatpush1.msra.mxu0 %v6015
        %6332 = vmatprep.subr.mxu0 0.0
        %6333 = vmatpush1.msra.mxu0 %v6020
        %6334 = vmatprep.subr.mxu0 0.0
        %6335 = vmatpush1.msra.mxu0 %v6025
        %6336 = vmatprep.subr.mxu0 0.0
        %6337 = vmatpush1.msra.mxu0 %v6030
        %6338 = vmatprep.subr.mxu0 0.0
        %6339 = vmatpush1.msra.mxu0 %v6035
        %6340 = vmatprep.subr.mxu0 0.0
        %6341 = vmatpush1.msra.mxu0 %v6040
        %6342 = vmatprep.subr.mxu0 0.0
        %6343 = vmatpush1.msra.mxu0 %v6045
        %6344 = vmatprep.subr.mxu0 0.0
        %6345 = vmatpush1.msra.mxu0 %v6050
        %6346 = vmatprep.subr.mxu0 0.0
        %6347 = vmatpush1.msra.mxu0 %v6055
        %6348 = vmatprep.subr.mxu0 0.0
        %6349 = vmatpush1.msra.mxu0 %v6060
        %6350 = vmatprep.subr.mxu0 0.0
        %6351 = vmatpush1.msra.mxu0 %v6065
        %6352 = vmatprep.subr.mxu0 0.0
        %6353 = vmatpush1.msra.mxu0 %v6070
        %6354 = vmatprep.subr.mxu0 0.0
        %6355 = vmatpush1.msra.mxu0 %v6075
        %6356 = vmatprep.subr.mxu0 0.0
        %6357 = vmatpush1.msra.mxu0 0.0
        %6358 = vmatprep.subr.mxu0 0.0
        %6359 = vmatpush1.msra.mxu0 0.0
        %6360 = vmatprep.subr.mxu0 0.0
        %6361 = vmatpush1.msra.mxu0 0.0
        %6362 = vmatprep.subr.mxu0 0.0
        %6363 = vmatpush1.msra.mxu0 0.0
        %6364 = vmatprep.subr.mxu0 0.0
        %6365 = vmatpush1.msra.mxu0 0.0
        %6366 = vmatprep.subr.mxu0 0.0
        %6367 = vmatpush1.msra.mxu0 0.0
        %6368 = vmatprep.subr.mxu0 0.0
        %6369 = vmatpush1.msra.mxu0 0.0
        %6370 = vmatprep.subr.mxu0 0.0
        %6371 = vmatpush1.msra.mxu0 0.0
        %6372 = vmatprep.subr.mxu0 0.0
        %6373 = vmatpush1.msra.mxu0 0.0
        %6374 = vmatprep.subr.mxu0 0.0
        %6375 = vmatpush1.msra.mxu0 0.0
        %6376 = vmatprep.subr.mxu0 0.0
        %6377 = vmatpush1.msra.mxu0 0.0
        %6378 = vmatprep.subr.mxu0 0.0
        %6379 = vmatpush1.msra.mxu0 0.0
        %6380 = vmatprep.subr.mxu0 0.0
        %6381 = vmatpush1.msra.mxu0 0.0
        %6382 = vmatprep.subr.mxu0 0.0
        %6383 = vmatpush1.msra.mxu0 0.0
        %6384 = vmatprep.subr.mxu0 0.0
        %6385 = vmatpush1.msra.mxu0 0.0
        %6386 = vmatprep.subr.mxu0 0.0
        %6387 = vmatpush1.msra.mxu0 0.0
        %6388 = vmatprep.mubr.f32.mxu0 0.0
        %6389 = vmatmul.mubr.f32.gmra.mrb[0].mxu0 %v6292
        %v6390 = vpop.f32.mrb[0].mxu0
        %v6391 = vadd.f32 0.0, %v6390
        %v6392 = vpop.f32.mrb[0].mxu0
        %6393 = vmatprep.mubr.f32.mxu0 0.0
        %6394 = vmatmul.mubr.f32.gmra.mrb[0].mxu0 %v6293
        %v6395 = vpop.f32.mrb[0].mxu0
        %v6396 = vadd.f32 0.0, %v6395
        %v6397 = vpop.f32.mrb[0].mxu0
        %6398 = vmatprep.mubr.f32.mxu0 0.0
        %6399 = vmatmul.mubr.f32.gmra.mrb[0].mxu0 %v6294
        %v6400 = vpop.f32.mrb[0].mxu0
        %v6401 = vadd.f32 0.0, %v6400
        %v6402 = vpop.f32.mrb[0].mxu0
        %6403 = vmatprep.mubr.f32.mxu0 0.0
        %6404 = vmatmul.mubr.f32.gmra.mrb[0].mxu0 %v6295
        %v6405 = vpop.f32.mrb[0].mxu0
        %v6406 = vadd.f32 0.0, %v6405
        %v6407 = vpop.f32.mrb[0].mxu0
        %6408 = vmatprep.mubr.f32.mxu0 0.0
        %6409 = vmatmul.mubr.f32.gmra.mrb[0].mxu0 %v6296
        %v6410 = vpop.f32.mrb[0].mxu0
        %v6411 = vadd.f32 0.0, %v6410
        %v6412 = vpop.f32.mrb[0].mxu0
        %6413 = vmatprep.mubr.f32.mxu0 0.0
        %6414 = vmatmul.mubr.f32.gmra.mrb[0].mxu0 %v6297
        %v6415 = vpop.f32.mrb[0].mxu0
        %v6416 = vadd.f32 0.0, %v6415
        %v6417 = vpop.f32.mrb[0].mxu0
        %6418 = vmatprep.mubr.f32.mxu0 0.0
        %6419 = vmatmul.mubr.f32.gmra.mrb[0].mxu0 %v6298
        %v6420 = vpop.f32.mrb[0].mxu0
        %v6421 = vadd.f32 0.0, %v6420
        %v6422 = vpop.f32.mrb[0].mxu0
        %6423 = vmatprep.mubr.f32.mxu0 0.0
        %6424 = vmatmul.mubr.f32.gmra.mrb[0].mxu0 %v6299
        %v6425 = vpop.f32.mrb[0].mxu0
        %v6426 = vadd.f32 0.0, %v6425
        %v6427 = vpop.f32.mrb[0].mxu0
        %6428 = vmatprep.mubr.f32.mxu0 0.0
        %6429 = vmatmul.mubr.f32.gmra.mrb[0].mxu0 %v6300
        %v6430 = vpop.f32.mrb[0].mxu0
        %v6431 = vadd.f32 0.0, %v6430
        %v6432 = vpop.f32.mrb[0].mxu0
        %6433 = vmatprep.mubr.f32.mxu0 0.0
        %6434 = vmatmul.mubr.f32.gmra.mrb[0].mxu0 %v6301
        %v6435 = vpop.f32.mrb[0].mxu0
        %v6436 = vadd.f32 0.0, %v6435
        %v6437 = vpop.f32.mrb[0].mxu0
        %6438 = vmatprep.mubr.f32.mxu0 0.0
        %6439 = vmatmul.mubr.f32.gmra.mrb[0].mxu0 %v6302
        %v6440 = vpop.f32.mrb[0].mxu0
        %v6441 = vadd.f32 0.0, %v6440
        %v6442 = vpop.f32.mrb[0].mxu0
        %6443 = vmatprep.mubr.f32.mxu0 0.0
        %6444 = vmatmul.mubr.f32.gmra.mrb[0].mxu0 %v6303
        %v6445 = vpop.f32.mrb[0].mxu0
        %v6446 = vadd.f32 0.0, %v6445
        %v6447 = vpop.f32.mrb[0].mxu0
        %6448 = vmatprep.mubr.f32.mxu0 0.0
        %6449 = vmatmul.mubr.f32.gmra.mrb[0].mxu0 %v6304
        %v6450 = vpop.f32.mrb[0].mxu0
        %v6451 = vadd.f32 0.0, %v6450
        %v6452 = vpop.f32.mrb[0].mxu0
        %6453 = vmatprep.mubr.f32.mxu0 0.0
        %6454 = vmatmul.mubr.f32.gmra.mrb[0].mxu0 %v6305
        %v6455 = vpop.f32.mrb[0].mxu0
        %v6456 = vadd.f32 0.0, %v6455
        %v6457 = vpop.f32.mrb[0].mxu0
        %6458 = vmatprep.mubr.f32.mxu0 0.0
        %6459 = vmatmul.mubr.f32.gmra.mrb[0].mxu0 %v6306
        %v6460 = vpop.f32.mrb[0].mxu0
        %v6461 = vadd.f32 0.0, %v6460
        %v6462 = vpop.f32.mrb[0].mxu0
        %6463 = vmatprep.mubr.f32.mxu0 0.0
        %6464 = vmatmul.mubr.f32.gmra.mrb[0].mxu0 %v6307
        %v6465 = vpop.f32.mrb[0].mxu0
        %v6466 = vadd.f32 0.0, %v6465
        %v6467 = vpop.f32.mrb[0].mxu0
        %6468 = vmatprep.mubr.f32.mxu0 0.0
        %6469 = vmatmul.mubr.f32.gmra.mrb[0].mxu0 %v6308
        %v6470 = vpop.f32.mrb[0].mxu0
        %v6471 = vadd.f32 0.0, %v6470
        %v6472 = vpop.f32.mrb[0].mxu0
        %6473 = vmatprep.mubr.f32.mxu0 0.0
        %6474 = vmatmul.mubr.f32.gmra.mrb[0].mxu0 %v6309
        %v6475 = vpop.f32.mrb[0].mxu0
        %v6476 = vadd.f32 0.0, %v6475
        %v6477 = vpop.f32.mrb[0].mxu0
        %6478 = vmatprep.mubr.f32.mxu0 0.0
        %6479 = vmatmul.mubr.f32.gmra.mrb[0].mxu0 %v6310
        %v6480 = vpop.f32.mrb[0].mxu0
        %v6481 = vadd.f32 0.0, %v6480
        %v6482 = vpop.f32.mrb[0].mxu0
        %6483 = vmatprep.mubr.f32.mxu0 0.0
        %6484 = vmatmul.mubr.f32.gmra.mrb[0].mxu0 %v6311
        %v6485 = vpop.f32.mrb[0].mxu0
        %v6486 = vadd.f32 0.0, %v6485
        %v6487 = vpop.f32.mrb[0].mxu0
        %6488 = vmatprep.mubr.f32.mxu0 0.0
        %6489 = vmatmul.mubr.f32.gmra.mrb[0].mxu0 %v6312
        %v6490 = vpop.f32.mrb[0].mxu0
        %v6491 = vadd.f32 0.0, %v6490
        %v6492 = vpop.f32.mrb[0].mxu0
        %6493 = vmatprep.mubr.f32.mxu0 0.0
        %6494 = vmatmul.mubr.f32.gmra.mrb[0].mxu0 %v6313
        %v6495 = vpop.f32.mrb[0].mxu0
        %v6496 = vadd.f32 0.0, %v6495
        %v6497 = vpop.f32.mrb[0].mxu0
        %6498 = vmatprep.mubr.f32.mxu0 0.0
        %6499 = vmatmul.mubr.f32.gmra.mrb[0].mxu0 %v6314
        %v6500 = vpop.f32.mrb[0].mxu0
        %v6501 = vadd.f32 0.0, %v6500
        %v6502 = vpop.f32.mrb[0].mxu0
        %6503 = vmatprep.mubr.f32.mxu0 0.0
        %6504 = vmatmul.mubr.f32.gmra.mrb[0].mxu0 %v6315
        %v6505 = vpop.f32.mrb[0].mxu0
        %v6506 = vadd.f32 0.0, %v6505
        %v6507 = vpop.f32.mrb[0].mxu0
        %6508 = vmatprep.mubr.f32.mxu0 0.0
        %6509 = vmatmul.mubr.f32.gmra.mrb[0].mxu0 %v6316
        %v6510 = vpop.f32.mrb[0].mxu0
        %v6511 = vadd.f32 0.0, %v6510
        %v6512 = vpop.f32.mrb[0].mxu0
        %6513 = vmatprep.mubr.f32.mxu0 0.0
        %6514 = vmatmul.mubr.f32.gmra.mrb[0].mxu0 %v6317
        %v6515 = vpop.f32.mrb[0].mxu0
        %v6516 = vadd.f32 0.0, %v6515
        %v6517 = vpop.f32.mrb[0].mxu0
        %6518 = vmatprep.mubr.f32.mxu0 0.0
        %6519 = vmatmul.mubr.f32.gmra.mrb[0].mxu0 %v6318
        %v6520 = vpop.f32.mrb[0].mxu0
        %v6521 = vadd.f32 0.0, %v6520
        %v6522 = vpop.f32.mrb[0].mxu0
        %6523 = vmatprep.mubr.f32.mxu0 0.0
        %6524 = vmatmul.mubr.f32.gmra.mrb[0].mxu0 %v6319
        %v6525 = vpop.f32.mrb[0].mxu0
        %v6526 = vadd.f32 0.0, %v6525
        %v6527 = vpop.f32.mrb[0].mxu0
        %6528 = vmatprep.mubr.f32.mxu0 0.0
        %6529 = vmatmul.mubr.f32.gmra.mrb[0].mxu0 %v6320
        %v6530 = vpop.f32.mrb[0].mxu0
        %v6531 = vadd.f32 0.0, %v6530
        %v6532 = vpop.f32.mrb[0].mxu0
        %6533 = vmatprep.mubr.f32.mxu0 0.0
        %6534 = vmatmul.mubr.f32.gmra.mrb[0].mxu0 %v6321
        %v6535 = vpop.f32.mrb[0].mxu0
        %v6536 = vadd.f32 0.0, %v6535
        %v6537 = vpop.f32.mrb[0].mxu0
        %6538 = vmatprep.mubr.f32.mxu0 0.0
        %6539 = vmatmul.mubr.f32.gmra.mrb[0].mxu0 %v6322
        %v6540 = vpop.f32.mrb[0].mxu0
        %v6541 = vadd.f32 0.0, %v6540
        %v6542 = vpop.f32.mrb[0].mxu0
        %6543 = vmatprep.mubr.f32.mxu0 0.0
        %6544 = vmatmul.mubr.f32.gmra.mrb[0].mxu0 %v6323
        %v6545 = vpop.f32.mrb[0].mxu0
        %v6546 = vadd.f32 0.0, %v6545
        %v6547 = vpop.f32.mrb[0].mxu0
        %6548 = vdwg.mxu0
        %6549 = vmatprep.subr.mxu0 0.0
        %6550 = vmatpush1.msra.mxu0 %v6243
        %6551 = vmatprep.subr.mxu0 0.0
        %6552 = vmatpush1.msra.mxu0 %v6244
        %6553 = vmatprep.subr.mxu0 0.0
        %6554 = vmatpush1.msra.mxu0 %v6245
        %6555 = vmatprep.subr.mxu0 0.0
        %6556 = vmatpush1.msra.mxu0 %v6246
        %6557 = vmatprep.subr.mxu0 0.0
        %6558 = vmatpush1.msra.mxu0 %v6247
        %6559 = vmatprep.subr.mxu0 0.0
        %6560 = vmatpush1.msra.mxu0 %v6248
        %6561 = vmatprep.subr.mxu0 0.0
        %6562 = vmatpush1.msra.mxu0 %v6249
        %6563 = vmatprep.subr.mxu0 0.0
        %6564 = vmatpush1.msra.mxu0 %v6250
        %6565 = vmatprep.subr.mxu0 0.0
        %6566 = vmatpush1.msra.mxu0 %v6251
        %6567 = vmatprep.subr.mxu0 0.0
        %6568 = vmatpush1.msra.mxu0 %v6252
        %6569 = vmatprep.subr.mxu0 0.0
        %6570 = vmatpush1.msra.mxu0 %v6253
        %6571 = vmatprep.subr.mxu0 0.0
        %6572 = vmatpush1.msra.mxu0 %v6254
        %6573 = vmatprep.subr.mxu0 0.0
        %6574 = vmatpush1.msra.mxu0 %v6255
        %6575 = vmatprep.subr.mxu0 0.0
        %6576 = vmatpush1.msra.mxu0 %v6256
        %6577 = vmatprep.subr.mxu0 0.0
        %6578 = vmatpush1.msra.mxu0 %v6257
        %6579 = vmatprep.subr.mxu0 0.0
        %6580 = vmatpush1.msra.mxu0 %v6258
        %6581 = vmatprep.subr.mxu0 0.0
        %6582 = vmatpush1.msra.mxu0 0.0
        %6583 = vmatprep.subr.mxu0 0.0
        %6584 = vmatpush1.msra.mxu0 0.0
        %6585 = vmatprep.subr.mxu0 0.0
        %6586 = vmatpush1.msra.mxu0 0.0
        %6587 = vmatprep.subr.mxu0 0.0
        %6588 = vmatpush1.msra.mxu0 0.0
        %6589 = vmatprep.subr.mxu0 0.0
        %6590 = vmatpush1.msra.mxu0 0.0
        %6591 = vmatprep.subr.mxu0 0.0
        %6592 = vmatpush1.msra.mxu0 0.0
        %6593 = vmatprep.subr.mxu0 0.0
        %6594 = vmatpush1.msra.mxu0 0.0
        %6595 = vmatprep.subr.mxu0 0.0
        %6596 = vmatpush1.msra.mxu0 0.0
        %6597 = vmatprep.subr.mxu0 0.0
        %6598 = vmatpush1.msra.mxu0 0.0
        %6599 = vmatprep.subr.mxu0 0.0
        %6600 = vmatpush1.msra.mxu0 0.0
        %6601 = vmatprep.subr.mxu0 0.0
        %6602 = vmatpush1.msra.mxu0 0.0
        %6603 = vmatprep.subr.mxu0 0.0
        %6604 = vmatpush1.msra.mxu0 0.0
        %6605 = vmatprep.subr.mxu0 0.0
        %6606 = vmatpush1.msra.mxu0 0.0
        %6607 = vmatprep.subr.mxu0 0.0
        %6608 = vmatpush1.msra.mxu0 0.0
        %6609 = vmatprep.subr.mxu0 0.0
        %6610 = vmatpush1.msra.mxu0 0.0
        %6611 = vmatprep.subr.mxu0 0.0
        %6612 = vmatpush1.msra.mxu0 0.0
        %6613 = vmatprep.mubr.f32.mxu0 0.0
        %6614 = vmatmul.mubr.f32.gmra.mrb[0].mxu0 %v6259
        %v6615 = vpop.f32.mrb[0].mxu0
        %v6616 = vadd.f32 %v6391, %v6615
        %v6617 = vpop.f32.mrb[0].mxu0
        %6618 = vmatprep.mubr.f32.mxu0 0.0
        %6619 = vmatmul.mubr.f32.gmra.mrb[0].mxu0 %v6260
        %v6620 = vpop.f32.mrb[0].mxu0
        %v6621 = vadd.f32 %v6396, %v6620
        %v6622 = vpop.f32.mrb[0].mxu0
        %6623 = vmatprep.mubr.f32.mxu0 0.0
        %6624 = vmatmul.mubr.f32.gmra.mrb[0].mxu0 %v6261
        %v6625 = vpop.f32.mrb[0].mxu0
        %v6626 = vadd.f32 %v6401, %v6625
        %v6627 = vpop.f32.mrb[0].mxu0
        %6628 = vmatprep.mubr.f32.mxu0 0.0
        %6629 = vmatmul.mubr.f32.gmra.mrb[0].mxu0 %v6262
        %v6630 = vpop.f32.mrb[0].mxu0
        %v6631 = vadd.f32 %v6406, %v6630
        %v6632 = vpop.f32.mrb[0].mxu0
        %6633 = vmatprep.mubr.f32.mxu0 0.0
        %6634 = vmatmul.mubr.f32.gmra.mrb[0].mxu0 %v6263
        %v6635 = vpop.f32.mrb[0].mxu0
        %v6636 = vadd.f32 %v6411, %v6635
        %v6637 = vpop.f32.mrb[0].mxu0
        %6638 = vmatprep.mubr.f32.mxu0 0.0
        %6639 = vmatmul.mubr.f32.gmra.mrb[0].mxu0 %v6264
        %v6640 = vpop.f32.mrb[0].mxu0
        %v6641 = vadd.f32 %v6416, %v6640
        %v6642 = vpop.f32.mrb[0].mxu0
        %6643 = vmatprep.mubr.f32.mxu0 0.0
        %6644 = vmatmul.mubr.f32.gmra.mrb[0].mxu0 %v6265
        %v6645 = vpop.f32.mrb[0].mxu0
        %v6646 = vadd.f32 %v6421, %v6645
        %v6647 = vpop.f32.mrb[0].mxu0
        %6648 = vmatprep.mubr.f32.mxu0 0.0
        %6649 = vmatmul.mubr.f32.gmra.mrb[0].mxu0 %v6266
        %v6650 = vpop.f32.mrb[0].mxu0
        %v6651 = vadd.f32 %v6426, %v6650
        %v6652 = vpop.f32.mrb[0].mxu0
        %6653 = vmatprep.mubr.f32.mxu0 0.0
        %6654 = vmatmul.mubr.f32.gmra.mrb[0].mxu0 %v6267
        %v6655 = vpop.f32.mrb[0].mxu0
        %v6656 = vadd.f32 %v6431, %v6655
        %v6657 = vpop.f32.mrb[0].mxu0
        %6658 = vmatprep.mubr.f32.mxu0 0.0
        %6659 = vmatmul.mubr.f32.gmra.mrb[0].mxu0 %v6268
        %v6660 = vpop.f32.mrb[0].mxu0
        %v6661 = vadd.f32 %v6436, %v6660
        %v6662 = vpop.f32.mrb[0].mxu0
        %6663 = vmatprep.mubr.f32.mxu0 0.0
        %6664 = vmatmul.mubr.f32.gmra.mrb[0].mxu0 %v6269
        %v6665 = vpop.f32.mrb[0].mxu0
        %v6666 = vadd.f32 %v6441, %v6665
        %v6667 = vpop.f32.mrb[0].mxu0
        %6668 = vmatprep.mubr.f32.mxu0 0.0
        %6669 = vmatmul.mubr.f32.gmra.mrb[0].mxu0 %v6270
        %v6670 = vpop.f32.mrb[0].mxu0
        %v6671 = vadd.f32 %v6446, %v6670
        %v6672 = vpop.f32.mrb[0].mxu0
        %6673 = vmatprep.mubr.f32.mxu0 0.0
        %6674 = vmatmul.mubr.f32.gmra.mrb[0].mxu0 %v6271
        %v6675 = vpop.f32.mrb[0].mxu0
        %v6676 = vadd.f32 %v6451, %v6675
        %v6677 = vpop.f32.mrb[0].mxu0
        %6678 = vmatprep.mubr.f32.mxu0 0.0
        %6679 = vmatmul.mubr.f32.gmra.mrb[0].mxu0 %v6272
        %v6680 = vpop.f32.mrb[0].mxu0
        %v6681 = vadd.f32 %v6456, %v6680
        %v6682 = vpop.f32.mrb[0].mxu0
        %6683 = vmatprep.mubr.f32.mxu0 0.0
        %6684 = vmatmul.mubr.f32.gmra.mrb[0].mxu0 %v6273
        %v6685 = vpop.f32.mrb[0].mxu0
        %v6686 = vadd.f32 %v6461, %v6685
        %v6687 = vpop.f32.mrb[0].mxu0
        %6688 = vmatprep.mubr.f32.mxu0 0.0
        %6689 = vmatmul.mubr.f32.gmra.mrb[0].mxu0 %v6274
        %v6690 = vpop.f32.mrb[0].mxu0
        %v6691 = vadd.f32 %v6466, %v6690
        %v6692 = vpop.f32.mrb[0].mxu0
        %6693 = vmatprep.mubr.f32.mxu0 0.0
        %6694 = vmatmul.mubr.f32.gmra.mrb[0].mxu0 %v6275
        %v6695 = vpop.f32.mrb[0].mxu0
        %v6696 = vadd.f32 %v6471, %v6695
        %v6697 = vpop.f32.mrb[0].mxu0
        %6698 = vmatprep.mubr.f32.mxu0 0.0
        %6699 = vmatmul.mubr.f32.gmra.mrb[0].mxu0 %v6276
        %v6700 = vpop.f32.mrb[0].mxu0
        %v6701 = vadd.f32 %v6476, %v6700
        %v6702 = vpop.f32.mrb[0].mxu0
        %6703 = vmatprep.mubr.f32.mxu0 0.0
        %6704 = vmatmul.mubr.f32.gmra.mrb[0].mxu0 %v6277
        %v6705 = vpop.f32.mrb[0].mxu0
        %v6706 = vadd.f32 %v6481, %v6705
        %v6707 = vpop.f32.mrb[0].mxu0
        %6708 = vmatprep.mubr.f32.mxu0 0.0
        %6709 = vmatmul.mubr.f32.gmra.mrb[0].mxu0 %v6278
        %v6710 = vpop.f32.mrb[0].mxu0
        %v6711 = vadd.f32 %v6486, %v6710
        %v6712 = vpop.f32.mrb[0].mxu0
        %6713 = vmatprep.mubr.f32.mxu0 0.0
        %6714 = vmatmul.mubr.f32.gmra.mrb[0].mxu0 %v6279
        %v6715 = vpop.f32.mrb[0].mxu0
        %v6716 = vadd.f32 %v6491, %v6715
        %v6717 = vpop.f32.mrb[0].mxu0
        %6718 = vmatprep.mubr.f32.mxu0 0.0
        %6719 = vmatmul.mubr.f32.gmra.mrb[0].mxu0 %v6280
        %v6720 = vpop.f32.mrb[0].mxu0
        %v6721 = vadd.f32 %v6496, %v6720
        %v6722 = vpop.f32.mrb[0].mxu0
        %6723 = vmatprep.mubr.f32.mxu0 0.0
        %6724 = vmatmul.mubr.f32.gmra.mrb[0].mxu0 %v6281
        %v6725 = vpop.f32.mrb[0].mxu0
        %v6726 = vadd.f32 %v6501, %v6725
        %v6727 = vpop.f32.mrb[0].mxu0
        %6728 = vmatprep.mubr.f32.mxu0 0.0
        %6729 = vmatmul.mubr.f32.gmra.mrb[0].mxu0 %v6282
        %v6730 = vpop.f32.mrb[0].mxu0
        %v6731 = vadd.f32 %v6506, %v6730
        %v6732 = vpop.f32.mrb[0].mxu0
        %6733 = vmatprep.mubr.f32.mxu0 0.0
        %6734 = vmatmul.mubr.f32.gmra.mrb[0].mxu0 %v6283
        %v6735 = vpop.f32.mrb[0].mxu0
        %v6736 = vadd.f32 %v6511, %v6735
        %v6737 = vpop.f32.mrb[0].mxu0
        %6738 = vmatprep.mubr.f32.mxu0 0.0
        %6739 = vmatmul.mubr.f32.gmra.mrb[0].mxu0 %v6284
        %v6740 = vpop.f32.mrb[0].mxu0
        %v6741 = vadd.f32 %v6516, %v6740
        %v6742 = vpop.f32.mrb[0].mxu0
        %6743 = vmatprep.mubr.f32.mxu0 0.0
        %6744 = vmatmul.mubr.f32.gmra.mrb[0].mxu0 %v6285
        %v6745 = vpop.f32.mrb[0].mxu0
        %v6746 = vadd.f32 %v6521, %v6745
        %v6747 = vpop.f32.mrb[0].mxu0
        %6748 = vmatprep.mubr.f32.mxu0 0.0
        %6749 = vmatmul.mubr.f32.gmra.mrb[0].mxu0 %v6286
        %v6750 = vpop.f32.mrb[0].mxu0
        %v6751 = vadd.f32 %v6526, %v6750
        %v6752 = vpop.f32.mrb[0].mxu0
        %6753 = vmatprep.mubr.f32.mxu0 0.0
        %6754 = vmatmul.mubr.f32.gmra.mrb[0].mxu0 %v6287
        %v6755 = vpop.f32.mrb[0].mxu0
        %v6756 = vadd.f32 %v6531, %v6755
        %v6757 = vpop.f32.mrb[0].mxu0
        %6758 = vmatprep.mubr.f32.mxu0 0.0
        %6759 = vmatmul.mubr.f32.gmra.mrb[0].mxu0 %v6288
        %v6760 = vpop.f32.mrb[0].mxu0
        %v6761 = vadd.f32 %v6536, %v6760
        %v6762 = vpop.f32.mrb[0].mxu0
        %6763 = vmatprep.mubr.f32.mxu0 0.0
        %6764 = vmatmul.mubr.f32.gmra.mrb[0].mxu0 %v6289
        %v6765 = vpop.f32.mrb[0].mxu0
        %v6766 = vadd.f32 %v6541, %v6765
        %v6767 = vpop.f32.mrb[0].mxu0
        %6768 = vmatprep.mubr.f32.mxu0 0.0
        %6769 = vmatmul.mubr.f32.gmra.mrb[0].mxu0 %v6290
        %v6770 = vpop.f32.mrb[0].mxu0
        %v6771 = vadd.f32 %v6546, %v6770
        %v6772 = vpop.f32.mrb[0].mxu0
        %6773 = vdwg.mxu0
        %vm6774 = vcmp.lt.s32.totalorder %v6078, 3
        %v6775 = vsel %vm6774, 1, 0
        %vm6776 = vcmp.eq.s32.totalorder %v6775, 1
        %6777 = vrot.lane.b32.xlu0 %v6160, 127
        %v6778 = vpop.permute.xlu0 %6777
        %6779 = vrot.lane.b32.xlu0 %v6161, 127
        %v6780 = vpop.permute.xlu0 %6779
        %6781 = vrot.lane.b32.xlu0 %v6162, 127
        %v6782 = vpop.permute.xlu0 %6781
        %6783 = vrot.lane.b32.xlu0 %v6163, 127
        %v6784 = vpop.permute.xlu0 %6783
        %6785 = vrot.lane.b32.xlu0 %v6164, 127
        %v6786 = vpop.permute.xlu0 %6785
        %6787 = vrot.lane.b32.xlu0 %v6165, 127
        %v6788 = vpop.permute.xlu0 %6787
        %6789 = vrot.lane.b32.xlu0 %v6166, 127
        %v6790 = vpop.permute.xlu0 %6789
        %6791 = vrot.lane.b32.xlu0 %v6167, 127
        %v6792 = vpop.permute.xlu0 %6791
        %6793 = vrot.lane.b32.xlu0 %v6168, 127
        %v6794 = vpop.permute.xlu0 %6793
        %6795 = vrot.lane.b32.xlu0 %v6169, 127
        %v6796 = vpop.permute.xlu0 %6795
        %6797 = vrot.lane.b32.xlu0 %v6170, 127
        %v6798 = vpop.permute.xlu0 %6797
        %6799 = vrot.lane.b32.xlu0 %v6171, 127
        %v6800 = vpop.permute.xlu0 %6799
        %6801 = vrot.lane.b32.xlu0 %v6172, 127
        %v6802 = vpop.permute.xlu0 %6801
        %6803 = vrot.lane.b32.xlu0 %v6173, 127
        %v6804 = vpop.permute.xlu0 %6803
        %6805 = vrot.lane.b32.xlu0 %v6174, 127
        %v6806 = vpop.permute.xlu0 %6805
        %6807 = vrot.lane.b32.xlu0 %v6175, 127
        %v6808 = vpop.permute.xlu0 %6807
        %v6825 = vsel %vm6776, %v6778, 0.0
        %v6826 = vsel %vm6776, %v6780, 0.0
        %v6827 = vsel %vm6776, %v6782, 0.0
        %v6828 = vsel %vm6776, %v6784, 0.0
        %v6829 = vsel %vm6776, %v6786, 0.0
        %v6830 = vsel %vm6776, %v6788, 0.0
        %v6831 = vsel %vm6776, %v6790, 0.0
        %v6832 = vsel %vm6776, %v6792, 0.0
        %v6833 = vsel %vm6776, %v6794, 0.0
        %v6834 = vsel %vm6776, %v6796, 0.0
        %v6835 = vsel %vm6776, %v6798, 0.0
        %v6836 = vsel %vm6776, %v6800, 0.0
        %v6837 = vsel %vm6776, %v6802, 0.0
        %v6838 = vsel %vm6776, %v6804, 0.0
        %v6839 = vsel %vm6776, %v6806, 0.0
        %v6840 = vsel %vm6776, %v6808, 0.0
        %s6841 = scalar_lea.vmem %s15, 512
        %v6842 = vld [vmem:[%s6841] sm:$0xff]
        %v6843 = vld [vmem:[%s6841 + $0x8] sm:$0xff]
        %v6844 = vld [vmem:[%s6841 + $0x10] sm:$0xff]
        %v6845 = vld [vmem:[%s6841 + $0x18] sm:$0xff]
        %v6846 = vld [vmem:[%s6841 + $0x20] sm:$0xff]
        %v6847 = vld [vmem:[%s6841 + $0x28] sm:$0xff]
        %v6848 = vld [vmem:[%s6841 + $0x30] sm:$0xff]
        %v6849 = vld [vmem:[%s6841 + $0x38] sm:$0xff]
        %v6850 = vld [vmem:[%s6841 + $0x40] sm:$0xff]
        %v6851 = vld [vmem:[%s6841 + $0x48] sm:$0xff]
        %v6852 = vld [vmem:[%s6841 + $0x50] sm:$0xff]
        %v6853 = vld [vmem:[%s6841 + $0x58] sm:$0xff]
        %v6854 = vld [vmem:[%s6841 + $0x60] sm:$0xff]
        %v6855 = vld [vmem:[%s6841 + $0x68] sm:$0xff]
        %v6856 = vld [vmem:[%s6841 + $0x70] sm:$0xff]
        %v6857 = vld [vmem:[%s6841 + $0x78] sm:$0xff]
        %v6858 = vld [vmem:[%s6841 + $0x80] sm:$0xff]
        %v6859 = vld [vmem:[%s6841 + $0x88] sm:$0xff]
        %v6860 = vld [vmem:[%s6841 + $0x90] sm:$0xff]
        %v6861 = vld [vmem:[%s6841 + $0x98] sm:$0xff]
        %v6862 = vld [vmem:[%s6841 + $0xa0] sm:$0xff]
        %v6863 = vld [vmem:[%s6841 + $0xa8] sm:$0xff]
        %v6864 = vld [vmem:[%s6841 + $0xb0] sm:$0xff]
        %v6865 = vld [vmem:[%s6841 + $0xb8] sm:$0xff]
        %v6866 = vld [vmem:[%s6841 + $0xc0] sm:$0xff]
        %v6867 = vld [vmem:[%s6841 + $0xc8] sm:$0xff]
        %v6868 = vld [vmem:[%s6841 + $0xd0] sm:$0xff]
        %v6869 = vld [vmem:[%s6841 + $0xd8] sm:$0xff]
        %v6870 = vld [vmem:[%s6841 + $0xe0] sm:$0xff]
        %v6871 = vld [vmem:[%s6841 + $0xe8] sm:$0xff]
        %v6872 = vld [vmem:[%s6841 + $0xf0] sm:$0xff]
        %v6873 = vld [vmem:[%s6841 + $0xf8] sm:$0xff]
        %6874 = vmatprep.subr.mxu0 0.0
        %6875 = vmatpush1.msra.mxu0 %v6825
        %6876 = vmatprep.subr.mxu0 0.0
        %6877 = vmatpush1.msra.mxu0 %v6826
        %6878 = vmatprep.subr.mxu0 0.0
        %6879 = vmatpush1.msra.mxu0 %v6827
        %6880 = vmatprep.subr.mxu0 0.0
        %6881 = vmatpush1.msra.mxu0 %v6828
        %6882 = vmatprep.subr.mxu0 0.0
        %6883 = vmatpush1.msra.mxu0 %v6829
        %6884 = vmatprep.subr.mxu0 0.0
        %6885 = vmatpush1.msra.mxu0 %v6830
        %6886 = vmatprep.subr.mxu0 0.0
        %6887 = vmatpush1.msra.mxu0 %v6831
        %6888 = vmatprep.subr.mxu0 0.0
        %6889 = vmatpush1.msra.mxu0 %v6832
        %6890 = vmatprep.subr.mxu0 0.0
        %6891 = vmatpush1.msra.mxu0 %v6833
        %6892 = vmatprep.subr.mxu0 0.0
        %6893 = vmatpush1.msra.mxu0 %v6834
        %6894 = vmatprep.subr.mxu0 0.0
        %6895 = vmatpush1.msra.mxu0 %v6835
        %6896 = vmatprep.subr.mxu0 0.0
        %6897 = vmatpush1.msra.mxu0 %v6836
        %6898 = vmatprep.subr.mxu0 0.0
        %6899 = vmatpush1.msra.mxu0 %v6837
        %6900 = vmatprep.subr.mxu0 0.0
        %6901 = vmatpush1.msra.mxu0 %v6838
        %6902 = vmatprep.subr.mxu0 0.0
        %6903 = vmatpush1.msra.mxu0 %v6839
        %6904 = vmatprep.subr.mxu0 0.0
        %6905 = vmatpush1.msra.mxu0 %v6840
        %6906 = vmatprep.subr.mxu0 0.0
        %6907 = vmatpush1.msra.mxu0 0.0
        %6908 = vmatprep.subr.mxu0 0.0
        %6909 = vmatpush1.msra.mxu0 0.0
        %6910 = vmatprep.subr.mxu0 0.0
        %6911 = vmatpush1.msra.mxu0 0.0
        %6912 = vmatprep.subr.mxu0 0.0
        %6913 = vmatpush1.msra.mxu0 0.0
        %6914 = vmatprep.subr.mxu0 0.0
        %6915 = vmatpush1.msra.mxu0 0.0
        %6916 = vmatprep.subr.mxu0 0.0
        %6917 = vmatpush1.msra.mxu0 0.0
        %6918 = vmatprep.subr.mxu0 0.0
        %6919 = vmatpush1.msra.mxu0 0.0
        %6920 = vmatprep.subr.mxu0 0.0
        %6921 = vmatpush1.msra.mxu0 0.0
        %6922 = vmatprep.subr.mxu0 0.0
        %6923 = vmatpush1.msra.mxu0 0.0
        %6924 = vmatprep.subr.mxu0 0.0
        %6925 = vmatpush1.msra.mxu0 0.0
        %6926 = vmatprep.subr.mxu0 0.0
        %6927 = vmatpush1.msra.mxu0 0.0
        %6928 = vmatprep.subr.mxu0 0.0
        %6929 = vmatpush1.msra.mxu0 0.0
        %6930 = vmatprep.subr.mxu0 0.0
        %6931 = vmatpush1.msra.mxu0 0.0
        %6932 = vmatprep.subr.mxu0 0.0
        %6933 = vmatpush1.msra.mxu0 0.0
        %6934 = vmatprep.subr.mxu0 0.0
        %6935 = vmatpush1.msra.mxu0 0.0
        %6936 = vmatprep.subr.mxu0 0.0
        %6937 = vmatpush1.msra.mxu0 0.0
        %6938 = vmatprep.mubr.f32.mxu0 0.0
        %6939 = vmatmul.mubr.f32.gmra.mrb[0].mxu0 %v6842
        %v6940 = vpop.f32.mrb[0].mxu0
        %v6941 = vadd.f32 0.0, %v6940
        %v6942 = vpop.f32.mrb[0].mxu0
        %6943 = vmatprep.mubr.f32.mxu0 0.0
        %6944 = vmatmul.mubr.f32.gmra.mrb[0].mxu0 %v6843
        %v6945 = vpop.f32.mrb[0].mxu0
        %v6946 = vadd.f32 0.0, %v6945
        %v6947 = vpop.f32.mrb[0].mxu0
        %6948 = vmatprep.mubr.f32.mxu0 0.0
        %6949 = vmatmul.mubr.f32.gmra.mrb[0].mxu0 %v6844
        %v6950 = vpop.f32.mrb[0].mxu0
        %v6951 = vadd.f32 0.0, %v6950
        %v6952 = vpop.f32.mrb[0].mxu0
        %6953 = vmatprep.mubr.f32.mxu0 0.0
        %6954 = vmatmul.mubr.f32.gmra.mrb[0].mxu0 %v6845
        %v6955 = vpop.f32.mrb[0].mxu0
        %v6956 = vadd.f32 0.0, %v6955
        %v6957 = vpop.f32.mrb[0].mxu0
        %6958 = vmatprep.mubr.f32.mxu0 0.0
        %6959 = vmatmul.mubr.f32.gmra.mrb[0].mxu0 %v6846
        %v6960 = vpop.f32.mrb[0].mxu0
        %v6961 = vadd.f32 0.0, %v6960
        %v6962 = vpop.f32.mrb[0].mxu0
        %6963 = vmatprep.mubr.f32.mxu0 0.0
        %6964 = vmatmul.mubr.f32.gmra.mrb[0].mxu0 %v6847
        %v6965 = vpop.f32.mrb[0].mxu0
        %v6966 = vadd.f32 0.0, %v6965
        %v6967 = vpop.f32.mrb[0].mxu0
        %6968 = vmatprep.mubr.f32.mxu0 0.0
        %6969 = vmatmul.mubr.f32.gmra.mrb[0].mxu0 %v6848
        %v6970 = vpop.f32.mrb[0].mxu0
        %v6971 = vadd.f32 0.0, %v6970
        %v6972 = vpop.f32.mrb[0].mxu0
        %6973 = vmatprep.mubr.f32.mxu0 0.0
        %6974 = vmatmul.mubr.f32.gmra.mrb[0].mxu0 %v6849
        %v6975 = vpop.f32.mrb[0].mxu0
        %v6976 = vadd.f32 0.0, %v6975
        %v6977 = vpop.f32.mrb[0].mxu0
        %6978 = vmatprep.mubr.f32.mxu0 0.0
        %6979 = vmatmul.mubr.f32.gmra.mrb[0].mxu0 %v6850
        %v6980 = vpop.f32.mrb[0].mxu0
        %v6981 = vadd.f32 0.0, %v6980
        %v6982 = vpop.f32.mrb[0].mxu0
        %6983 = vmatprep.mubr.f32.mxu0 0.0
        %6984 = vmatmul.mubr.f32.gmra.mrb[0].mxu0 %v6851
        %v6985 = vpop.f32.mrb[0].mxu0
        %v6986 = vadd.f32 0.0, %v6985
        %v6987 = vpop.f32.mrb[0].mxu0
        %6988 = vmatprep.mubr.f32.mxu0 0.0
        %6989 = vmatmul.mubr.f32.gmra.mrb[0].mxu0 %v6852
        %v6990 = vpop.f32.mrb[0].mxu0
        %v6991 = vadd.f32 0.0, %v6990
        %v6992 = vpop.f32.mrb[0].mxu0
        %6993 = vmatprep.mubr.f32.mxu0 0.0
        %6994 = vmatmul.mubr.f32.gmra.mrb[0].mxu0 %v6853
        %v6995 = vpop.f32.mrb[0].mxu0
        %v6996 = vadd.f32 0.0, %v6995
        %v6997 = vpop.f32.mrb[0].mxu0
        %6998 = vmatprep.mubr.f32.mxu0 0.0
        %6999 = vmatmul.mubr.f32.gmra.mrb[0].mxu0 %v6854
        %v7000 = vpop.f32.mrb[0].mxu0
        %v7001 = vadd.f32 0.0, %v7000
        %v7002 = vpop.f32.mrb[0].mxu0
        %7003 = vmatprep.mubr.f32.mxu0 0.0
        %7004 = vmatmul.mubr.f32.gmra.mrb[0].mxu0 %v6855
        %v7005 = vpop.f32.mrb[0].mxu0
        %v7006 = vadd.f32 0.0, %v7005
        %v7007 = vpop.f32.mrb[0].mxu0
        %7008 = vmatprep.mubr.f32.mxu0 0.0
        %7009 = vmatmul.mubr.f32.gmra.mrb[0].mxu0 %v6856
        %v7010 = vpop.f32.mrb[0].mxu0
        %v7011 = vadd.f32 0.0, %v7010
        %v7012 = vpop.f32.mrb[0].mxu0
        %7013 = vmatprep.mubr.f32.mxu0 0.0
        %7014 = vmatmul.mubr.f32.gmra.mrb[0].mxu0 %v6857
        %v7015 = vpop.f32.mrb[0].mxu0
        %v7016 = vadd.f32 0.0, %v7015
        %v7017 = vpop.f32.mrb[0].mxu0
        %7018 = vmatprep.mubr.f32.mxu0 0.0
        %7019 = vmatmul.mubr.f32.gmra.mrb[0].mxu0 %v6858
        %v7020 = vpop.f32.mrb[0].mxu0
        %v7021 = vadd.f32 0.0, %v7020
        %v7022 = vpop.f32.mrb[0].mxu0
        %7023 = vmatprep.mubr.f32.mxu0 0.0
        %7024 = vmatmul.mubr.f32.gmra.mrb[0].mxu0 %v6859
        %v7025 = vpop.f32.mrb[0].mxu0
        %v7026 = vadd.f32 0.0, %v7025
        %v7027 = vpop.f32.mrb[0].mxu0
        %7028 = vmatprep.mubr.f32.mxu0 0.0
        %7029 = vmatmul.mubr.f32.gmra.mrb[0].mxu0 %v6860
        %v7030 = vpop.f32.mrb[0].mxu0
        %v7031 = vadd.f32 0.0, %v7030
        %v7032 = vpop.f32.mrb[0].mxu0
        %7033 = vmatprep.mubr.f32.mxu0 0.0
        %7034 = vmatmul.mubr.f32.gmra.mrb[0].mxu0 %v6861
        %v7035 = vpop.f32.mrb[0].mxu0
        %v7036 = vadd.f32 0.0, %v7035
        %v7037 = vpop.f32.mrb[0].mxu0
        %7038 = vmatprep.mubr.f32.mxu0 0.0
        %7039 = vmatmul.mubr.f32.gmra.mrb[0].mxu0 %v6862
        %v7040 = vpop.f32.mrb[0].mxu0
        %v7041 = vadd.f32 0.0, %v7040
        %v7042 = vpop.f32.mrb[0].mxu0
        %7043 = vmatprep.mubr.f32.mxu0 0.0
        %7044 = vmatmul.mubr.f32.gmra.mrb[0].mxu0 %v6863
        %v7045 = vpop.f32.mrb[0].mxu0
        %v7046 = vadd.f32 0.0, %v7045
        %v7047 = vpop.f32.mrb[0].mxu0
        %7048 = vmatprep.mubr.f32.mxu0 0.0
        %7049 = vmatmul.mubr.f32.gmra.mrb[0].mxu0 %v6864
        %v7050 = vpop.f32.mrb[0].mxu0
        %v7051 = vadd.f32 0.0, %v7050
        %v7052 = vpop.f32.mrb[0].mxu0
        %7053 = vmatprep.mubr.f32.mxu0 0.0
        %7054 = vmatmul.mubr.f32.gmra.mrb[0].mxu0 %v6865
        %v7055 = vpop.f32.mrb[0].mxu0
        %v7056 = vadd.f32 0.0, %v7055
        %v7057 = vpop.f32.mrb[0].mxu0
        %7058 = vmatprep.mubr.f32.mxu0 0.0
        %7059 = vmatmul.mubr.f32.gmra.mrb[0].mxu0 %v6866
        %v7060 = vpop.f32.mrb[0].mxu0
        %v7061 = vadd.f32 0.0, %v7060
        %v7062 = vpop.f32.mrb[0].mxu0
        %7063 = vmatprep.mubr.f32.mxu0 0.0
        %7064 = vmatmul.mubr.f32.gmra.mrb[0].mxu0 %v6867
        %v7065 = vpop.f32.mrb[0].mxu0
        %v7066 = vadd.f32 0.0, %v7065
        %v7067 = vpop.f32.mrb[0].mxu0
        %7068 = vmatprep.mubr.f32.mxu0 0.0
        %7069 = vmatmul.mubr.f32.gmra.mrb[0].mxu0 %v6868
        %v7070 = vpop.f32.mrb[0].mxu0
        %v7071 = vadd.f32 0.0, %v7070
        %v7072 = vpop.f32.mrb[0].mxu0
        %7073 = vmatprep.mubr.f32.mxu0 0.0
        %7074 = vmatmul.mubr.f32.gmra.mrb[0].mxu0 %v6869
        %v7075 = vpop.f32.mrb[0].mxu0
        %v7076 = vadd.f32 0.0, %v7075
        %v7077 = vpop.f32.mrb[0].mxu0
        %7078 = vmatprep.mubr.f32.mxu0 0.0
        %7079 = vmatmul.mubr.f32.gmra.mrb[0].mxu0 %v6870
        %v7080 = vpop.f32.mrb[0].mxu0
        %v7081 = vadd.f32 0.0, %v7080
        %v7082 = vpop.f32.mrb[0].mxu0
        %7083 = vmatprep.mubr.f32.mxu0 0.0
        %7084 = vmatmul.mubr.f32.gmra.mrb[0].mxu0 %v6871
        %v7085 = vpop.f32.mrb[0].mxu0
        %v7086 = vadd.f32 0.0, %v7085
        %v7087 = vpop.f32.mrb[0].mxu0
        %7088 = vmatprep.mubr.f32.mxu0 0.0
        %7089 = vmatmul.mubr.f32.gmra.mrb[0].mxu0 %v6872
        %v7090 = vpop.f32.mrb[0].mxu0
        %v7091 = vadd.f32 0.0, %v7090
        %v7092 = vpop.f32.mrb[0].mxu0
        %7093 = vmatprep.mubr.f32.mxu0 0.0
        %7094 = vmatmul.mubr.f32.gmra.mrb[0].mxu0 %v6873
        %v7095 = vpop.f32.mrb[0].mxu0
        %v7096 = vadd.f32 0.0, %v7095
        %v7097 = vpop.f32.mrb[0].mxu0
        %7098 = vdwg.mxu0
        %v7099 = vadd.f32 %v6616, %v6941
        %v7100 = vadd.f32 %v6621, %v6946
        %v7101 = vadd.f32 %v6626, %v6951
        %v7102 = vadd.f32 %v6631, %v6956
        %v7103 = vadd.f32 %v6636, %v6961
        %v7104 = vadd.f32 %v6641, %v6966
        %v7105 = vadd.f32 %v6646, %v6971
        %v7106 = vadd.f32 %v6651, %v6976
        %v7107 = vadd.f32 %v6656, %v6981
        %v7108 = vadd.f32 %v6661, %v6986
        %v7109 = vadd.f32 %v6666, %v6991
        %v7110 = vadd.f32 %v6671, %v6996
        %v7111 = vadd.f32 %v6676, %v7001
        %v7112 = vadd.f32 %v6681, %v7006
        %v7113 = vadd.f32 %v6686, %v7011
        %v7114 = vadd.f32 %v6691, %v7016
        %v7115 = vadd.f32 %v6696, %v7021
        %v7116 = vadd.f32 %v6701, %v7026
        %v7117 = vadd.f32 %v6706, %v7031
        %v7118 = vadd.f32 %v6711, %v7036
        %v7119 = vadd.f32 %v6716, %v7041
        %v7120 = vadd.f32 %v6721, %v7046
        %v7121 = vadd.f32 %v6726, %v7051
        %v7122 = vadd.f32 %v6731, %v7056
        %v7123 = vadd.f32 %v6736, %v7061
        %v7124 = vadd.f32 %v6741, %v7066
        %v7125 = vadd.f32 %v6746, %v7071
        %v7126 = vadd.f32 %v6751, %v7076
        %v7127 = vadd.f32 %v6756, %v7081
        %v7128 = vadd.f32 %v6761, %v7086
        %v7129 = vadd.f32 %v6766, %v7091
        %v7130 = vadd.f32 %v6771, %v7096
        %v7131 = vld [vmem:[%s16] sm:$0xff]
        %v7132 = vld [vmem:[%s16 + $0x8] sm:$0xff]
        %v7133 = vld [vmem:[%s16 + $0x10] sm:$0xff]
        %v7134 = vld [vmem:[%s16 + $0x18] sm:$0xff]
        %v7135 = vld [vmem:[%s16 + $0x20] sm:$0xff]
        %v7136 = vld [vmem:[%s16 + $0x28] sm:$0xff]
        %v7137 = vld [vmem:[%s16 + $0x30] sm:$0xff]
        %v7138 = vld [vmem:[%s16 + $0x38] sm:$0xff]
        %v7139 = vld [vmem:[%s16 + $0x40] sm:$0xff]
        %v7140 = vld [vmem:[%s16 + $0x48] sm:$0xff]
        %v7141 = vld [vmem:[%s16 + $0x50] sm:$0xff]
        %v7142 = vld [vmem:[%s16 + $0x58] sm:$0xff]
        %v7143 = vld [vmem:[%s16 + $0x60] sm:$0xff]
        %v7144 = vld [vmem:[%s16 + $0x68] sm:$0xff]
        %v7145 = vld [vmem:[%s16 + $0x70] sm:$0xff]
        %v7146 = vld [vmem:[%s16 + $0x78] sm:$0xff]
        %v7147 = vld [vmem:[%s16 + $0x80] sm:$0xff]
        %v7148 = vld [vmem:[%s16 + $0x88] sm:$0xff]
        %v7149 = vld [vmem:[%s16 + $0x90] sm:$0xff]
        %v7150 = vld [vmem:[%s16 + $0x98] sm:$0xff]
        %v7151 = vld [vmem:[%s16 + $0xa0] sm:$0xff]
        %v7152 = vld [vmem:[%s16 + $0xa8] sm:$0xff]
        %v7153 = vld [vmem:[%s16 + $0xb0] sm:$0xff]
        %v7154 = vld [vmem:[%s16 + $0xb8] sm:$0xff]
        %v7155 = vld [vmem:[%s16 + $0xc0] sm:$0xff]
        %v7156 = vld [vmem:[%s16 + $0xc8] sm:$0xff]
        %v7157 = vld [vmem:[%s16 + $0xd0] sm:$0xff]
        %v7158 = vld [vmem:[%s16 + $0xd8] sm:$0xff]
        %v7159 = vld [vmem:[%s16 + $0xe0] sm:$0xff]
        %v7160 = vld [vmem:[%s16 + $0xe8] sm:$0xff]
        %v7161 = vld [vmem:[%s16 + $0xf0] sm:$0xff]
        %v7162 = vld [vmem:[%s16 + $0xf8] sm:$0xff]
        %7164 = vset.pattern.permute.xlu0 0
        %7165 = vperm.xlu0 %7164, %v7131
        %v7166 = vpop.permute.xlu0 %7165
        %7169 = vset.pattern.permute.xlu0 0
        %7170 = vperm.xlu0 %7169, %v7132
        %v7171 = vpop.permute.xlu0 %7170
        %7174 = vset.pattern.permute.xlu0 0
        %7175 = vperm.xlu0 %7174, %v7133
        %v7176 = vpop.permute.xlu0 %7175
        %7179 = vset.pattern.permute.xlu0 0
        %7180 = vperm.xlu0 %7179, %v7134
        %v7181 = vpop.permute.xlu0 %7180
        %7184 = vset.pattern.permute.xlu0 0
        %7185 = vperm.xlu0 %7184, %v7135
        %v7186 = vpop.permute.xlu0 %7185
        %7189 = vset.pattern.permute.xlu0 0
        %7190 = vperm.xlu0 %7189, %v7136
        %v7191 = vpop.permute.xlu0 %7190
        %7194 = vset.pattern.permute.xlu0 0
        %7195 = vperm.xlu0 %7194, %v7137
        %v7196 = vpop.permute.xlu0 %7195
        %7199 = vset.pattern.permute.xlu0 0
        %7200 = vperm.xlu0 %7199, %v7138
        %v7201 = vpop.permute.xlu0 %7200
        %7204 = vset.pattern.permute.xlu0 0
        %7205 = vperm.xlu0 %7204, %v7139
        %v7206 = vpop.permute.xlu0 %7205
        %7209 = vset.pattern.permute.xlu0 0
        %7210 = vperm.xlu0 %7209, %v7140
        %v7211 = vpop.permute.xlu0 %7210
        %7214 = vset.pattern.permute.xlu0 0
        %7215 = vperm.xlu0 %7214, %v7141
        %v7216 = vpop.permute.xlu0 %7215
        %7219 = vset.pattern.permute.xlu0 0
        %7220 = vperm.xlu0 %7219, %v7142
        %v7221 = vpop.permute.xlu0 %7220
        %7224 = vset.pattern.permute.xlu0 0
        %7225 = vperm.xlu0 %7224, %v7143
        %v7226 = vpop.permute.xlu0 %7225
        %7229 = vset.pattern.permute.xlu0 0
        %7230 = vperm.xlu0 %7229, %v7144
        %v7231 = vpop.permute.xlu0 %7230
        %7234 = vset.pattern.permute.xlu0 0
        %7235 = vperm.xlu0 %7234, %v7145
        %v7236 = vpop.permute.xlu0 %7235
        %7239 = vset.pattern.permute.xlu0 0
        %7240 = vperm.xlu0 %7239, %v7146
        %v7241 = vpop.permute.xlu0 %7240
        %7244 = vset.pattern.permute.xlu0 0
        %7245 = vperm.xlu0 %7244, %v7147
        %v7246 = vpop.permute.xlu0 %7245
        %7249 = vset.pattern.permute.xlu0 0
        %7250 = vperm.xlu0 %7249, %v7148
        %v7251 = vpop.permute.xlu0 %7250
        %7254 = vset.pattern.permute.xlu0 0
        %7255 = vperm.xlu0 %7254, %v7149
        %v7256 = vpop.permute.xlu0 %7255
        %7259 = vset.pattern.permute.xlu0 0
        %7260 = vperm.xlu0 %7259, %v7150
        %v7261 = vpop.permute.xlu0 %7260
        %7264 = vset.pattern.permute.xlu0 0
        %7265 = vperm.xlu0 %7264, %v7151
        %v7266 = vpop.permute.xlu0 %7265
        %7269 = vset.pattern.permute.xlu0 0
        %7270 = vperm.xlu0 %7269, %v7152
        %v7271 = vpop.permute.xlu0 %7270
        %7274 = vset.pattern.permute.xlu0 0
        %7275 = vperm.xlu0 %7274, %v7153
        %v7276 = vpop.permute.xlu0 %7275
        %7279 = vset.pattern.permute.xlu0 0
        %7280 = vperm.xlu0 %7279, %v7154
        %v7281 = vpop.permute.xlu0 %7280
        %7284 = vset.pattern.permute.xlu0 0
        %7285 = vperm.xlu0 %7284, %v7155
        %v7286 = vpop.permute.xlu0 %7285
        %7289 = vset.pattern.permute.xlu0 0
        %7290 = vperm.xlu0 %7289, %v7156
        %v7291 = vpop.permute.xlu0 %7290
        %7294 = vset.pattern.permute.xlu0 0
        %7295 = vperm.xlu0 %7294, %v7157
        %v7296 = vpop.permute.xlu0 %7295
        %7299 = vset.pattern.permute.xlu0 0
        %7300 = vperm.xlu0 %7299, %v7158
        %v7301 = vpop.permute.xlu0 %7300
        %7304 = vset.pattern.permute.xlu0 0
        %7305 = vperm.xlu0 %7304, %v7159
        %v7306 = vpop.permute.xlu0 %7305
        %7309 = vset.pattern.permute.xlu0 0
        %7310 = vperm.xlu0 %7309, %v7160
        %v7311 = vpop.permute.xlu0 %7310
        %7314 = vset.pattern.permute.xlu0 0
        %7315 = vperm.xlu0 %7314, %v7161
        %v7316 = vpop.permute.xlu0 %7315
        %7319 = vset.pattern.permute.xlu0 0
        %7320 = vperm.xlu0 %7319, %v7162
        %v7321 = vpop.permute.xlu0 %7320
        %v7323 = vadd.f32 %v7099, %v7166
        %v7324 = vadd.f32 %v7100, %v7171
        %v7325 = vadd.f32 %v7101, %v7176
        %v7326 = vadd.f32 %v7102, %v7181
        %v7327 = vadd.f32 %v7103, %v7186
        %v7328 = vadd.f32 %v7104, %v7191
        %v7329 = vadd.f32 %v7105, %v7196
        %v7330 = vadd.f32 %v7106, %v7201
        %v7331 = vadd.f32 %v7107, %v7206
        %v7332 = vadd.f32 %v7108, %v7211
        %v7333 = vadd.f32 %v7109, %v7216
        %v7334 = vadd.f32 %v7110, %v7221
        %v7335 = vadd.f32 %v7111, %v7226
        %v7336 = vadd.f32 %v7112, %v7231
        %v7337 = vadd.f32 %v7113, %v7236
        %v7338 = vadd.f32 %v7114, %v7241
        %v7339 = vadd.f32 %v7115, %v7246
        %v7340 = vadd.f32 %v7116, %v7251
        %v7341 = vadd.f32 %v7117, %v7256
        %v7342 = vadd.f32 %v7118, %v7261
        %v7343 = vadd.f32 %v7119, %v7266
        %v7344 = vadd.f32 %v7120, %v7271
        %v7345 = vadd.f32 %v7121, %v7276
        %v7346 = vadd.f32 %v7122, %v7281
        %v7347 = vadd.f32 %v7123, %v7286
        %v7348 = vadd.f32 %v7124, %v7291
        %v7349 = vadd.f32 %v7125, %v7296
        %v7350 = vadd.f32 %v7126, %v7301
        %v7351 = vadd.f32 %v7127, %v7306
        %v7352 = vadd.f32 %v7128, %v7311
        %v7353 = vadd.f32 %v7129, %v7316
        %v7354 = vadd.f32 %v7130, %v7321
        %v7355 = vmax.f32 %v7323, 0.0
        %v7356 = vmax.f32 %v7324, 0.0
        %v7357 = vmax.f32 %v7325, 0.0
        %v7358 = vmax.f32 %v7326, 0.0
        %v7359 = vmax.f32 %v7327, 0.0
        %v7360 = vmax.f32 %v7328, 0.0
        %v7361 = vmax.f32 %v7329, 0.0
        %v7362 = vmax.f32 %v7330, 0.0
        %v7363 = vmax.f32 %v7331, 0.0
        %v7364 = vmax.f32 %v7332, 0.0
        %v7365 = vmax.f32 %v7333, 0.0
        %v7366 = vmax.f32 %v7334, 0.0
        %v7367 = vmax.f32 %v7335, 0.0
        %v7368 = vmax.f32 %v7336, 0.0
        %v7369 = vmax.f32 %v7337, 0.0
        %v7370 = vmax.f32 %v7338, 0.0
        %v7371 = vmax.f32 %v7339, 0.0
        %v7372 = vmax.f32 %v7340, 0.0
        %v7373 = vmax.f32 %v7341, 0.0
        %v7374 = vmax.f32 %v7342, 0.0
        %v7375 = vmax.f32 %v7343, 0.0
        %v7376 = vmax.f32 %v7344, 0.0
        %v7377 = vmax.f32 %v7345, 0.0
        %v7378 = vmax.f32 %v7346, 0.0
        %v7379 = vmax.f32 %v7347, 0.0
        %v7380 = vmax.f32 %v7348, 0.0
        %v7381 = vmax.f32 %v7349, 0.0
        %v7382 = vmax.f32 %v7350, 0.0
        %v7383 = vmax.f32 %v7351, 0.0
        %v7384 = vmax.f32 %v7352, 0.0
        %v7385 = vmax.f32 %v7353, 0.0
        %v7386 = vmax.f32 %v7354, 0.0
        %v7387 = vld [vmem:[%s18] sm:$0xff]
        %v7388 = vld [vmem:[%s18 + $0x8] sm:$0xff]
        %v7389 = vld [vmem:[%s2] sm:$0xff]
        %v7390 = vld [vmem:[%s2 + $0x8] sm:$0xff]
        %v7391 = vld [vmem:[%s2 + $0x10] sm:$0xff]
        %v7392 = vld [vmem:[%s2 + $0x18] sm:$0xff]
        %v7394 = vsel %vm4370, %v7355, 0
        %v7397 = vsel %vm4370, %v7356, 0
        %v7400 = vsel %vm4370, %v7357, 0
        %v7403 = vsel %vm4370, %v7358, 0
        %v7406 = vsel %vm4370, %v7359, 0
        %v7409 = vsel %vm4370, %v7360, 0
        %v7412 = vsel %vm4370, %v7361, 0
        %v7415 = vsel %vm4370, %v7362, 0
        %v7418 = vsel %vm4370, %v7363, 0
        %v7421 = vsel %vm4370, %v7364, 0
        %v7424 = vsel %vm4370, %v7365, 0
        %v7427 = vsel %vm4370, %v7366, 0
        %v7430 = vsel %vm4370, %v7367, 0
        %v7433 = vsel %vm4370, %v7368, 0
        %v7436 = vsel %vm4370, %v7369, 0
        %v7439 = vsel %vm4370, %v7370, 0
        %v7442 = vsel %vm4370, %v7371, 0
        %v7445 = vsel %vm4370, %v7372, 0
        %v7448 = vsel %vm4370, %v7373, 0
        %v7451 = vsel %vm4370, %v7374, 0
        %v7454 = vsel %vm4370, %v7375, 0
        %v7457 = vsel %vm4370, %v7376, 0
        %v7460 = vsel %vm4370, %v7377, 0
        %v7463 = vsel %vm4370, %v7378, 0
        %v7466 = vsel %vm4370, %v7379, 0
        %v7469 = vsel %vm4370, %v7380, 0
        %v7472 = vsel %vm4370, %v7381, 0
        %v7475 = vsel %vm4370, %v7382, 0
        %v7478 = vsel %vm4370, %v7383, 0
        %v7481 = vsel %vm4370, %v7384, 0
        %v7484 = vsel %vm4370, %v7385, 0
        %v7487 = vsel %vm4370, %v7386, 0
        %7489 = vmatprep.subr.mxu0 0.0
        %7490 = vmatpush1.msra.mxu0 %v7389
        %7491 = vmatprep.subr.mxu0 0.0
        %7492 = vmatpush1.msra.mxu0 %v7390
        %7493 = vmatprep.subr.mxu0 0.0
        %7494 = vmatpush1.msra.mxu0 %v7391
        %7495 = vmatprep.subr.mxu0 0.0
        %7496 = vmatpush1.msra.mxu0 %v7392
        %7497 = vmatprep.subr.mxu0 0.0
        %7498 = vmatpush1.msra.mxu0 0.0
        %7499 = vmatprep.subr.mxu0 0.0
        %7500 = vmatpush1.msra.mxu0 0.0
        %7501 = vmatprep.subr.mxu0 0.0
        %7502 = vmatpush1.msra.mxu0 0.0
        %7503 = vmatprep.subr.mxu0 0.0
        %7504 = vmatpush1.msra.mxu0 0.0
        %7505 = vmatprep.subr.mxu0 0.0
        %7506 = vmatpush1.msra.mxu0 0.0
        %7507 = vmatprep.subr.mxu0 0.0
        %7508 = vmatpush1.msra.mxu0 0.0
        %7509 = vmatprep.subr.mxu0 0.0
        %7510 = vmatpush1.msra.mxu0 0.0
        %7511 = vmatprep.subr.mxu0 0.0
        %7512 = vmatpush1.msra.mxu0 0.0
        %7513 = vmatprep.subr.mxu0 0.0
        %7514 = vmatpush1.msra.mxu0 0.0
        %7515 = vmatprep.subr.mxu0 0.0
        %7516 = vmatpush1.msra.mxu0 0.0
        %7517 = vmatprep.subr.mxu0 0.0
        %7518 = vmatpush1.msra.mxu0 0.0
        %7519 = vmatprep.subr.mxu0 0.0
        %7520 = vmatpush1.msra.mxu0 0.0
        %7521 = vmatprep.subr.mxu0 0.0
        %7522 = vmatpush1.msra.mxu0 0.0
        %7523 = vmatprep.subr.mxu0 0.0
        %7524 = vmatpush1.msra.mxu0 0.0
        %7525 = vmatprep.subr.mxu0 0.0
        %7526 = vmatpush1.msra.mxu0 0.0
        %7527 = vmatprep.subr.mxu0 0.0
        %7528 = vmatpush1.msra.mxu0 0.0
        %7529 = vmatprep.subr.mxu0 0.0
        %7530 = vmatpush1.msra.mxu0 0.0
        %7531 = vmatprep.subr.mxu0 0.0
        %7532 = vmatpush1.msra.mxu0 0.0
        %7533 = vmatprep.subr.mxu0 0.0
        %7534 = vmatpush1.msra.mxu0 0.0
        %7535 = vmatprep.subr.mxu0 0.0
        %7536 = vmatpush1.msra.mxu0 0.0
        %7537 = vmatprep.subr.mxu0 0.0
        %7538 = vmatpush1.msra.mxu0 0.0
        %7539 = vmatprep.subr.mxu0 0.0
        %7540 = vmatpush1.msra.mxu0 0.0
        %7541 = vmatprep.subr.mxu0 0.0
        %7542 = vmatpush1.msra.mxu0 0.0
        %7543 = vmatprep.subr.mxu0 0.0
        %7544 = vmatpush1.msra.mxu0 0.0
        %7545 = vmatprep.subr.mxu0 0.0
        %7546 = vmatpush1.msra.mxu0 0.0
        %7547 = vmatprep.subr.mxu0 0.0
        %7548 = vmatpush1.msra.mxu0 0.0
        %7549 = vmatprep.subr.mxu0 0.0
        %7550 = vmatpush1.msra.mxu0 0.0
        %7551 = vmatprep.subr.mxu0 0.0
        %7552 = vmatpush1.msra.mxu0 0.0
        %7553 = vmatprep.mubr.f32.mxu0 0.0
        %7554 = vmatmul.mubr.f32.gmra.mrb[0].mxu0 %v7394
        %v7555 = vpop.f32.mrb[0].mxu0
        %v7556 = vadd.f32 0.0, %v7555
        %v7557 = vpop.f32.mrb[0].mxu0
        %7558 = vmatprep.mubr.f32.mxu0 0.0
        %7559 = vmatmul.mubr.f32.gmra.mrb[0].mxu0 %v7397
        %v7560 = vpop.f32.mrb[0].mxu0
        %v7561 = vadd.f32 0.0, %v7560
        %v7562 = vpop.f32.mrb[0].mxu0
        %7563 = vmatprep.mubr.f32.mxu0 0.0
        %7564 = vmatmul.mubr.f32.gmra.mrb[0].mxu0 %v7400
        %v7565 = vpop.f32.mrb[0].mxu0
        %v7566 = vadd.f32 0.0, %v7565
        %v7567 = vpop.f32.mrb[0].mxu0
        %7568 = vmatprep.mubr.f32.mxu0 0.0
        %7569 = vmatmul.mubr.f32.gmra.mrb[0].mxu0 %v7403
        %v7570 = vpop.f32.mrb[0].mxu0
        %v7571 = vadd.f32 0.0, %v7570
        %v7572 = vpop.f32.mrb[0].mxu0
        %7573 = vmatprep.mubr.f32.mxu0 0.0
        %7574 = vmatmul.mubr.f32.gmra.mrb[0].mxu0 %v7406
        %v7575 = vpop.f32.mrb[0].mxu0
        %v7576 = vadd.f32 0.0, %v7575
        %v7577 = vpop.f32.mrb[0].mxu0
        %7578 = vmatprep.mubr.f32.mxu0 0.0
        %7579 = vmatmul.mubr.f32.gmra.mrb[0].mxu0 %v7409
        %v7580 = vpop.f32.mrb[0].mxu0
        %v7581 = vadd.f32 0.0, %v7580
        %v7582 = vpop.f32.mrb[0].mxu0
        %7583 = vmatprep.mubr.f32.mxu0 0.0
        %7584 = vmatmul.mubr.f32.gmra.mrb[0].mxu0 %v7412
        %v7585 = vpop.f32.mrb[0].mxu0
        %v7586 = vadd.f32 0.0, %v7585
        %v7587 = vpop.f32.mrb[0].mxu0
        %7588 = vmatprep.mubr.f32.mxu0 0.0
        %7589 = vmatmul.mubr.f32.gmra.mrb[0].mxu0 %v7415
        %v7590 = vpop.f32.mrb[0].mxu0
        %v7591 = vadd.f32 0.0, %v7590
        %v7592 = vpop.f32.mrb[0].mxu0
        %7593 = vmatprep.mubr.f32.mxu0 0.0
        %7594 = vmatmul.mubr.f32.gmra.mrb[0].mxu0 %v7418
        %v7595 = vpop.f32.mrb[0].mxu0
        %v7596 = vadd.f32 0.0, %v7595
        %v7597 = vpop.f32.mrb[0].mxu0
        %7598 = vmatprep.mubr.f32.mxu0 0.0
        %7599 = vmatmul.mubr.f32.gmra.mrb[0].mxu0 %v7421
        %v7600 = vpop.f32.mrb[0].mxu0
        %v7601 = vadd.f32 0.0, %v7600
        %v7602 = vpop.f32.mrb[0].mxu0
        %7603 = vmatprep.mubr.f32.mxu0 0.0
        %7604 = vmatmul.mubr.f32.gmra.mrb[0].mxu0 %v7424
        %v7605 = vpop.f32.mrb[0].mxu0
        %v7606 = vadd.f32 0.0, %v7605
        %v7607 = vpop.f32.mrb[0].mxu0
        %7608 = vmatprep.mubr.f32.mxu0 0.0
        %7609 = vmatmul.mubr.f32.gmra.mrb[0].mxu0 %v7427
        %v7610 = vpop.f32.mrb[0].mxu0
        %v7611 = vadd.f32 0.0, %v7610
        %v7612 = vpop.f32.mrb[0].mxu0
        %7613 = vmatprep.mubr.f32.mxu0 0.0
        %7614 = vmatmul.mubr.f32.gmra.mrb[0].mxu0 %v7430
        %v7615 = vpop.f32.mrb[0].mxu0
        %v7616 = vadd.f32 0.0, %v7615
        %v7617 = vpop.f32.mrb[0].mxu0
        %7618 = vmatprep.mubr.f32.mxu0 0.0
        %7619 = vmatmul.mubr.f32.gmra.mrb[0].mxu0 %v7433
        %v7620 = vpop.f32.mrb[0].mxu0
        %v7621 = vadd.f32 0.0, %v7620
        %v7622 = vpop.f32.mrb[0].mxu0
        %7623 = vmatprep.mubr.f32.mxu0 0.0
        %7624 = vmatmul.mubr.f32.gmra.mrb[0].mxu0 %v7436
        %v7625 = vpop.f32.mrb[0].mxu0
        %v7626 = vadd.f32 0.0, %v7625
        %v7627 = vpop.f32.mrb[0].mxu0
        %7628 = vmatprep.mubr.f32.mxu0 0.0
        %7629 = vmatmul.mubr.f32.gmra.mrb[0].mxu0 %v7439
        %v7630 = vpop.f32.mrb[0].mxu0
        %v7631 = vadd.f32 0.0, %v7630
        %v7632 = vpop.f32.mrb[0].mxu0
        %7633 = vmatprep.mubr.f32.mxu0 0.0
        %7634 = vmatmul.mubr.f32.gmra.mrb[0].mxu0 %v7442
        %v7635 = vpop.f32.mrb[0].mxu0
        %v7636 = vadd.f32 0.0, %v7635
        %v7637 = vpop.f32.mrb[0].mxu0
        %7638 = vmatprep.mubr.f32.mxu0 0.0
        %7639 = vmatmul.mubr.f32.gmra.mrb[0].mxu0 %v7445
        %v7640 = vpop.f32.mrb[0].mxu0
        %v7641 = vadd.f32 0.0, %v7640
        %v7642 = vpop.f32.mrb[0].mxu0
        %7643 = vmatprep.mubr.f32.mxu0 0.0
        %7644 = vmatmul.mubr.f32.gmra.mrb[0].mxu0 %v7448
        %v7645 = vpop.f32.mrb[0].mxu0
        %v7646 = vadd.f32 0.0, %v7645
        %v7647 = vpop.f32.mrb[0].mxu0
        %7648 = vmatprep.mubr.f32.mxu0 0.0
        %7649 = vmatmul.mubr.f32.gmra.mrb[0].mxu0 %v7451
        %v7650 = vpop.f32.mrb[0].mxu0
        %v7651 = vadd.f32 0.0, %v7650
        %v7652 = vpop.f32.mrb[0].mxu0
        %7653 = vmatprep.mubr.f32.mxu0 0.0
        %7654 = vmatmul.mubr.f32.gmra.mrb[0].mxu0 %v7454
        %v7655 = vpop.f32.mrb[0].mxu0
        %v7656 = vadd.f32 0.0, %v7655
        %v7657 = vpop.f32.mrb[0].mxu0
        %7658 = vmatprep.mubr.f32.mxu0 0.0
        %7659 = vmatmul.mubr.f32.gmra.mrb[0].mxu0 %v7457
        %v7660 = vpop.f32.mrb[0].mxu0
        %v7661 = vadd.f32 0.0, %v7660
        %v7662 = vpop.f32.mrb[0].mxu0
        %7663 = vmatprep.mubr.f32.mxu0 0.0
        %7664 = vmatmul.mubr.f32.gmra.mrb[0].mxu0 %v7460
        %v7665 = vpop.f32.mrb[0].mxu0
        %v7666 = vadd.f32 0.0, %v7665
        %v7667 = vpop.f32.mrb[0].mxu0
        %7668 = vmatprep.mubr.f32.mxu0 0.0
        %7669 = vmatmul.mubr.f32.gmra.mrb[0].mxu0 %v7463
        %v7670 = vpop.f32.mrb[0].mxu0
        %v7671 = vadd.f32 0.0, %v7670
        %v7672 = vpop.f32.mrb[0].mxu0
        %7673 = vmatprep.mubr.f32.mxu0 0.0
        %7674 = vmatmul.mubr.f32.gmra.mrb[0].mxu0 %v7466
        %v7675 = vpop.f32.mrb[0].mxu0
        %v7676 = vadd.f32 0.0, %v7675
        %v7677 = vpop.f32.mrb[0].mxu0
        %7678 = vmatprep.mubr.f32.mxu0 0.0
        %7679 = vmatmul.mubr.f32.gmra.mrb[0].mxu0 %v7469
        %v7680 = vpop.f32.mrb[0].mxu0
        %v7681 = vadd.f32 0.0, %v7680
        %v7682 = vpop.f32.mrb[0].mxu0
        %7683 = vmatprep.mubr.f32.mxu0 0.0
        %7684 = vmatmul.mubr.f32.gmra.mrb[0].mxu0 %v7472
        %v7685 = vpop.f32.mrb[0].mxu0
        %v7686 = vadd.f32 0.0, %v7685
        %v7687 = vpop.f32.mrb[0].mxu0
        %7688 = vmatprep.mubr.f32.mxu0 0.0
        %7689 = vmatmul.mubr.f32.gmra.mrb[0].mxu0 %v7475
        %v7690 = vpop.f32.mrb[0].mxu0
        %v7691 = vadd.f32 0.0, %v7690
        %v7692 = vpop.f32.mrb[0].mxu0
        %7693 = vmatprep.mubr.f32.mxu0 0.0
        %7694 = vmatmul.mubr.f32.gmra.mrb[0].mxu0 %v7478
        %v7695 = vpop.f32.mrb[0].mxu0
        %v7696 = vadd.f32 0.0, %v7695
        %v7697 = vpop.f32.mrb[0].mxu0
        %7698 = vmatprep.mubr.f32.mxu0 0.0
        %7699 = vmatmul.mubr.f32.gmra.mrb[0].mxu0 %v7481
        %v7700 = vpop.f32.mrb[0].mxu0
        %v7701 = vadd.f32 0.0, %v7700
        %v7702 = vpop.f32.mrb[0].mxu0
        %7703 = vmatprep.mubr.f32.mxu0 0.0
        %7704 = vmatmul.mubr.f32.gmra.mrb[0].mxu0 %v7484
        %v7705 = vpop.f32.mrb[0].mxu0
        %v7706 = vadd.f32 0.0, %v7705
        %v7707 = vpop.f32.mrb[0].mxu0
        %7708 = vmatprep.mubr.f32.mxu0 0.0
        %7709 = vmatmul.mubr.f32.gmra.mrb[0].mxu0 %v7487
        %v7710 = vpop.f32.mrb[0].mxu0
        %v7711 = vadd.f32 0.0, %v7710
        %v7712 = vpop.f32.mrb[0].mxu0
        %7713 = vdwg.mxu0
        %v7714 = vld [vmem:[%s17] sm:$0xff]
        %v7715 = vld [vmem:[%s17 + $0x8] sm:$0xff]
        %v7716 = vld [vmem:[%s17 + $0x10] sm:$0xff]
        %v7717 = vld [vmem:[%s17 + $0x18] sm:$0xff]
        %7718 = vmatprep.subr.mxu0 0.0
        %7719 = vmatpush1.msra.mxu0 %v7556
        %7720 = vmatprep.subr.mxu0 0.0
        %7721 = vmatpush1.msra.mxu0 %v7561
        %7722 = vmatprep.subr.mxu0 0.0
        %7723 = vmatpush1.msra.mxu0 %v7566
        %7724 = vmatprep.subr.mxu0 0.0
        %7725 = vmatpush1.msra.mxu0 %v7571
        %7726 = vmatprep.subr.mxu0 0.0
        %7727 = vmatpush1.msra.mxu0 %v7576
        %7728 = vmatprep.subr.mxu0 0.0
        %7729 = vmatpush1.msra.mxu0 %v7581
        %7730 = vmatprep.subr.mxu0 0.0
        %7731 = vmatpush1.msra.mxu0 %v7586
        %7732 = vmatprep.subr.mxu0 0.0
        %7733 = vmatpush1.msra.mxu0 %v7591
        %7734 = vmatprep.subr.mxu0 0.0
        %7735 = vmatpush1.msra.mxu0 %v7596
        %7736 = vmatprep.subr.mxu0 0.0
        %7737 = vmatpush1.msra.mxu0 %v7601
        %7738 = vmatprep.subr.mxu0 0.0
        %7739 = vmatpush1.msra.mxu0 %v7606
        %7740 = vmatprep.subr.mxu0 0.0
        %7741 = vmatpush1.msra.mxu0 %v7611
        %7742 = vmatprep.subr.mxu0 0.0
        %7743 = vmatpush1.msra.mxu0 %v7616
        %7744 = vmatprep.subr.mxu0 0.0
        %7745 = vmatpush1.msra.mxu0 %v7621
        %7746 = vmatprep.subr.mxu0 0.0
        %7747 = vmatpush1.msra.mxu0 %v7626
        %7748 = vmatprep.subr.mxu0 0.0
        %7749 = vmatpush1.msra.mxu0 %v7631
        %7750 = vmatprep.subr.mxu0 0.0
        %7751 = vmatpush1.msra.mxu0 %v7636
        %7752 = vmatprep.subr.mxu0 0.0
        %7753 = vmatpush1.msra.mxu0 %v7641
        %7754 = vmatprep.subr.mxu0 0.0
        %7755 = vmatpush1.msra.mxu0 %v7646
        %7756 = vmatprep.subr.mxu0 0.0
        %7757 = vmatpush1.msra.mxu0 %v7651
        %7758 = vmatprep.subr.mxu0 0.0
        %7759 = vmatpush1.msra.mxu0 %v7656
        %7760 = vmatprep.subr.mxu0 0.0
        %7761 = vmatpush1.msra.mxu0 %v7661
        %7762 = vmatprep.subr.mxu0 0.0
        %7763 = vmatpush1.msra.mxu0 %v7666
        %7764 = vmatprep.subr.mxu0 0.0
        %7765 = vmatpush1.msra.mxu0 %v7671
        %7766 = vmatprep.subr.mxu0 0.0
        %7767 = vmatpush1.msra.mxu0 %v7676
        %7768 = vmatprep.subr.mxu0 0.0
        %7769 = vmatpush1.msra.mxu0 %v7681
        %7770 = vmatprep.subr.mxu0 0.0
        %7771 = vmatpush1.msra.mxu0 %v7686
        %7772 = vmatprep.subr.mxu0 0.0
        %7773 = vmatpush1.msra.mxu0 %v7691
        %7774 = vmatprep.subr.mxu0 0.0
        %7775 = vmatpush1.msra.mxu0 %v7696
        %7776 = vmatprep.subr.mxu0 0.0
        %7777 = vmatpush1.msra.mxu0 %v7701
        %7778 = vmatprep.subr.mxu0 0.0
        %7779 = vmatpush1.msra.mxu0 %v7706
        %7780 = vmatprep.subr.mxu0 0.0
        %7781 = vmatpush1.msra.mxu0 %v7711
        %7782 = vmatprep.mubr.f32.mxu0 %v7715
        %7783 = vmatmul.mubr.f32.gmra.mrb[0].mxu0 %v7714
        %v7784 = vpop.f32.mrb[0].mxu0
        %v7785 = vadd.f32 0.0, %v7784
        %v7786 = vpop.f32.mrb[0].mxu0
        %7787 = vmatprep.mubr.f32.mxu0 %v7717
        %7788 = vmatmul.mubr.f32.gmra.mrb[0].mxu0 %v7716
        %v7789 = vpop.f32.mrb[0].mxu0
        %v7790 = vadd.f32 0.0, %v7789
        %v7791 = vpop.f32.mrb[0].mxu0
        %7792 = vdwg.mxu0
        %7794 = vset.pattern.permute.xlu0 0
        %7795 = vperm.xlu0 %7794, %v7387
        %v7796 = vpop.permute.xlu0 %7795
        %7799 = vset.pattern.permute.xlu0 0
        %7800 = vperm.xlu0 %7799, %v7388
        %v7801 = vpop.permute.xlu0 %7800
        %v7803 = vadd.f32 %v7796, %v7785
        %v7804 = vadd.f32 %v7801, %v7790
        %s7805 = scalar_lea.vmem %s2, 32
        %v7806 = vld [vmem:[%s7805] sm:$0xff]
        %v7807 = vld [vmem:[%s7805 + $0x8] sm:$0xff]
        %v7808 = vld [vmem:[%s7805 + $0x10] sm:$0xff]
        %v7809 = vld [vmem:[%s7805 + $0x18] sm:$0xff]
        %7810 = vmatprep.subr.mxu0 0.0
        %7811 = vmatpush1.msra.mxu0 %v7806
        %7812 = vmatprep.subr.mxu0 0.0
        %7813 = vmatpush1.msra.mxu0 %v7807
        %7814 = vmatprep.subr.mxu0 0.0
        %7815 = vmatpush1.msra.mxu0 %v7808
        %7816 = vmatprep.subr.mxu0 0.0
        %7817 = vmatpush1.msra.mxu0 %v7809
        %7818 = vmatprep.subr.mxu0 0.0
        %7819 = vmatpush1.msra.mxu0 0.0
        %7820 = vmatprep.subr.mxu0 0.0
        %7821 = vmatpush1.msra.mxu0 0.0
        %7822 = vmatprep.subr.mxu0 0.0
        %7823 = vmatpush1.msra.mxu0 0.0
        %7824 = vmatprep.subr.mxu0 0.0
        %7825 = vmatpush1.msra.mxu0 0.0
        %7826 = vmatprep.subr.mxu0 0.0
        %7827 = vmatpush1.msra.mxu0 0.0
        %7828 = vmatprep.subr.mxu0 0.0
        %7829 = vmatpush1.msra.mxu0 0.0
        %7830 = vmatprep.subr.mxu0 0.0
        %7831 = vmatpush1.msra.mxu0 0.0
        %7832 = vmatprep.subr.mxu0 0.0
        %7833 = vmatpush1.msra.mxu0 0.0
        %7834 = vmatprep.subr.mxu0 0.0
        %7835 = vmatpush1.msra.mxu0 0.0
        %7836 = vmatprep.subr.mxu0 0.0
        %7837 = vmatpush1.msra.mxu0 0.0
        %7838 = vmatprep.subr.mxu0 0.0
        %7839 = vmatpush1.msra.mxu0 0.0
        %7840 = vmatprep.subr.mxu0 0.0
        %7841 = vmatpush1.msra.mxu0 0.0
        %7842 = vmatprep.subr.mxu0 0.0
        %7843 = vmatpush1.msra.mxu0 0.0
        %7844 = vmatprep.subr.mxu0 0.0
        %7845 = vmatpush1.msra.mxu0 0.0
        %7846 = vmatprep.subr.mxu0 0.0
        %7847 = vmatpush1.msra.mxu0 0.0
        %7848 = vmatprep.subr.mxu0 0.0
        %7849 = vmatpush1.msra.mxu0 0.0
        %7850 = vmatprep.subr.mxu0 0.0
        %7851 = vmatpush1.msra.mxu0 0.0
        %7852 = vmatprep.subr.mxu0 0.0
        %7853 = vmatpush1.msra.mxu0 0.0
        %7854 = vmatprep.subr.mxu0 0.0
        %7855 = vmatpush1.msra.mxu0 0.0
        %7856 = vmatprep.subr.mxu0 0.0
        %7857 = vmatpush1.msra.mxu0 0.0
        %7858 = vmatprep.subr.mxu0 0.0
        %7859 = vmatpush1.msra.mxu0 0.0
        %7860 = vmatprep.subr.mxu0 0.0
        %7861 = vmatpush1.msra.mxu0 0.0
        %7862 = vmatprep.subr.mxu0 0.0
        %7863 = vmatpush1.msra.mxu0 0.0
        %7864 = vmatprep.subr.mxu0 0.0
        %7865 = vmatpush1.msra.mxu0 0.0
        %7866 = vmatprep.subr.mxu0 0.0
        %7867 = vmatpush1.msra.mxu0 0.0
        %7868 = vmatprep.subr.mxu0 0.0
        %7869 = vmatpush1.msra.mxu0 0.0
        %7870 = vmatprep.subr.mxu0 0.0
        %7871 = vmatpush1.msra.mxu0 0.0
        %7872 = vmatprep.subr.mxu0 0.0
        %7873 = vmatpush1.msra.mxu0 0.0
        %7874 = vmatprep.mubr.f32.mxu0 0.0
        %7875 = vmatmul.mubr.f32.gmra.mrb[0].mxu0 %v7394
        %v7876 = vpop.f32.mrb[0].mxu0
        %v7877 = vadd.f32 0.0, %v7876
        %v7878 = vpop.f32.mrb[0].mxu0
        %7879 = vmatprep.mubr.f32.mxu0 0.0
        %7880 = vmatmul.mubr.f32.gmra.mrb[0].mxu0 %v7397
        %v7881 = vpop.f32.mrb[0].mxu0
        %v7882 = vadd.f32 0.0, %v7881
        %v7883 = vpop.f32.mrb[0].mxu0
        %7884 = vmatprep.mubr.f32.mxu0 0.0
        %7885 = vmatmul.mubr.f32.gmra.mrb[0].mxu0 %v7400
        %v7886 = vpop.f32.mrb[0].mxu0
        %v7887 = vadd.f32 0.0, %v7886
        %v7888 = vpop.f32.mrb[0].mxu0
        %7889 = vmatprep.mubr.f32.mxu0 0.0
        %7890 = vmatmul.mubr.f32.gmra.mrb[0].mxu0 %v7403
        %v7891 = vpop.f32.mrb[0].mxu0
        %v7892 = vadd.f32 0.0, %v7891
        %v7893 = vpop.f32.mrb[0].mxu0
        %7894 = vmatprep.mubr.f32.mxu0 0.0
        %7895 = vmatmul.mubr.f32.gmra.mrb[0].mxu0 %v7406
        %v7896 = vpop.f32.mrb[0].mxu0
        %v7897 = vadd.f32 0.0, %v7896
        %v7898 = vpop.f32.mrb[0].mxu0
        %7899 = vmatprep.mubr.f32.mxu0 0.0
        %7900 = vmatmul.mubr.f32.gmra.mrb[0].mxu0 %v7409
        %v7901 = vpop.f32.mrb[0].mxu0
        %v7902 = vadd.f32 0.0, %v7901
        %v7903 = vpop.f32.mrb[0].mxu0
        %7904 = vmatprep.mubr.f32.mxu0 0.0
        %7905 = vmatmul.mubr.f32.gmra.mrb[0].mxu0 %v7412
        %v7906 = vpop.f32.mrb[0].mxu0
        %v7907 = vadd.f32 0.0, %v7906
        %v7908 = vpop.f32.mrb[0].mxu0
        %7909 = vmatprep.mubr.f32.mxu0 0.0
        %7910 = vmatmul.mubr.f32.gmra.mrb[0].mxu0 %v7415
        %v7911 = vpop.f32.mrb[0].mxu0
        %v7912 = vadd.f32 0.0, %v7911
        %v7913 = vpop.f32.mrb[0].mxu0
        %7914 = vmatprep.mubr.f32.mxu0 0.0
        %7915 = vmatmul.mubr.f32.gmra.mrb[0].mxu0 %v7418
        %v7916 = vpop.f32.mrb[0].mxu0
        %v7917 = vadd.f32 0.0, %v7916
        %v7918 = vpop.f32.mrb[0].mxu0
        %7919 = vmatprep.mubr.f32.mxu0 0.0
        %7920 = vmatmul.mubr.f32.gmra.mrb[0].mxu0 %v7421
        %v7921 = vpop.f32.mrb[0].mxu0
        %v7922 = vadd.f32 0.0, %v7921
        %v7923 = vpop.f32.mrb[0].mxu0
        %7924 = vmatprep.mubr.f32.mxu0 0.0
        %7925 = vmatmul.mubr.f32.gmra.mrb[0].mxu0 %v7424
        %v7926 = vpop.f32.mrb[0].mxu0
        %v7927 = vadd.f32 0.0, %v7926
        %v7928 = vpop.f32.mrb[0].mxu0
        %7929 = vmatprep.mubr.f32.mxu0 0.0
        %7930 = vmatmul.mubr.f32.gmra.mrb[0].mxu0 %v7427
        %v7931 = vpop.f32.mrb[0].mxu0
        %v7932 = vadd.f32 0.0, %v7931
        %v7933 = vpop.f32.mrb[0].mxu0
        %7934 = vmatprep.mubr.f32.mxu0 0.0
        %7935 = vmatmul.mubr.f32.gmra.mrb[0].mxu0 %v7430
        %v7936 = vpop.f32.mrb[0].mxu0
        %v7937 = vadd.f32 0.0, %v7936
        %v7938 = vpop.f32.mrb[0].mxu0
        %7939 = vmatprep.mubr.f32.mxu0 0.0
        %7940 = vmatmul.mubr.f32.gmra.mrb[0].mxu0 %v7433
        %v7941 = vpop.f32.mrb[0].mxu0
        %v7942 = vadd.f32 0.0, %v7941
        %v7943 = vpop.f32.mrb[0].mxu0
        %7944 = vmatprep.mubr.f32.mxu0 0.0
        %7945 = vmatmul.mubr.f32.gmra.mrb[0].mxu0 %v7436
        %v7946 = vpop.f32.mrb[0].mxu0
        %v7947 = vadd.f32 0.0, %v7946
        %v7948 = vpop.f32.mrb[0].mxu0
        %7949 = vmatprep.mubr.f32.mxu0 0.0
        %7950 = vmatmul.mubr.f32.gmra.mrb[0].mxu0 %v7439
        %v7951 = vpop.f32.mrb[0].mxu0
        %v7952 = vadd.f32 0.0, %v7951
        %v7953 = vpop.f32.mrb[0].mxu0
        %7954 = vmatprep.mubr.f32.mxu0 0.0
        %7955 = vmatmul.mubr.f32.gmra.mrb[0].mxu0 %v7442
        %v7956 = vpop.f32.mrb[0].mxu0
        %v7957 = vadd.f32 0.0, %v7956
        %v7958 = vpop.f32.mrb[0].mxu0
        %7959 = vmatprep.mubr.f32.mxu0 0.0
        %7960 = vmatmul.mubr.f32.gmra.mrb[0].mxu0 %v7445
        %v7961 = vpop.f32.mrb[0].mxu0
        %v7962 = vadd.f32 0.0, %v7961
        %v7963 = vpop.f32.mrb[0].mxu0
        %7964 = vmatprep.mubr.f32.mxu0 0.0
        %7965 = vmatmul.mubr.f32.gmra.mrb[0].mxu0 %v7448
        %v7966 = vpop.f32.mrb[0].mxu0
        %v7967 = vadd.f32 0.0, %v7966
        %v7968 = vpop.f32.mrb[0].mxu0
        %7969 = vmatprep.mubr.f32.mxu0 0.0
        %7970 = vmatmul.mubr.f32.gmra.mrb[0].mxu0 %v7451
        %v7971 = vpop.f32.mrb[0].mxu0
        %v7972 = vadd.f32 0.0, %v7971
        %v7973 = vpop.f32.mrb[0].mxu0
        %7974 = vmatprep.mubr.f32.mxu0 0.0
        %7975 = vmatmul.mubr.f32.gmra.mrb[0].mxu0 %v7454
        %v7976 = vpop.f32.mrb[0].mxu0
        %v7977 = vadd.f32 0.0, %v7976
        %v7978 = vpop.f32.mrb[0].mxu0
        %7979 = vmatprep.mubr.f32.mxu0 0.0
        %7980 = vmatmul.mubr.f32.gmra.mrb[0].mxu0 %v7457
        %v7981 = vpop.f32.mrb[0].mxu0
        %v7982 = vadd.f32 0.0, %v7981
        %v7983 = vpop.f32.mrb[0].mxu0
        %7984 = vmatprep.mubr.f32.mxu0 0.0
        %7985 = vmatmul.mubr.f32.gmra.mrb[0].mxu0 %v7460
        %v7986 = vpop.f32.mrb[0].mxu0
        %v7987 = vadd.f32 0.0, %v7986
        %v7988 = vpop.f32.mrb[0].mxu0
        %7989 = vmatprep.mubr.f32.mxu0 0.0
        %7990 = vmatmul.mubr.f32.gmra.mrb[0].mxu0 %v7463
        %v7991 = vpop.f32.mrb[0].mxu0
        %v7992 = vadd.f32 0.0, %v7991
        %v7993 = vpop.f32.mrb[0].mxu0
        %7994 = vmatprep.mubr.f32.mxu0 0.0
        %7995 = vmatmul.mubr.f32.gmra.mrb[0].mxu0 %v7466
        %v7996 = vpop.f32.mrb[0].mxu0
        %v7997 = vadd.f32 0.0, %v7996
        %v7998 = vpop.f32.mrb[0].mxu0
        %7999 = vmatprep.mubr.f32.mxu0 0.0
        %8000 = vmatmul.mubr.f32.gmra.mrb[0].mxu0 %v7469
        %v8001 = vpop.f32.mrb[0].mxu0
        %v8002 = vadd.f32 0.0, %v8001
        %v8003 = vpop.f32.mrb[0].mxu0
        %8004 = vmatprep.mubr.f32.mxu0 0.0
        %8005 = vmatmul.mubr.f32.gmra.mrb[0].mxu0 %v7472
        %v8006 = vpop.f32.mrb[0].mxu0
        %v8007 = vadd.f32 0.0, %v8006
        %v8008 = vpop.f32.mrb[0].mxu0
        %8009 = vmatprep.mubr.f32.mxu0 0.0
        %8010 = vmatmul.mubr.f32.gmra.mrb[0].mxu0 %v7475
        %v8011 = vpop.f32.mrb[0].mxu0
        %v8012 = vadd.f32 0.0, %v8011
        %v8013 = vpop.f32.mrb[0].mxu0
        %8014 = vmatprep.mubr.f32.mxu0 0.0
        %8015 = vmatmul.mubr.f32.gmra.mrb[0].mxu0 %v7478
        %v8016 = vpop.f32.mrb[0].mxu0
        %v8017 = vadd.f32 0.0, %v8016
        %v8018 = vpop.f32.mrb[0].mxu0
        %8019 = vmatprep.mubr.f32.mxu0 0.0
        %8020 = vmatmul.mubr.f32.gmra.mrb[0].mxu0 %v7481
        %v8021 = vpop.f32.mrb[0].mxu0
        %v8022 = vadd.f32 0.0, %v8021
        %v8023 = vpop.f32.mrb[0].mxu0
        %8024 = vmatprep.mubr.f32.mxu0 0.0
        %8025 = vmatmul.mubr.f32.gmra.mrb[0].mxu0 %v7484
        %v8026 = vpop.f32.mrb[0].mxu0
        %v8027 = vadd.f32 0.0, %v8026
        %v8028 = vpop.f32.mrb[0].mxu0
        %8029 = vmatprep.mubr.f32.mxu0 0.0
        %8030 = vmatmul.mubr.f32.gmra.mrb[0].mxu0 %v7487
        %v8031 = vpop.f32.mrb[0].mxu0
        %v8032 = vadd.f32 0.0, %v8031
        %v8033 = vpop.f32.mrb[0].mxu0
        %8034 = vdwg.mxu0
        %s8035 = scalar_lea.vmem %s17, 32
        %v8036 = vld [vmem:[%s8035] sm:$0xff]
        %v8037 = vld [vmem:[%s8035 + $0x8] sm:$0xff]
        %v8038 = vld [vmem:[%s8035 + $0x10] sm:$0xff]
        %v8039 = vld [vmem:[%s8035 + $0x18] sm:$0xff]
        %8040 = vmatprep.subr.mxu0 0.0
        %8041 = vmatpush1.msra.mxu0 %v7877
        %8042 = vmatprep.subr.mxu0 0.0
        %8043 = vmatpush1.msra.mxu0 %v7882
        %8044 = vmatprep.subr.mxu0 0.0
        %8045 = vmatpush1.msra.mxu0 %v7887
        %8046 = vmatprep.subr.mxu0 0.0
        %8047 = vmatpush1.msra.mxu0 %v7892
        %8048 = vmatprep.subr.mxu0 0.0
        %8049 = vmatpush1.msra.mxu0 %v7897
        %8050 = vmatprep.subr.mxu0 0.0
        %8051 = vmatpush1.msra.mxu0 %v7902
        %8052 = vmatprep.subr.mxu0 0.0
        %8053 = vmatpush1.msra.mxu0 %v7907
        %8054 = vmatprep.subr.mxu0 0.0
        %8055 = vmatpush1.msra.mxu0 %v7912
        %8056 = vmatprep.subr.mxu0 0.0
        %8057 = vmatpush1.msra.mxu0 %v7917
        %8058 = vmatprep.subr.mxu0 0.0
        %8059 = vmatpush1.msra.mxu0 %v7922
        %8060 = vmatprep.subr.mxu0 0.0
        %8061 = vmatpush1.msra.mxu0 %v7927
        %8062 = vmatprep.subr.mxu0 0.0
        %8063 = vmatpush1.msra.mxu0 %v7932
        %8064 = vmatprep.subr.mxu0 0.0
        %8065 = vmatpush1.msra.mxu0 %v7937
        %8066 = vmatprep.subr.mxu0 0.0
        %8067 = vmatpush1.msra.mxu0 %v7942
        %8068 = vmatprep.subr.mxu0 0.0
        %8069 = vmatpush1.msra.mxu0 %v7947
        %8070 = vmatprep.subr.mxu0 0.0
        %8071 = vmatpush1.msra.mxu0 %v7952
        %8072 = vmatprep.subr.mxu0 0.0
        %8073 = vmatpush1.msra.mxu0 %v7957
        %8074 = vmatprep.subr.mxu0 0.0
        %8075 = vmatpush1.msra.mxu0 %v7962
        %8076 = vmatprep.subr.mxu0 0.0
        %8077 = vmatpush1.msra.mxu0 %v7967
        %8078 = vmatprep.subr.mxu0 0.0
        %8079 = vmatpush1.msra.mxu0 %v7972
        %8080 = vmatprep.subr.mxu0 0.0
        %8081 = vmatpush1.msra.mxu0 %v7977
        %8082 = vmatprep.subr.mxu0 0.0
        %8083 = vmatpush1.msra.mxu0 %v7982
        %8084 = vmatprep.subr.mxu0 0.0
        %8085 = vmatpush1.msra.mxu0 %v7987
        %8086 = vmatprep.subr.mxu0 0.0
        %8087 = vmatpush1.msra.mxu0 %v7992
        %8088 = vmatprep.subr.mxu0 0.0
        %8089 = vmatpush1.msra.mxu0 %v7997
        %8090 = vmatprep.subr.mxu0 0.0
        %8091 = vmatpush1.msra.mxu0 %v8002
        %8092 = vmatprep.subr.mxu0 0.0
        %8093 = vmatpush1.msra.mxu0 %v8007
        %8094 = vmatprep.subr.mxu0 0.0
        %8095 = vmatpush1.msra.mxu0 %v8012
        %8096 = vmatprep.subr.mxu0 0.0
        %8097 = vmatpush1.msra.mxu0 %v8017
        %8098 = vmatprep.subr.mxu0 0.0
        %8099 = vmatpush1.msra.mxu0 %v8022
        %8100 = vmatprep.subr.mxu0 0.0
        %8101 = vmatpush1.msra.mxu0 %v8027
        %8102 = vmatprep.subr.mxu0 0.0
        %8103 = vmatpush1.msra.mxu0 %v8032
        %8104 = vmatprep.mubr.f32.mxu0 %v8037
        %8105 = vmatmul.mubr.f32.gmra.mrb[0].mxu0 %v8036
        %v8106 = vpop.f32.mrb[0].mxu0
        %v8107 = vadd.f32 0.0, %v8106
        %v8108 = vpop.f32.mrb[0].mxu0
        %8109 = vmatprep.mubr.f32.mxu0 %v8039
        %8110 = vmatmul.mubr.f32.gmra.mrb[0].mxu0 %v8038
        %v8111 = vpop.f32.mrb[0].mxu0
        %v8112 = vadd.f32 0.0, %v8111
        %v8113 = vpop.f32.mrb[0].mxu0
        %8114 = vdwg.mxu0
        %v8115 = vadd.f32 %v7803, %v8107
        %v8116 = vadd.f32 %v7804, %v8112
        %8117 = vxpose.xlu0.b32.start [1/16] %v8115, 128
        %8118 = vxpose.xlu0.b32.cont [2/16] %v8116, 128
        %8119 = vxpose.xlu0.b32.cont [3/16] 0.0, 128
        %8120 = vxpose.xlu0.b32.cont [4/16] 0.0, 128
        %8121 = vxpose.xlu0.b32.cont [5/16] 0.0, 128
        %8122 = vxpose.xlu0.b32.cont [6/16] 0.0, 128
        %8123 = vxpose.xlu0.b32.cont [7/16] 0.0, 128
        %8124 = vxpose.xlu0.b32.cont [8/16] 0.0, 128
        %8125 = vxpose.xlu0.b32.cont [9/16] 0.0, 128
        %8126 = vxpose.xlu0.b32.cont [10/16] 0.0, 128
        %8127 = vxpose.xlu0.b32.cont [11/16] 0.0, 128
        %8128 = vxpose.xlu0.b32.cont [12/16] 0.0, 128
        %8129 = vxpose.xlu0.b32.cont [13/16] 0.0, 128
        %8130 = vxpose.xlu0.b32.cont [14/16] 0.0, 128
        %8131 = vxpose.xlu0.b32.cont [15/16] 0.0, 128
        %8132 = vxpose.xlu0.b32.end [16/16] 0.0, 128
        %v8133 = vpop.trf.xlu0
        %v8134 = vpop.trf.xlu0
        %v8135 = vpop.trf.xlu0
        %v8136 = vpop.trf.xlu0
        %v8137 = vpop.trf.xlu0
        %v8138 = vpop.trf.xlu0
        %v8139 = vpop.trf.xlu0
        %v8140 = vpop.trf.xlu0
        %v8141 = vpop.trf.xlu0
        %v8142 = vpop.trf.xlu0
        %v8143 = vpop.trf.xlu0
        %v8144 = vpop.trf.xlu0
        %v8145 = vpop.trf.xlu0
        %v8146 = vpop.trf.xlu0
        %v8147 = vpop.trf.xlu0
        %v8148 = vpop.trf.xlu0
        %8149 = vst.msk [vmem:[%s593] sm:$0xff] %vm3873, %v8133
        %s8150 = sand.u32 %s445, 1
        %s8151 = scalar_lea.sflag [#allocation3], %s8150
        %s8152 = sand.u32 %s445, 1
        %s8153 = smul.addr %s8152, 8
        %s8154 = scalar_lea.vmem [#allocation2], %s8153
        // Predicated region
        $region97: #{ascad_branch_forward.1} parent=95 // pred_check
          %p8155 = pneg %p455
        $region98: #{ascad_branch_forward.1} parent=95 // pred_check_branch
          %8157 = sbr.rel (%p8155) target = $region100
        $region99: #{ascad_branch_forward.1} parent=95 // pred_region
          %s8159 = ssub.s32 128, 128
          %8160 = vsyncadd %s8151, %s8159
          %s8161 = smul.addr %s33, 128
          %s8162 = scalar_lea.hbm %s19, %s8161
          %s8164 = sshll.u32 %s8154, 4
          %s8165 = int_to_ptr.vmem [resolvable:$true] %s8164
          %8167 = dma.vmem_to_hbm [thread:$0]  %s8165, 128, %s8162, %s8151
        $region100: #{ascad_branch_forward.1} parent=95 // pred_fallthru
          _
      $region96: #{ascad_branch_forward.1} parent=5 // pred_fallthru
        _
      %p8168 = scmp.le.s32.totalorder 2, %s28
      // Predicated region
      $region101: #{ascad_branch_forward.1} parent=5 // pred_check
        %p8169 = pneg %p8168
      $region102: #{ascad_branch_forward.1} parent=5 // pred_check_branch
        %8171 = sbr.rel (%p8169) target = $region104
      $region103: #{ascad_branch_forward.1} parent=5 // pred_region
        %s8172 = ssub.s32 %s28, 2
        // Predicated region
        $region105: #{ascad_branch_forward.1} parent=103 // pred_check
          %p8173 = pneg %p461
        $region106: #{ascad_branch_forward.1} parent=103 // pred_check_branch
          %8175 = sbr.rel (%p8173) target = $region108
        $region107: #{ascad_branch_forward.1} parent=103 // pred_region
          %s8176 = sand.u32 %s446, 1
          %s8177 = scalar_lea.sflag [#allocation3], %s8176
          %s8178 = sand.u32 %s446, 1
          %s8179 = smul.addr %s8178, 8
          %s8180 = scalar_lea.vmem [#allocation2], %s8179
          %8181 = dma.done %s8177, 128
        $region108: #{ascad_branch_forward.1} parent=103 // pred_fallthru
          _
      $region104: #{ascad_branch_forward.1} parent=5 // pred_fallthru
        _
    $region6: #{ascad_branch_forward.1} parent=1 // loop_footer
      %s32 = sadd.s32 1, %s28
    $region7: #{ascad_branch_forward.1} parent=1 // loop_footer_branch
      %27 = sbr.rel target = $region3
    $region8: #{ascad_branch_forward.1} parent=1 // loop_exit
      _
    %8182 = vsyncpa [#allocation3], 1
    %s8183 = scalar_lea.sflag [#allocation3], 1
    %8184 = vsyncpa %s8183, 1

</llo_original>
